<compile_context>
chip_gen: v6e
topology: v6e:2x2x1
jax: 0.10.0
libtpu: 0.0.40
codegen_flags: <defaults>
</compile_context>

<pallas_src>
import jax
import jax.numpy as jnp
import numpy as np
from jax import lax
from jax.experimental import pallas as pl
from jax.experimental.pallas import tpu as pltpu

HI = jax.lax.Precision.HIGHEST       # reference only
EPS = 1e-5                           # InstanceNorm2d default
_VMEM_LIMIT = 64 * 1024 * 1024       # explicit scoped-VMEM cap (far above use)


# ---------------------------------------------------------------------------
# Layout helpers: margined padded-flat format
#   pf(H, W): (B, C, Lm) bf16, Lm = (H+2)*(W+2) + 2*Mg, Mg = W + 3,
#   zero everywhere except the interior image pixels.
# ---------------------------------------------------------------------------
def _pf_dims(H, W):
    Wp, Hp = W + 2, H + 2
    Lp = Hp * Wp
    Mg = Wp + 1                      # covers the max |conv tap offset| = Wp+1
    return Hp, Wp, Lp, Mg


def to_pf(x):
    """(B, C, H, W) f32 -> margined padded-flat (B, C, Lm) bf16."""
    B, C, H, W = x.shape
    _, _, Lp, Mg = _pf_dims(H, W)
    xp = jnp.pad(x, ((0, 0), (0, 0), (1, 1), (1, 1)))
    flat = xp.reshape(B, C, Lp)
    return jnp.pad(flat, ((0, 0), (0, 0), (Mg, Mg))).astype(jnp.bfloat16)


def _interior_mask_np(H, W):
    Hp, Wp, Lp, _ = _pf_dims(H, W)
    m = np.zeros((Hp, Wp), np.float32)
    m[1:H + 1, 1:W + 1] = 1.0
    return m.reshape(1, Lp)


# ---------------------------------------------------------------------------
# Fused DoubleConv: (3x3 conv -> InstanceNorm -> ReLU) x2, padded-flat layout
# ---------------------------------------------------------------------------
def _make_double_conv_kernel(H, W, Cin, Cmid, Cout):
    Hp, Wp, Lp, Mg = _pf_dims(H, W)
    Lm = Lp + 2 * Mg
    offs = [(dy - 1) * Wp + (dx - 1) for dy in range(3) for dx in range(3)]
    inv_n = np.float32(1.0 / (H * W))

    def in_relu(acc, mask):
        # masked InstanceNorm (stats over interior pixels only) + ReLU, f32
        mean = jnp.sum(acc * mask, axis=1, keepdims=True) * inv_n
        diff = (acc - mean) * mask           # borders -> exactly 0
        var = jnp.sum(diff * diff, axis=1, keepdims=True) * inv_n
        return jnp.maximum(diff * jax.lax.rsqrt(var + EPS), 0.0)

    def kernel(x_ref, w1_ref, w2_ref, m_ref, o_ref, col1, mid, col2):
        # x_ref : (1, Cin, Lm) bf16      w1_ref: (Cmid, 9*Cin) bf16
        # w2_ref: (Cout, 9*Cmid) bf16    m_ref : (1, Lp) f32
        # o_ref : (1, Cout, Lm) bf16
        # col1: (9*Cin, Lp) f32   mid: (Cmid, Lm) f32   col2: (9*Cmid, Lp) f32
        mask = m_ref[...]

        # ---- conv1: im2col scratch + single MXU matmul ----
        for t, d in enumerate(offs):
            col1[t * Cin:(t + 1) * Cin, :] = (
                x_ref[0, :, Mg + d:Mg + d + Lp].astype(jnp.float32))
        acc1 = jnp.dot(w1_ref[...], col1[...].astype(jnp.bfloat16),
                       preferred_element_type=jnp.float32)        # (Cmid, Lp)
        y1 = in_relu(acc1, mask)

        # stash conv1 output in padded-flat-with-margins form in VMEM so that
        # conv2's taps read proper zero padding (mask already zeroed borders)
        mid[:, :Mg] = jnp.zeros((Cmid, Mg), jnp.float32)
        mid[:, Mg:Mg + Lp] = y1
        mid[:, Mg + Lp:Lm] = jnp.zeros((Cmid, Mg), jnp.float32)

        # ---- conv2: im2col scratch + single MXU matmul ----
        for t, d in enumerate(offs):
            col2[t * Cmid:(t + 1) * Cmid, :] = mid[:, Mg + d:Mg + d + Lp]
        acc2 = jnp.dot(w2_ref[...], col2[...].astype(jnp.bfloat16),
                       preferred_element_type=jnp.float32)        # (Cout, Lp)
        y2 = in_relu(acc2, mask)

        # write back in the same margined padded-flat format (borders stay 0)
        o_ref[0, :, :Mg] = jnp.zeros((Cout, Mg), jnp.bfloat16)
        o_ref[0, :, Mg:Mg + Lp] = y2.astype(jnp.bfloat16)
        o_ref[0, :, Mg + Lp:Lm] = jnp.zeros((Cout, Mg), jnp.bfloat16)

    return kernel


def double_conv_pf(x_pf, w1, w2, H, W):
    """Fused (conv3x3 -> IN -> ReLU) x2.  x_pf: (B, Cin, Lm) bf16;
    w1: (Cmid, Cin, 3, 3); w2: (Cout, Cmid, 3, 3).  Returns (B, Cout, Lm) bf16."""
    B, Cin, Lm = x_pf.shape
    Cmid, Cout = w1.shape[0], w2.shape[0]
    _, _, Lp, Mg = _pf_dims(H, W)
    assert Lm == Lp + 2 * Mg, (Lm, Lp, Mg)
    # im2col-major weights: column (ky*3 + kx)*Cin + c  <->  w[o, c, ky, kx]
    w1m = jnp.transpose(w1, (0, 2, 3, 1)).reshape(Cmid, 9 * Cin).astype(jnp.bfloat16)
    w2m = jnp.transpose(w2, (0, 2, 3, 1)).reshape(Cout, 9 * Cmid).astype(jnp.bfloat16)
    mask = jnp.asarray(_interior_mask_np(H, W))
    kernel = _make_double_conv_kernel(H, W, Cin, Cmid, Cout)
    return pl.pallas_call(
        kernel,
        out_shape=jax.ShapeDtypeStruct((B, Cout, Lm), jnp.bfloat16),
        grid=(B,),
        in_specs=[pl.BlockSpec((1, Cin, Lm), lambda b: (b, 0, 0)),
                  pl.BlockSpec((Cmid, 9 * Cin), lambda b: (0, 0)),
                  pl.BlockSpec((Cout, 9 * Cmid), lambda b: (0, 0)),
                  pl.BlockSpec((1, Lp), lambda b: (0, 0))],
        out_specs=pl.BlockSpec((1, Cout, Lm), lambda b: (b, 0, 0)),
        scratch_shapes=[pltpu.VMEM((9 * Cin, Lp), jnp.float32),
                        pltpu.VMEM((Cmid, Lm), jnp.float32),
                        pltpu.VMEM((9 * Cmid, Lp), jnp.float32)],
        compiler_params=pltpu.CompilerParams(
            dimension_semantics=("parallel",),
            vmem_limit_bytes=_VMEM_LIMIT),
    )(x_pf, w1m, w2m, mask)


# ---------------------------------------------------------------------------
# Bilinear x2 upsample (align_corners=True), fused pf(H,W) -> pf(2H,2W)
# ---------------------------------------------------------------------------
def _interp_matrix_np(n_in):
    """Interp matrix of nn.Upsample(scale=2, bilinear, align_corners=True)."""
    assert n_in >= 2, "align_corners=True bilinear x2 needs n_in >= 2"
    n_out = 2 * n_in
    i = np.arange(n_out, dtype=np.float64)
    src = i * (n_in - 1) / (n_out - 1)
    lo = np.clip(np.floor(src).astype(np.int64), 0, n_in - 2)
    frac = (src - lo).astype(np.float32)
    A = np.zeros((n_out, n_in), np.float32)
    A[np.arange(n_out), lo] += 1.0 - frac
    A[np.arange(n_out), lo + 1] += frac
    return A


def _up2_kron_np(H, W):
    """Transposed Kronecker operator (Lp_in, Lp_out) mapping padded-flat(H,W)
    to padded-flat(2H,2W); zero output borders are built into the matrix."""
    Ah, Aw = _interp_matrix_np(H), _interp_matrix_np(W)
    Hp_i, Wp_i = H + 2, W + 2
    Hp_o, Wp_o = 2 * H + 2, 2 * W + 2
    Bh = np.zeros((Hp_o, Hp_i), np.float32)
    Bh[1:2 * H + 1, 1:H + 1] = Ah
    Bw = np.zeros((Wp_o, Wp_i), np.float32)
    Bw[1:2 * W + 1, 1:W + 1] = Aw
    return np.ascontiguousarray(np.kron(Bh, Bw).T)       # (Lp_in, Lp_out)


def _make_up2_kernel(H, W, C):
    _, _, Lp_i, Mg_i = _pf_dims(H, W)
    _, _, Lp_o, Mg_o = _pf_dims(2 * H, 2 * W)
    Lm_o = Lp_o + 2 * Mg_o

    def kernel(x_ref, k_ref, o_ref):
        # x_ref: (1, C, Lm_in) bf16  k_ref: (Lp_in, Lp_out) bf16
        # o_ref: (1, C, Lm_out) bf16
        xi = x_ref[0, :, Mg_i:Mg_i + Lp_i]                         # (C, Lp_in)
        y = jnp.dot(xi, k_ref[...], preferred_element_type=jnp.float32)
        o_ref[0, :, :Mg_o] = jnp.zeros((C, Mg_o), jnp.bfloat16)
        o_ref[0, :, Mg_o:Mg_o + Lp_o] = y.astype(jnp.bfloat16)
        o_ref[0, :, Mg_o + Lp_o:Lm_o] = jnp.zeros((C, Mg_o), jnp.bfloat16)

    return kernel


def upsample2x_pf(x_pf, H, W):
    """Bilinear x2 upsample, one lane-dense matmul per batch, pf in -> pf out.

    TODO(synk): the Kronecker operator is O((H*W)^2) memory; for production
    image sizes replace with two separable row/column passes + spatial tiling.
    """
    B, C, Lm_i = x_pf.shape
    _, _, Lp_i, Mg_i = _pf_dims(H, W)
    _, _, Lp_o, Mg_o = _pf_dims(2 * H, 2 * W)
    Lm_o = Lp_o + 2 * Mg_o
    assert Lm_i == Lp_i + 2 * Mg_i
    kmat = jnp.asarray(_up2_kron_np(H, W), jnp.bfloat16)
    kernel = _make_up2_kernel(H, W, C)
    return pl.pallas_call(
        kernel,
        out_shape=jax.ShapeDtypeStruct((B, C, Lm_o), jnp.bfloat16),
        grid=(B,),
        in_specs=[pl.BlockSpec((1, C, Lm_i), lambda b: (b, 0, 0)),
                  pl.BlockSpec((Lp_i, Lp_o), lambda b: (0, 0))],
        out_specs=pl.BlockSpec((1, C, Lm_o), lambda b: (b, 0, 0)),
        compiler_params=pltpu.CompilerParams(
            dimension_semantics=("parallel",),
            vmem_limit_bytes=_VMEM_LIMIT),
    )(x_pf, kmat)


# ---------------------------------------------------------------------------
# 1x1 conv + bias + sigmoid, single lane-dense matmul over all batches
# ---------------------------------------------------------------------------
def _outconv_kernel(x_ref, w_ref, b_ref, o_ref):
    # x_ref: (Cin, N) bf16   w_ref: (Cout, Cin) bf16   b_ref: (Cout, 1) f32
    y = jnp.dot(w_ref[...], x_ref[...],
                preferred_element_type=jnp.float32) + b_ref[...]
    o_ref[...] = pl.reciprocal(1.0 + jnp.exp(-y), approx=True)


def outconv_sigmoid_pf(x_pf, w, b, H, W):
    """x_pf: (B, Cin, Lm) bf16, w: (Cout, Cin), b: (Cout,) -> (B, Cout, H, W) f32."""
    B, Cin, Lm = x_pf.shape
    Cout = w.shape[0]
    Hp, Wp, Lp, Mg = _pf_dims(H, W)
    # one lane-dense matmul over all batches: (Cout, Cin) @ (Cin, B*Lp)
    xs = jnp.transpose(x_pf[:, :, Mg:Mg + Lp], (1, 0, 2)).reshape(Cin, B * Lp)
    y = pl.pallas_call(
        _outconv_kernel,
        out_shape=jax.ShapeDtypeStruct((Cout, B * Lp), jnp.float32),
        grid=(1,),
        in_specs=[pl.BlockSpec((Cin, B * Lp), lambda i: (0, 0)),
                  pl.BlockSpec((Cout, Cin), lambda i: (0, 0)),
                  pl.BlockSpec((Cout, 1), lambda i: (0, 0))],
        out_specs=pl.BlockSpec((Cout, B * Lp), lambda i: (0, 0)),
        compiler_params=pltpu.CompilerParams(
            dimension_semantics=("arbitrary",),
            vmem_limit_bytes=_VMEM_LIMIT),
    )(xs, w.astype(jnp.bfloat16), b.reshape(Cout, 1).astype(jnp.float32))
    y = y.reshape(Cout, B, Hp, Wp)
    return jnp.transpose(y, (1, 0, 2, 3))[:, :, 1:H + 1, 1:W + 1]


# ---------------------------------------------------------------------------
# Full Upsampler forward
# ---------------------------------------------------------------------------
def upsampler_forward(x, params):
    B, _, H, W = x.shape
    xp = to_pf(x)
    # inc: DoubleConv(input_dim -> 4C)
    xp = double_conv_pf(xp, params["inc_w1"], params["inc_w2"], H, W)
    # up1: x2 bilinear upsample, then DoubleConv(4C -> 2C, mid=2C)
    xp = upsample2x_pf(xp, H, W)
    H, W = 2 * H, 2 * W
    xp = double_conv_pf(xp, params["up1_w1"], params["up1_w2"], H, W)
    # up2: x2 bilinear upsample, then DoubleConv(2C -> C, mid=C)
    xp = upsample2x_pf(xp, H, W)
    H, W = 2 * H, 2 * W
    xp = double_conv_pf(xp, params["up2_w1"], params["up2_w2"], H, W)
    # outc: 1x1 conv + bias + sigmoid
    return outconv_sigmoid_pf(xp, params["outc_w"], params["outc_b"], H, W)


def init_params(key, input_dim, output_dim, cap):
    def conv_w(k, cout, cin):
        return jax.random.normal(k, (cout, cin, 3, 3), jnp.float32) / np.sqrt(9 * cin)
    ks = jax.random.split(key, 8)
    c4, c2, c1 = 4 * cap, 2 * cap, cap
    return {
        "inc_w1": conv_w(ks[0], c4, input_dim),
        "inc_w2": conv_w(ks[1], c4, c4),
        "up1_w1": conv_w(ks[2], c2, c4),
        "up1_w2": conv_w(ks[3], c2, c2),
        "up2_w1": conv_w(ks[4], c1, c2),
        "up2_w2": conv_w(ks[5], c1, c1),
        "outc_w": jax.random.normal(ks[6], (output_dim, c1), jnp.float32) / np.sqrt(c1),
        "outc_b": jax.random.normal(ks[7], (output_dim,), jnp.float32) * 0.1,
    }


# ---------------------------------------------------------------------------
# Pure-JAX f32 reference (for correctness check)
# ---------------------------------------------------------------------------
def _ref_conv_in_relu(x, w):
    y = lax.conv_general_dilated(x, w, (1, 1), ((1, 1), (1, 1)),
                                 dimension_numbers=("NCHW", "OIHW", "NCHW"),
                                 precision=HI)
    mean = y.mean(axis=(2, 3), keepdims=True)
    var = y.var(axis=(2, 3), keepdims=True)
    return jnp.maximum((y - mean) * jax.lax.rsqrt(var + EPS), 0.0)


def _ref_up2(x):
    _, _, H, W = x.shape
    Ah = jnp.asarray(_interp_matrix_np(H))
    Aw = jnp.asarray(_interp_matrix_np(W))
    return jnp.einsum("oh,bchw,pw->bcop", Ah, x, Aw, precision=HI)


def _ref_forward(x, p):
    x = _ref_conv_in_relu(x, p["inc_w1"])
    x = _ref_conv_in_relu(x, p["inc_w2"])
    x = _ref_up2(x)
    x = _ref_conv_in_relu(x, p["up1_w1"])
    x = _ref_conv_in_relu(x, p["up1_w2"])
    x = _ref_up2(x)
    x = _ref_conv_in_relu(x, p["up2_w1"])
    x = _ref_conv_in_relu(x, p["up2_w2"])
    y = jnp.einsum("bchw,oc->bohw", x, p["outc_w"], precision=HI)
    y = y + p["outc_b"][None, :, None, None]
    return 1.0 / (1.0 + jnp.exp(-y))


if __name__ == "__main__":
    # Small, forward-consistent shapes: B=2, input_dim=8, H=W=8,
    # network_capacity=8, output_dim=3  ->  output (2, 3, 32, 32).
    B, INPUT_DIM, OUTPUT_DIM, CAP, H, W = 2, 8, 3, 8, 8, 8

    key = jax.random.PRNGKey(0)
    kx, kp = jax.random.split(key)
    x = jax.random.normal(kx, (B, INPUT_DIM, H, W), jnp.float32)   # NCHW
    params = init_params(kp, INPUT_DIM, OUTPUT_DIM, CAP)

    out = jax.block_until_ready(jax.jit(upsampler_forward)(x, params))

    assert out.shape == (B, OUTPUT_DIM, 4 * H, 4 * W), out.shape
    assert bool(jnp.all(jnp.isfinite(out)))

    ref = jax.block_until_ready(_ref_forward(x, params))
    np.testing.assert_allclose(np.asarray(out), np.asarray(ref),
                               atol=5e-2, rtol=5e-2)

    print("KERNEL_OK")
</pallas_src>

<mosaic_0001>
module attributes {stable_mosaic.version = 11 : i64} {
  func.func @kernel(%arg0: i32, %arg1: memref<1x8x122xbf16, #tpu.memory_space<vmem>>, %arg2: memref<32x72xbf16, #tpu.memory_space<vmem>>, %arg3: memref<32x288xbf16, #tpu.memory_space<vmem>>, %arg4: memref<1x100xf32, #tpu.memory_space<vmem>>, %arg5: memref<1x32x122xbf16, #tpu.memory_space<vmem>>, %arg6: memref<72x100xf32, #tpu.memory_space<vmem>>, %arg7: memref<32x122xf32, #tpu.memory_space<vmem>>, %arg8: memref<288x100xf32, #tpu.memory_space<vmem>>) attributes {dimension_semantics = [#tpu.dimension_semantics<parallel>], iteration_bounds = array<i64: 2>, scalar_prefetch = 0 : i64, scratch_operands = 3 : i64, tpu.core_type = #tpu.core_type<tc>, window_params = [{transform_indices = @transform_0, window_bounds = array<i64: 1, 8, 122>}, {pipeline_mode = #tpu.pipeline_mode<synchronous>, transform_indices = @transform_1, window_bounds = array<i64: 32, 72>}, {pipeline_mode = #tpu.pipeline_mode<synchronous>, transform_indices = @transform_2, window_bounds = array<i64: 32, 288>}, {pipeline_mode = #tpu.pipeline_mode<synchronous>, transform_indices = @transform_3, window_bounds = array<i64: 1, 100>}, {transform_indices = @transform_4, window_bounds = array<i64: 1, 32, 122>}]} {
    %c0 = arith.constant 0 : index
    %c0_0 = arith.constant 0 : index
    %0 = vector.load %arg4[%c0, %c0_0] : memref<1x100xf32, #tpu.memory_space<vmem>>, vector<1x100xf32>
    %c0_1 = arith.constant 0 : index
    %c0_2 = arith.constant 0 : index
    %c0_3 = arith.constant 0 : index
    %1 = vector.load %arg1[%c0_1, %c0_2, %c0_3] : memref<1x8x122xbf16, #tpu.memory_space<vmem>>, vector<1x8x100xbf16>
    %2 = vector.shape_cast %1 : vector<1x8x100xbf16> to vector<8x100xbf16>
    %3 = arith.extf %2 : vector<8x100xbf16> to vector<8x100xf32>
    %c0_4 = arith.constant 0 : index
    %c0_5 = arith.constant 0 : index
    %4 = vector.load %arg6[%c0_4, %c0_5] : memref<72x100xf32, #tpu.memory_space<vmem>>, vector<8x100xf32>
    tpu.vector_store %arg6[%c0_4, %c0_5], %3 {strides = array<i32>} : memref<72x100xf32, #tpu.memory_space<vmem>>, vector<8x100xf32>,
    %c0_6 = arith.constant 0 : index
    %c0_7 = arith.constant 0 : index
    %c1 = arith.constant 1 : index
    %5 = vector.load %arg1[%c0_6, %c0_7, %c1] : memref<1x8x122xbf16, #tpu.memory_space<vmem>>, vector<1x8x100xbf16>
    %6 = vector.shape_cast %5 : vector<1x8x100xbf16> to vector<8x100xbf16>
    %7 = arith.extf %6 : vector<8x100xbf16> to vector<8x100xf32>
    %c8 = arith.constant 8 : index
    %c0_8 = arith.constant 0 : index
    %8 = vector.load %arg6[%c8, %c0_8] : memref<72x100xf32, #tpu.memory_space<vmem>>, vector<8x100xf32>
    tpu.vector_store %arg6[%c8, %c0_8], %7 {strides = array<i32>} : memref<72x100xf32, #tpu.memory_space<vmem>>, vector<8x100xf32>,
    %c0_9 = arith.constant 0 : index
    %c0_10 = arith.constant 0 : index
    %c2 = arith.constant 2 : index
    %9 = vector.load %arg1[%c0_9, %c0_10, %c2] : memref<1x8x122xbf16, #tpu.memory_space<vmem>>, vector<1x8x100xbf16>
    %10 = vector.shape_cast %9 : vector<1x8x100xbf16> to vector<8x100xbf16>
    %11 = arith.extf %10 : vector<8x100xbf16> to vector<8x100xf32>
    %c16 = arith.constant 16 : index
    %c0_11 = arith.constant 0 : index
    %12 = vector.load %arg6[%c16, %c0_11] : memref<72x100xf32, #tpu.memory_space<vmem>>, vector<8x100xf32>
    tpu.vector_store %arg6[%c16, %c0_11], %11 {strides = array<i32>} : memref<72x100xf32, #tpu.memory_space<vmem>>, vector<8x100xf32>,
    %c0_12 = arith.constant 0 : index
    %c0_13 = arith.constant 0 : index
    %c10 = arith.constant 10 : index
    %13 = vector.load %arg1[%c0_12, %c0_13, %c10] : memref<1x8x122xbf16, #tpu.memory_space<vmem>>, vector<1x8x100xbf16>
    %14 = vector.shape_cast %13 : vector<1x8x100xbf16> to vector<8x100xbf16>
    %15 = arith.extf %14 : vector<8x100xbf16> to vector<8x100xf32>
    %c24 = arith.constant 24 : index
    %c0_14 = arith.constant 0 : index
    %16 = vector.load %arg6[%c24, %c0_14] : memref<72x100xf32, #tpu.memory_space<vmem>>, vector<8x100xf32>
    tpu.vector_store %arg6[%c24, %c0_14], %15 {strides = array<i32>} : memref<72x100xf32, #tpu.memory_space<vmem>>, vector<8x100xf32>,
    %c0_15 = arith.constant 0 : index
    %c0_16 = arith.constant 0 : index
    %c11 = arith.constant 11 : index
    %17 = vector.load %arg1[%c0_15, %c0_16, %c11] : memref<1x8x122xbf16, #tpu.memory_space<vmem>>, vector<1x8x100xbf16>
    %18 = vector.shape_cast %17 : vector<1x8x100xbf16> to vector<8x100xbf16>
    %19 = arith.extf %18 : vector<8x100xbf16> to vector<8x100xf32>
    %c32 = arith.constant 32 : index
    %c0_17 = arith.constant 0 : index
    %20 = vector.load %arg6[%c32, %c0_17] : memref<72x100xf32, #tpu.memory_space<vmem>>, vector<8x100xf32>
    tpu.vector_store %arg6[%c32, %c0_17], %19 {strides = array<i32>} : memref<72x100xf32, #tpu.memory_space<vmem>>, vector<8x100xf32>,
    %c0_18 = arith.constant 0 : index
    %c0_19 = arith.constant 0 : index
    %c12 = arith.constant 12 : index
    %21 = vector.load %arg1[%c0_18, %c0_19, %c12] : memref<1x8x122xbf16, #tpu.memory_space<vmem>>, vector<1x8x100xbf16>
    %22 = vector.shape_cast %21 : vector<1x8x100xbf16> to vector<8x100xbf16>
    %23 = arith.extf %22 : vector<8x100xbf16> to vector<8x100xf32>
    %c40 = arith.constant 40 : index
    %c0_20 = arith.constant 0 : index
    %24 = vector.load %arg6[%c40, %c0_20] : memref<72x100xf32, #tpu.memory_space<vmem>>, vector<8x100xf32>
    tpu.vector_store %arg6[%c40, %c0_20], %23 {strides = array<i32>} : memref<72x100xf32, #tpu.memory_space<vmem>>, vector<8x100xf32>,
    %c0_21 = arith.constant 0 : index
    %c0_22 = arith.constant 0 : index
    %c20 = arith.constant 20 : index
    %25 = vector.load %arg1[%c0_21, %c0_22, %c20] : memref<1x8x122xbf16, #tpu.memory_space<vmem>>, vector<1x8x100xbf16>
    %26 = vector.shape_cast %25 : vector<1x8x100xbf16> to vector<8x100xbf16>
    %27 = arith.extf %26 : vector<8x100xbf16> to vector<8x100xf32>
    %c48 = arith.constant 48 : index
    %c0_23 = arith.constant 0 : index
    %28 = vector.load %arg6[%c48, %c0_23] : memref<72x100xf32, #tpu.memory_space<vmem>>, vector<8x100xf32>
    tpu.vector_store %arg6[%c48, %c0_23], %27 {strides = array<i32>} : memref<72x100xf32, #tpu.memory_space<vmem>>, vector<8x100xf32>,
    %c0_24 = arith.constant 0 : index
    %c0_25 = arith.constant 0 : index
    %c21 = arith.constant 21 : index
    %29 = vector.load %arg1[%c0_24, %c0_25, %c21] : memref<1x8x122xbf16, #tpu.memory_space<vmem>>, vector<1x8x100xbf16>
    %30 = vector.shape_cast %29 : vector<1x8x100xbf16> to vector<8x100xbf16>
    %31 = arith.extf %30 : vector<8x100xbf16> to vector<8x100xf32>
    %c56 = arith.constant 56 : index
    %c0_26 = arith.constant 0 : index
    %32 = vector.load %arg6[%c56, %c0_26] : memref<72x100xf32, #tpu.memory_space<vmem>>, vector<8x100xf32>
    tpu.vector_store %arg6[%c56, %c0_26], %31 {strides = array<i32>} : memref<72x100xf32, #tpu.memory_space<vmem>>, vector<8x100xf32>,
    %c0_27 = arith.constant 0 : index
    %c0_28 = arith.constant 0 : index
    %c22 = arith.constant 22 : index
    %33 = vector.load %arg1[%c0_27, %c0_28, %c22] : memref<1x8x122xbf16, #tpu.memory_space<vmem>>, vector<1x8x100xbf16>
    %34 = vector.shape_cast %33 : vector<1x8x100xbf16> to vector<8x100xbf16>
    %35 = arith.extf %34 : vector<8x100xbf16> to vector<8x100xf32>
    %c64 = arith.constant 64 : index
    %c0_29 = arith.constant 0 : index
    %36 = vector.load %arg6[%c64, %c0_29] : memref<72x100xf32, #tpu.memory_space<vmem>>, vector<8x100xf32>
    tpu.vector_store %arg6[%c64, %c0_29], %35 {strides = array<i32>} : memref<72x100xf32, #tpu.memory_space<vmem>>, vector<8x100xf32>,
    %c0_30 = arith.constant 0 : index
    %c0_31 = arith.constant 0 : index
    %37 = vector.load %arg2[%c0_30, %c0_31] : memref<32x72xbf16, #tpu.memory_space<vmem>>, vector<32x72xbf16>
    %c0_32 = arith.constant 0 : index
    %c0_33 = arith.constant 0 : index
    %38 = vector.load %arg6[%c0_32, %c0_33] : memref<72x100xf32, #tpu.memory_space<vmem>>, vector<72x100xf32>
    %39 = arith.truncf %38 : vector<72x100xf32> to vector<72x100xbf16>
    %cst = arith.constant dense<0.000000e+00> : vector<32x100xf32>
    %40 = tpu.matmul %37, %39, %cst {dimension_numbers = #tpu.dot_dimension_numbers<[1], [0], [0], [1], [0, 0, 1, 1], [], []>} : vector<32x72xbf16>, vector<72x100xbf16>, vector<32x100xf32> -> vector<32x100xf32>
    %41 = vector.broadcast %0 : vector<1x100xf32> to vector<32x100xf32>
    %42 = arith.mulf %40, %41 : vector<32x100xf32>
    %cst_34 = arith.constant dense<0.000000e+00> : vector<32xf32>
    %43 = vector.multi_reduction <add>, %42, %cst_34 [1] : vector<32x100xf32> to vector<32xf32>
    %44 = vector.shape_cast %43 : vector<32xf32> to vector<32x1xf32>
    %cst_35 = arith.constant 1.562500e-02 : f32
    %45 = vector.broadcast %cst_35 : f32 to vector<32x1xf32>
    %46 = arith.mulf %44, %45 : vector<32x1xf32>
    %47 = vector.broadcast %46 : vector<32x1xf32> to vector<32x100xf32>
    %48 = arith.subf %40, %47 : vector<32x100xf32>
    %49 = vector.broadcast %0 : vector<1x100xf32> to vector<32x100xf32>
    %50 = arith.mulf %48, %49 : vector<32x100xf32>
    %51 = arith.mulf %50, %50 : vector<32x100xf32>
    %cst_36 = arith.constant dense<0.000000e+00> : vector<32xf32>
    %52 = vector.multi_reduction <add>, %51, %cst_36 [1] : vector<32x100xf32> to vector<32xf32>
    %53 = vector.shape_cast %52 : vector<32xf32> to vector<32x1xf32>
    %cst_37 = arith.constant 1.562500e-02 : f32
    %54 = vector.broadcast %cst_37 : f32 to vector<32x1xf32>
    %55 = arith.mulf %53, %54 : vector<32x1xf32>
    %cst_38 = arith.constant 9.99999974E-6 : f32
    %56 = vector.broadcast %cst_38 : f32 to vector<32x1xf32>
    %57 = arith.addf %55, %56 : vector<32x1xf32>
    %58 = math.rsqrt %57 : vector<32x1xf32>
    %59 = vector.broadcast %58 : vector<32x1xf32> to vector<32x100xf32>
    %60 = arith.mulf %50, %59 : vector<32x100xf32>
    %cst_39 = arith.constant 0.000000e+00 : f32
    %61 = vector.broadcast %cst_39 : f32 to vector<32x100xf32>
    %62 = arith.maximumf %60, %61 : vector<32x100xf32>
    %cst_40 = arith.constant 0.000000e+00 : f32
    %63 = vector.broadcast %cst_40 : f32 to vector<32x11xf32>
    %c0_41 = arith.constant 0 : index
    %c0_42 = arith.constant 0 : index
    %64 = vector.load %arg7[%c0_41, %c0_42] : memref<32x122xf32, #tpu.memory_space<vmem>>, vector<32x11xf32>
    tpu.vector_store %arg7[%c0_41, %c0_42], %63 {strides = array<i32>} : memref<32x122xf32, #tpu.memory_space<vmem>>, vector<32x11xf32>,
    %c0_43 = arith.constant 0 : index
    %c11_44 = arith.constant 11 : index
    %65 = vector.load %arg7[%c0_43, %c11_44] : memref<32x122xf32, #tpu.memory_space<vmem>>, vector<32x100xf32>
    tpu.vector_store %arg7[%c0_43, %c11_44], %62 {strides = array<i32>} : memref<32x122xf32, #tpu.memory_space<vmem>>, vector<32x100xf32>,
    %cst_45 = arith.constant 0.000000e+00 : f32
    %66 = vector.broadcast %cst_45 : f32 to vector<32x11xf32>
    %c0_46 = arith.constant 0 : index
    %c111 = arith.constant 111 : index
    %67 = vector.load %arg7[%c0_46, %c111] : memref<32x122xf32, #tpu.memory_space<vmem>>, vector<32x11xf32>
    tpu.vector_store %arg7[%c0_46, %c111], %66 {strides = array<i32>} : memref<32x122xf32, #tpu.memory_space<vmem>>, vector<32x11xf32>,
    %c0_47 = arith.constant 0 : index
    %c0_48 = arith.constant 0 : index
    %68 = vector.load %arg7[%c0_47, %c0_48] : memref<32x122xf32, #tpu.memory_space<vmem>>, vector<32x100xf32>
    %c0_49 = arith.constant 0 : index
    %c0_50 = arith.constant 0 : index
    %69 = vector.load %arg8[%c0_49, %c0_50] : memref<288x100xf32, #tpu.memory_space<vmem>>, vector<32x100xf32>
    tpu.vector_store %arg8[%c0_49, %c0_50], %68 {strides = array<i32>} : memref<288x100xf32, #tpu.memory_space<vmem>>, vector<32x100xf32>,
    %c0_51 = arith.constant 0 : index
    %c1_52 = arith.constant 1 : index
    %70 = vector.load %arg7[%c0_51, %c1_52] : memref<32x122xf32, #tpu.memory_space<vmem>>, vector<32x100xf32>
    %c32_53 = arith.constant 32 : index
    %c0_54 = arith.constant 0 : index
    %71 = vector.load %arg8[%c32_53, %c0_54] : memref<288x100xf32, #tpu.memory_space<vmem>>, vector<32x100xf32>
    tpu.vector_store %arg8[%c32_53, %c0_54], %70 {strides = array<i32>} : memref<288x100xf32, #tpu.memory_space<vmem>>, vector<32x100xf32>,
    %c0_55 = arith.constant 0 : index
    %c2_56 = arith.constant 2 : index
    %72 = vector.load %arg7[%c0_55, %c2_56] : memref<32x122xf32, #tpu.memory_space<vmem>>, vector<32x100xf32>
    %c64_57 = arith.constant 64 : index
    %c0_58 = arith.constant 0 : index
    %73 = vector.load %arg8[%c64_57, %c0_58] : memref<288x100xf32, #tpu.memory_space<vmem>>, vector<32x100xf32>
    tpu.vector_store %arg8[%c64_57, %c0_58], %72 {strides = array<i32>} : memref<288x100xf32, #tpu.memory_space<vmem>>, vector<32x100xf32>,
    %c0_59 = arith.constant 0 : index
    %c10_60 = arith.constant 10 : index
    %74 = vector.load %arg7[%c0_59, %c10_60] : memref<32x122xf32, #tpu.memory_space<vmem>>, vector<32x100xf32>
    %c96 = arith.constant 96 : index
    %c0_61 = arith.constant 0 : index
    %75 = vector.load %arg8[%c96, %c0_61] : memref<288x100xf32, #tpu.memory_space<vmem>>, vector<32x100xf32>
    tpu.vector_store %arg8[%c96, %c0_61], %74 {strides = array<i32>} : memref<288x100xf32, #tpu.memory_space<vmem>>, vector<32x100xf32>,
    %c0_62 = arith.constant 0 : index
    %c11_63 = arith.constant 11 : index
    %76 = vector.load %arg7[%c0_62, %c11_63] : memref<32x122xf32, #tpu.memory_space<vmem>>, vector<32x100xf32>
    %c128 = arith.constant 128 : index
    %c0_64 = arith.constant 0 : index
    %77 = vector.load %arg8[%c128, %c0_64] : memref<288x100xf32, #tpu.memory_space<vmem>>, vector<32x100xf32>
    tpu.vector_store %arg8[%c128, %c0_64], %76 {strides = array<i32>} : memref<288x100xf32, #tpu.memory_space<vmem>>, vector<32x100xf32>,
    %c0_65 = arith.constant 0 : index
    %c12_66 = arith.constant 12 : index
    %78 = vector.load %arg7[%c0_65, %c12_66] : memref<32x122xf32, #tpu.memory_space<vmem>>, vector<32x100xf32>
    %c160 = arith.constant 160 : index
    %c0_67 = arith.constant 0 : index
    %79 = vector.load %arg8[%c160, %c0_67] : memref<288x100xf32, #tpu.memory_space<vmem>>, vector<32x100xf32>
    tpu.vector_store %arg8[%c160, %c0_67], %78 {strides = array<i32>} : memref<288x100xf32, #tpu.memory_space<vmem>>, vector<32x100xf32>,
    %c0_68 = arith.constant 0 : index
    %c20_69 = arith.constant 20 : index
    %80 = vector.load %arg7[%c0_68, %c20_69] : memref<32x122xf32, #tpu.memory_space<vmem>>, vector<32x100xf32>
    %c192 = arith.constant 192 : index
    %c0_70 = arith.constant 0 : index
    %81 = vector.load %arg8[%c192, %c0_70] : memref<288x100xf32, #tpu.memory_space<vmem>>, vector<32x100xf32>
    tpu.vector_store %arg8[%c192, %c0_70], %80 {strides = array<i32>} : memref<288x100xf32, #tpu.memory_space<vmem>>, vector<32x100xf32>,
    %c0_71 = arith.constant 0 : index
    %c21_72 = arith.constant 21 : index
    %82 = vector.load %arg7[%c0_71, %c21_72] : memref<32x122xf32, #tpu.memory_space<vmem>>, vector<32x100xf32>
    %c224 = arith.constant 224 : index
    %c0_73 = arith.constant 0 : index
    %83 = vector.load %arg8[%c224, %c0_73] : memref<288x100xf32, #tpu.memory_space<vmem>>, vector<32x100xf32>
    tpu.vector_store %arg8[%c224, %c0_73], %82 {strides = array<i32>} : memref<288x100xf32, #tpu.memory_space<vmem>>, vector<32x100xf32>,
    %c0_74 = arith.constant 0 : index
    %c22_75 = arith.constant 22 : index
    %84 = vector.load %arg7[%c0_74, %c22_75] : memref<32x122xf32, #tpu.memory_space<vmem>>, vector<32x100xf32>
    %c256 = arith.constant 256 : index
    %c0_76 = arith.constant 0 : index
    %85 = vector.load %arg8[%c256, %c0_76] : memref<288x100xf32, #tpu.memory_space<vmem>>, vector<32x100xf32>
    tpu.vector_store %arg8[%c256, %c0_76], %84 {strides = array<i32>} : memref<288x100xf32, #tpu.memory_space<vmem>>, vector<32x100xf32>,
    %c0_77 = arith.constant 0 : index
    %c0_78 = arith.constant 0 : index
    %86 = vector.load %arg3[%c0_77, %c0_78] : memref<32x288xbf16, #tpu.memory_space<vmem>>, vector<32x288xbf16>
    %c0_79 = arith.constant 0 : index
    %c0_80 = arith.constant 0 : index
    %87 = vector.load %arg8[%c0_79, %c0_80] : memref<288x100xf32, #tpu.memory_space<vmem>>, vector<288x100xf32>
    %88 = arith.truncf %87 : vector<288x100xf32> to vector<288x100xbf16>
    %cst_81 = arith.constant dense<0.000000e+00> : vector<32x100xf32>
    %89 = tpu.matmul %86, %88, %cst_81 {dimension_numbers = #tpu.dot_dimension_numbers<[1], [0], [0], [1], [0, 0, 1, 1], [], []>} : vector<32x288xbf16>, vector<288x100xbf16>, vector<32x100xf32> -> vector<32x100xf32>
    %90 = vector.broadcast %0 : vector<1x100xf32> to vector<32x100xf32>
    %91 = arith.mulf %89, %90 : vector<32x100xf32>
    %cst_82 = arith.constant dense<0.000000e+00> : vector<32xf32>
    %92 = vector.multi_reduction <add>, %91, %cst_82 [1] : vector<32x100xf32> to vector<32xf32>
    %93 = vector.shape_cast %92 : vector<32xf32> to vector<32x1xf32>
    %cst_83 = arith.constant 1.562500e-02 : f32
    %94 = vector.broadcast %cst_83 : f32 to vector<32x1xf32>
    %95 = arith.mulf %93, %94 : vector<32x1xf32>
    %96 = vector.broadcast %95 : vector<32x1xf32> to vector<32x100xf32>
    %97 = arith.subf %89, %96 : vector<32x100xf32>
    %98 = vector.broadcast %0 : vector<1x100xf32> to vector<32x100xf32>
    %99 = arith.mulf %97, %98 : vector<32x100xf32>
    %100 = arith.mulf %99, %99 : vector<32x100xf32>
    %cst_84 = arith.constant dense<0.000000e+00> : vector<32xf32>
    %101 = vector.multi_reduction <add>, %100, %cst_84 [1] : vector<32x100xf32> to vector<32xf32>
    %102 = vector.shape_cast %101 : vector<32xf32> to vector<32x1xf32>
    %cst_85 = arith.constant 1.562500e-02 : f32
    %103 = vector.broadcast %cst_85 : f32 to vector<32x1xf32>
    %104 = arith.mulf %102, %103 : vector<32x1xf32>
    %cst_86 = arith.constant 9.99999974E-6 : f32
    %105 = vector.broadcast %cst_86 : f32 to vector<32x1xf32>
    %106 = arith.addf %104, %105 : vector<32x1xf32>
    %107 = math.rsqrt %106 : vector<32x1xf32>
    %108 = vector.broadcast %107 : vector<32x1xf32> to vector<32x100xf32>
    %109 = arith.mulf %99, %108 : vector<32x100xf32>
    %cst_87 = arith.constant 0.000000e+00 : f32
    %110 = vector.broadcast %cst_87 : f32 to vector<32x100xf32>
    %111 = arith.maximumf %109, %110 : vector<32x100xf32>
    %cst_88 = arith.constant 0.000000e+00 : bf16
    %112 = vector.broadcast %cst_88 : bf16 to vector<32x11xbf16>
    %c0_89 = arith.constant 0 : index
    %c0_90 = arith.constant 0 : index
    %c0_91 = arith.constant 0 : index
    %113 = vector.load %arg5[%c0_89, %c0_90, %c0_91] : memref<1x32x122xbf16, #tpu.memory_space<vmem>>, vector<1x32x11xbf16>
    %114 = vector.shape_cast %113 : vector<1x32x11xbf16> to vector<32x11xbf16>
    %115 = vector.shape_cast %112 : vector<32x11xbf16> to vector<1x32x11xbf16>
    tpu.vector_store %arg5[%c0_89, %c0_90, %c0_91], %115 {strides = array<i32>} : memref<1x32x122xbf16, #tpu.memory_space<vmem>>, vector<1x32x11xbf16>,
    %116 = arith.truncf %111 : vector<32x100xf32> to vector<32x100xbf16>
    %c0_92 = arith.constant 0 : index
    %c0_93 = arith.constant 0 : index
    %c11_94 = arith.constant 11 : index
    %117 = vector.load %arg5[%c0_92, %c0_93, %c11_94] : memref<1x32x122xbf16, #tpu.memory_space<vmem>>, vector<1x32x100xbf16>
    %118 = vector.shape_cast %117 : vector<1x32x100xbf16> to vector<32x100xbf16>
    %119 = vector.shape_cast %116 : vector<32x100xbf16> to vector<1x32x100xbf16>
    tpu.vector_store %arg5[%c0_92, %c0_93, %c11_94], %119 {strides = array<i32>} : memref<1x32x122xbf16, #tpu.memory_space<vmem>>, vector<1x32x100xbf16>,
    %cst_95 = arith.constant 0.000000e+00 : bf16
    %120 = vector.broadcast %cst_95 : bf16 to vector<32x11xbf16>
    %c0_96 = arith.constant 0 : index
    %c0_97 = arith.constant 0 : index
    %c111_98 = arith.constant 111 : index
    %121 = vector.load %arg5[%c0_96, %c0_97, %c111_98] : memref<1x32x122xbf16, #tpu.memory_space<vmem>>, vector<1x32x11xbf16>
    %122 = vector.shape_cast %121 : vector<1x32x11xbf16> to vector<32x11xbf16>
    %123 = vector.shape_cast %120 : vector<32x11xbf16> to vector<1x32x11xbf16>
    tpu.vector_store %arg5[%c0_96, %c0_97, %c111_98], %123 {strides = array<i32>} : memref<1x32x122xbf16, #tpu.memory_space<vmem>>, vector<1x32x11xbf16>,
    return
  }
  func.func @transform_0(%arg0: i32) -> (i32, i32, i32) {
    %c0_i32 = arith.constant 0 : i32
    %c0_i32_0 = arith.constant 0 : i32
    %c0_i32_1 = arith.constant 0 : i32
    return %arg0, %c0_i32, %c0_i32_0 : i32, i32, i32
  }
  func.func @transform_1(%arg0: i32) -> (i32, i32) {
    %c0_i32 = arith.constant 0 : i32
    %c0_i32_0 = arith.constant 0 : i32
    %c0_i32_1 = arith.constant 0 : i32
    return %c0_i32, %c0_i32_0 : i32, i32
  }
  func.func @transform_2(%arg0: i32) -> (i32, i32) {
    %c0_i32 = arith.constant 0 : i32
    %c0_i32_0 = arith.constant 0 : i32
    %c0_i32_1 = arith.constant 0 : i32
    return %c0_i32, %c0_i32_0 : i32, i32
  }
  func.func @transform_3(%arg0: i32) -> (i32, i32) {
    %c0_i32 = arith.constant 0 : i32
    %c0_i32_0 = arith.constant 0 : i32
    %c0_i32_1 = arith.constant 0 : i32
    return %c0_i32, %c0_i32_0 : i32, i32
  }
  func.func @transform_4(%arg0: i32) -> (i32, i32, i32) {
    %c0_i32 = arith.constant 0 : i32
    %c0_i32_0 = arith.constant 0 : i32
    %c0_i32_1 = arith.constant 0 : i32
    return %arg0, %c0_i32, %c0_i32_0 : i32, i32, i32
  }
}

module attributes {stable_mosaic.version = 11 : i64} {
  func.func @kernel(%arg0: i32, %arg1: memref<1x32x122xbf16, #tpu.memory_space<vmem>>, %arg2: memref<100x324xbf16, #tpu.memory_space<vmem>>, %arg3: memref<1x32x362xbf16, #tpu.memory_space<vmem>>) attributes {dimension_semantics = [#tpu.dimension_semantics<parallel>], iteration_bounds = array<i64: 2>, scalar_prefetch = 0 : i64, scratch_operands = 0 : i64, tpu.core_type = #tpu.core_type<tc>, window_params = [{transform_indices = @transform_0, window_bounds = array<i64: 1, 32, 122>}, {pipeline_mode = #tpu.pipeline_mode<synchronous>, transform_indices = @transform_1, window_bounds = array<i64: 100, 324>}, {transform_indices = @transform_2, window_bounds = array<i64: 1, 32, 362>}]} {
    %c0 = arith.constant 0 : index
    %c0_0 = arith.constant 0 : index
    %c11 = arith.constant 11 : index
    %0 = vector.load %arg1[%c0, %c0_0, %c11] : memref<1x32x122xbf16, #tpu.memory_space<vmem>>, vector<1x32x100xbf16>
    %1 = vector.shape_cast %0 : vector<1x32x100xbf16> to vector<32x100xbf16>
    %c0_1 = arith.constant 0 : index
    %c0_2 = arith.constant 0 : index
    %2 = vector.load %arg2[%c0_1, %c0_2] : memref<100x324xbf16, #tpu.memory_space<vmem>>, vector<100x324xbf16>
    %cst = arith.constant dense<0.000000e+00> : vector<32x324xf32>
    %3 = tpu.matmul %1, %2, %cst {dimension_numbers = #tpu.dot_dimension_numbers<[1], [0], [0], [1], [0, 0, 1, 1], [], []>} : vector<32x100xbf16>, vector<100x324xbf16>, vector<32x324xf32> -> vector<32x324xf32>
    %cst_3 = arith.constant 0.000000e+00 : bf16
    %4 = vector.broadcast %cst_3 : bf16 to vector<32x19xbf16>
    %c0_4 = arith.constant 0 : index
    %c0_5 = arith.constant 0 : index
    %c0_6 = arith.constant 0 : index
    %5 = vector.load %arg3[%c0_4, %c0_5, %c0_6] : memref<1x32x362xbf16, #tpu.memory_space<vmem>>, vector<1x32x19xbf16>
    %6 = vector.shape_cast %5 : vector<1x32x19xbf16> to vector<32x19xbf16>
    %7 = vector.shape_cast %4 : vector<32x19xbf16> to vector<1x32x19xbf16>
    tpu.vector_store %arg3[%c0_4, %c0_5, %c0_6], %7 {strides = array<i32>} : memref<1x32x362xbf16, #tpu.memory_space<vmem>>, vector<1x32x19xbf16>,
    %8 = arith.truncf %3 : vector<32x324xf32> to vector<32x324xbf16>
    %c0_7 = arith.constant 0 : index
    %c0_8 = arith.constant 0 : index
    %c19 = arith.constant 19 : index
    %9 = vector.load %arg3[%c0_7, %c0_8, %c19] : memref<1x32x362xbf16, #tpu.memory_space<vmem>>, vector<1x32x324xbf16>
    %10 = vector.shape_cast %9 : vector<1x32x324xbf16> to vector<32x324xbf16>
    %11 = vector.shape_cast %8 : vector<32x324xbf16> to vector<1x32x324xbf16>
    tpu.vector_store %arg3[%c0_7, %c0_8, %c19], %11 {strides = array<i32>} : memref<1x32x362xbf16, #tpu.memory_space<vmem>>, vector<1x32x324xbf16>,
    %cst_9 = arith.constant 0.000000e+00 : bf16
    %12 = vector.broadcast %cst_9 : bf16 to vector<32x19xbf16>
    %c0_10 = arith.constant 0 : index
    %c0_11 = arith.constant 0 : index
    %c343 = arith.constant 343 : index
    %13 = vector.load %arg3[%c0_10, %c0_11, %c343] : memref<1x32x362xbf16, #tpu.memory_space<vmem>>, vector<1x32x19xbf16>
    %14 = vector.shape_cast %13 : vector<1x32x19xbf16> to vector<32x19xbf16>
    %15 = vector.shape_cast %12 : vector<32x19xbf16> to vector<1x32x19xbf16>
    tpu.vector_store %arg3[%c0_10, %c0_11, %c343], %15 {strides = array<i32>} : memref<1x32x362xbf16, #tpu.memory_space<vmem>>, vector<1x32x19xbf16>,
    return
  }
  func.func @transform_0(%arg0: i32) -> (i32, i32, i32) {
    %c0_i32 = arith.constant 0 : i32
    %c0_i32_0 = arith.constant 0 : i32
    %c0_i32_1 = arith.constant 0 : i32
    return %arg0, %c0_i32, %c0_i32_0 : i32, i32, i32
  }
  func.func @transform_1(%arg0: i32) -> (i32, i32) {
    %c0_i32 = arith.constant 0 : i32
    %c0_i32_0 = arith.constant 0 : i32
    %c0_i32_1 = arith.constant 0 : i32
    return %c0_i32, %c0_i32_0 : i32, i32
  }
  func.func @transform_2(%arg0: i32) -> (i32, i32, i32) {
    %c0_i32 = arith.constant 0 : i32
    %c0_i32_0 = arith.constant 0 : i32
    %c0_i32_1 = arith.constant 0 : i32
    return %arg0, %c0_i32, %c0_i32_0 : i32, i32, i32
  }
}

module attributes {stable_mosaic.version = 11 : i64} {
  func.func @kernel(%arg0: i32, %arg1: memref<1x32x362xbf16, #tpu.memory_space<vmem>>, %arg2: memref<16x288xbf16, #tpu.memory_space<vmem>>, %arg3: memref<16x144xbf16, #tpu.memory_space<vmem>>, %arg4: memref<1x324xf32, #tpu.memory_space<vmem>>, %arg5: memref<1x16x362xbf16, #tpu.memory_space<vmem>>, %arg6: memref<288x324xf32, #tpu.memory_space<vmem>>, %arg7: memref<16x362xf32, #tpu.memory_space<vmem>>, %arg8: memref<144x324xf32, #tpu.memory_space<vmem>>) attributes {dimension_semantics = [#tpu.dimension_semantics<parallel>], iteration_bounds = array<i64: 2>, scalar_prefetch = 0 : i64, scratch_operands = 3 : i64, tpu.core_type = #tpu.core_type<tc>, window_params = [{transform_indices = @transform_0, window_bounds = array<i64: 1, 32, 362>}, {pipeline_mode = #tpu.pipeline_mode<synchronous>, transform_indices = @transform_1, window_bounds = array<i64: 16, 288>}, {pipeline_mode = #tpu.pipeline_mode<synchronous>, transform_indices = @transform_2, window_bounds = array<i64: 16, 144>}, {pipeline_mode = #tpu.pipeline_mode<synchronous>, transform_indices = @transform_3, window_bounds = array<i64: 1, 324>}, {transform_indices = @transform_4, window_bounds = array<i64: 1, 16, 362>}]} {
    %c0 = arith.constant 0 : index
    %c0_0 = arith.constant 0 : index
    %0 = vector.load %arg4[%c0, %c0_0] : memref<1x324xf32, #tpu.memory_space<vmem>>, vector<1x324xf32>
    %c0_1 = arith.constant 0 : index
    %c0_2 = arith.constant 0 : index
    %c0_3 = arith.constant 0 : index
    %1 = vector.load %arg1[%c0_1, %c0_2, %c0_3] : memref<1x32x362xbf16, #tpu.memory_space<vmem>>, vector<1x32x324xbf16>
    %2 = vector.shape_cast %1 : vector<1x32x324xbf16> to vector<32x324xbf16>
    %3 = arith.extf %2 : vector<32x324xbf16> to vector<32x324xf32>
    %c0_4 = arith.constant 0 : index
    %c0_5 = arith.constant 0 : index
    %4 = vector.load %arg6[%c0_4, %c0_5] : memref<288x324xf32, #tpu.memory_space<vmem>>, vector<32x324xf32>
    tpu.vector_store %arg6[%c0_4, %c0_5], %3 {strides = array<i32>} : memref<288x324xf32, #tpu.memory_space<vmem>>, vector<32x324xf32>,
    %c0_6 = arith.constant 0 : index
    %c0_7 = arith.constant 0 : index
    %c1 = arith.constant 1 : index
    %5 = vector.load %arg1[%c0_6, %c0_7, %c1] : memref<1x32x362xbf16, #tpu.memory_space<vmem>>, vector<1x32x324xbf16>
    %6 = vector.shape_cast %5 : vector<1x32x324xbf16> to vector<32x324xbf16>
    %7 = arith.extf %6 : vector<32x324xbf16> to vector<32x324xf32>
    %c32 = arith.constant 32 : index
    %c0_8 = arith.constant 0 : index
    %8 = vector.load %arg6[%c32, %c0_8] : memref<288x324xf32, #tpu.memory_space<vmem>>, vector<32x324xf32>
    tpu.vector_store %arg6[%c32, %c0_8], %7 {strides = array<i32>} : memref<288x324xf32, #tpu.memory_space<vmem>>, vector<32x324xf32>,
    %c0_9 = arith.constant 0 : index
    %c0_10 = arith.constant 0 : index
    %c2 = arith.constant 2 : index
    %9 = vector.load %arg1[%c0_9, %c0_10, %c2] : memref<1x32x362xbf16, #tpu.memory_space<vmem>>, vector<1x32x324xbf16>
    %10 = vector.shape_cast %9 : vector<1x32x324xbf16> to vector<32x324xbf16>
    %11 = arith.extf %10 : vector<32x324xbf16> to vector<32x324xf32>
    %c64 = arith.constant 64 : index
    %c0_11 = arith.constant 0 : index
    %12 = vector.load %arg6[%c64, %c0_11] : memref<288x324xf32, #tpu.memory_space<vmem>>, vector<32x324xf32>
    tpu.vector_store %arg6[%c64, %c0_11], %11 {strides = array<i32>} : memref<288x324xf32, #tpu.memory_space<vmem>>, vector<32x324xf32>,
    %c0_12 = arith.constant 0 : index
    %c0_13 = arith.constant 0 : index
    %c18 = arith.constant 18 : index
    %13 = vector.load %arg1[%c0_12, %c0_13, %c18] : memref<1x32x362xbf16, #tpu.memory_space<vmem>>, vector<1x32x324xbf16>
    %14 = vector.shape_cast %13 : vector<1x32x324xbf16> to vector<32x324xbf16>
    %15 = arith.extf %14 : vector<32x324xbf16> to vector<32x324xf32>
    %c96 = arith.constant 96 : index
    %c0_14 = arith.constant 0 : index
    %16 = vector.load %arg6[%c96, %c0_14] : memref<288x324xf32, #tpu.memory_space<vmem>>, vector<32x324xf32>
    tpu.vector_store %arg6[%c96, %c0_14], %15 {strides = array<i32>} : memref<288x324xf32, #tpu.memory_space<vmem>>, vector<32x324xf32>,
    %c0_15 = arith.constant 0 : index
    %c0_16 = arith.constant 0 : index
    %c19 = arith.constant 19 : index
    %17 = vector.load %arg1[%c0_15, %c0_16, %c19] : memref<1x32x362xbf16, #tpu.memory_space<vmem>>, vector<1x32x324xbf16>
    %18 = vector.shape_cast %17 : vector<1x32x324xbf16> to vector<32x324xbf16>
    %19 = arith.extf %18 : vector<32x324xbf16> to vector<32x324xf32>
    %c128 = arith.constant 128 : index
    %c0_17 = arith.constant 0 : index
    %20 = vector.load %arg6[%c128, %c0_17] : memref<288x324xf32, #tpu.memory_space<vmem>>, vector<32x324xf32>
    tpu.vector_store %arg6[%c128, %c0_17], %19 {strides = array<i32>} : memref<288x324xf32, #tpu.memory_space<vmem>>, vector<32x324xf32>,
    %c0_18 = arith.constant 0 : index
    %c0_19 = arith.constant 0 : index
    %c20 = arith.constant 20 : index
    %21 = vector.load %arg1[%c0_18, %c0_19, %c20] : memref<1x32x362xbf16, #tpu.memory_space<vmem>>, vector<1x32x324xbf16>
    %22 = vector.shape_cast %21 : vector<1x32x324xbf16> to vector<32x324xbf16>
    %23 = arith.extf %22 : vector<32x324xbf16> to vector<32x324xf32>
    %c160 = arith.constant 160 : index
    %c0_20 = arith.constant 0 : index
    %24 = vector.load %arg6[%c160, %c0_20] : memref<288x324xf32, #tpu.memory_space<vmem>>, vector<32x324xf32>
    tpu.vector_store %arg6[%c160, %c0_20], %23 {strides = array<i32>} : memref<288x324xf32, #tpu.memory_space<vmem>>, vector<32x324xf32>,
    %c0_21 = arith.constant 0 : index
    %c0_22 = arith.constant 0 : index
    %c36 = arith.constant 36 : index
    %25 = vector.load %arg1[%c0_21, %c0_22, %c36] : memref<1x32x362xbf16, #tpu.memory_space<vmem>>, vector<1x32x324xbf16>
    %26 = vector.shape_cast %25 : vector<1x32x324xbf16> to vector<32x324xbf16>
    %27 = arith.extf %26 : vector<32x324xbf16> to vector<32x324xf32>
    %c192 = arith.constant 192 : index
    %c0_23 = arith.constant 0 : index
    %28 = vector.load %arg6[%c192, %c0_23] : memref<288x324xf32, #tpu.memory_space<vmem>>, vector<32x324xf32>
    tpu.vector_store %arg6[%c192, %c0_23], %27 {strides = array<i32>} : memref<288x324xf32, #tpu.memory_space<vmem>>, vector<32x324xf32>,
    %c0_24 = arith.constant 0 : index
    %c0_25 = arith.constant 0 : index
    %c37 = arith.constant 37 : index
    %29 = vector.load %arg1[%c0_24, %c0_25, %c37] : memref<1x32x362xbf16, #tpu.memory_space<vmem>>, vector<1x32x324xbf16>
    %30 = vector.shape_cast %29 : vector<1x32x324xbf16> to vector<32x324xbf16>
    %31 = arith.extf %30 : vector<32x324xbf16> to vector<32x324xf32>
    %c224 = arith.constant 224 : index
    %c0_26 = arith.constant 0 : index
    %32 = vector.load %arg6[%c224, %c0_26] : memref<288x324xf32, #tpu.memory_space<vmem>>, vector<32x324xf32>
    tpu.vector_store %arg6[%c224, %c0_26], %31 {strides = array<i32>} : memref<288x324xf32, #tpu.memory_space<vmem>>, vector<32x324xf32>,
    %c0_27 = arith.constant 0 : index
    %c0_28 = arith.constant 0 : index
    %c38 = arith.constant 38 : index
    %33 = vector.load %arg1[%c0_27, %c0_28, %c38] : memref<1x32x362xbf16, #tpu.memory_space<vmem>>, vector<1x32x324xbf16>
    %34 = vector.shape_cast %33 : vector<1x32x324xbf16> to vector<32x324xbf16>
    %35 = arith.extf %34 : vector<32x324xbf16> to vector<32x324xf32>
    %c256 = arith.constant 256 : index
    %c0_29 = arith.constant 0 : index
    %36 = vector.load %arg6[%c256, %c0_29] : memref<288x324xf32, #tpu.memory_space<vmem>>, vector<32x324xf32>
    tpu.vector_store %arg6[%c256, %c0_29], %35 {strides = array<i32>} : memref<288x324xf32, #tpu.memory_space<vmem>>, vector<32x324xf32>,
    %c0_30 = arith.constant 0 : index
    %c0_31 = arith.constant 0 : index
    %37 = vector.load %arg2[%c0_30, %c0_31] : memref<16x288xbf16, #tpu.memory_space<vmem>>, vector<16x288xbf16>
    %c0_32 = arith.constant 0 : index
    %c0_33 = arith.constant 0 : index
    %38 = vector.load %arg6[%c0_32, %c0_33] : memref<288x324xf32, #tpu.memory_space<vmem>>, vector<288x324xf32>
    %39 = arith.truncf %38 : vector<288x324xf32> to vector<288x324xbf16>
    %cst = arith.constant dense<0.000000e+00> : vector<16x324xf32>
    %40 = tpu.matmul %37, %39, %cst {dimension_numbers = #tpu.dot_dimension_numbers<[1], [0], [0], [1], [0, 0, 1, 1], [], []>} : vector<16x288xbf16>, vector<288x324xbf16>, vector<16x324xf32> -> vector<16x324xf32>
    %41 = vector.broadcast %0 : vector<1x324xf32> to vector<16x324xf32>
    %42 = arith.mulf %40, %41 : vector<16x324xf32>
    %cst_34 = arith.constant dense<0.000000e+00> : vector<16xf32>
    %43 = vector.multi_reduction <add>, %42, %cst_34 [1] : vector<16x324xf32> to vector<16xf32>
    %44 = vector.shape_cast %43 : vector<16xf32> to vector<16x1xf32>
    %cst_35 = arith.constant 3.906250e-03 : f32
    %45 = vector.broadcast %cst_35 : f32 to vector<16x1xf32>
    %46 = arith.mulf %44, %45 : vector<16x1xf32>
    %47 = vector.broadcast %46 : vector<16x1xf32> to vector<16x324xf32>
    %48 = arith.subf %40, %47 : vector<16x324xf32>
    %49 = vector.broadcast %0 : vector<1x324xf32> to vector<16x324xf32>
    %50 = arith.mulf %48, %49 : vector<16x324xf32>
    %51 = arith.mulf %50, %50 : vector<16x324xf32>
    %cst_36 = arith.constant dense<0.000000e+00> : vector<16xf32>
    %52 = vector.multi_reduction <add>, %51, %cst_36 [1] : vector<16x324xf32> to vector<16xf32>
    %53 = vector.shape_cast %52 : vector<16xf32> to vector<16x1xf32>
    %cst_37 = arith.constant 3.906250e-03 : f32
    %54 = vector.broadcast %cst_37 : f32 to vector<16x1xf32>
    %55 = arith.mulf %53, %54 : vector<16x1xf32>
    %cst_38 = arith.constant 9.99999974E-6 : f32
    %56 = vector.broadcast %cst_38 : f32 to vector<16x1xf32>
    %57 = arith.addf %55, %56 : vector<16x1xf32>
    %58 = math.rsqrt %57 : vector<16x1xf32>
    %59 = vector.broadcast %58 : vector<16x1xf32> to vector<16x324xf32>
    %60 = arith.mulf %50, %59 : vector<16x324xf32>
    %cst_39 = arith.constant 0.000000e+00 : f32
    %61 = vector.broadcast %cst_39 : f32 to vector<16x324xf32>
    %62 = arith.maximumf %60, %61 : vector<16x324xf32>
    %cst_40 = arith.constant 0.000000e+00 : f32
    %63 = vector.broadcast %cst_40 : f32 to vector<16x19xf32>
    %c0_41 = arith.constant 0 : index
    %c0_42 = arith.constant 0 : index
    %64 = vector.load %arg7[%c0_41, %c0_42] : memref<16x362xf32, #tpu.memory_space<vmem>>, vector<16x19xf32>
    tpu.vector_store %arg7[%c0_41, %c0_42], %63 {strides = array<i32>} : memref<16x362xf32, #tpu.memory_space<vmem>>, vector<16x19xf32>,
    %c0_43 = arith.constant 0 : index
    %c19_44 = arith.constant 19 : index
    %65 = vector.load %arg7[%c0_43, %c19_44] : memref<16x362xf32, #tpu.memory_space<vmem>>, vector<16x324xf32>
    tpu.vector_store %arg7[%c0_43, %c19_44], %62 {strides = array<i32>} : memref<16x362xf32, #tpu.memory_space<vmem>>, vector<16x324xf32>,
    %cst_45 = arith.constant 0.000000e+00 : f32
    %66 = vector.broadcast %cst_45 : f32 to vector<16x19xf32>
    %c0_46 = arith.constant 0 : index
    %c343 = arith.constant 343 : index
    %67 = vector.load %arg7[%c0_46, %c343] : memref<16x362xf32, #tpu.memory_space<vmem>>, vector<16x19xf32>
    tpu.vector_store %arg7[%c0_46, %c343], %66 {strides = array<i32>} : memref<16x362xf32, #tpu.memory_space<vmem>>, vector<16x19xf32>,
    %c0_47 = arith.constant 0 : index
    %c0_48 = arith.constant 0 : index
    %68 = vector.load %arg7[%c0_47, %c0_48] : memref<16x362xf32, #tpu.memory_space<vmem>>, vector<16x324xf32>
    %c0_49 = arith.constant 0 : index
    %c0_50 = arith.constant 0 : index
    %69 = vector.load %arg8[%c0_49, %c0_50] : memref<144x324xf32, #tpu.memory_space<vmem>>, vector<16x324xf32>
    tpu.vector_store %arg8[%c0_49, %c0_50], %68 {strides = array<i32>} : memref<144x324xf32, #tpu.memory_space<vmem>>, vector<16x324xf32>,
    %c0_51 = arith.constant 0 : index
    %c1_52 = arith.constant 1 : index
    %70 = vector.load %arg7[%c0_51, %c1_52] : memref<16x362xf32, #tpu.memory_space<vmem>>, vector<16x324xf32>
    %c16 = arith.constant 16 : index
    %c0_53 = arith.constant 0 : index
    %71 = vector.load %arg8[%c16, %c0_53] : memref<144x324xf32, #tpu.memory_space<vmem>>, vector<16x324xf32>
    tpu.vector_store %arg8[%c16, %c0_53], %70 {strides = array<i32>} : memref<144x324xf32, #tpu.memory_space<vmem>>, vector<16x324xf32>,
    %c0_54 = arith.constant 0 : index
    %c2_55 = arith.constant 2 : index
    %72 = vector.load %arg7[%c0_54, %c2_55] : memref<16x362xf32, #tpu.memory_space<vmem>>, vector<16x324xf32>
    %c32_56 = arith.constant 32 : index
    %c0_57 = arith.constant 0 : index
    %73 = vector.load %arg8[%c32_56, %c0_57] : memref<144x324xf32, #tpu.memory_space<vmem>>, vector<16x324xf32>
    tpu.vector_store %arg8[%c32_56, %c0_57], %72 {strides = array<i32>} : memref<144x324xf32, #tpu.memory_space<vmem>>, vector<16x324xf32>,
    %c0_58 = arith.constant 0 : index
    %c18_59 = arith.constant 18 : index
    %74 = vector.load %arg7[%c0_58, %c18_59] : memref<16x362xf32, #tpu.memory_space<vmem>>, vector<16x324xf32>
    %c48 = arith.constant 48 : index
    %c0_60 = arith.constant 0 : index
    %75 = vector.load %arg8[%c48, %c0_60] : memref<144x324xf32, #tpu.memory_space<vmem>>, vector<16x324xf32>
    tpu.vector_store %arg8[%c48, %c0_60], %74 {strides = array<i32>} : memref<144x324xf32, #tpu.memory_space<vmem>>, vector<16x324xf32>,
    %c0_61 = arith.constant 0 : index
    %c19_62 = arith.constant 19 : index
    %76 = vector.load %arg7[%c0_61, %c19_62] : memref<16x362xf32, #tpu.memory_space<vmem>>, vector<16x324xf32>
    %c64_63 = arith.constant 64 : index
    %c0_64 = arith.constant 0 : index
    %77 = vector.load %arg8[%c64_63, %c0_64] : memref<144x324xf32, #tpu.memory_space<vmem>>, vector<16x324xf32>
    tpu.vector_store %arg8[%c64_63, %c0_64], %76 {strides = array<i32>} : memref<144x324xf32, #tpu.memory_space<vmem>>, vector<16x324xf32>,
    %c0_65 = arith.constant 0 : index
    %c20_66 = arith.constant 20 : index
    %78 = vector.load %arg7[%c0_65, %c20_66] : memref<16x362xf32, #tpu.memory_space<vmem>>, vector<16x324xf32>
    %c80 = arith.constant 80 : index
    %c0_67 = arith.constant 0 : index
    %79 = vector.load %arg8[%c80, %c0_67] : memref<144x324xf32, #tpu.memory_space<vmem>>, vector<16x324xf32>
    tpu.vector_store %arg8[%c80, %c0_67], %78 {strides = array<i32>} : memref<144x324xf32, #tpu.memory_space<vmem>>, vector<16x324xf32>,
    %c0_68 = arith.constant 0 : index
    %c36_69 = arith.constant 36 : index
    %80 = vector.load %arg7[%c0_68, %c36_69] : memref<16x362xf32, #tpu.memory_space<vmem>>, vector<16x324xf32>
    %c96_70 = arith.constant 96 : index
    %c0_71 = arith.constant 0 : index
    %81 = vector.load %arg8[%c96_70, %c0_71] : memref<144x324xf32, #tpu.memory_space<vmem>>, vector<16x324xf32>
    tpu.vector_store %arg8[%c96_70, %c0_71], %80 {strides = array<i32>} : memref<144x324xf32, #tpu.memory_space<vmem>>, vector<16x324xf32>,
    %c0_72 = arith.constant 0 : index
    %c37_73 = arith.constant 37 : index
    %82 = vector.load %arg7[%c0_72, %c37_73] : memref<16x362xf32, #tpu.memory_space<vmem>>, vector<16x324xf32>
    %c112 = arith.constant 112 : index
    %c0_74 = arith.constant 0 : index
    %83 = vector.load %arg8[%c112, %c0_74] : memref<144x324xf32, #tpu.memory_space<vmem>>, vector<16x324xf32>
    tpu.vector_store %arg8[%c112, %c0_74], %82 {strides = array<i32>} : memref<144x324xf32, #tpu.memory_space<vmem>>, vector<16x324xf32>,
    %c0_75 = arith.constant 0 : index
    %c38_76 = arith.constant 38 : index
    %84 = vector.load %arg7[%c0_75, %c38_76] : memref<16x362xf32, #tpu.memory_space<vmem>>, vector<16x324xf32>
    %c128_77 = arith.constant 128 : index
    %c0_78 = arith.constant 0 : index
    %85 = vector.load %arg8[%c128_77, %c0_78] : memref<144x324xf32, #tpu.memory_space<vmem>>, vector<16x324xf32>
    tpu.vector_store %arg8[%c128_77, %c0_78], %84 {strides = array<i32>} : memref<144x324xf32, #tpu.memory_space<vmem>>, vector<16x324xf32>,
    %c0_79 = arith.constant 0 : index
    %c0_80 = arith.constant 0 : index
    %86 = vector.load %arg3[%c0_79, %c0_80] : memref<16x144xbf16, #tpu.memory_space<vmem>>, vector<16x144xbf16>
    %c0_81 = arith.constant 0 : index
    %c0_82 = arith.constant 0 : index
    %87 = vector.load %arg8[%c0_81, %c0_82] : memref<144x324xf32, #tpu.memory_space<vmem>>, vector<144x324xf32>
    %88 = arith.truncf %87 : vector<144x324xf32> to vector<144x324xbf16>
    %cst_83 = arith.constant dense<0.000000e+00> : vector<16x324xf32>
    %89 = tpu.matmul %86, %88, %cst_83 {dimension_numbers = #tpu.dot_dimension_numbers<[1], [0], [0], [1], [0, 0, 1, 1], [], []>} : vector<16x144xbf16>, vector<144x324xbf16>, vector<16x324xf32> -> vector<16x324xf32>
    %90 = vector.broadcast %0 : vector<1x324xf32> to vector<16x324xf32>
    %91 = arith.mulf %89, %90 : vector<16x324xf32>
    %cst_84 = arith.constant dense<0.000000e+00> : vector<16xf32>
    %92 = vector.multi_reduction <add>, %91, %cst_84 [1] : vector<16x324xf32> to vector<16xf32>
    %93 = vector.shape_cast %92 : vector<16xf32> to vector<16x1xf32>
    %cst_85 = arith.constant 3.906250e-03 : f32
    %94 = vector.broadcast %cst_85 : f32 to vector<16x1xf32>
    %95 = arith.mulf %93, %94 : vector<16x1xf32>
    %96 = vector.broadcast %95 : vector<16x1xf32> to vector<16x324xf32>
    %97 = arith.subf %89, %96 : vector<16x324xf32>
    %98 = vector.broadcast %0 : vector<1x324xf32> to vector<16x324xf32>
    %99 = arith.mulf %97, %98 : vector<16x324xf32>
    %100 = arith.mulf %99, %99 : vector<16x324xf32>
    %cst_86 = arith.constant dense<0.000000e+00> : vector<16xf32>
    %101 = vector.multi_reduction <add>, %100, %cst_86 [1] : vector<16x324xf32> to vector<16xf32>
    %102 = vector.shape_cast %101 : vector<16xf32> to vector<16x1xf32>
    %cst_87 = arith.constant 3.906250e-03 : f32
    %103 = vector.broadcast %cst_87 : f32 to vector<16x1xf32>
    %104 = arith.mulf %102, %103 : vector<16x1xf32>
    %cst_88 = arith.constant 9.99999974E-6 : f32
    %105 = vector.broadcast %cst_88 : f32 to vector<16x1xf32>
    %106 = arith.addf %104, %105 : vector<16x1xf32>
    %107 = math.rsqrt %106 : vector<16x1xf32>
    %108 = vector.broadcast %107 : vector<16x1xf32> to vector<16x324xf32>
    %109 = arith.mulf %99, %108 : vector<16x324xf32>
    %cst_89 = arith.constant 0.000000e+00 : f32
    %110 = vector.broadcast %cst_89 : f32 to vector<16x324xf32>
    %111 = arith.maximumf %109, %110 : vector<16x324xf32>
    %cst_90 = arith.constant 0.000000e+00 : bf16
    %112 = vector.broadcast %cst_90 : bf16 to vector<16x19xbf16>
    %c0_91 = arith.constant 0 : index
    %c0_92 = arith.constant 0 : index
    %c0_93 = arith.constant 0 : index
    %113 = vector.load %arg5[%c0_91, %c0_92, %c0_93] : memref<1x16x362xbf16, #tpu.memory_space<vmem>>, vector<1x16x19xbf16>
    %114 = vector.shape_cast %113 : vector<1x16x19xbf16> to vector<16x19xbf16>
    %115 = vector.shape_cast %112 : vector<16x19xbf16> to vector<1x16x19xbf16>
    tpu.vector_store %arg5[%c0_91, %c0_92, %c0_93], %115 {strides = array<i32>} : memref<1x16x362xbf16, #tpu.memory_space<vmem>>, vector<1x16x19xbf16>,
    %116 = arith.truncf %111 : vector<16x324xf32> to vector<16x324xbf16>
    %c0_94 = arith.constant 0 : index
    %c0_95 = arith.constant 0 : index
    %c19_96 = arith.constant 19 : index
    %117 = vector.load %arg5[%c0_94, %c0_95, %c19_96] : memref<1x16x362xbf16, #tpu.memory_space<vmem>>, vector<1x16x324xbf16>
    %118 = vector.shape_cast %117 : vector<1x16x324xbf16> to vector<16x324xbf16>
    %119 = vector.shape_cast %116 : vector<16x324xbf16> to vector<1x16x324xbf16>
    tpu.vector_store %arg5[%c0_94, %c0_95, %c19_96], %119 {strides = array<i32>} : memref<1x16x362xbf16, #tpu.memory_space<vmem>>, vector<1x16x324xbf16>,
    %cst_97 = arith.constant 0.000000e+00 : bf16
    %120 = vector.broadcast %cst_97 : bf16 to vector<16x19xbf16>
    %c0_98 = arith.constant 0 : index
    %c0_99 = arith.constant 0 : index
    %c343_100 = arith.constant 343 : index
    %121 = vector.load %arg5[%c0_98, %c0_99, %c343_100] : memref<1x16x362xbf16, #tpu.memory_space<vmem>>, vector<1x16x19xbf16>
    %122 = vector.shape_cast %121 : vector<1x16x19xbf16> to vector<16x19xbf16>
    %123 = vector.shape_cast %120 : vector<16x19xbf16> to vector<1x16x19xbf16>
    tpu.vector_store %arg5[%c0_98, %c0_99, %c343_100], %123 {strides = array<i32>} : memref<1x16x362xbf16, #tpu.memory_space<vmem>>, vector<1x16x19xbf16>,
    return
  }
  func.func @transform_0(%arg0: i32) -> (i32, i32, i32) {
    %c0_i32 = arith.constant 0 : i32
    %c0_i32_0 = arith.constant 0 : i32
    %c0_i32_1 = arith.constant 0 : i32
    return %arg0, %c0_i32, %c0_i32_0 : i32, i32, i32
  }
  func.func @transform_1(%arg0: i32) -> (i32, i32) {
    %c0_i32 = arith.constant 0 : i32
    %c0_i32_0 = arith.constant 0 : i32
    %c0_i32_1 = arith.constant 0 : i32
    return %c0_i32, %c0_i32_0 : i32, i32
  }
  func.func @transform_2(%arg0: i32) -> (i32, i32) {
    %c0_i32 = arith.constant 0 : i32
    %c0_i32_0 = arith.constant 0 : i32
    %c0_i32_1 = arith.constant 0 : i32
    return %c0_i32, %c0_i32_0 : i32, i32
  }
  func.func @transform_3(%arg0: i32) -> (i32, i32) {
    %c0_i32 = arith.constant 0 : i32
    %c0_i32_0 = arith.constant 0 : i32
    %c0_i32_1 = arith.constant 0 : i32
    return %c0_i32, %c0_i32_0 : i32, i32
  }
  func.func @transform_4(%arg0: i32) -> (i32, i32, i32) {
    %c0_i32 = arith.constant 0 : i32
    %c0_i32_0 = arith.constant 0 : i32
    %c0_i32_1 = arith.constant 0 : i32
    return %arg0, %c0_i32, %c0_i32_0 : i32, i32, i32
  }
}

module attributes {stable_mosaic.version = 11 : i64} {
  func.func @kernel(%arg0: i32, %arg1: memref<1x16x362xbf16, #tpu.memory_space<vmem>>, %arg2: memref<324x1156xbf16, #tpu.memory_space<vmem>>, %arg3: memref<1x16x1226xbf16, #tpu.memory_space<vmem>>) attributes {dimension_semantics = [#tpu.dimension_semantics<parallel>], iteration_bounds = array<i64: 2>, scalar_prefetch = 0 : i64, scratch_operands = 0 : i64, tpu.core_type = #tpu.core_type<tc>, window_params = [{transform_indices = @transform_0, window_bounds = array<i64: 1, 16, 362>}, {pipeline_mode = #tpu.pipeline_mode<synchronous>, transform_indices = @transform_1, window_bounds = array<i64: 324, 1156>}, {transform_indices = @transform_2, window_bounds = array<i64: 1, 16, 1226>}]} {
    %c0 = arith.constant 0 : index
    %c0_0 = arith.constant 0 : index
    %c19 = arith.constant 19 : index
    %0 = vector.load %arg1[%c0, %c0_0, %c19] : memref<1x16x362xbf16, #tpu.memory_space<vmem>>, vector<1x16x324xbf16>
    %1 = vector.shape_cast %0 : vector<1x16x324xbf16> to vector<16x324xbf16>
    %c0_1 = arith.constant 0 : index
    %c0_2 = arith.constant 0 : index
    %2 = vector.load %arg2[%c0_1, %c0_2] : memref<324x1156xbf16, #tpu.memory_space<vmem>>, vector<324x1156xbf16>
    %cst = arith.constant dense<0.000000e+00> : vector<16x1156xf32>
    %3 = tpu.matmul %1, %2, %cst {dimension_numbers = #tpu.dot_dimension_numbers<[1], [0], [0], [1], [0, 0, 1, 1], [], []>} : vector<16x324xbf16>, vector<324x1156xbf16>, vector<16x1156xf32> -> vector<16x1156xf32>
    %cst_3 = arith.constant 0.000000e+00 : bf16
    %4 = vector.broadcast %cst_3 : bf16 to vector<16x35xbf16>
    %c0_4 = arith.constant 0 : index
    %c0_5 = arith.constant 0 : index
    %c0_6 = arith.constant 0 : index
    %5 = vector.load %arg3[%c0_4, %c0_5, %c0_6] : memref<1x16x1226xbf16, #tpu.memory_space<vmem>>, vector<1x16x35xbf16>
    %6 = vector.shape_cast %5 : vector<1x16x35xbf16> to vector<16x35xbf16>
    %7 = vector.shape_cast %4 : vector<16x35xbf16> to vector<1x16x35xbf16>
    tpu.vector_store %arg3[%c0_4, %c0_5, %c0_6], %7 {strides = array<i32>} : memref<1x16x1226xbf16, #tpu.memory_space<vmem>>, vector<1x16x35xbf16>,
    %8 = arith.truncf %3 : vector<16x1156xf32> to vector<16x1156xbf16>
    %c0_7 = arith.constant 0 : index
    %c0_8 = arith.constant 0 : index
    %c35 = arith.constant 35 : index
    %9 = vector.load %arg3[%c0_7, %c0_8, %c35] : memref<1x16x1226xbf16, #tpu.memory_space<vmem>>, vector<1x16x1156xbf16>
    %10 = vector.shape_cast %9 : vector<1x16x1156xbf16> to vector<16x1156xbf16>
    %11 = vector.shape_cast %8 : vector<16x1156xbf16> to vector<1x16x1156xbf16>
    tpu.vector_store %arg3[%c0_7, %c0_8, %c35], %11 {strides = array<i32>} : memref<1x16x1226xbf16, #tpu.memory_space<vmem>>, vector<1x16x1156xbf16>,
    %cst_9 = arith.constant 0.000000e+00 : bf16
    %12 = vector.broadcast %cst_9 : bf16 to vector<16x35xbf16>
    %c0_10 = arith.constant 0 : index
    %c0_11 = arith.constant 0 : index
    %c1191 = arith.constant 1191 : index
    %13 = vector.load %arg3[%c0_10, %c0_11, %c1191] : memref<1x16x1226xbf16, #tpu.memory_space<vmem>>, vector<1x16x35xbf16>
    %14 = vector.shape_cast %13 : vector<1x16x35xbf16> to vector<16x35xbf16>
    %15 = vector.shape_cast %12 : vector<16x35xbf16> to vector<1x16x35xbf16>
    tpu.vector_store %arg3[%c0_10, %c0_11, %c1191], %15 {strides = array<i32>} : memref<1x16x1226xbf16, #tpu.memory_space<vmem>>, vector<1x16x35xbf16>,
    return
  }
  func.func @transform_0(%arg0: i32) -> (i32, i32, i32) {
    %c0_i32 = arith.constant 0 : i32
    %c0_i32_0 = arith.constant 0 : i32
    %c0_i32_1 = arith.constant 0 : i32
    return %arg0, %c0_i32, %c0_i32_0 : i32, i32, i32
  }
  func.func @transform_1(%arg0: i32) -> (i32, i32) {
    %c0_i32 = arith.constant 0 : i32
    %c0_i32_0 = arith.constant 0 : i32
    %c0_i32_1 = arith.constant 0 : i32
    return %c0_i32, %c0_i32_0 : i32, i32
  }
  func.func @transform_2(%arg0: i32) -> (i32, i32, i32) {
    %c0_i32 = arith.constant 0 : i32
    %c0_i32_0 = arith.constant 0 : i32
    %c0_i32_1 = arith.constant 0 : i32
    return %arg0, %c0_i32, %c0_i32_0 : i32, i32, i32
  }
}

module attributes {stable_mosaic.version = 11 : i64} {
  func.func @kernel(%arg0: i32, %arg1: memref<1x16x1226xbf16, #tpu.memory_space<vmem>>, %arg2: memref<8x144xbf16, #tpu.memory_space<vmem>>, %arg3: memref<8x72xbf16, #tpu.memory_space<vmem>>, %arg4: memref<1x1156xf32, #tpu.memory_space<vmem>>, %arg5: memref<1x8x1226xbf16, #tpu.memory_space<vmem>>, %arg6: memref<144x1156xf32, #tpu.memory_space<vmem>>, %arg7: memref<8x1226xf32, #tpu.memory_space<vmem>>, %arg8: memref<72x1156xf32, #tpu.memory_space<vmem>>) attributes {dimension_semantics = [#tpu.dimension_semantics<parallel>], iteration_bounds = array<i64: 2>, scalar_prefetch = 0 : i64, scratch_operands = 3 : i64, tpu.core_type = #tpu.core_type<tc>, window_params = [{transform_indices = @transform_0, window_bounds = array<i64: 1, 16, 1226>}, {pipeline_mode = #tpu.pipeline_mode<synchronous>, transform_indices = @transform_1, window_bounds = array<i64: 8, 144>}, {pipeline_mode = #tpu.pipeline_mode<synchronous>, transform_indices = @transform_2, window_bounds = array<i64: 8, 72>}, {pipeline_mode = #tpu.pipeline_mode<synchronous>, transform_indices = @transform_3, window_bounds = array<i64: 1, 1156>}, {transform_indices = @transform_4, window_bounds = array<i64: 1, 8, 1226>}]} {
    %c0 = arith.constant 0 : index
    %c0_0 = arith.constant 0 : index
    %0 = vector.load %arg4[%c0, %c0_0] : memref<1x1156xf32, #tpu.memory_space<vmem>>, vector<1x1156xf32>
    %c0_1 = arith.constant 0 : index
    %c0_2 = arith.constant 0 : index
    %c0_3 = arith.constant 0 : index
    %1 = vector.load %arg1[%c0_1, %c0_2, %c0_3] : memref<1x16x1226xbf16, #tpu.memory_space<vmem>>, vector<1x16x1156xbf16>
    %2 = vector.shape_cast %1 : vector<1x16x1156xbf16> to vector<16x1156xbf16>
    %3 = arith.extf %2 : vector<16x1156xbf16> to vector<16x1156xf32>
    %c0_4 = arith.constant 0 : index
    %c0_5 = arith.constant 0 : index
    %4 = vector.load %arg6[%c0_4, %c0_5] : memref<144x1156xf32, #tpu.memory_space<vmem>>, vector<16x1156xf32>
    tpu.vector_store %arg6[%c0_4, %c0_5], %3 {strides = array<i32>} : memref<144x1156xf32, #tpu.memory_space<vmem>>, vector<16x1156xf32>,
    %c0_6 = arith.constant 0 : index
    %c0_7 = arith.constant 0 : index
    %c1 = arith.constant 1 : index
    %5 = vector.load %arg1[%c0_6, %c0_7, %c1] : memref<1x16x1226xbf16, #tpu.memory_space<vmem>>, vector<1x16x1156xbf16>
    %6 = vector.shape_cast %5 : vector<1x16x1156xbf16> to vector<16x1156xbf16>
    %7 = arith.extf %6 : vector<16x1156xbf16> to vector<16x1156xf32>
    %c16 = arith.constant 16 : index
    %c0_8 = arith.constant 0 : index
    %8 = vector.load %arg6[%c16, %c0_8] : memref<144x1156xf32, #tpu.memory_space<vmem>>, vector<16x1156xf32>
    tpu.vector_store %arg6[%c16, %c0_8], %7 {strides = array<i32>} : memref<144x1156xf32, #tpu.memory_space<vmem>>, vector<16x1156xf32>,
    %c0_9 = arith.constant 0 : index
    %c0_10 = arith.constant 0 : index
    %c2 = arith.constant 2 : index
    %9 = vector.load %arg1[%c0_9, %c0_10, %c2] : memref<1x16x1226xbf16, #tpu.memory_space<vmem>>, vector<1x16x1156xbf16>
    %10 = vector.shape_cast %9 : vector<1x16x1156xbf16> to vector<16x1156xbf16>
    %11 = arith.extf %10 : vector<16x1156xbf16> to vector<16x1156xf32>
    %c32 = arith.constant 32 : index
    %c0_11 = arith.constant 0 : index
    %12 = vector.load %arg6[%c32, %c0_11] : memref<144x1156xf32, #tpu.memory_space<vmem>>, vector<16x1156xf32>
    tpu.vector_store %arg6[%c32, %c0_11], %11 {strides = array<i32>} : memref<144x1156xf32, #tpu.memory_space<vmem>>, vector<16x1156xf32>,
    %c0_12 = arith.constant 0 : index
    %c0_13 = arith.constant 0 : index
    %c34 = arith.constant 34 : index
    %13 = vector.load %arg1[%c0_12, %c0_13, %c34] : memref<1x16x1226xbf16, #tpu.memory_space<vmem>>, vector<1x16x1156xbf16>
    %14 = vector.shape_cast %13 : vector<1x16x1156xbf16> to vector<16x1156xbf16>
    %15 = arith.extf %14 : vector<16x1156xbf16> to vector<16x1156xf32>
    %c48 = arith.constant 48 : index
    %c0_14 = arith.constant 0 : index
    %16 = vector.load %arg6[%c48, %c0_14] : memref<144x1156xf32, #tpu.memory_space<vmem>>, vector<16x1156xf32>
    tpu.vector_store %arg6[%c48, %c0_14], %15 {strides = array<i32>} : memref<144x1156xf32, #tpu.memory_space<vmem>>, vector<16x1156xf32>,
    %c0_15 = arith.constant 0 : index
    %c0_16 = arith.constant 0 : index
    %c35 = arith.constant 35 : index
    %17 = vector.load %arg1[%c0_15, %c0_16, %c35] : memref<1x16x1226xbf16, #tpu.memory_space<vmem>>, vector<1x16x1156xbf16>
    %18 = vector.shape_cast %17 : vector<1x16x1156xbf16> to vector<16x1156xbf16>
    %19 = arith.extf %18 : vector<16x1156xbf16> to vector<16x1156xf32>
    %c64 = arith.constant 64 : index
    %c0_17 = arith.constant 0 : index
    %20 = vector.load %arg6[%c64, %c0_17] : memref<144x1156xf32, #tpu.memory_space<vmem>>, vector<16x1156xf32>
    tpu.vector_store %arg6[%c64, %c0_17], %19 {strides = array<i32>} : memref<144x1156xf32, #tpu.memory_space<vmem>>, vector<16x1156xf32>,
    %c0_18 = arith.constant 0 : index
    %c0_19 = arith.constant 0 : index
    %c36 = arith.constant 36 : index
    %21 = vector.load %arg1[%c0_18, %c0_19, %c36] : memref<1x16x1226xbf16, #tpu.memory_space<vmem>>, vector<1x16x1156xbf16>
    %22 = vector.shape_cast %21 : vector<1x16x1156xbf16> to vector<16x1156xbf16>
    %23 = arith.extf %22 : vector<16x1156xbf16> to vector<16x1156xf32>
    %c80 = arith.constant 80 : index
    %c0_20 = arith.constant 0 : index
    %24 = vector.load %arg6[%c80, %c0_20] : memref<144x1156xf32, #tpu.memory_space<vmem>>, vector<16x1156xf32>
    tpu.vector_store %arg6[%c80, %c0_20], %23 {strides = array<i32>} : memref<144x1156xf32, #tpu.memory_space<vmem>>, vector<16x1156xf32>,
    %c0_21 = arith.constant 0 : index
    %c0_22 = arith.constant 0 : index
    %c68 = arith.constant 68 : index
    %25 = vector.load %arg1[%c0_21, %c0_22, %c68] : memref<1x16x1226xbf16, #tpu.memory_space<vmem>>, vector<1x16x1156xbf16>
    %26 = vector.shape_cast %25 : vector<1x16x1156xbf16> to vector<16x1156xbf16>
    %27 = arith.extf %26 : vector<16x1156xbf16> to vector<16x1156xf32>
    %c96 = arith.constant 96 : index
    %c0_23 = arith.constant 0 : index
    %28 = vector.load %arg6[%c96, %c0_23] : memref<144x1156xf32, #tpu.memory_space<vmem>>, vector<16x1156xf32>
    tpu.vector_store %arg6[%c96, %c0_23], %27 {strides = array<i32>} : memref<144x1156xf32, #tpu.memory_space<vmem>>, vector<16x1156xf32>,
    %c0_24 = arith.constant 0 : index
    %c0_25 = arith.constant 0 : index
    %c69 = arith.constant 69 : index
    %29 = vector.load %arg1[%c0_24, %c0_25, %c69] : memref<1x16x1226xbf16, #tpu.memory_space<vmem>>, vector<1x16x1156xbf16>
    %30 = vector.shape_cast %29 : vector<1x16x1156xbf16> to vector<16x1156xbf16>
    %31 = arith.extf %30 : vector<16x1156xbf16> to vector<16x1156xf32>
    %c112 = arith.constant 112 : index
    %c0_26 = arith.constant 0 : index
    %32 = vector.load %arg6[%c112, %c0_26] : memref<144x1156xf32, #tpu.memory_space<vmem>>, vector<16x1156xf32>
    tpu.vector_store %arg6[%c112, %c0_26], %31 {strides = array<i32>} : memref<144x1156xf32, #tpu.memory_space<vmem>>, vector<16x1156xf32>,
    %c0_27 = arith.constant 0 : index
    %c0_28 = arith.constant 0 : index
    %c70 = arith.constant 70 : index
    %33 = vector.load %arg1[%c0_27, %c0_28, %c70] : memref<1x16x1226xbf16, #tpu.memory_space<vmem>>, vector<1x16x1156xbf16>
    %34 = vector.shape_cast %33 : vector<1x16x1156xbf16> to vector<16x1156xbf16>
    %35 = arith.extf %34 : vector<16x1156xbf16> to vector<16x1156xf32>
    %c128 = arith.constant 128 : index
    %c0_29 = arith.constant 0 : index
    %36 = vector.load %arg6[%c128, %c0_29] : memref<144x1156xf32, #tpu.memory_space<vmem>>, vector<16x1156xf32>
    tpu.vector_store %arg6[%c128, %c0_29], %35 {strides = array<i32>} : memref<144x1156xf32, #tpu.memory_space<vmem>>, vector<16x1156xf32>,
    %c0_30 = arith.constant 0 : index
    %c0_31 = arith.constant 0 : index
    %37 = vector.load %arg2[%c0_30, %c0_31] : memref<8x144xbf16, #tpu.memory_space<vmem>>, vector<8x144xbf16>
    %c0_32 = arith.constant 0 : index
    %c0_33 = arith.constant 0 : index
    %38 = vector.load %arg6[%c0_32, %c0_33] : memref<144x1156xf32, #tpu.memory_space<vmem>>, vector<144x1156xf32>
    %39 = arith.truncf %38 : vector<144x1156xf32> to vector<144x1156xbf16>
    %cst = arith.constant dense<0.000000e+00> : vector<8x1156xf32>
    %40 = tpu.matmul %37, %39, %cst {dimension_numbers = #tpu.dot_dimension_numbers<[1], [0], [0], [1], [0, 0, 1, 1], [], []>} : vector<8x144xbf16>, vector<144x1156xbf16>, vector<8x1156xf32> -> vector<8x1156xf32>
    %41 = vector.broadcast %0 : vector<1x1156xf32> to vector<8x1156xf32>
    %42 = arith.mulf %40, %41 : vector<8x1156xf32>
    %cst_34 = arith.constant dense<0.000000e+00> : vector<8xf32>
    %43 = vector.multi_reduction <add>, %42, %cst_34 [1] : vector<8x1156xf32> to vector<8xf32>
    %44 = vector.shape_cast %43 : vector<8xf32> to vector<8x1xf32>
    %cst_35 = arith.constant 9.765625E-4 : f32
    %45 = vector.broadcast %cst_35 : f32 to vector<8x1xf32>
    %46 = arith.mulf %44, %45 : vector<8x1xf32>
    %47 = vector.broadcast %46 : vector<8x1xf32> to vector<8x1156xf32>
    %48 = arith.subf %40, %47 : vector<8x1156xf32>
    %49 = vector.broadcast %0 : vector<1x1156xf32> to vector<8x1156xf32>
    %50 = arith.mulf %48, %49 : vector<8x1156xf32>
    %51 = arith.mulf %50, %50 : vector<8x1156xf32>
    %cst_36 = arith.constant dense<0.000000e+00> : vector<8xf32>
    %52 = vector.multi_reduction <add>, %51, %cst_36 [1] : vector<8x1156xf32> to vector<8xf32>
    %53 = vector.shape_cast %52 : vector<8xf32> to vector<8x1xf32>
    %cst_37 = arith.constant 9.765625E-4 : f32
    %54 = vector.broadcast %cst_37 : f32 to vector<8x1xf32>
    %55 = arith.mulf %53, %54 : vector<8x1xf32>
    %cst_38 = arith.constant 9.99999974E-6 : f32
    %56 = vector.broadcast %cst_38 : f32 to vector<8x1xf32>
    %57 = arith.addf %55, %56 : vector<8x1xf32>
    %58 = math.rsqrt %57 : vector<8x1xf32>
    %59 = vector.broadcast %58 : vector<8x1xf32> to vector<8x1156xf32>
    %60 = arith.mulf %50, %59 : vector<8x1156xf32>
    %cst_39 = arith.constant 0.000000e+00 : f32
    %61 = vector.broadcast %cst_39 : f32 to vector<8x1156xf32>
    %62 = arith.maximumf %60, %61 : vector<8x1156xf32>
    %cst_40 = arith.constant 0.000000e+00 : f32
    %63 = vector.broadcast %cst_40 : f32 to vector<8x35xf32>
    %c0_41 = arith.constant 0 : index
    %c0_42 = arith.constant 0 : index
    %64 = vector.load %arg7[%c0_41, %c0_42] : memref<8x1226xf32, #tpu.memory_space<vmem>>, vector<8x35xf32>
    tpu.vector_store %arg7[%c0_41, %c0_42], %63 {strides = array<i32>} : memref<8x1226xf32, #tpu.memory_space<vmem>>, vector<8x35xf32>,
    %c0_43 = arith.constant 0 : index
    %c35_44 = arith.constant 35 : index
    %65 = vector.load %arg7[%c0_43, %c35_44] : memref<8x1226xf32, #tpu.memory_space<vmem>>, vector<8x1156xf32>
    tpu.vector_store %arg7[%c0_43, %c35_44], %62 {strides = array<i32>} : memref<8x1226xf32, #tpu.memory_space<vmem>>, vector<8x1156xf32>,
    %cst_45 = arith.constant 0.000000e+00 : f32
    %66 = vector.broadcast %cst_45 : f32 to vector<8x35xf32>
    %c0_46 = arith.constant 0 : index
    %c1191 = arith.constant 1191 : index
    %67 = vector.load %arg7[%c0_46, %c1191] : memref<8x1226xf32, #tpu.memory_space<vmem>>, vector<8x35xf32>
    tpu.vector_store %arg7[%c0_46, %c1191], %66 {strides = array<i32>} : memref<8x1226xf32, #tpu.memory_space<vmem>>, vector<8x35xf32>,
    %c0_47 = arith.constant 0 : index
    %c0_48 = arith.constant 0 : index
    %68 = vector.load %arg7[%c0_47, %c0_48] : memref<8x1226xf32, #tpu.memory_space<vmem>>, vector<8x1156xf32>
    %c0_49 = arith.constant 0 : index
    %c0_50 = arith.constant 0 : index
    %69 = vector.load %arg8[%c0_49, %c0_50] : memref<72x1156xf32, #tpu.memory_space<vmem>>, vector<8x1156xf32>
    tpu.vector_store %arg8[%c0_49, %c0_50], %68 {strides = array<i32>} : memref<72x1156xf32, #tpu.memory_space<vmem>>, vector<8x1156xf32>,
    %c0_51 = arith.constant 0 : index
    %c1_52 = arith.constant 1 : index
    %70 = vector.load %arg7[%c0_51, %c1_52] : memref<8x1226xf32, #tpu.memory_space<vmem>>, vector<8x1156xf32>
    %c8 = arith.constant 8 : index
    %c0_53 = arith.constant 0 : index
    %71 = vector.load %arg8[%c8, %c0_53] : memref<72x1156xf32, #tpu.memory_space<vmem>>, vector<8x1156xf32>
    tpu.vector_store %arg8[%c8, %c0_53], %70 {strides = array<i32>} : memref<72x1156xf32, #tpu.memory_space<vmem>>, vector<8x1156xf32>,
    %c0_54 = arith.constant 0 : index
    %c2_55 = arith.constant 2 : index
    %72 = vector.load %arg7[%c0_54, %c2_55] : memref<8x1226xf32, #tpu.memory_space<vmem>>, vector<8x1156xf32>
    %c16_56 = arith.constant 16 : index
    %c0_57 = arith.constant 0 : index
    %73 = vector.load %arg8[%c16_56, %c0_57] : memref<72x1156xf32, #tpu.memory_space<vmem>>, vector<8x1156xf32>
    tpu.vector_store %arg8[%c16_56, %c0_57], %72 {strides = array<i32>} : memref<72x1156xf32, #tpu.memory_space<vmem>>, vector<8x1156xf32>,
    %c0_58 = arith.constant 0 : index
    %c34_59 = arith.constant 34 : index
    %74 = vector.load %arg7[%c0_58, %c34_59] : memref<8x1226xf32, #tpu.memory_space<vmem>>, vector<8x1156xf32>
    %c24 = arith.constant 24 : index
    %c0_60 = arith.constant 0 : index
    %75 = vector.load %arg8[%c24, %c0_60] : memref<72x1156xf32, #tpu.memory_space<vmem>>, vector<8x1156xf32>
    tpu.vector_store %arg8[%c24, %c0_60], %74 {strides = array<i32>} : memref<72x1156xf32, #tpu.memory_space<vmem>>, vector<8x1156xf32>,
    %c0_61 = arith.constant 0 : index
    %c35_62 = arith.constant 35 : index
    %76 = vector.load %arg7[%c0_61, %c35_62] : memref<8x1226xf32, #tpu.memory_space<vmem>>, vector<8x1156xf32>
    %c32_63 = arith.constant 32 : index
    %c0_64 = arith.constant 0 : index
    %77 = vector.load %arg8[%c32_63, %c0_64] : memref<72x1156xf32, #tpu.memory_space<vmem>>, vector<8x1156xf32>
    tpu.vector_store %arg8[%c32_63, %c0_64], %76 {strides = array<i32>} : memref<72x1156xf32, #tpu.memory_space<vmem>>, vector<8x1156xf32>,
    %c0_65 = arith.constant 0 : index
    %c36_66 = arith.constant 36 : index
    %78 = vector.load %arg7[%c0_65, %c36_66] : memref<8x1226xf32, #tpu.memory_space<vmem>>, vector<8x1156xf32>
    %c40 = arith.constant 40 : index
    %c0_67 = arith.constant 0 : index
    %79 = vector.load %arg8[%c40, %c0_67] : memref<72x1156xf32, #tpu.memory_space<vmem>>, vector<8x1156xf32>
    tpu.vector_store %arg8[%c40, %c0_67], %78 {strides = array<i32>} : memref<72x1156xf32, #tpu.memory_space<vmem>>, vector<8x1156xf32>,
    %c0_68 = arith.constant 0 : index
    %c68_69 = arith.constant 68 : index
    %80 = vector.load %arg7[%c0_68, %c68_69] : memref<8x1226xf32, #tpu.memory_space<vmem>>, vector<8x1156xf32>
    %c48_70 = arith.constant 48 : index
    %c0_71 = arith.constant 0 : index
    %81 = vector.load %arg8[%c48_70, %c0_71] : memref<72x1156xf32, #tpu.memory_space<vmem>>, vector<8x1156xf32>
    tpu.vector_store %arg8[%c48_70, %c0_71], %80 {strides = array<i32>} : memref<72x1156xf32, #tpu.memory_space<vmem>>, vector<8x1156xf32>,
    %c0_72 = arith.constant 0 : index
    %c69_73 = arith.constant 69 : index
    %82 = vector.load %arg7[%c0_72, %c69_73] : memref<8x1226xf32, #tpu.memory_space<vmem>>, vector<8x1156xf32>
    %c56 = arith.constant 56 : index
    %c0_74 = arith.constant 0 : index
    %83 = vector.load %arg8[%c56, %c0_74] : memref<72x1156xf32, #tpu.memory_space<vmem>>, vector<8x1156xf32>
    tpu.vector_store %arg8[%c56, %c0_74], %82 {strides = array<i32>} : memref<72x1156xf32, #tpu.memory_space<vmem>>, vector<8x1156xf32>,
    %c0_75 = arith.constant 0 : index
    %c70_76 = arith.constant 70 : index
    %84 = vector.load %arg7[%c0_75, %c70_76] : memref<8x1226xf32, #tpu.memory_space<vmem>>, vector<8x1156xf32>
    %c64_77 = arith.constant 64 : index
    %c0_78 = arith.constant 0 : index
    %85 = vector.load %arg8[%c64_77, %c0_78] : memref<72x1156xf32, #tpu.memory_space<vmem>>, vector<8x1156xf32>
    tpu.vector_store %arg8[%c64_77, %c0_78], %84 {strides = array<i32>} : memref<72x1156xf32, #tpu.memory_space<vmem>>, vector<8x1156xf32>,
    %c0_79 = arith.constant 0 : index
    %c0_80 = arith.constant 0 : index
    %86 = vector.load %arg3[%c0_79, %c0_80] : memref<8x72xbf16, #tpu.memory_space<vmem>>, vector<8x72xbf16>
    %c0_81 = arith.constant 0 : index
    %c0_82 = arith.constant 0 : index
    %87 = vector.load %arg8[%c0_81, %c0_82] : memref<72x1156xf32, #tpu.memory_space<vmem>>, vector<72x1156xf32>
    %88 = arith.truncf %87 : vector<72x1156xf32> to vector<72x1156xbf16>
    %cst_83 = arith.constant dense<0.000000e+00> : vector<8x1156xf32>
    %89 = tpu.matmul %86, %88, %cst_83 {dimension_numbers = #tpu.dot_dimension_numbers<[1], [0], [0], [1], [0, 0, 1, 1], [], []>} : vector<8x72xbf16>, vector<72x1156xbf16>, vector<8x1156xf32> -> vector<8x1156xf32>
    %90 = vector.broadcast %0 : vector<1x1156xf32> to vector<8x1156xf32>
    %91 = arith.mulf %89, %90 : vector<8x1156xf32>
    %cst_84 = arith.constant dense<0.000000e+00> : vector<8xf32>
    %92 = vector.multi_reduction <add>, %91, %cst_84 [1] : vector<8x1156xf32> to vector<8xf32>
    %93 = vector.shape_cast %92 : vector<8xf32> to vector<8x1xf32>
    %cst_85 = arith.constant 9.765625E-4 : f32
    %94 = vector.broadcast %cst_85 : f32 to vector<8x1xf32>
    %95 = arith.mulf %93, %94 : vector<8x1xf32>
    %96 = vector.broadcast %95 : vector<8x1xf32> to vector<8x1156xf32>
    %97 = arith.subf %89, %96 : vector<8x1156xf32>
    %98 = vector.broadcast %0 : vector<1x1156xf32> to vector<8x1156xf32>
    %99 = arith.mulf %97, %98 : vector<8x1156xf32>
    %100 = arith.mulf %99, %99 : vector<8x1156xf32>
    %cst_86 = arith.constant dense<0.000000e+00> : vector<8xf32>
    %101 = vector.multi_reduction <add>, %100, %cst_86 [1] : vector<8x1156xf32> to vector<8xf32>
    %102 = vector.shape_cast %101 : vector<8xf32> to vector<8x1xf32>
    %cst_87 = arith.constant 9.765625E-4 : f32
    %103 = vector.broadcast %cst_87 : f32 to vector<8x1xf32>
    %104 = arith.mulf %102, %103 : vector<8x1xf32>
    %cst_88 = arith.constant 9.99999974E-6 : f32
    %105 = vector.broadcast %cst_88 : f32 to vector<8x1xf32>
    %106 = arith.addf %104, %105 : vector<8x1xf32>
    %107 = math.rsqrt %106 : vector<8x1xf32>
    %108 = vector.broadcast %107 : vector<8x1xf32> to vector<8x1156xf32>
    %109 = arith.mulf %99, %108 : vector<8x1156xf32>
    %cst_89 = arith.constant 0.000000e+00 : f32
    %110 = vector.broadcast %cst_89 : f32 to vector<8x1156xf32>
    %111 = arith.maximumf %109, %110 : vector<8x1156xf32>
    %cst_90 = arith.constant 0.000000e+00 : bf16
    %112 = vector.broadcast %cst_90 : bf16 to vector<8x35xbf16>
    %c0_91 = arith.constant 0 : index
    %c0_92 = arith.constant 0 : index
    %c0_93 = arith.constant 0 : index
    %113 = vector.load %arg5[%c0_91, %c0_92, %c0_93] : memref<1x8x1226xbf16, #tpu.memory_space<vmem>>, vector<1x8x35xbf16>
    %114 = vector.shape_cast %113 : vector<1x8x35xbf16> to vector<8x35xbf16>
    %115 = vector.shape_cast %112 : vector<8x35xbf16> to vector<1x8x35xbf16>
    tpu.vector_store %arg5[%c0_91, %c0_92, %c0_93], %115 {strides = array<i32>} : memref<1x8x1226xbf16, #tpu.memory_space<vmem>>, vector<1x8x35xbf16>,
    %116 = arith.truncf %111 : vector<8x1156xf32> to vector<8x1156xbf16>
    %c0_94 = arith.constant 0 : index
    %c0_95 = arith.constant 0 : index
    %c35_96 = arith.constant 35 : index
    %117 = vector.load %arg5[%c0_94, %c0_95, %c35_96] : memref<1x8x1226xbf16, #tpu.memory_space<vmem>>, vector<1x8x1156xbf16>
    %118 = vector.shape_cast %117 : vector<1x8x1156xbf16> to vector<8x1156xbf16>
    %119 = vector.shape_cast %116 : vector<8x1156xbf16> to vector<1x8x1156xbf16>
    tpu.vector_store %arg5[%c0_94, %c0_95, %c35_96], %119 {strides = array<i32>} : memref<1x8x1226xbf16, #tpu.memory_space<vmem>>, vector<1x8x1156xbf16>,
    %cst_97 = arith.constant 0.000000e+00 : bf16
    %120 = vector.broadcast %cst_97 : bf16 to vector<8x35xbf16>
    %c0_98 = arith.constant 0 : index
    %c0_99 = arith.constant 0 : index
    %c1191_100 = arith.constant 1191 : index
    %121 = vector.load %arg5[%c0_98, %c0_99, %c1191_100] : memref<1x8x1226xbf16, #tpu.memory_space<vmem>>, vector<1x8x35xbf16>
    %122 = vector.shape_cast %121 : vector<1x8x35xbf16> to vector<8x35xbf16>
    %123 = vector.shape_cast %120 : vector<8x35xbf16> to vector<1x8x35xbf16>
    tpu.vector_store %arg5[%c0_98, %c0_99, %c1191_100], %123 {strides = array<i32>} : memref<1x8x1226xbf16, #tpu.memory_space<vmem>>, vector<1x8x35xbf16>,
    return
  }
  func.func @transform_0(%arg0: i32) -> (i32, i32, i32) {
    %c0_i32 = arith.constant 0 : i32
    %c0_i32_0 = arith.constant 0 : i32
    %c0_i32_1 = arith.constant 0 : i32
    return %arg0, %c0_i32, %c0_i32_0 : i32, i32, i32
  }
  func.func @transform_1(%arg0: i32) -> (i32, i32) {
    %c0_i32 = arith.constant 0 : i32
    %c0_i32_0 = arith.constant 0 : i32
    %c0_i32_1 = arith.constant 0 : i32
    return %c0_i32, %c0_i32_0 : i32, i32
  }
  func.func @transform_2(%arg0: i32) -> (i32, i32) {
    %c0_i32 = arith.constant 0 : i32
    %c0_i32_0 = arith.constant 0 : i32
    %c0_i32_1 = arith.constant 0 : i32
    return %c0_i32, %c0_i32_0 : i32, i32
  }
  func.func @transform_3(%arg0: i32) -> (i32, i32) {
    %c0_i32 = arith.constant 0 : i32
    %c0_i32_0 = arith.constant 0 : i32
    %c0_i32_1 = arith.constant 0 : i32
    return %c0_i32, %c0_i32_0 : i32, i32
  }
  func.func @transform_4(%arg0: i32) -> (i32, i32, i32) {
    %c0_i32 = arith.constant 0 : i32
    %c0_i32_0 = arith.constant 0 : i32
    %c0_i32_1 = arith.constant 0 : i32
    return %arg0, %c0_i32, %c0_i32_0 : i32, i32, i32
  }
}

module attributes {stable_mosaic.version = 11 : i64} {
  func.func @_outconv_kernel(%arg0: i32, %arg1: memref<8x2312xbf16, #tpu.memory_space<vmem>>, %arg2: memref<3x8xbf16, #tpu.memory_space<vmem>>, %arg3: memref<3x1xf32, #tpu.memory_space<vmem>>, %arg4: memref<3x2312xf32, #tpu.memory_space<vmem>>) attributes {dimension_semantics = [#tpu.dimension_semantics<arbitrary>], iteration_bounds = array<i64: 1>, scalar_prefetch = 0 : i64, scratch_operands = 0 : i64, tpu.core_type = #tpu.core_type<tc>, window_params = [{pipeline_mode = #tpu.pipeline_mode<synchronous>, transform_indices = @transform_0, window_bounds = array<i64: 8, 2312>}, {pipeline_mode = #tpu.pipeline_mode<synchronous>, transform_indices = @transform_1, window_bounds = array<i64: 3, 8>}, {pipeline_mode = #tpu.pipeline_mode<synchronous>, transform_indices = @transform_2, window_bounds = array<i64: 3, 1>}, {pipeline_mode = #tpu.pipeline_mode<synchronous>, transform_indices = @transform_3, window_bounds = array<i64: 3, 2312>}]} {
    %c0 = arith.constant 0 : index
    %c0_0 = arith.constant 0 : index
    %0 = vector.load %arg2[%c0, %c0_0] : memref<3x8xbf16, #tpu.memory_space<vmem>>, vector<3x8xbf16>
    %c0_1 = arith.constant 0 : index
    %c0_2 = arith.constant 0 : index
    %1 = vector.load %arg1[%c0_1, %c0_2] : memref<8x2312xbf16, #tpu.memory_space<vmem>>, vector<8x2312xbf16>
    %cst = arith.constant dense<0.000000e+00> : vector<3x2312xf32>
    %2 = tpu.matmul %0, %1, %cst {dimension_numbers = #tpu.dot_dimension_numbers<[1], [0], [0], [1], [0, 0, 1, 1], [], []>} : vector<3x8xbf16>, vector<8x2312xbf16>, vector<3x2312xf32> -> vector<3x2312xf32>
    %c0_3 = arith.constant 0 : index
    %c0_4 = arith.constant 0 : index
    %3 = vector.load %arg3[%c0_3, %c0_4] : memref<3x1xf32, #tpu.memory_space<vmem>>, vector<3x1xf32>
    %4 = vector.broadcast %3 : vector<3x1xf32> to vector<3x2312xf32>
    %5 = arith.addf %2, %4 : vector<3x2312xf32>
    %cst_5 = arith.constant 0.000000e+00 : f32
    %6 = vector.broadcast %cst_5 : f32 to vector<3x2312xf32>
    %7 = arith.subf %6, %5 : vector<3x2312xf32>
    %8 = math.exp %7 : vector<3x2312xf32>
    %cst_6 = arith.constant 1.000000e+00 : f32
    %9 = vector.broadcast %cst_6 : f32 to vector<3x2312xf32>
    %10 = arith.addf %9, %8 : vector<3x2312xf32>
    %11 = tpu.reciprocal %10 {approx = true} : vector<3x2312xf32> -> vector<3x2312xf32>
    %c0_7 = arith.constant 0 : index
    %c0_8 = arith.constant 0 : index
    %12 = vector.load %arg4[%c0_7, %c0_8] : memref<3x2312xf32, #tpu.memory_space<vmem>>, vector<3x2312xf32>
    tpu.vector_store %arg4[%c0_7, %c0_8], %11 {strides = array<i32>} : memref<3x2312xf32, #tpu.memory_space<vmem>>, vector<3x2312xf32>,
    return
  }
  func.func @transform_0(%arg0: i32) -> (i32, i32) {
    %c0_i32 = arith.constant 0 : i32
    %c0_i32_0 = arith.constant 0 : i32
    %c0_i32_1 = arith.constant 0 : i32
    return %c0_i32, %c0_i32_0 : i32, i32
  }
  func.func @transform_1(%arg0: i32) -> (i32, i32) {
    %c0_i32 = arith.constant 0 : i32
    %c0_i32_0 = arith.constant 0 : i32
    %c0_i32_1 = arith.constant 0 : i32
    return %c0_i32, %c0_i32_0 : i32, i32
  }
  func.func @transform_2(%arg0: i32) -> (i32, i32) {
    %c0_i32 = arith.constant 0 : i32
    %c0_i32_0 = arith.constant 0 : i32
    %c0_i32_1 = arith.constant 0 : i32
    return %c0_i32, %c0_i32_0 : i32, i32
  }
  func.func @transform_3(%arg0: i32) -> (i32, i32) {
    %c0_i32 = arith.constant 0 : i32
    %c0_i32_0 = arith.constant 0 : i32
    %c0_i32_1 = arith.constant 0 : i32
    return %c0_i32, %c0_i32_0 : i32, i32
  }
}

</mosaic_0001>

<llo_original>
// kernel: upsampler_forward.7
$region0: #{upsampler_forward.7}
  #allocation0 [shape = 'u32[]', space=smem, size = 0x4, offset = 0x4, fixed_abs, tag = 'smem constant byte address 0x4 - core index']
  #allocation1 [shape = 'u32[144,128]{1,0:T(1,128)}', space=vmem, size = 0x12000, scoped, tag = 'internal scratch']
  %s0 = inlined_call_operand.vmem [shape: bf16[2,32,122], index: 0, kind: input, shape index: {}]
  %s1 = inlined_call_operand.vmem [shape: bf16[100,324], index: 1, kind: input, shape index: {}]
  %s2 = inlined_call_operand.vmem [shape: bf16[2,32,362], index: 2, kind: output, shape index: {}]
  %s3 = sld [smem:[#allocation0]]
  $region41: #{upsampler_forward.7} parent=0
    _
  %s5 = ssub.s32 1, %s3
  %s6 = scalar_select 0, %s5, %s3
  loop: start=0, step=1, limit=4
  $region2: #{upsampler_forward.7} parent=0 // loop_pre_header
    _
  $region3: #{upsampler_forward.7} parent=0 // loop_header
    %s8 = sphi 0, %s12
    %p9 = scmp.ge.s32.totalorder %s8, 4
    %s18 = sphi 0, %s20
    %s21 = sphi 0, %s18
    %s22 = sphi 0, %s21
    %s38 = sphi 0, %s22
    %s42 = sphi 0, %s42
    %s44 = sphi 0, %s42
    %s45 = sphi 0, %s44
    %s59 = sphi 0, %s45
    %s65 = sphi 0, %s67
    %s68 = sphi 0, %s65
    %s69 = sphi 0, %s68
    %s85 = sphi 0, %s69
  $region4: #{upsampler_forward.7} parent=0 // loop_header_branch
    %11 = sbr.rel (%p9) target = $region8
  $region5: #{upsampler_forward.7} parent=0 // loop_body
    %s13 = ssub.s32 %s8, 1
    %s14 = ssub.s32 %s8, 2
    %s15 = sadd.s32 %s8, 1
    %s16 = ssub.s32 %s8, %s15
    %p17 = scmp.eq.s32.totalorder %s16, 0
    %s19 = sadd.s32 %s18, 1
    %s20 = scalar_select %p17, %s18, %s19
    %p23 = pneg %p17
    %p24 = scmp.eq.s32.totalorder %s8, 1
    %p25 = por %p23, %p24
    %p26 = scmp.ne.s32.totalorder %s18, %s21
    %p27 = scmp.eq.s32.totalorder %s8, 0
    %p28 = por %p26, %p27
    %p29 = scmp.ne.s32.totalorder %s18, %s21
    %p30 = scmp.eq.s32.totalorder %s13, 1
    %p31 = por %p29, %p30
    %p32 = scmp.ne.s32.totalorder %s21, %s22
    %p33 = scmp.eq.s32.totalorder %s13, 0
    %p34 = por %p32, %p33
    %p35 = scmp.ne.s32.totalorder %s21, %s22
    %p36 = scmp.eq.s32.totalorder %s14, 1
    %p37 = por %p35, %p36
    %p39 = scmp.ne.s32.totalorder %s22, %s38
    %p40 = scmp.eq.s32.totalorder %s14, 0
    %p41 = por %p39, %p40
    %s43 = sadd.s32 %s42, 1
    %p46 = scmp.eq.s32.totalorder %s8, 1
    %p47 = scmp.ne.s32.totalorder %s42, %s44
    %p48 = scmp.eq.s32.totalorder %s8, 0
    %p49 = por %p47, %p48
    %p50 = scmp.ne.s32.totalorder %s42, %s44
    %p51 = scmp.eq.s32.totalorder %s13, 1
    %p52 = por %p50, %p51
    %p53 = scmp.ne.s32.totalorder %s44, %s45
    %p54 = scmp.eq.s32.totalorder %s13, 0
    %p55 = por %p53, %p54
    %p56 = scmp.ne.s32.totalorder %s44, %s45
    %p57 = scmp.eq.s32.totalorder %s14, 1
    %p58 = por %p56, %p57
    %p60 = scmp.ne.s32.totalorder %s45, %s59
    %p61 = scmp.eq.s32.totalorder %s14, 0
    %p62 = por %p60, %p61
    %s63 = ssub.s32 %s8, %s15
    %p64 = scmp.eq.s32.totalorder %s63, 0
    %s66 = sadd.s32 %s65, 1
    %s67 = scalar_select %p64, %s65, %s66
    %p70 = pneg %p64
    %p71 = scmp.eq.s32.totalorder %s8, 1
    %p72 = por %p70, %p71
    %p73 = scmp.ne.s32.totalorder %s65, %s68
    %p74 = scmp.eq.s32.totalorder %s8, 0
    %p75 = por %p73, %p74
    %p76 = scmp.ne.s32.totalorder %s65, %s68
    %p77 = scmp.eq.s32.totalorder %s13, 1
    %p78 = por %p76, %p77
    %p79 = scmp.ne.s32.totalorder %s68, %s69
    %p80 = scmp.eq.s32.totalorder %s13, 0
    %p81 = por %p79, %p80
    %p82 = scmp.ne.s32.totalorder %s68, %s69
    %p83 = scmp.eq.s32.totalorder %s14, 1
    %p84 = por %p82, %p83
    %p86 = scmp.ne.s32.totalorder %s69, %s85
    %p87 = scmp.eq.s32.totalorder %s14, 0
    %p88 = por %p86, %p87
    %p89 = scmp.le.s32.totalorder 1, %s8
    %p90 = scmp.lt.s32.totalorder %s8, 3
    %p91 = pnand %p89, %p90
    %p92 = pneg %p91
    // Predicated region
    $region9: #{upsampler_forward.7} parent=5 // pred_check
      _
    $region10: #{upsampler_forward.7} parent=5 // pred_check_branch
      %94 = sbr.rel (%p91) target = $region12
    $region11: #{upsampler_forward.7} parent=5 // pred_region
      %s95 = ssub.s32 %s8, 1
      // Predicated region
      $region13: #{upsampler_forward.7} parent=11 // pred_check
        %p96 = pneg %p55
      $region14: #{upsampler_forward.7} parent=11 // pred_check_branch
        %98 = sbr.rel (%p96) target = $region16
      $region15: #{upsampler_forward.7} parent=11 // pred_region
        _
      $region16: #{upsampler_forward.7} parent=11 // pred_fallthru
        _
    $region12: #{upsampler_forward.7} parent=5 // pred_fallthru
      _
    %p99 = scmp.lt.s32.totalorder %s8, 2
    // Predicated region
    $region17: #{upsampler_forward.7} parent=5 // pred_check
      %p100 = pneg %p99
    $region18: #{upsampler_forward.7} parent=5 // pred_check_branch
      %102 = sbr.rel (%p100) target = $region20
    $region19: #{upsampler_forward.7} parent=5 // pred_region
      // Predicated region
      $region21: #{upsampler_forward.7} parent=19 // pred_check
        %p103 = pneg %p28
      $region22: #{upsampler_forward.7} parent=19 // pred_check_branch
        %105 = sbr.rel (%p103) target = $region24
      $region23: #{upsampler_forward.7} parent=19 // pred_region
        %p106 = scmp.lt.s32.totalorder %s8, 1
        %s107 = scalar_select %p106, %s8, 1
        %s108 = smul.addr %s107, 4
        %s109 = smul.addr %s108, 4
        %s110 = scalar_lea.vmem %s0, %s109
      $region24: #{upsampler_forward.7} parent=19 // pred_fallthru
        _
    $region20: #{upsampler_forward.7} parent=5 // pred_fallthru
      _
    %p111 = scmp.le.s32.totalorder 1, %s8
    %p112 = scmp.lt.s32.totalorder %s8, 3
    %p113 = pnand %p111, %p112
    %p114 = pneg %p113
    // Predicated region
    $region25: #{upsampler_forward.7} parent=5 // pred_check
      _
    $region26: #{upsampler_forward.7} parent=5 // pred_check_branch
      %116 = sbr.rel (%p113) target = $region28
    $region27: #{upsampler_forward.7} parent=5 // pred_region
      %s117 = ssub.s32 %s8, 1
      %p118 = scmp.lt.s32.totalorder %s13, 1
      %s119 = scalar_select %p118, %s13, 1
      %s120 = smul.addr %s119, 4
      %s121 = smul.addr %s120, 4
      %s122 = scalar_lea.vmem %s0, %s121
      %p123 = pneg %p34
      %p124 = pneg %p31
      %p125 = pneg %p55
      %p126 = pneg %p52
      %p127 = pneg %p81
      %p128 = pneg %p78
      %p129 = scmp.lt.s32.totalorder %s13, 1
      %s130 = scalar_select %p129, %s13, 1
      %s131 = smul.addr %s130, 12
      %s132 = smul.addr %s131, 4
      %s133 = scalar_lea.vmem %s2, %s132
      %p134 = scmp.lt.s32.totalorder %s13, 1
      %s135 = scalar_select %p134, %s13, 1
      %s136 = smul.addr %s135, 4
      %s137 = smul.addr %s136, 4
      %s138 = scalar_lea.vmem %s0, %s137
      %p139 = scmp.lt.s32.totalorder %s13, 1
      %s140 = scalar_select %p139, %s13, 1
      %s141 = smul.addr %s140, 12
      %s142 = smul.addr %s141, 4
      %s143 = scalar_lea.vmem %s2, %s142
      %v145 = vld [vmem:[%s138] sm:$0xf]
      %v146 = vld [vmem:[%s138 + $0x4] sm:$0xf]
      %v147 = vld [vmem:[%s138 + $0x8] sm:$0xf]
      %v148 = vld [vmem:[%s138 + $0xc] sm:$0xf]
      %v149 = vld [vmem:[%s1] sm:$0xff]
      %v150 = vld [vmem:[%s1 + $0x8] sm:$0xf]
      %v151 = vld [vmem:[%s1 + $0xc] sm:$0xff]
      %v152 = vld [vmem:[%s1 + $0x14] sm:$0xf]
      %v153 = vld [vmem:[%s1 + $0x18] sm:$0xff]
      %v154 = vld [vmem:[%s1 + $0x20] sm:$0xf]
      %v155 = vld [vmem:[%s1 + $0x24] sm:$0xff]
      %v156 = vld [vmem:[%s1 + $0x2c] sm:$0xf]
      %v157 = vld [vmem:[%s1 + $0x30] sm:$0xff]
      %v158 = vld [vmem:[%s1 + $0x38] sm:$0xf]
      %v159 = vld [vmem:[%s1 + $0x3c] sm:$0xff]
      %v160 = vld [vmem:[%s1 + $0x44] sm:$0xf]
      %v161 = vld [vmem:[%s1 + $0x48] sm:$0xff]
      %v162 = vld [vmem:[%s1 + $0x50] sm:$0xf]
      %v163 = vld [vmem:[%s1 + $0x54] sm:$0xff]
      %v164 = vld [vmem:[%s1 + $0x5c] sm:$0xf]
      %v165 = vld [vmem:[%s1 + $0x60] sm:$0xff]
      %v166 = vld [vmem:[%s1 + $0x68] sm:$0xf]
      %v167 = vld [vmem:[%s1 + $0x6c] sm:$0xff]
      %v168 = vld [vmem:[%s1 + $0x74] sm:$0xf]
      %v169 = vld [vmem:[%s1 + $0x78] sm:$0xff]
      %v170 = vld [vmem:[%s1 + $0x80] sm:$0xf]
      %v171 = vld [vmem:[%s1 + $0x84] sm:$0xff]
      %v172 = vld [vmem:[%s1 + $0x8c] sm:$0xf]
      %v173 = vld [vmem:[%s1 + $0x90] sm:$0x33]
      %v174 = vld [vmem:[%s1 + $0x98] sm:$0x3]
      %v179 = vunpack.c.l.b16 %v145
      %v180 = vunpack.c.l.b16 %v146
      %v181 = vunpack.c.l.b16 %v147
      %v182 = vunpack.c.l.b16 %v148
      %v183 = vpack.c.b16 %v180, %v179
      %v184 = vpack.c.b16 %v182, %v181
      %185 = vrot.lane.b32.xlu0 %v183, 117
      %v186 = vpop.permute.xlu0 %185
      %187 = vrot.lane.b32.xlu0 %v184, 117
      %v188 = vpop.permute.xlu0 %187
      %v215 = vunpack.c.l.b16 %v149
      %v216 = vunpack.c.h.b16 %v149
      %v217 = vunpack.c.l.b16 %v150
      %v218 = vunpack.c.l.b16 %v151
      %v219 = vunpack.c.h.b16 %v151
      %v220 = vunpack.c.l.b16 %v152
      %v221 = vunpack.c.l.b16 %v153
      %v222 = vunpack.c.h.b16 %v153
      %v223 = vunpack.c.l.b16 %v154
      %v224 = vunpack.c.l.b16 %v155
      %v225 = vunpack.c.h.b16 %v155
      %v226 = vunpack.c.l.b16 %v156
      %v227 = vunpack.c.l.b16 %v157
      %v228 = vunpack.c.h.b16 %v157
      %v229 = vunpack.c.l.b16 %v158
      %v230 = vunpack.c.l.b16 %v159
      %v231 = vunpack.c.h.b16 %v159
      %v232 = vunpack.c.l.b16 %v160
      %v233 = vunpack.c.l.b16 %v161
      %v234 = vunpack.c.h.b16 %v161
      %v235 = vunpack.c.l.b16 %v162
      %v236 = vunpack.c.l.b16 %v163
      %v237 = vunpack.c.h.b16 %v163
      %v238 = vunpack.c.l.b16 %v164
      %v239 = vunpack.c.l.b16 %v165
      %v240 = vunpack.c.h.b16 %v165
      %v241 = vunpack.c.l.b16 %v166
      %v242 = vunpack.c.l.b16 %v167
      %v243 = vunpack.c.h.b16 %v167
      %v244 = vunpack.c.l.b16 %v168
      %v245 = vunpack.c.l.b16 %v169
      %v246 = vunpack.c.h.b16 %v169
      %v247 = vunpack.c.l.b16 %v170
      %v248 = vunpack.c.l.b16 %v171
      %v249 = vunpack.c.h.b16 %v171
      %v250 = vunpack.c.l.b16 %v172
      %v251 = vunpack.c.l.b16 %v173
      %v252 = vunpack.c.h.b16 %v173
      %v253 = vunpack.c.l.b16 %v174
      %v254 = vpack.c.b16 %v218, %v215
      %v255 = vpack.c.b16 %v219, %v216
      %v256 = vpack.c.b16 %v220, %v217
      %v257 = vpack.c.b16 %v224, %v221
      %v258 = vpack.c.b16 %v225, %v222
      %v259 = vpack.c.b16 %v226, %v223
      %v260 = vpack.c.b16 %v230, %v227
      %v261 = vpack.c.b16 %v231, %v228
      %v262 = vpack.c.b16 %v232, %v229
      %v263 = vpack.c.b16 %v236, %v233
      %v264 = vpack.c.b16 %v237, %v234
      %v265 = vpack.c.b16 %v238, %v235
      %v266 = vpack.c.b16 %v242, %v239
      %v267 = vpack.c.b16 %v243, %v240
      %v268 = vpack.c.b16 %v244, %v241
      %v269 = vpack.c.b16 %v248, %v245
      %v270 = vpack.c.b16 %v249, %v246
      %v271 = vpack.c.b16 %v250, %v247
      %v272 = vpack.c.b16 %v251, %v251
      %v273 = vpack.c.b16 %v252, %v252
      %v274 = vpack.c.b16 %v253, %v253
      %vm293 = vcmask 818176
      %v295 = vsel %vm293, %v186, 0
      %v298 = vsel %vm293, %v188, 0
      %vm300 = vcmask 1041408
      %v302 = vsel %vm300, %v272, 0
      %v305 = vsel %vm300, %v273, 0
      %v308 = vsel %vm300, %v274, 0
      %310 = vmatprep.subr.bf16.mxu0 0
      %311 = vmatpush1.bf16.msra.mxu0 0
      %312 = vmatprep.subr.bf16.mxu0 %v305
      %313 = vmatpush1.bf16.msra.mxu0 %v302
      %314 = vmatprep.subr.bf16.mxu0 %v270
      %315 = vmatpush1.bf16.msra.mxu0 %v269
      %316 = vmatprep.subr.bf16.mxu0 %v267
      %317 = vmatpush1.bf16.msra.mxu0 %v266
      %318 = vmatprep.subr.bf16.mxu0 %v264
      %319 = vmatpush1.bf16.msra.mxu0 %v263
      %320 = vmatprep.subr.bf16.mxu0 %v261
      %321 = vmatpush1.bf16.msra.mxu0 %v260
      %322 = vmatprep.subr.bf16.mxu0 %v258
      %323 = vmatpush1.bf16.msra.mxu0 %v257
      %324 = vmatprep.subr.bf16.mxu0 %v255
      %325 = vmatpush1.bf16.msra.mxu0 %v254
      %326 = vmatprep.subr.bf16.mxu0 0
      %327 = vmatpush2.bf16.msra.mxu0 0
      %328 = vmatprep.subr.bf16.mxu0 0
      %329 = vmatpush2.bf16.msra.mxu0 0
      %330 = vmatprep.subr.bf16.mxu0 0
      %331 = vmatpush2.bf16.msra.mxu0 0
      %332 = vmatprep.subr.bf16.mxu0 0
      %333 = vmatpush2.bf16.msra.mxu0 0
      %334 = vmatprep.subr.bf16.mxu0 0
      %335 = vmatpush2.bf16.msra.mxu0 0
      %336 = vmatprep.subr.bf16.mxu0 0
      %337 = vmatpush2.bf16.msra.mxu0 0
      %338 = vmatprep.subr.bf16.mxu0 0
      %339 = vmatpush2.bf16.msra.mxu0 0
      %340 = vmatprep.subr.bf16.mxu0 0
      %341 = vmatpush2.bf16.msra.mxu0 0
      %342 = vmatprep.mubr.bf16.mxu0 0
      %343 = vmatmul.mubr.bf16.gmra.mxu0 %v295
      %v344 = vpop.f32.mrf.mxu0
      %v345 = vadd.f32 0.0, %v344
      %v346 = vpop.f32.mrf.mxu0
      %v347 = vadd.f32 0.0, %v346
      %v348 = vpop.f32.mrf.mxu0
      %v349 = vadd.f32 0.0, %v348
      %v350 = vpop.f32.mrf.mxu0
      %v351 = vadd.f32 0.0, %v350
      %352 = vmatprep.mubr.bf16.mxu0 0
      %353 = vmatmul.mubr.bf16.gmra.mxu0 %v298
      %v354 = vpop.f32.mrf.mxu0
      %v355 = vadd.f32 0.0, %v354
      %v356 = vpop.f32.mrf.mxu0
      %v357 = vadd.f32 0.0, %v356
      %v358 = vpop.f32.mrf.mxu0
      %v359 = vadd.f32 0.0, %v358
      %v360 = vpop.f32.mrf.mxu0
      %v361 = vadd.f32 0.0, %v360
      %362 = vdwg.mxu0
      %363 = vmatprep.subr.bf16.mxu0 0
      %364 = vmatpush1.bf16.msra.mxu0 0
      %365 = vmatprep.subr.bf16.mxu0 0
      %366 = vmatpush1.bf16.msra.mxu0 %v308
      %367 = vmatprep.subr.bf16.mxu0 0
      %368 = vmatpush1.bf16.msra.mxu0 %v271
      %369 = vmatprep.subr.bf16.mxu0 0
      %370 = vmatpush1.bf16.msra.mxu0 %v268
      %371 = vmatprep.subr.bf16.mxu0 0
      %372 = vmatpush1.bf16.msra.mxu0 %v265
      %373 = vmatprep.subr.bf16.mxu0 0
      %374 = vmatpush1.bf16.msra.mxu0 %v262
      %375 = vmatprep.subr.bf16.mxu0 0
      %376 = vmatpush1.bf16.msra.mxu0 %v259
      %377 = vmatprep.subr.bf16.mxu0 0
      %378 = vmatpush1.bf16.msra.mxu0 %v256
      %379 = vmatprep.subr.bf16.mxu0 0
      %380 = vmatpush2.bf16.msra.mxu0 0
      %381 = vmatprep.subr.bf16.mxu0 0
      %382 = vmatpush2.bf16.msra.mxu0 0
      %383 = vmatprep.subr.bf16.mxu0 0
      %384 = vmatpush2.bf16.msra.mxu0 0
      %385 = vmatprep.subr.bf16.mxu0 0
      %386 = vmatpush2.bf16.msra.mxu0 0
      %387 = vmatprep.subr.bf16.mxu0 0
      %388 = vmatpush2.bf16.msra.mxu0 0
      %389 = vmatprep.subr.bf16.mxu0 0
      %390 = vmatpush2.bf16.msra.mxu0 0
      %391 = vmatprep.subr.bf16.mxu0 0
      %392 = vmatpush2.bf16.msra.mxu0 0
      %393 = vmatprep.subr.bf16.mxu0 0
      %394 = vmatpush2.bf16.msra.mxu0 0
      %395 = vmatprep.mubr.bf16.mxu0 0
      %396 = vmatmul.mubr.bf16.gmra.mxu0 %v295
      %v397 = vpop.f32.mrf.mxu0
      %v398 = vadd.f32 0.0, %v397
      %v399 = vpop.f32.mrf.mxu0
      %v400 = vpop.f32.mrf.mxu0
      %v401 = vadd.f32 0.0, %v400
      %v402 = vpop.f32.mrf.mxu0
      %403 = vmatprep.mubr.bf16.mxu0 0
      %404 = vmatmul.mubr.bf16.gmra.mxu0 %v298
      %v405 = vpop.f32.mrf.mxu0
      %v406 = vadd.f32 0.0, %v405
      %v407 = vpop.f32.mrf.mxu0
      %v408 = vpop.f32.mrf.mxu0
      %v409 = vadd.f32 0.0, %v408
      %v410 = vpop.f32.mrf.mxu0
      %411 = vdwg.mxu0
      %vm412 = vcmask 150528
      %413 = vst.msk [vmem:[%s143] sm:$0xf] %vm412, 0
      %414 = vst.msk [vmem:[%s143 + $0xc] sm:$0xf] %vm412, 0
      %415 = vst.msk [vmem:[%s143 + $0x18] sm:$0xf] %vm412, 0
      %416 = vst.msk [vmem:[%s143 + $0x24] sm:$0xf] %vm412, 0
      %v417 = vpack.c.bf16 %v349, %v345
      %v418 = vpack.c.bf16 %v351, %v347
      %v419 = vpack.c.bf16 %v401, %v398
      %v420 = vpack.c.bf16 %v359, %v355
      %v421 = vpack.c.bf16 %v361, %v357
      %v422 = vpack.c.bf16 %v409, %v406
      %v429 = vunpack.c.l.b16 %v417
      %v430 = vunpack.c.l.b16 %v418
      %v431 = vunpack.c.l.b16 %v419
      %v432 = vunpack.c.h.b16 %v417
      %v433 = vunpack.c.h.b16 %v418
      %v434 = vunpack.c.h.b16 %v419
      %v435 = vunpack.c.l.b16 %v420
      %v436 = vunpack.c.l.b16 %v421
      %v437 = vunpack.c.l.b16 %v422
      %v438 = vunpack.c.h.b16 %v420
      %v439 = vunpack.c.h.b16 %v421
      %v440 = vunpack.c.h.b16 %v422
      %v441 = vpack.c.b16 %v430, %v429
      %v442 = vpack.c.b16 %v431, %v431
      %v443 = vpack.c.b16 %v433, %v432
      %v444 = vpack.c.b16 %v434, %v434
      %v445 = vpack.c.b16 %v436, %v435
      %v446 = vpack.c.b16 %v437, %v437
      %v447 = vpack.c.b16 %v439, %v438
      %v448 = vpack.c.b16 %v440, %v440
      %449 = vrot.lane.b32.xlu0 %v441, 19
      %v450 = vpop.permute.xlu0 %449
      %451 = vrot.lane.b32.xlu0 %v442, 19
      %v452 = vpop.permute.xlu0 %451
      %453 = vrot.lane.b32.xlu0 %v443, 19
      %v454 = vpop.permute.xlu0 %453
      %455 = vrot.lane.b32.xlu0 %v444, 19
      %v456 = vpop.permute.xlu0 %455
      %457 = vrot.lane.b32.xlu0 %v445, 19
      %v458 = vpop.permute.xlu0 %457
      %459 = vrot.lane.b32.xlu0 %v446, 19
      %v460 = vpop.permute.xlu0 %459
      %461 = vrot.lane.b32.xlu0 %v447, 19
      %v462 = vpop.permute.xlu0 %461
      %463 = vrot.lane.b32.xlu0 %v448, 19
      %v464 = vpop.permute.xlu0 %463
      %v465 = vrot.slane %v450, 4
      %v466 = vrot.slane %v454, 4
      %v467 = vrot.slane %v458, 4
      %v468 = vrot.slane %v462, 4
      %vm469 = vcmask 154624
      %v470 = vsel %vm469, %v465, %v450
      %v471 = vsel %vm469, %v465, %v452
      %v472 = vsel %vm469, %v466, %v454
      %v473 = vsel %vm469, %v466, %v456
      %v474 = vsel %vm469, %v467, %v458
      %v475 = vsel %vm469, %v467, %v460
      %v476 = vsel %vm469, %v468, %v462
      %v477 = vsel %vm469, %v468, %v464
      %vm486 = vcmask 1043608
      %vm487 = vcmask 1047556
      %vm488 = vmor %vm487, %vm486
      %489 = vst.msk [vmem:[%s143] sm:$0xff] %vm488, %v470
      %vm490 = vcmask 707584
      %491 = vst.msk [vmem:[%s143 + $0x8] sm:$0xf] %vm490, %v471
      %492 = vst.msk [vmem:[%s143 + $0xc] sm:$0xff] %vm488, %v472
      %493 = vst.msk [vmem:[%s143 + $0x14] sm:$0xf] %vm490, %v473
      %494 = vst.msk [vmem:[%s143 + $0x18] sm:$0xff] %vm488, %v474
      %495 = vst.msk [vmem:[%s143 + $0x20] sm:$0xf] %vm490, %v475
      %496 = vst.msk [vmem:[%s143 + $0x24] sm:$0xff] %vm488, %v476
      %497 = vst.msk [vmem:[%s143 + $0x2c] sm:$0xf] %vm490, %v477
      %vm498 = vcmask 863928
      %499 = vst.msk [vmem:[%s143 + $0x8] sm:$0xf] %vm498, 0
      %500 = vst.msk [vmem:[%s143 + $0x14] sm:$0xf] %vm498, 0
      %501 = vst.msk [vmem:[%s143 + $0x20] sm:$0xf] %vm498, 0
      %502 = vst.msk [vmem:[%s143 + $0x2c] sm:$0xf] %vm498, 0
      %p503 = scmp.lt.s32.totalorder %s13, 1
      %s504 = scalar_select %p503, %s13, 1
      %s505 = smul.addr %s504, 12
      %s506 = smul.addr %s505, 4
      %s507 = scalar_lea.vmem %s2, %s506
      // Predicated region
      $region29: #{upsampler_forward.7} parent=27 // pred_check
        %p508 = pneg %p78
      $region30: #{upsampler_forward.7} parent=27 // pred_check_branch
        %510 = sbr.rel (%p508) target = $region32
      $region31: #{upsampler_forward.7} parent=27 // pred_region
        _
      $region32: #{upsampler_forward.7} parent=27 // pred_fallthru
        _
    $region28: #{upsampler_forward.7} parent=5 // pred_fallthru
      _
    %p511 = scmp.le.s32.totalorder 2, %s8
    // Predicated region
    $region33: #{upsampler_forward.7} parent=5 // pred_check
      %p512 = pneg %p511
    $region34: #{upsampler_forward.7} parent=5 // pred_check_branch
      %514 = sbr.rel (%p512) target = $region36
    $region35: #{upsampler_forward.7} parent=5 // pred_region
      %s515 = ssub.s32 %s8, 2
      // Predicated region
      $region37: #{upsampler_forward.7} parent=35 // pred_check
        %p516 = pneg %p84
      $region38: #{upsampler_forward.7} parent=35 // pred_check_branch
        %518 = sbr.rel (%p516) target = $region40
      $region39: #{upsampler_forward.7} parent=35 // pred_region
        %p519 = scmp.lt.s32.totalorder %s14, 1
        %s520 = scalar_select %p519, %s14, 1
        %s521 = smul.addr %s520, 12
        %s522 = smul.addr %s521, 4
        %s523 = scalar_lea.vmem %s2, %s522
      $region40: #{upsampler_forward.7} parent=35 // pred_fallthru
        _
    $region36: #{upsampler_forward.7} parent=5 // pred_fallthru
      _
  $region6: #{upsampler_forward.7} parent=0 // loop_footer
    %s12 = sadd.s32 1, %s8
  $region7: #{upsampler_forward.7} parent=0 // loop_footer_branch
    %7 = sbr.rel target = $region3
  $region8: #{upsampler_forward.7} parent=0 // loop_exit
    _

// kernel: upsampler_forward.6
$region0: #{upsampler_forward.6}
  #allocation0 [shape = 'u32[]', space=smem, size = 0x4, offset = 0x4, fixed_abs, tag = 'smem constant byte address 0x4 - core index']
  #allocation1 [shape = 'u32[144,128]{1,0:T(1,128)}', space=vmem, size = 0x12000, scoped, tag = 'internal scratch']
  #allocation2 [shape = 'f32[72,100]{1,0:T(8,128)}', space=vmem, size = 0x9000, scoped, tag = 'scratch operand']
  #allocation3 [shape = 'f32[32,122]{1,0:T(8,128)}', space=vmem, size = 0x4000, scoped, tag = 'scratch operand']
  #allocation4 [shape = 'f32[288,100]{1,0:T(8,128)}', space=vmem, size = 0x24000, scoped, tag = 'scratch operand']
  %s0 = inlined_call_operand.vmem [shape: bf16[2,8,122], index: 0, kind: input, shape index: {}]
  %s1 = inlined_call_operand.vmem [shape: bf16[32,72], index: 1, kind: input, shape index: {}]
  %s2 = inlined_call_operand.vmem [shape: bf16[32,288], index: 2, kind: input, shape index: {}]
  %s3 = inlined_call_operand.vmem [shape: f32[1,100], index: 3, kind: input, shape index: {}]
  %s4 = inlined_call_operand.vmem [shape: bf16[2,32,122], index: 4, kind: output, shape index: {}]
  %s5 = sld [smem:[#allocation0]]
  $region49: #{upsampler_forward.6} parent=0
    _
  %s7 = ssub.s32 1, %s5
  %s8 = scalar_select 0, %s7, %s5
  loop: start=0, step=1, limit=4
  $region2: #{upsampler_forward.6} parent=0 // loop_pre_header
    _
  $region3: #{upsampler_forward.6} parent=0 // loop_header
    %s10 = sphi 0, %s14
    %p11 = scmp.ge.s32.totalorder %s10, 4
    %s20 = sphi 0, %s22
    %s23 = sphi 0, %s20
    %s24 = sphi 0, %s23
    %s40 = sphi 0, %s24
    %s44 = sphi 0, %s44
    %s46 = sphi 0, %s44
    %s47 = sphi 0, %s46
    %s61 = sphi 0, %s47
    %s65 = sphi 0, %s65
    %s67 = sphi 0, %s65
    %s68 = sphi 0, %s67
    %s82 = sphi 0, %s68
    %s86 = sphi 0, %s86
    %s88 = sphi 0, %s86
    %s89 = sphi 0, %s88
    %s103 = sphi 0, %s89
    %s109 = sphi 0, %s111
    %s112 = sphi 0, %s109
    %s113 = sphi 0, %s112
    %s129 = sphi 0, %s113
  $region4: #{upsampler_forward.6} parent=0 // loop_header_branch
    %13 = sbr.rel (%p11) target = $region8
  $region5: #{upsampler_forward.6} parent=0 // loop_body
    %s15 = ssub.s32 %s10, 1
    %s16 = ssub.s32 %s10, 2
    %s17 = sadd.s32 %s10, 1
    %s18 = ssub.s32 %s10, %s17
    %p19 = scmp.eq.s32.totalorder %s18, 0
    %s21 = sadd.s32 %s20, 1
    %s22 = scalar_select %p19, %s20, %s21
    %p25 = pneg %p19
    %p26 = scmp.eq.s32.totalorder %s10, 1
    %p27 = por %p25, %p26
    %p28 = scmp.ne.s32.totalorder %s20, %s23
    %p29 = scmp.eq.s32.totalorder %s10, 0
    %p30 = por %p28, %p29
    %p31 = scmp.ne.s32.totalorder %s20, %s23
    %p32 = scmp.eq.s32.totalorder %s15, 1
    %p33 = por %p31, %p32
    %p34 = scmp.ne.s32.totalorder %s23, %s24
    %p35 = scmp.eq.s32.totalorder %s15, 0
    %p36 = por %p34, %p35
    %p37 = scmp.ne.s32.totalorder %s23, %s24
    %p38 = scmp.eq.s32.totalorder %s16, 1
    %p39 = por %p37, %p38
    %p41 = scmp.ne.s32.totalorder %s24, %s40
    %p42 = scmp.eq.s32.totalorder %s16, 0
    %p43 = por %p41, %p42
    %s45 = sadd.s32 %s44, 1
    %p48 = scmp.eq.s32.totalorder %s10, 1
    %p49 = scmp.ne.s32.totalorder %s44, %s46
    %p50 = scmp.eq.s32.totalorder %s10, 0
    %p51 = por %p49, %p50
    %p52 = scmp.ne.s32.totalorder %s44, %s46
    %p53 = scmp.eq.s32.totalorder %s15, 1
    %p54 = por %p52, %p53
    %p55 = scmp.ne.s32.totalorder %s46, %s47
    %p56 = scmp.eq.s32.totalorder %s15, 0
    %p57 = por %p55, %p56
    %p58 = scmp.ne.s32.totalorder %s46, %s47
    %p59 = scmp.eq.s32.totalorder %s16, 1
    %p60 = por %p58, %p59
    %p62 = scmp.ne.s32.totalorder %s47, %s61
    %p63 = scmp.eq.s32.totalorder %s16, 0
    %p64 = por %p62, %p63
    %s66 = sadd.s32 %s65, 1
    %p69 = scmp.eq.s32.totalorder %s10, 1
    %p70 = scmp.ne.s32.totalorder %s65, %s67
    %p71 = scmp.eq.s32.totalorder %s10, 0
    %p72 = por %p70, %p71
    %p73 = scmp.ne.s32.totalorder %s65, %s67
    %p74 = scmp.eq.s32.totalorder %s15, 1
    %p75 = por %p73, %p74
    %p76 = scmp.ne.s32.totalorder %s67, %s68
    %p77 = scmp.eq.s32.totalorder %s15, 0
    %p78 = por %p76, %p77
    %p79 = scmp.ne.s32.totalorder %s67, %s68
    %p80 = scmp.eq.s32.totalorder %s16, 1
    %p81 = por %p79, %p80
    %p83 = scmp.ne.s32.totalorder %s68, %s82
    %p84 = scmp.eq.s32.totalorder %s16, 0
    %p85 = por %p83, %p84
    %s87 = sadd.s32 %s86, 1
    %p90 = scmp.eq.s32.totalorder %s10, 1
    %p91 = scmp.ne.s32.totalorder %s86, %s88
    %p92 = scmp.eq.s32.totalorder %s10, 0
    %p93 = por %p91, %p92
    %p94 = scmp.ne.s32.totalorder %s86, %s88
    %p95 = scmp.eq.s32.totalorder %s15, 1
    %p96 = por %p94, %p95
    %p97 = scmp.ne.s32.totalorder %s88, %s89
    %p98 = scmp.eq.s32.totalorder %s15, 0
    %p99 = por %p97, %p98
    %p100 = scmp.ne.s32.totalorder %s88, %s89
    %p101 = scmp.eq.s32.totalorder %s16, 1
    %p102 = por %p100, %p101
    %p104 = scmp.ne.s32.totalorder %s89, %s103
    %p105 = scmp.eq.s32.totalorder %s16, 0
    %p106 = por %p104, %p105
    %s107 = ssub.s32 %s10, %s17
    %p108 = scmp.eq.s32.totalorder %s107, 0
    %s110 = sadd.s32 %s109, 1
    %s111 = scalar_select %p108, %s109, %s110
    %p114 = pneg %p108
    %p115 = scmp.eq.s32.totalorder %s10, 1
    %p116 = por %p114, %p115
    %p117 = scmp.ne.s32.totalorder %s109, %s112
    %p118 = scmp.eq.s32.totalorder %s10, 0
    %p119 = por %p117, %p118
    %p120 = scmp.ne.s32.totalorder %s109, %s112
    %p121 = scmp.eq.s32.totalorder %s15, 1
    %p122 = por %p120, %p121
    %p123 = scmp.ne.s32.totalorder %s112, %s113
    %p124 = scmp.eq.s32.totalorder %s15, 0
    %p125 = por %p123, %p124
    %p126 = scmp.ne.s32.totalorder %s112, %s113
    %p127 = scmp.eq.s32.totalorder %s16, 1
    %p128 = por %p126, %p127
    %p130 = scmp.ne.s32.totalorder %s113, %s129
    %p131 = scmp.eq.s32.totalorder %s16, 0
    %p132 = por %p130, %p131
    %p133 = scmp.le.s32.totalorder 1, %s10
    %p134 = scmp.lt.s32.totalorder %s10, 3
    %p135 = pnand %p133, %p134
    %p136 = pneg %p135
    // Predicated region
    $region9: #{upsampler_forward.6} parent=5 // pred_check
      _
    $region10: #{upsampler_forward.6} parent=5 // pred_check_branch
      %138 = sbr.rel (%p135) target = $region12
    $region11: #{upsampler_forward.6} parent=5 // pred_region
      %s139 = ssub.s32 %s10, 1
      // Predicated region
      $region13: #{upsampler_forward.6} parent=11 // pred_check
        %p140 = pneg %p57
      $region14: #{upsampler_forward.6} parent=11 // pred_check_branch
        %142 = sbr.rel (%p140) target = $region16
      $region15: #{upsampler_forward.6} parent=11 // pred_region
        _
      $region16: #{upsampler_forward.6} parent=11 // pred_fallthru
        _
      // Predicated region
      $region17: #{upsampler_forward.6} parent=11 // pred_check
        %p143 = pneg %p78
      $region18: #{upsampler_forward.6} parent=11 // pred_check_branch
        %145 = sbr.rel (%p143) target = $region20
      $region19: #{upsampler_forward.6} parent=11 // pred_region
        _
      $region20: #{upsampler_forward.6} parent=11 // pred_fallthru
        _
      // Predicated region
      $region21: #{upsampler_forward.6} parent=11 // pred_check
        %p146 = pneg %p99
      $region22: #{upsampler_forward.6} parent=11 // pred_check_branch
        %148 = sbr.rel (%p146) target = $region24
      $region23: #{upsampler_forward.6} parent=11 // pred_region
        _
      $region24: #{upsampler_forward.6} parent=11 // pred_fallthru
        _
    $region12: #{upsampler_forward.6} parent=5 // pred_fallthru
      _
    %p149 = scmp.lt.s32.totalorder %s10, 2
    // Predicated region
    $region25: #{upsampler_forward.6} parent=5 // pred_check
      %p150 = pneg %p149
    $region26: #{upsampler_forward.6} parent=5 // pred_check_branch
      %152 = sbr.rel (%p150) target = $region28
    $region27: #{upsampler_forward.6} parent=5 // pred_region
      // Predicated region
      $region29: #{upsampler_forward.6} parent=27 // pred_check
        %p153 = pneg %p30
      $region30: #{upsampler_forward.6} parent=27 // pred_check_branch
        %155 = sbr.rel (%p153) target = $region32
      $region31: #{upsampler_forward.6} parent=27 // pred_region
        %p156 = scmp.lt.s32.totalorder %s10, 1
        %s157 = scalar_select %p156, %s10, 1
        %s158 = smul.addr %s157, 4
        %s159 = scalar_lea.vmem %s0, %s158
      $region32: #{upsampler_forward.6} parent=27 // pred_fallthru
        _
    $region28: #{upsampler_forward.6} parent=5 // pred_fallthru
      _
    %p160 = scmp.le.s32.totalorder 1, %s10
    %p161 = scmp.lt.s32.totalorder %s10, 3
    %p162 = pnand %p160, %p161
    %p163 = pneg %p162
    // Predicated region
    $region33: #{upsampler_forward.6} parent=5 // pred_check
      _
    $region34: #{upsampler_forward.6} parent=5 // pred_check_branch
      %165 = sbr.rel (%p162) target = $region36
    $region35: #{upsampler_forward.6} parent=5 // pred_region
      %s166 = ssub.s32 %s10, 1
      %p167 = scmp.lt.s32.totalorder %s15, 1
      %s168 = scalar_select %p167, %s15, 1
      %s169 = smul.addr %s168, 4
      %s170 = scalar_lea.vmem %s0, %s169
      %p171 = pneg %p36
      %p172 = pneg %p33
      %p173 = pneg %p57
      %p174 = pneg %p54
      %p175 = pneg %p78
      %p176 = pneg %p75
      %p177 = pneg %p99
      %p178 = pneg %p96
      %p179 = pneg %p125
      %p180 = pneg %p122
      %p181 = scmp.lt.s32.totalorder %s15, 1
      %s182 = scalar_select %p181, %s15, 1
      %s183 = smul.addr %s182, 4
      %s184 = smul.addr %s183, 4
      %s185 = scalar_lea.vmem %s4, %s184
      %p186 = scmp.lt.s32.totalorder %s15, 1
      %s187 = scalar_select %p186, %s15, 1
      %s188 = smul.addr %s187, 4
      %s189 = scalar_lea.vmem %s0, %s188
      %p190 = scmp.lt.s32.totalorder %s15, 1
      %s191 = scalar_select %p190, %s15, 1
      %s192 = smul.addr %s191, 4
      %s193 = smul.addr %s192, 4
      %s194 = scalar_lea.vmem %s4, %s193
      %v196 = vld [vmem:[%s3] sm:$0x1]
      %v197 = vld [vmem:[%s189] sm:$0xf]
      %v198 = vunpack.c.l.bf16 %v197
      %vm199 = vcmask 818176
      %200 = vst.msk [vmem:[#allocation2] sm:$0xff] %vm199, %v198
      %v201 = vld [vmem:[%s189] sm:$0xf]
      %v202 = vunpack.c.l.bf16 %v201
      %204 = vrot.lane.b32.xlu0 %v202, 127
      %v205 = vpop.permute.xlu0 %204
      %207 = vst.msk [vmem:[#allocation2 + $0x8] sm:$0xff] %vm199, %v205
      %v208 = vld [vmem:[%s189] sm:$0xf]
      %v209 = vunpack.c.l.bf16 %v208
      %211 = vrot.lane.b32.xlu0 %v209, 126
      %v212 = vpop.permute.xlu0 %211
      %214 = vst.msk [vmem:[#allocation2 + $0x10] sm:$0xff] %vm199, %v212
      %v215 = vld [vmem:[%s189] sm:$0xf]
      %v216 = vunpack.c.l.bf16 %v215
      %218 = vrot.lane.b32.xlu0 %v216, 118
      %v219 = vpop.permute.xlu0 %218
      %221 = vst.msk [vmem:[#allocation2 + $0x18] sm:$0xff] %vm199, %v219
      %v222 = vld [vmem:[%s189] sm:$0xf]
      %v223 = vunpack.c.l.bf16 %v222
      %225 = vrot.lane.b32.xlu0 %v223, 117
      %v226 = vpop.permute.xlu0 %225
      %228 = vst.msk [vmem:[#allocation2 + $0x20] sm:$0xff] %vm199, %v226
      %v229 = vld [vmem:[%s189] sm:$0xf]
      %v230 = vunpack.c.l.bf16 %v229
      %232 = vrot.lane.b32.xlu0 %v230, 116
      %v233 = vpop.permute.xlu0 %232
      %235 = vst.msk [vmem:[#allocation2 + $0x28] sm:$0xff] %vm199, %v233
      %v236 = vld [vmem:[%s189] sm:$0xf]
      %v237 = vunpack.c.l.bf16 %v236
      %239 = vrot.lane.b32.xlu0 %v237, 108
      %v240 = vpop.permute.xlu0 %239
      %242 = vst.msk [vmem:[#allocation2 + $0x30] sm:$0xff] %vm199, %v240
      %v243 = vld [vmem:[%s189] sm:$0xf]
      %v244 = vunpack.c.l.bf16 %v243
      %246 = vrot.lane.b32.xlu0 %v244, 107
      %v247 = vpop.permute.xlu0 %246
      %249 = vst.msk [vmem:[#allocation2 + $0x38] sm:$0xff] %vm199, %v247
      %v250 = vld [vmem:[%s189] sm:$0xf]
      %v251 = vunpack.c.l.bf16 %v250
      %253 = vrot.lane.b32.xlu0 %v251, 106
      %v254 = vpop.permute.xlu0 %253
      %256 = vst.msk [vmem:[#allocation2 + $0x40] sm:$0xff] %vm199, %v254
      %v257 = vld [vmem:[%s1] sm:$0xf]
      %v258 = vld [vmem:[%s1 + $0x4] sm:$0xf]
      %v259 = vld [vmem:[%s1 + $0x8] sm:$0xf]
      %v260 = vld [vmem:[%s1 + $0xc] sm:$0xf]
      %v261 = vld [vmem:[#allocation2] sm:$0xff]
      %v262 = vld [vmem:[#allocation2 + $0x8] sm:$0xff]
      %v263 = vld [vmem:[#allocation2 + $0x10] sm:$0xff]
      %v264 = vld [vmem:[#allocation2 + $0x18] sm:$0xff]
      %v265 = vld [vmem:[#allocation2 + $0x20] sm:$0xff]
      %v266 = vld [vmem:[#allocation2 + $0x28] sm:$0xff]
      %v267 = vld [vmem:[#allocation2 + $0x30] sm:$0xff]
      %v268 = vld [vmem:[#allocation2 + $0x38] sm:$0xff]
      %v269 = vld [vmem:[#allocation2 + $0x40] sm:$0xff]
      %v270 = vpack.c.bf16 %v262, %v261
      %v271 = vpack.c.bf16 %v264, %v263
      %v272 = vpack.c.bf16 %v266, %v265
      %v273 = vpack.c.bf16 %v268, %v267
      %v274 = vpack.c.bf16 %v269, %v269
      %v279 = vunpack.c.l.b16 %v257
      %v280 = vunpack.c.l.b16 %v258
      %v281 = vunpack.c.l.b16 %v259
      %v282 = vunpack.c.l.b16 %v260
      %v283 = vpack.c.b16 %v280, %v279
      %v284 = vpack.c.b16 %v282, %v281
      %vm285 = vcmask 588800
      %v287 = vsel %vm285, %v283, 0
      %v290 = vsel %vm285, %v284, 0
      %vm292 = vcmask 1043456
      %v294 = vsel %vm292, %v274, 0
      %296 = vmatprep.subr.bf16.mxu0 0
      %297 = vmatpush1.bf16.msra.mxu0 0
      %298 = vmatprep.subr.bf16.mxu0 0
      %299 = vmatpush1.bf16.msra.mxu0 0
      %300 = vmatprep.subr.bf16.mxu0 0
      %301 = vmatpush1.bf16.msra.mxu0 0
      %302 = vmatprep.subr.bf16.mxu0 0
      %303 = vmatpush1.bf16.msra.mxu0 %v294
      %304 = vmatprep.subr.bf16.mxu0 0
      %305 = vmatpush1.bf16.msra.mxu0 %v273
      %306 = vmatprep.subr.bf16.mxu0 0
      %307 = vmatpush1.bf16.msra.mxu0 %v272
      %308 = vmatprep.subr.bf16.mxu0 0
      %309 = vmatpush1.bf16.msra.mxu0 %v271
      %310 = vmatprep.subr.bf16.mxu0 0
      %311 = vmatpush1.bf16.msra.mxu0 %v270
      %312 = vmatprep.subr.bf16.mxu0 0
      %313 = vmatpush2.bf16.msra.mxu0 0
      %314 = vmatprep.subr.bf16.mxu0 0
      %315 = vmatpush2.bf16.msra.mxu0 0
      %316 = vmatprep.subr.bf16.mxu0 0
      %317 = vmatpush2.bf16.msra.mxu0 0
      %318 = vmatprep.subr.bf16.mxu0 0
      %319 = vmatpush2.bf16.msra.mxu0 0
      %320 = vmatprep.subr.bf16.mxu0 0
      %321 = vmatpush2.bf16.msra.mxu0 0
      %322 = vmatprep.subr.bf16.mxu0 0
      %323 = vmatpush2.bf16.msra.mxu0 0
      %324 = vmatprep.subr.bf16.mxu0 0
      %325 = vmatpush2.bf16.msra.mxu0 0
      %326 = vmatprep.subr.bf16.mxu0 0
      %327 = vmatpush2.bf16.msra.mxu0 0
      %328 = vmatprep.mubr.bf16.mxu0 0
      %329 = vmatmul.mubr.bf16.gmra.mxu0 %v287
      %v330 = vpop.f32.mrf.mxu0
      %v331 = vadd.f32 0.0, %v330
      %v332 = vpop.f32.mrf.mxu0
      %v333 = vpop.f32.mrf.mxu0
      %v334 = vadd.f32 0.0, %v333
      %v335 = vpop.f32.mrf.mxu0
      %336 = vmatprep.mubr.bf16.mxu0 0
      %337 = vmatmul.mubr.bf16.gmra.mxu0 %v290
      %v338 = vpop.f32.mrf.mxu0
      %v339 = vadd.f32 0.0, %v338
      %v340 = vpop.f32.mrf.mxu0
      %v341 = vpop.f32.mrf.mxu0
      %v342 = vadd.f32 0.0, %v341
      %v343 = vpop.f32.mrf.mxu0
      %344 = vdwg.mxu0
      %v346 = vlaneseq
      %v347 = vshrl.u32 %v346, 7
      %v348 = vsub.s32 0, %v347
      %v349 = vrot.slane %v196, %v348
      %v351 = vmul.f32 %v331, %v349
      %v352 = vmul.f32 %v334, %v349
      %v353 = vmul.f32 %v339, %v349
      %v354 = vmul.f32 %v342, %v349
      %v355 = vsel %vm199, %v351, 0.0
      %356 = vadd.xlane.f32.xlu0 %v355
      %v357 = vpop.xlane.xlu0 %356
      %v358 = vsel %vm199, %v352, 0.0
      %359 = vadd.xlane.f32.xlu0 %v358
      %v360 = vpop.xlane.xlu0 %359
      %v361 = vsel %vm199, %v353, 0.0
      %362 = vadd.xlane.f32.xlu0 %v361
      %v363 = vpop.xlane.xlu0 %362
      %v364 = vsel %vm199, %v354, 0.0
      %365 = vadd.xlane.f32.xlu0 %v364
      %v366 = vpop.xlane.xlu0 %365
      %v367 = vmul.f32 %v357, 0.015625
      %v368 = vmul.f32 %v360, 0.015625
      %v369 = vmul.f32 %v363, 0.015625
      %v370 = vmul.f32 %v366, 0.015625
      %v371 = vsub.f32 %v331, %v367
      %v372 = vsub.f32 %v334, %v368
      %v373 = vsub.f32 %v339, %v369
      %v374 = vsub.f32 %v342, %v370
      %v375 = vmul.f32 %v371, %v349
      %v376 = vmul.f32 %v372, %v349
      %v377 = vmul.f32 %v373, %v349
      %v378 = vmul.f32 %v374, %v349
      %v379 = vmul.f32 %v375, %v375
      %v380 = vmul.f32 %v376, %v376
      %v381 = vmul.f32 %v377, %v377
      %v382 = vmul.f32 %v378, %v378
      %v383 = vsel %vm199, %v379, 0.0
      %384 = vadd.xlane.f32.xlu0 %v383
      %v385 = vpop.xlane.xlu0 %384
      %v386 = vsel %vm199, %v380, 0.0
      %387 = vadd.xlane.f32.xlu0 %v386
      %v388 = vpop.xlane.xlu0 %387
      %v389 = vsel %vm199, %v381, 0.0
      %390 = vadd.xlane.f32.xlu0 %v389
      %v391 = vpop.xlane.xlu0 %390
      %v392 = vsel %vm199, %v382, 0.0
      %393 = vadd.xlane.f32.xlu0 %v392
      %v394 = vpop.xlane.xlu0 %393
      %v395 = vmul.f32 %v385, 0.015625
      %v396 = vmul.f32 %v388, 0.015625
      %v397 = vmul.f32 %v391, 0.015625
      %v398 = vmul.f32 %v394, 0.015625
      %v399 = vadd.f32 %v395, 1e-05
      %v400 = vadd.f32 %v396, 1e-05
      %v401 = vadd.f32 %v397, 1e-05
      %v402 = vadd.f32 %v398, 1e-05
      %v403 = vrsqrt.pop %v399
      %v404 = vrsqrt.pop %v400
      %v405 = vrsqrt.pop %v401
      %v406 = vrsqrt.pop %v402
      %v407 = vmul.f32 %v375, %v403
      %v408 = vmul.f32 %v376, %v404
      %v409 = vmul.f32 %v377, %v405
      %v410 = vmul.f32 %v378, %v406
      %v411 = vmax.f32 %v407, 0.0
      %v412 = vmax.f32 %v408, 0.0
      %v413 = vmax.f32 %v409, 0.0
      %v414 = vmax.f32 %v410, 0.0
      %vm415 = vcmask 89088
      %416 = vst.msk [vmem:[#allocation3] sm:$0xff] %vm415, 0.0
      %417 = vst.msk [vmem:[#allocation3 + $0x8] sm:$0xff] %vm415, 0.0
      %418 = vst.msk [vmem:[#allocation3 + $0x10] sm:$0xff] %vm415, 0.0
      %419 = vst.msk [vmem:[#allocation3 + $0x18] sm:$0xff] %vm415, 0.0
      %424 = vrot.lane.b32.xlu0 %v411, 11
      %v425 = vpop.permute.xlu0 %424
      %426 = vrot.lane.b32.xlu0 %v412, 11
      %v427 = vpop.permute.xlu0 %426
      %428 = vrot.lane.b32.xlu0 %v413, 11
      %v429 = vpop.permute.xlu0 %428
      %430 = vrot.lane.b32.xlu0 %v414, 11
      %v431 = vpop.permute.xlu0 %430
      %vm436 = vcmask 908376
      %437 = vst.msk [vmem:[#allocation3] sm:$0xff] %vm436, %v425
      %438 = vst.msk [vmem:[#allocation3 + $0x8] sm:$0xff] %vm436, %v427
      %439 = vst.msk [vmem:[#allocation3 + $0x10] sm:$0xff] %vm436, %v429
      %440 = vst.msk [vmem:[#allocation3 + $0x18] sm:$0xff] %vm436, %v431
      %vm441 = vcmask 999288
      %442 = vst.msk [vmem:[#allocation3] sm:$0xff] %vm441, 0.0
      %443 = vst.msk [vmem:[#allocation3 + $0x8] sm:$0xff] %vm441, 0.0
      %444 = vst.msk [vmem:[#allocation3 + $0x10] sm:$0xff] %vm441, 0.0
      %445 = vst.msk [vmem:[#allocation3 + $0x18] sm:$0xff] %vm441, 0.0
      %v446 = vld [vmem:[#allocation3] sm:$0xff]
      %v447 = vld [vmem:[#allocation3 + $0x8] sm:$0xff]
      %v448 = vld [vmem:[#allocation3 + $0x10] sm:$0xff]
      %v449 = vld [vmem:[#allocation3 + $0x18] sm:$0xff]
      %450 = vst.msk [vmem:[#allocation4] sm:$0xff] %vm199, %v446
      %451 = vst.msk [vmem:[#allocation4 + $0x8] sm:$0xff] %vm199, %v447
      %452 = vst.msk [vmem:[#allocation4 + $0x10] sm:$0xff] %vm199, %v448
      %453 = vst.msk [vmem:[#allocation4 + $0x18] sm:$0xff] %vm199, %v449
      %v454 = vld [vmem:[#allocation3] sm:$0xff]
      %v455 = vld [vmem:[#allocation3 + $0x8] sm:$0xff]
      %v456 = vld [vmem:[#allocation3 + $0x10] sm:$0xff]
      %v457 = vld [vmem:[#allocation3 + $0x18] sm:$0xff]
      %462 = vrot.lane.b32.xlu0 %v454, 127
      %v463 = vpop.permute.xlu0 %462
      %464 = vrot.lane.b32.xlu0 %v455, 127
      %v465 = vpop.permute.xlu0 %464
      %466 = vrot.lane.b32.xlu0 %v456, 127
      %v467 = vpop.permute.xlu0 %466
      %468 = vrot.lane.b32.xlu0 %v457, 127
      %v469 = vpop.permute.xlu0 %468
      %474 = vst.msk [vmem:[#allocation4 + $0x20] sm:$0xff] %vm199, %v463
      %475 = vst.msk [vmem:[#allocation4 + $0x28] sm:$0xff] %vm199, %v465
      %476 = vst.msk [vmem:[#allocation4 + $0x30] sm:$0xff] %vm199, %v467
      %477 = vst.msk [vmem:[#allocation4 + $0x38] sm:$0xff] %vm199, %v469
      %v478 = vld [vmem:[#allocation3] sm:$0xff]
      %v479 = vld [vmem:[#allocation3 + $0x8] sm:$0xff]
      %v480 = vld [vmem:[#allocation3 + $0x10] sm:$0xff]
      %v481 = vld [vmem:[#allocation3 + $0x18] sm:$0xff]
      %486 = vrot.lane.b32.xlu0 %v478, 126
      %v487 = vpop.permute.xlu0 %486
      %488 = vrot.lane.b32.xlu0 %v479, 126
      %v489 = vpop.permute.xlu0 %488
      %490 = vrot.lane.b32.xlu0 %v480, 126
      %v491 = vpop.permute.xlu0 %490
      %492 = vrot.lane.b32.xlu0 %v481, 126
      %v493 = vpop.permute.xlu0 %492
      %498 = vst.msk [vmem:[#allocation4 + $0x40] sm:$0xff] %vm199, %v487
      %499 = vst.msk [vmem:[#allocation4 + $0x48] sm:$0xff] %vm199, %v489
      %500 = vst.msk [vmem:[#allocation4 + $0x50] sm:$0xff] %vm199, %v491
      %501 = vst.msk [vmem:[#allocation4 + $0x58] sm:$0xff] %vm199, %v493
      %v502 = vld [vmem:[#allocation3] sm:$0xff]
      %v503 = vld [vmem:[#allocation3 + $0x8] sm:$0xff]
      %v504 = vld [vmem:[#allocation3 + $0x10] sm:$0xff]
      %v505 = vld [vmem:[#allocation3 + $0x18] sm:$0xff]
      %510 = vrot.lane.b32.xlu0 %v502, 118
      %v511 = vpop.permute.xlu0 %510
      %512 = vrot.lane.b32.xlu0 %v503, 118
      %v513 = vpop.permute.xlu0 %512
      %514 = vrot.lane.b32.xlu0 %v504, 118
      %v515 = vpop.permute.xlu0 %514
      %516 = vrot.lane.b32.xlu0 %v505, 118
      %v517 = vpop.permute.xlu0 %516
      %522 = vst.msk [vmem:[#allocation4 + $0x60] sm:$0xff] %vm199, %v511
      %523 = vst.msk [vmem:[#allocation4 + $0x68] sm:$0xff] %vm199, %v513
      %524 = vst.msk [vmem:[#allocation4 + $0x70] sm:$0xff] %vm199, %v515
      %525 = vst.msk [vmem:[#allocation4 + $0x78] sm:$0xff] %vm199, %v517
      %v526 = vld [vmem:[#allocation3] sm:$0xff]
      %v527 = vld [vmem:[#allocation3 + $0x8] sm:$0xff]
      %v528 = vld [vmem:[#allocation3 + $0x10] sm:$0xff]
      %v529 = vld [vmem:[#allocation3 + $0x18] sm:$0xff]
      %534 = vrot.lane.b32.xlu0 %v526, 117
      %v535 = vpop.permute.xlu0 %534
      %536 = vrot.lane.b32.xlu0 %v527, 117
      %v537 = vpop.permute.xlu0 %536
      %538 = vrot.lane.b32.xlu0 %v528, 117
      %v539 = vpop.permute.xlu0 %538
      %540 = vrot.lane.b32.xlu0 %v529, 117
      %v541 = vpop.permute.xlu0 %540
      %546 = vst.msk [vmem:[#allocation4 + $0x80] sm:$0xff] %vm199, %v535
      %547 = vst.msk [vmem:[#allocation4 + $0x88] sm:$0xff] %vm199, %v537
      %548 = vst.msk [vmem:[#allocation4 + $0x90] sm:$0xff] %vm199, %v539
      %549 = vst.msk [vmem:[#allocation4 + $0x98] sm:$0xff] %vm199, %v541
      %v550 = vld [vmem:[#allocation3] sm:$0xff]
      %v551 = vld [vmem:[#allocation3 + $0x8] sm:$0xff]
      %v552 = vld [vmem:[#allocation3 + $0x10] sm:$0xff]
      %v553 = vld [vmem:[#allocation3 + $0x18] sm:$0xff]
      %558 = vrot.lane.b32.xlu0 %v550, 116
      %v559 = vpop.permute.xlu0 %558
      %560 = vrot.lane.b32.xlu0 %v551, 116
      %v561 = vpop.permute.xlu0 %560
      %562 = vrot.lane.b32.xlu0 %v552, 116
      %v563 = vpop.permute.xlu0 %562
      %564 = vrot.lane.b32.xlu0 %v553, 116
      %v565 = vpop.permute.xlu0 %564
      %570 = vst.msk [vmem:[#allocation4 + $0xa0] sm:$0xff] %vm199, %v559
      %571 = vst.msk [vmem:[#allocation4 + $0xa8] sm:$0xff] %vm199, %v561
      %572 = vst.msk [vmem:[#allocation4 + $0xb0] sm:$0xff] %vm199, %v563
      %573 = vst.msk [vmem:[#allocation4 + $0xb8] sm:$0xff] %vm199, %v565
      %v574 = vld [vmem:[#allocation3] sm:$0xff]
      %v575 = vld [vmem:[#allocation3 + $0x8] sm:$0xff]
      %v576 = vld [vmem:[#allocation3 + $0x10] sm:$0xff]
      %v577 = vld [vmem:[#allocation3 + $0x18] sm:$0xff]
      %582 = vrot.lane.b32.xlu0 %v574, 108
      %v583 = vpop.permute.xlu0 %582
      %584 = vrot.lane.b32.xlu0 %v575, 108
      %v585 = vpop.permute.xlu0 %584
      %586 = vrot.lane.b32.xlu0 %v576, 108
      %v587 = vpop.permute.xlu0 %586
      %588 = vrot.lane.b32.xlu0 %v577, 108
      %v589 = vpop.permute.xlu0 %588
      %594 = vst.msk [vmem:[#allocation4 + $0xc0] sm:$0xff] %vm199, %v583
      %595 = vst.msk [vmem:[#allocation4 + $0xc8] sm:$0xff] %vm199, %v585
      %596 = vst.msk [vmem:[#allocation4 + $0xd0] sm:$0xff] %vm199, %v587
      %597 = vst.msk [vmem:[#allocation4 + $0xd8] sm:$0xff] %vm199, %v589
      %v598 = vld [vmem:[#allocation3] sm:$0xff]
      %v599 = vld [vmem:[#allocation3 + $0x8] sm:$0xff]
      %v600 = vld [vmem:[#allocation3 + $0x10] sm:$0xff]
      %v601 = vld [vmem:[#allocation3 + $0x18] sm:$0xff]
      %606 = vrot.lane.b32.xlu0 %v598, 107
      %v607 = vpop.permute.xlu0 %606
      %608 = vrot.lane.b32.xlu0 %v599, 107
      %v609 = vpop.permute.xlu0 %608
      %610 = vrot.lane.b32.xlu0 %v600, 107
      %v611 = vpop.permute.xlu0 %610
      %612 = vrot.lane.b32.xlu0 %v601, 107
      %v613 = vpop.permute.xlu0 %612
      %618 = vst.msk [vmem:[#allocation4 + $0xe0] sm:$0xff] %vm199, %v607
      %619 = vst.msk [vmem:[#allocation4 + $0xe8] sm:$0xff] %vm199, %v609
      %620 = vst.msk [vmem:[#allocation4 + $0xf0] sm:$0xff] %vm199, %v611
      %621 = vst.msk [vmem:[#allocation4 + $0xf8] sm:$0xff] %vm199, %v613
      %v622 = vld [vmem:[#allocation3] sm:$0xff]
      %v623 = vld [vmem:[#allocation3 + $0x8] sm:$0xff]
      %v624 = vld [vmem:[#allocation3 + $0x10] sm:$0xff]
      %v625 = vld [vmem:[#allocation3 + $0x18] sm:$0xff]
      %630 = vrot.lane.b32.xlu0 %v622, 106
      %v631 = vpop.permute.xlu0 %630
      %632 = vrot.lane.b32.xlu0 %v623, 106
      %v633 = vpop.permute.xlu0 %632
      %634 = vrot.lane.b32.xlu0 %v624, 106
      %v635 = vpop.permute.xlu0 %634
      %636 = vrot.lane.b32.xlu0 %v625, 106
      %v637 = vpop.permute.xlu0 %636
      %642 = vst.msk [vmem:[#allocation4 + $0x100] sm:$0xff] %vm199, %v631
      %643 = vst.msk [vmem:[#allocation4 + $0x108] sm:$0xff] %vm199, %v633
      %644 = vst.msk [vmem:[#allocation4 + $0x110] sm:$0xff] %vm199, %v635
      %645 = vst.msk [vmem:[#allocation4 + $0x118] sm:$0xff] %vm199, %v637
      %v646 = vld [vmem:[%s2] sm:$0xff]
      %v647 = vld [vmem:[%s2 + $0x8] sm:$0xf]
      %v648 = vld [vmem:[%s2 + $0xc] sm:$0xff]
      %v649 = vld [vmem:[%s2 + $0x14] sm:$0xf]
      %v650 = vld [vmem:[%s2 + $0x18] sm:$0xff]
      %v651 = vld [vmem:[%s2 + $0x20] sm:$0xf]
      %v652 = vld [vmem:[%s2 + $0x24] sm:$0xff]
      %v653 = vld [vmem:[%s2 + $0x2c] sm:$0xf]
      %v654 = vld [vmem:[#allocation4] sm:$0xff]
      %v655 = vld [vmem:[#allocation4 + $0x8] sm:$0xff]
      %v656 = vld [vmem:[#allocation4 + $0x10] sm:$0xff]
      %v657 = vld [vmem:[#allocation4 + $0x18] sm:$0xff]
      %v658 = vld [vmem:[#allocation4 + $0x20] sm:$0xff]
      %v659 = vld [vmem:[#allocation4 + $0x28] sm:$0xff]
      %v660 = vld [vmem:[#allocation4 + $0x30] sm:$0xff]
      %v661 = vld [vmem:[#allocation4 + $0x38] sm:$0xff]
      %v662 = vld [vmem:[#allocation4 + $0x40] sm:$0xff]
      %v663 = vld [vmem:[#allocation4 + $0x48] sm:$0xff]
      %v664 = vld [vmem:[#allocation4 + $0x50] sm:$0xff]
      %v665 = vld [vmem:[#allocation4 + $0x58] sm:$0xff]
      %v666 = vld [vmem:[#allocation4 + $0x60] sm:$0xff]
      %v667 = vld [vmem:[#allocation4 + $0x68] sm:$0xff]
      %v668 = vld [vmem:[#allocation4 + $0x70] sm:$0xff]
      %v669 = vld [vmem:[#allocation4 + $0x78] sm:$0xff]
      %v670 = vld [vmem:[#allocation4 + $0x80] sm:$0xff]
      %v671 = vld [vmem:[#allocation4 + $0x88] sm:$0xff]
      %v672 = vld [vmem:[#allocation4 + $0x90] sm:$0xff]
      %v673 = vld [vmem:[#allocation4 + $0x98] sm:$0xff]
      %v674 = vld [vmem:[#allocation4 + $0xa0] sm:$0xff]
      %v675 = vld [vmem:[#allocation4 + $0xa8] sm:$0xff]
      %v676 = vld [vmem:[#allocation4 + $0xb0] sm:$0xff]
      %v677 = vld [vmem:[#allocation4 + $0xb8] sm:$0xff]
      %v678 = vld [vmem:[#allocation4 + $0xc0] sm:$0xff]
      %v679 = vld [vmem:[#allocation4 + $0xc8] sm:$0xff]
      %v680 = vld [vmem:[#allocation4 + $0xd0] sm:$0xff]
      %v681 = vld [vmem:[#allocation4 + $0xd8] sm:$0xff]
      %v682 = vld [vmem:[#allocation4 + $0xe0] sm:$0xff]
      %v683 = vld [vmem:[#allocation4 + $0xe8] sm:$0xff]
      %v684 = vld [vmem:[#allocation4 + $0xf0] sm:$0xff]
      %v685 = vld [vmem:[#allocation4 + $0xf8] sm:$0xff]
      %v686 = vld [vmem:[#allocation4 + $0x100] sm:$0xff]
      %v687 = vld [vmem:[#allocation4 + $0x108] sm:$0xff]
      %v688 = vld [vmem:[#allocation4 + $0x110] sm:$0xff]
      %v689 = vld [vmem:[#allocation4 + $0x118] sm:$0xff]
      %v690 = vpack.c.bf16 %v655, %v654
      %v691 = vpack.c.bf16 %v657, %v656
      %v692 = vpack.c.bf16 %v659, %v658
      %v693 = vpack.c.bf16 %v661, %v660
      %v694 = vpack.c.bf16 %v663, %v662
      %v695 = vpack.c.bf16 %v665, %v664
      %v696 = vpack.c.bf16 %v667, %v666
      %v697 = vpack.c.bf16 %v669, %v668
      %v698 = vpack.c.bf16 %v671, %v670
      %v699 = vpack.c.bf16 %v673, %v672
      %v700 = vpack.c.bf16 %v675, %v674
      %v701 = vpack.c.bf16 %v677, %v676
      %v702 = vpack.c.bf16 %v679, %v678
      %v703 = vpack.c.bf16 %v681, %v680
      %v704 = vpack.c.bf16 %v683, %v682
      %v705 = vpack.c.bf16 %v685, %v684
      %v706 = vpack.c.bf16 %v687, %v686
      %v707 = vpack.c.bf16 %v689, %v688
      %v716 = vunpack.c.l.b16 %v646
      %v717 = vunpack.c.h.b16 %v646
      %v718 = vunpack.c.l.b16 %v647
      %v719 = vunpack.c.l.b16 %v648
      %v720 = vunpack.c.h.b16 %v648
      %v721 = vunpack.c.l.b16 %v649
      %v722 = vunpack.c.l.b16 %v650
      %v723 = vunpack.c.h.b16 %v650
      %v724 = vunpack.c.l.b16 %v651
      %v725 = vunpack.c.l.b16 %v652
      %v726 = vunpack.c.h.b16 %v652
      %v727 = vunpack.c.l.b16 %v653
      %v728 = vpack.c.b16 %v719, %v716
      %v729 = vpack.c.b16 %v720, %v717
      %v730 = vpack.c.b16 %v721, %v718
      %v731 = vpack.c.b16 %v725, %v722
      %v732 = vpack.c.b16 %v726, %v723
      %v733 = vpack.c.b16 %v727, %v724
      %vm738 = vcmask 261120
      %v740 = vsel %vm738, %v730, 0
      %v743 = vsel %vm738, %v733, 0
      %745 = vmatprep.subr.bf16.mxu0 0
      %746 = vmatpush1.bf16.msra.mxu0 %v697
      %747 = vmatprep.subr.bf16.mxu0 0
      %748 = vmatpush1.bf16.msra.mxu0 %v696
      %749 = vmatprep.subr.bf16.mxu0 0
      %750 = vmatpush1.bf16.msra.mxu0 %v695
      %751 = vmatprep.subr.bf16.mxu0 0
      %752 = vmatpush1.bf16.msra.mxu0 %v694
      %753 = vmatprep.subr.bf16.mxu0 0
      %754 = vmatpush1.bf16.msra.mxu0 %v693
      %755 = vmatprep.subr.bf16.mxu0 0
      %756 = vmatpush1.bf16.msra.mxu0 %v692
      %757 = vmatprep.subr.bf16.mxu0 0
      %758 = vmatpush1.bf16.msra.mxu0 %v691
      %759 = vmatprep.subr.bf16.mxu0 0
      %760 = vmatpush1.bf16.msra.mxu0 %v690
      %761 = vmatprep.subr.bf16.mxu0 0
      %762 = vmatpush2.bf16.msra.mxu0 %v705
      %763 = vmatprep.subr.bf16.mxu0 0
      %764 = vmatpush2.bf16.msra.mxu0 %v704
      %765 = vmatprep.subr.bf16.mxu0 0
      %766 = vmatpush2.bf16.msra.mxu0 %v703
      %767 = vmatprep.subr.bf16.mxu0 0
      %768 = vmatpush2.bf16.msra.mxu0 %v702
      %769 = vmatprep.subr.bf16.mxu0 0
      %770 = vmatpush2.bf16.msra.mxu0 %v701
      %771 = vmatprep.subr.bf16.mxu0 0
      %772 = vmatpush2.bf16.msra.mxu0 %v700
      %773 = vmatprep.subr.bf16.mxu0 0
      %774 = vmatpush2.bf16.msra.mxu0 %v699
      %775 = vmatprep.subr.bf16.mxu0 0
      %776 = vmatpush2.bf16.msra.mxu0 %v698
      %777 = vmatprep.mubr.bf16.mxu0 %v729
      %778 = vmatmul.mubr.bf16.gmra.mxu0 %v728
      %v779 = vpop.f32.mrf.mxu0
      %v780 = vadd.f32 0.0, %v779
      %v781 = vpop.f32.mrf.mxu0
      %v782 = vpop.f32.mrf.mxu0
      %v783 = vadd.f32 0.0, %v782
      %v784 = vpop.f32.mrf.mxu0
      %785 = vmatprep.mubr.bf16.mxu0 %v732
      %786 = vmatmul.mubr.bf16.gmra.mxu0 %v731
      %v787 = vpop.f32.mrf.mxu0
      %v788 = vadd.f32 0.0, %v787
      %v789 = vpop.f32.mrf.mxu0
      %v790 = vpop.f32.mrf.mxu0
      %v791 = vadd.f32 0.0, %v790
      %v792 = vpop.f32.mrf.mxu0
      %793 = vdwg.mxu0
      %794 = vmatprep.subr.bf16.mxu0 0
      %795 = vmatpush1.bf16.msra.mxu0 0
      %796 = vmatprep.subr.bf16.mxu0 0
      %797 = vmatpush1.bf16.msra.mxu0 0
      %798 = vmatprep.subr.bf16.mxu0 0
      %799 = vmatpush1.bf16.msra.mxu0 0
      %800 = vmatprep.subr.bf16.mxu0 0
      %801 = vmatpush1.bf16.msra.mxu0 0
      %802 = vmatprep.subr.bf16.mxu0 0
      %803 = vmatpush1.bf16.msra.mxu0 0
      %804 = vmatprep.subr.bf16.mxu0 0
      %805 = vmatpush1.bf16.msra.mxu0 0
      %806 = vmatprep.subr.bf16.mxu0 0
      %807 = vmatpush1.bf16.msra.mxu0 %v707
      %808 = vmatprep.subr.bf16.mxu0 0
      %809 = vmatpush1.bf16.msra.mxu0 %v706
      %810 = vmatprep.subr.bf16.mxu0 0
      %811 = vmatpush2.bf16.msra.mxu0 0
      %812 = vmatprep.subr.bf16.mxu0 0
      %813 = vmatpush2.bf16.msra.mxu0 0
      %814 = vmatprep.subr.bf16.mxu0 0
      %815 = vmatpush2.bf16.msra.mxu0 0
      %816 = vmatprep.subr.bf16.mxu0 0
      %817 = vmatpush2.bf16.msra.mxu0 0
      %818 = vmatprep.subr.bf16.mxu0 0
      %819 = vmatpush2.bf16.msra.mxu0 0
      %820 = vmatprep.subr.bf16.mxu0 0
      %821 = vmatpush2.bf16.msra.mxu0 0
      %822 = vmatprep.subr.bf16.mxu0 0
      %823 = vmatpush2.bf16.msra.mxu0 0
      %824 = vmatprep.subr.bf16.mxu0 0
      %825 = vmatpush2.bf16.msra.mxu0 0
      %826 = vmatprep.mubr.bf16.mxu0 0
      %827 = vmatmul.mubr.bf16.gmra.mxu0 %v740
      %v828 = vpop.f32.mrf.mxu0
      %v829 = vadd.f32 %v780, %v828
      %v830 = vpop.f32.mrf.mxu0
      %v831 = vpop.f32.mrf.mxu0
      %v832 = vadd.f32 %v783, %v831
      %v833 = vpop.f32.mrf.mxu0
      %834 = vmatprep.mubr.bf16.mxu0 0
      %835 = vmatmul.mubr.bf16.gmra.mxu0 %v743
      %v836 = vpop.f32.mrf.mxu0
      %v837 = vadd.f32 %v788, %v836
      %v838 = vpop.f32.mrf.mxu0
      %v839 = vpop.f32.mrf.mxu0
      %v840 = vadd.f32 %v791, %v839
      %v841 = vpop.f32.mrf.mxu0
      %842 = vdwg.mxu0
      %v843 = vmul.f32 %v829, %v349
      %v844 = vmul.f32 %v832, %v349
      %v845 = vmul.f32 %v837, %v349
      %v846 = vmul.f32 %v840, %v349
      %v847 = vsel %vm199, %v843, 0.0
      %848 = vadd.xlane.f32.xlu0 %v847
      %v849 = vpop.xlane.xlu0 %848
      %v850 = vsel %vm199, %v844, 0.0
      %851 = vadd.xlane.f32.xlu0 %v850
      %v852 = vpop.xlane.xlu0 %851
      %v853 = vsel %vm199, %v845, 0.0
      %854 = vadd.xlane.f32.xlu0 %v853
      %v855 = vpop.xlane.xlu0 %854
      %v856 = vsel %vm199, %v846, 0.0
      %857 = vadd.xlane.f32.xlu0 %v856
      %v858 = vpop.xlane.xlu0 %857
      %v859 = vmul.f32 %v849, 0.015625
      %v860 = vmul.f32 %v852, 0.015625
      %v861 = vmul.f32 %v855, 0.015625
      %v862 = vmul.f32 %v858, 0.015625
      %v863 = vsub.f32 %v829, %v859
      %v864 = vsub.f32 %v832, %v860
      %v865 = vsub.f32 %v837, %v861
      %v866 = vsub.f32 %v840, %v862
      %v867 = vmul.f32 %v863, %v349
      %v868 = vmul.f32 %v864, %v349
      %v869 = vmul.f32 %v865, %v349
      %v870 = vmul.f32 %v866, %v349
      %v871 = vmul.f32 %v867, %v867
      %v872 = vmul.f32 %v868, %v868
      %v873 = vmul.f32 %v869, %v869
      %v874 = vmul.f32 %v870, %v870
      %v875 = vsel %vm199, %v871, 0.0
      %876 = vadd.xlane.f32.xlu0 %v875
      %v877 = vpop.xlane.xlu0 %876
      %v878 = vsel %vm199, %v872, 0.0
      %879 = vadd.xlane.f32.xlu0 %v878
      %v880 = vpop.xlane.xlu0 %879
      %v881 = vsel %vm199, %v873, 0.0
      %882 = vadd.xlane.f32.xlu0 %v881
      %v883 = vpop.xlane.xlu0 %882
      %v884 = vsel %vm199, %v874, 0.0
      %885 = vadd.xlane.f32.xlu0 %v884
      %v886 = vpop.xlane.xlu0 %885
      %v887 = vmul.f32 %v877, 0.015625
      %v888 = vmul.f32 %v880, 0.015625
      %v889 = vmul.f32 %v883, 0.015625
      %v890 = vmul.f32 %v886, 0.015625
      %v891 = vadd.f32 %v887, 1e-05
      %v892 = vadd.f32 %v888, 1e-05
      %v893 = vadd.f32 %v889, 1e-05
      %v894 = vadd.f32 %v890, 1e-05
      %v895 = vrsqrt.pop %v891
      %v896 = vrsqrt.pop %v892
      %v897 = vrsqrt.pop %v893
      %v898 = vrsqrt.pop %v894
      %v899 = vmul.f32 %v867, %v895
      %v900 = vmul.f32 %v868, %v896
      %v901 = vmul.f32 %v869, %v897
      %v902 = vmul.f32 %v870, %v898
      %v903 = vmax.f32 %v899, 0.0
      %v904 = vmax.f32 %v900, 0.0
      %v905 = vmax.f32 %v901, 0.0
      %v906 = vmax.f32 %v902, 0.0
      %vm907 = vcmask 84992
      %908 = vst.msk [vmem:[%s194] sm:$0xf] %vm907, 0
      %909 = vst.msk [vmem:[%s194 + $0x4] sm:$0xf] %vm907, 0
      %910 = vst.msk [vmem:[%s194 + $0x8] sm:$0xf] %vm907, 0
      %911 = vst.msk [vmem:[%s194 + $0xc] sm:$0xf] %vm907, 0
      %v912 = vpack.c.bf16 %v904, %v903
      %v913 = vpack.c.bf16 %v906, %v905
      %v916 = vunpack.c.l.b16 %v912
      %v917 = vunpack.c.h.b16 %v912
      %v918 = vunpack.c.l.b16 %v913
      %v919 = vunpack.c.h.b16 %v913
      %v920 = vpack.c.b16 %v916, %v916
      %v921 = vpack.c.b16 %v917, %v917
      %v922 = vpack.c.b16 %v918, %v918
      %v923 = vpack.c.b16 %v919, %v919
      %924 = vrot.lane.b32.xlu0 %v920, 11
      %v925 = vpop.permute.xlu0 %924
      %926 = vrot.lane.b32.xlu0 %v921, 11
      %v927 = vpop.permute.xlu0 %926
      %928 = vrot.lane.b32.xlu0 %v922, 11
      %v929 = vpop.permute.xlu0 %928
      %930 = vrot.lane.b32.xlu0 %v923, 11
      %v931 = vpop.permute.xlu0 %930
      %vm936 = vcmask 904280
      %937 = vst.msk [vmem:[%s194] sm:$0xf] %vm936, %v925
      %938 = vst.msk [vmem:[%s194 + $0x4] sm:$0xf] %vm936, %v927
      %939 = vst.msk [vmem:[%s194 + $0x8] sm:$0xf] %vm936, %v929
      %940 = vst.msk [vmem:[%s194 + $0xc] sm:$0xf] %vm936, %v931
      %vm941 = vcmask 995192
      %942 = vst.msk [vmem:[%s194] sm:$0xf] %vm941, 0
      %943 = vst.msk [vmem:[%s194 + $0x4] sm:$0xf] %vm941, 0
      %944 = vst.msk [vmem:[%s194 + $0x8] sm:$0xf] %vm941, 0
      %945 = vst.msk [vmem:[%s194 + $0xc] sm:$0xf] %vm941, 0
      %p946 = scmp.lt.s32.totalorder %s15, 1
      %s947 = scalar_select %p946, %s15, 1
      %s948 = smul.addr %s947, 4
      %s949 = smul.addr %s948, 4
      %s950 = scalar_lea.vmem %s4, %s949
      // Predicated region
      $region37: #{upsampler_forward.6} parent=35 // pred_check
        %p951 = pneg %p122
      $region38: #{upsampler_forward.6} parent=35 // pred_check_branch
        %953 = sbr.rel (%p951) target = $region40
      $region39: #{upsampler_forward.6} parent=35 // pred_region
        _
      $region40: #{upsampler_forward.6} parent=35 // pred_fallthru
        _
    $region36: #{upsampler_forward.6} parent=5 // pred_fallthru
      _
    %p954 = scmp.le.s32.totalorder 2, %s10
    // Predicated region
    $region41: #{upsampler_forward.6} parent=5 // pred_check
      %p955 = pneg %p954
    $region42: #{upsampler_forward.6} parent=5 // pred_check_branch
      %957 = sbr.rel (%p955) target = $region44
    $region43: #{upsampler_forward.6} parent=5 // pred_region
      %s958 = ssub.s32 %s10, 2
      // Predicated region
      $region45: #{upsampler_forward.6} parent=43 // pred_check
        %p959 = pneg %p128
      $region46: #{upsampler_forward.6} parent=43 // pred_check_branch
        %961 = sbr.rel (%p959) target = $region48
      $region47: #{upsampler_forward.6} parent=43 // pred_region
        %p962 = scmp.lt.s32.totalorder %s16, 1
        %s963 = scalar_select %p962, %s16, 1
        %s964 = smul.addr %s963, 4
        %s965 = smul.addr %s964, 4
        %s966 = scalar_lea.vmem %s4, %s965
      $region48: #{upsampler_forward.6} parent=43 // pred_fallthru
        _
    $region44: #{upsampler_forward.6} parent=5 // pred_fallthru
      _
  $region6: #{upsampler_forward.6} parent=0 // loop_footer
    %s14 = sadd.s32 1, %s10
  $region7: #{upsampler_forward.6} parent=0 // loop_footer_branch
    %9 = sbr.rel target = $region3
  $region8: #{upsampler_forward.6} parent=0 // loop_exit
    _

// kernel: upsampler_forward.8
$region0: #{upsampler_forward.8}
  #allocation0 [shape = 'u32[]', space=smem, size = 0x4, offset = 0x4, fixed_abs, tag = 'smem constant byte address 0x4 - core index']
  #allocation1 [shape = 'u32[144,128]{1,0:T(1,128)}', space=vmem, size = 0x12000, scoped, tag = 'internal scratch']
  #allocation2 [shape = 'f32[288,324]{1,0:T(8,128)}', space=vmem, size = 0x6c000, scoped, tag = 'scratch operand']
  #allocation3 [shape = 'f32[16,362]{1,0:T(8,128)}', space=vmem, size = 0x6000, scoped, tag = 'scratch operand']
  #allocation4 [shape = 'f32[144,324]{1,0:T(8,128)}', space=vmem, size = 0x36000, scoped, tag = 'scratch operand']
  %s0 = inlined_call_operand.vmem [shape: bf16[2,32,362], index: 0, kind: input, shape index: {}]
  %s1 = inlined_call_operand.vmem [shape: bf16[16,288], index: 1, kind: input, shape index: {}]
  %s2 = inlined_call_operand.vmem [shape: bf16[16,144], index: 2, kind: input, shape index: {}]
  %s3 = inlined_call_operand.vmem [shape: f32[1,324], index: 3, kind: input, shape index: {}]
  %s4 = inlined_call_operand.vmem [shape: bf16[2,16,362], index: 4, kind: output, shape index: {}]
  %s5 = sld [smem:[#allocation0]]
  $region49: #{upsampler_forward.8} parent=0
    _
  %s7 = ssub.s32 1, %s5
  %s8 = scalar_select 0, %s7, %s5
  loop: start=0, step=1, limit=4
  $region2: #{upsampler_forward.8} parent=0 // loop_pre_header
    _
  $region3: #{upsampler_forward.8} parent=0 // loop_header
    %s10 = sphi 0, %s14
    %p11 = scmp.ge.s32.totalorder %s10, 4
    %s20 = sphi 0, %s22
    %s23 = sphi 0, %s20
    %s24 = sphi 0, %s23
    %s40 = sphi 0, %s24
    %s44 = sphi 0, %s44
    %s46 = sphi 0, %s44
    %s47 = sphi 0, %s46
    %s61 = sphi 0, %s47
    %s65 = sphi 0, %s65
    %s67 = sphi 0, %s65
    %s68 = sphi 0, %s67
    %s82 = sphi 0, %s68
    %s86 = sphi 0, %s86
    %s88 = sphi 0, %s86
    %s89 = sphi 0, %s88
    %s103 = sphi 0, %s89
    %s109 = sphi 0, %s111
    %s112 = sphi 0, %s109
    %s113 = sphi 0, %s112
    %s129 = sphi 0, %s113
  $region4: #{upsampler_forward.8} parent=0 // loop_header_branch
    %13 = sbr.rel (%p11) target = $region8
  $region5: #{upsampler_forward.8} parent=0 // loop_body
    %s15 = ssub.s32 %s10, 1
    %s16 = ssub.s32 %s10, 2
    %s17 = sadd.s32 %s10, 1
    %s18 = ssub.s32 %s10, %s17
    %p19 = scmp.eq.s32.totalorder %s18, 0
    %s21 = sadd.s32 %s20, 1
    %s22 = scalar_select %p19, %s20, %s21
    %p25 = pneg %p19
    %p26 = scmp.eq.s32.totalorder %s10, 1
    %p27 = por %p25, %p26
    %p28 = scmp.ne.s32.totalorder %s20, %s23
    %p29 = scmp.eq.s32.totalorder %s10, 0
    %p30 = por %p28, %p29
    %p31 = scmp.ne.s32.totalorder %s20, %s23
    %p32 = scmp.eq.s32.totalorder %s15, 1
    %p33 = por %p31, %p32
    %p34 = scmp.ne.s32.totalorder %s23, %s24
    %p35 = scmp.eq.s32.totalorder %s15, 0
    %p36 = por %p34, %p35
    %p37 = scmp.ne.s32.totalorder %s23, %s24
    %p38 = scmp.eq.s32.totalorder %s16, 1
    %p39 = por %p37, %p38
    %p41 = scmp.ne.s32.totalorder %s24, %s40
    %p42 = scmp.eq.s32.totalorder %s16, 0
    %p43 = por %p41, %p42
    %s45 = sadd.s32 %s44, 1
    %p48 = scmp.eq.s32.totalorder %s10, 1
    %p49 = scmp.ne.s32.totalorder %s44, %s46
    %p50 = scmp.eq.s32.totalorder %s10, 0
    %p51 = por %p49, %p50
    %p52 = scmp.ne.s32.totalorder %s44, %s46
    %p53 = scmp.eq.s32.totalorder %s15, 1
    %p54 = por %p52, %p53
    %p55 = scmp.ne.s32.totalorder %s46, %s47
    %p56 = scmp.eq.s32.totalorder %s15, 0
    %p57 = por %p55, %p56
    %p58 = scmp.ne.s32.totalorder %s46, %s47
    %p59 = scmp.eq.s32.totalorder %s16, 1
    %p60 = por %p58, %p59
    %p62 = scmp.ne.s32.totalorder %s47, %s61
    %p63 = scmp.eq.s32.totalorder %s16, 0
    %p64 = por %p62, %p63
    %s66 = sadd.s32 %s65, 1
    %p69 = scmp.eq.s32.totalorder %s10, 1
    %p70 = scmp.ne.s32.totalorder %s65, %s67
    %p71 = scmp.eq.s32.totalorder %s10, 0
    %p72 = por %p70, %p71
    %p73 = scmp.ne.s32.totalorder %s65, %s67
    %p74 = scmp.eq.s32.totalorder %s15, 1
    %p75 = por %p73, %p74
    %p76 = scmp.ne.s32.totalorder %s67, %s68
    %p77 = scmp.eq.s32.totalorder %s15, 0
    %p78 = por %p76, %p77
    %p79 = scmp.ne.s32.totalorder %s67, %s68
    %p80 = scmp.eq.s32.totalorder %s16, 1
    %p81 = por %p79, %p80
    %p83 = scmp.ne.s32.totalorder %s68, %s82
    %p84 = scmp.eq.s32.totalorder %s16, 0
    %p85 = por %p83, %p84
    %s87 = sadd.s32 %s86, 1
    %p90 = scmp.eq.s32.totalorder %s10, 1
    %p91 = scmp.ne.s32.totalorder %s86, %s88
    %p92 = scmp.eq.s32.totalorder %s10, 0
    %p93 = por %p91, %p92
    %p94 = scmp.ne.s32.totalorder %s86, %s88
    %p95 = scmp.eq.s32.totalorder %s15, 1
    %p96 = por %p94, %p95
    %p97 = scmp.ne.s32.totalorder %s88, %s89
    %p98 = scmp.eq.s32.totalorder %s15, 0
    %p99 = por %p97, %p98
    %p100 = scmp.ne.s32.totalorder %s88, %s89
    %p101 = scmp.eq.s32.totalorder %s16, 1
    %p102 = por %p100, %p101
    %p104 = scmp.ne.s32.totalorder %s89, %s103
    %p105 = scmp.eq.s32.totalorder %s16, 0
    %p106 = por %p104, %p105
    %s107 = ssub.s32 %s10, %s17
    %p108 = scmp.eq.s32.totalorder %s107, 0
    %s110 = sadd.s32 %s109, 1
    %s111 = scalar_select %p108, %s109, %s110
    %p114 = pneg %p108
    %p115 = scmp.eq.s32.totalorder %s10, 1
    %p116 = por %p114, %p115
    %p117 = scmp.ne.s32.totalorder %s109, %s112
    %p118 = scmp.eq.s32.totalorder %s10, 0
    %p119 = por %p117, %p118
    %p120 = scmp.ne.s32.totalorder %s109, %s112
    %p121 = scmp.eq.s32.totalorder %s15, 1
    %p122 = por %p120, %p121
    %p123 = scmp.ne.s32.totalorder %s112, %s113
    %p124 = scmp.eq.s32.totalorder %s15, 0
    %p125 = por %p123, %p124
    %p126 = scmp.ne.s32.totalorder %s112, %s113
    %p127 = scmp.eq.s32.totalorder %s16, 1
    %p128 = por %p126, %p127
    %p130 = scmp.ne.s32.totalorder %s113, %s129
    %p131 = scmp.eq.s32.totalorder %s16, 0
    %p132 = por %p130, %p131
    %p133 = scmp.le.s32.totalorder 1, %s10
    %p134 = scmp.lt.s32.totalorder %s10, 3
    %p135 = pnand %p133, %p134
    %p136 = pneg %p135
    // Predicated region
    $region9: #{upsampler_forward.8} parent=5 // pred_check
      _
    $region10: #{upsampler_forward.8} parent=5 // pred_check_branch
      %138 = sbr.rel (%p135) target = $region12
    $region11: #{upsampler_forward.8} parent=5 // pred_region
      %s139 = ssub.s32 %s10, 1
      // Predicated region
      $region13: #{upsampler_forward.8} parent=11 // pred_check
        %p140 = pneg %p57
      $region14: #{upsampler_forward.8} parent=11 // pred_check_branch
        %142 = sbr.rel (%p140) target = $region16
      $region15: #{upsampler_forward.8} parent=11 // pred_region
        _
      $region16: #{upsampler_forward.8} parent=11 // pred_fallthru
        _
      // Predicated region
      $region17: #{upsampler_forward.8} parent=11 // pred_check
        %p143 = pneg %p78
      $region18: #{upsampler_forward.8} parent=11 // pred_check_branch
        %145 = sbr.rel (%p143) target = $region20
      $region19: #{upsampler_forward.8} parent=11 // pred_region
        _
      $region20: #{upsampler_forward.8} parent=11 // pred_fallthru
        _
      // Predicated region
      $region21: #{upsampler_forward.8} parent=11 // pred_check
        %p146 = pneg %p99
      $region22: #{upsampler_forward.8} parent=11 // pred_check_branch
        %148 = sbr.rel (%p146) target = $region24
      $region23: #{upsampler_forward.8} parent=11 // pred_region
        _
      $region24: #{upsampler_forward.8} parent=11 // pred_fallthru
        _
    $region12: #{upsampler_forward.8} parent=5 // pred_fallthru
      _
    %p149 = scmp.lt.s32.totalorder %s10, 2
    // Predicated region
    $region25: #{upsampler_forward.8} parent=5 // pred_check
      %p150 = pneg %p149
    $region26: #{upsampler_forward.8} parent=5 // pred_check_branch
      %152 = sbr.rel (%p150) target = $region28
    $region27: #{upsampler_forward.8} parent=5 // pred_region
      // Predicated region
      $region29: #{upsampler_forward.8} parent=27 // pred_check
        %p153 = pneg %p30
      $region30: #{upsampler_forward.8} parent=27 // pred_check_branch
        %155 = sbr.rel (%p153) target = $region32
      $region31: #{upsampler_forward.8} parent=27 // pred_region
        %p156 = scmp.lt.s32.totalorder %s10, 1
        %s157 = scalar_select %p156, %s10, 1
        %s158 = smul.addr %s157, 12
        %s159 = smul.addr %s158, 4
        %s160 = scalar_lea.vmem %s0, %s159
      $region32: #{upsampler_forward.8} parent=27 // pred_fallthru
        _
    $region28: #{upsampler_forward.8} parent=5 // pred_fallthru
      _
    %p161 = scmp.le.s32.totalorder 1, %s10
    %p162 = scmp.lt.s32.totalorder %s10, 3
    %p163 = pnand %p161, %p162
    %p164 = pneg %p163
    // Predicated region
    $region33: #{upsampler_forward.8} parent=5 // pred_check
      _
    $region34: #{upsampler_forward.8} parent=5 // pred_check_branch
      %166 = sbr.rel (%p163) target = $region36
    $region35: #{upsampler_forward.8} parent=5 // pred_region
      %s167 = ssub.s32 %s10, 1
      %p168 = scmp.lt.s32.totalorder %s15, 1
      %s169 = scalar_select %p168, %s15, 1
      %s170 = smul.addr %s169, 12
      %s171 = smul.addr %s170, 4
      %s172 = scalar_lea.vmem %s0, %s171
      %p173 = pneg %p36
      %p174 = pneg %p33
      %p175 = pneg %p57
      %p176 = pneg %p54
      %p177 = pneg %p78
      %p178 = pneg %p75
      %p179 = pneg %p99
      %p180 = pneg %p96
      %p181 = pneg %p125
      %p182 = pneg %p122
      %p183 = scmp.lt.s32.totalorder %s15, 1
      %s184 = scalar_select %p183, %s15, 1
      %s185 = smul.addr %s184, 6
      %s186 = smul.addr %s185, 4
      %s187 = scalar_lea.vmem %s4, %s186
      %p188 = scmp.lt.s32.totalorder %s15, 1
      %s189 = scalar_select %p188, %s15, 1
      %s190 = smul.addr %s189, 12
      %s191 = smul.addr %s190, 4
      %s192 = scalar_lea.vmem %s0, %s191
      %p193 = scmp.lt.s32.totalorder %s15, 1
      %s194 = scalar_select %p193, %s15, 1
      %s195 = smul.addr %s194, 6
      %s196 = smul.addr %s195, 4
      %s197 = scalar_lea.vmem %s4, %s196
      %v199 = vld [vmem:[%s3] sm:$0x7]
      %v200 = vld [vmem:[%s192] sm:$0xff]
      %v201 = vld [vmem:[%s192 + $0x8] sm:$0xf]
      %v202 = vld [vmem:[%s192 + $0xc] sm:$0xff]
      %v203 = vld [vmem:[%s192 + $0x14] sm:$0xf]
      %v204 = vld [vmem:[%s192 + $0x18] sm:$0xff]
      %v205 = vld [vmem:[%s192 + $0x20] sm:$0xf]
      %v206 = vld [vmem:[%s192 + $0x24] sm:$0xff]
      %v207 = vld [vmem:[%s192 + $0x2c] sm:$0xf]
      %v208 = vunpack.c.l.bf16 %v200
      %v209 = vunpack.c.h.bf16 %v200
      %v210 = vunpack.c.l.bf16 %v201
      %v211 = vunpack.c.l.bf16 %v202
      %v212 = vunpack.c.h.bf16 %v202
      %v213 = vunpack.c.l.bf16 %v203
      %v214 = vunpack.c.l.bf16 %v204
      %v215 = vunpack.c.h.bf16 %v204
      %v216 = vunpack.c.l.bf16 %v205
      %v217 = vunpack.c.l.bf16 %v206
      %v218 = vunpack.c.h.bf16 %v206
      %v219 = vunpack.c.l.bf16 %v207
      %220 = vst [vmem:[#allocation2] sm:$0xff] %v208
      %221 = vst [vmem:[#allocation2 + $0x8] sm:$0xff] %v209
      %vm222 = vcmask 556032
      %223 = vst.msk [vmem:[#allocation2 + $0x10] sm:$0xff] %vm222, %v210
      %224 = vst [vmem:[#allocation2 + $0x18] sm:$0xff] %v211
      %225 = vst [vmem:[#allocation2 + $0x20] sm:$0xff] %v212
      %226 = vst.msk [vmem:[#allocation2 + $0x28] sm:$0xff] %vm222, %v213
      %227 = vst [vmem:[#allocation2 + $0x30] sm:$0xff] %v214
      %228 = vst [vmem:[#allocation2 + $0x38] sm:$0xff] %v215
      %229 = vst.msk [vmem:[#allocation2 + $0x40] sm:$0xff] %vm222, %v216
      %230 = vst [vmem:[#allocation2 + $0x48] sm:$0xff] %v217
      %231 = vst [vmem:[#allocation2 + $0x50] sm:$0xff] %v218
      %232 = vst.msk [vmem:[#allocation2 + $0x58] sm:$0xff] %vm222, %v219
      %v233 = vld [vmem:[%s192] sm:$0xff]
      %v234 = vld [vmem:[%s192 + $0x8] sm:$0xf]
      %v235 = vld [vmem:[%s192 + $0xc] sm:$0xff]
      %v236 = vld [vmem:[%s192 + $0x14] sm:$0xf]
      %v237 = vld [vmem:[%s192 + $0x18] sm:$0xff]
      %v238 = vld [vmem:[%s192 + $0x20] sm:$0xf]
      %v239 = vld [vmem:[%s192 + $0x24] sm:$0xff]
      %v240 = vld [vmem:[%s192 + $0x2c] sm:$0xf]
      %v241 = vunpack.c.l.bf16 %v233
      %v242 = vunpack.c.h.bf16 %v233
      %v243 = vunpack.c.l.bf16 %v234
      %v244 = vunpack.c.l.bf16 %v235
      %v245 = vunpack.c.h.bf16 %v235
      %v246 = vunpack.c.l.bf16 %v236
      %v247 = vunpack.c.l.bf16 %v237
      %v248 = vunpack.c.h.bf16 %v237
      %v249 = vunpack.c.l.bf16 %v238
      %v250 = vunpack.c.l.bf16 %v239
      %v251 = vunpack.c.h.bf16 %v239
      %v252 = vunpack.c.l.bf16 %v240
      %265 = vrot.lane.b32.xlu0 %v241, 127
      %v266 = vpop.permute.xlu0 %265
      %267 = vrot.lane.b32.xlu0 %v242, 127
      %v268 = vpop.permute.xlu0 %267
      %269 = vrot.lane.b32.xlu0 %v243, 127
      %v270 = vpop.permute.xlu0 %269
      %271 = vrot.lane.b32.xlu0 %v244, 127
      %v272 = vpop.permute.xlu0 %271
      %273 = vrot.lane.b32.xlu0 %v245, 127
      %v274 = vpop.permute.xlu0 %273
      %275 = vrot.lane.b32.xlu0 %v246, 127
      %v276 = vpop.permute.xlu0 %275
      %277 = vrot.lane.b32.xlu0 %v247, 127
      %v278 = vpop.permute.xlu0 %277
      %279 = vrot.lane.b32.xlu0 %v248, 127
      %v280 = vpop.permute.xlu0 %279
      %281 = vrot.lane.b32.xlu0 %v249, 127
      %v282 = vpop.permute.xlu0 %281
      %283 = vrot.lane.b32.xlu0 %v250, 127
      %v284 = vpop.permute.xlu0 %283
      %285 = vrot.lane.b32.xlu0 %v251, 127
      %v286 = vpop.permute.xlu0 %285
      %287 = vrot.lane.b32.xlu0 %v252, 127
      %v288 = vpop.permute.xlu0 %287
      %vm289 = vcmask 1039360
      %v290 = vsel %vm289, %v266, %v268
      %v291 = vsel %vm289, %v268, %v270
      %v292 = vsel %vm289, %v272, %v274
      %v293 = vsel %vm289, %v274, %v276
      %v294 = vsel %vm289, %v278, %v280
      %v295 = vsel %vm289, %v280, %v282
      %v296 = vsel %vm289, %v284, %v286
      %v297 = vsel %vm289, %v286, %v288
      %310 = vst [vmem:[#allocation2 + $0x60] sm:$0xff] %v290
      %311 = vst [vmem:[#allocation2 + $0x68] sm:$0xff] %v291
      %312 = vst.msk [vmem:[#allocation2 + $0x70] sm:$0xff] %vm222, %v270
      %313 = vst [vmem:[#allocation2 + $0x78] sm:$0xff] %v292
      %314 = vst [vmem:[#allocation2 + $0x80] sm:$0xff] %v293
      %315 = vst.msk [vmem:[#allocation2 + $0x88] sm:$0xff] %vm222, %v276
      %316 = vst [vmem:[#allocation2 + $0x90] sm:$0xff] %v294
      %317 = vst [vmem:[#allocation2 + $0x98] sm:$0xff] %v295
      %318 = vst.msk [vmem:[#allocation2 + $0xa0] sm:$0xff] %vm222, %v282
      %319 = vst [vmem:[#allocation2 + $0xa8] sm:$0xff] %v296
      %320 = vst [vmem:[#allocation2 + $0xb0] sm:$0xff] %v297
      %321 = vst.msk [vmem:[#allocation2 + $0xb8] sm:$0xff] %vm222, %v288
      %v322 = vld [vmem:[%s192] sm:$0xff]
      %v323 = vld [vmem:[%s192 + $0x8] sm:$0xf]
      %v324 = vld [vmem:[%s192 + $0xc] sm:$0xff]
      %v325 = vld [vmem:[%s192 + $0x14] sm:$0xf]
      %v326 = vld [vmem:[%s192 + $0x18] sm:$0xff]
      %v327 = vld [vmem:[%s192 + $0x20] sm:$0xf]
      %v328 = vld [vmem:[%s192 + $0x24] sm:$0xff]
      %v329 = vld [vmem:[%s192 + $0x2c] sm:$0xf]
      %v330 = vunpack.c.l.bf16 %v322
      %v331 = vunpack.c.h.bf16 %v322
      %v332 = vunpack.c.l.bf16 %v323
      %v333 = vunpack.c.l.bf16 %v324
      %v334 = vunpack.c.h.bf16 %v324
      %v335 = vunpack.c.l.bf16 %v325
      %v336 = vunpack.c.l.bf16 %v326
      %v337 = vunpack.c.h.bf16 %v326
      %v338 = vunpack.c.l.bf16 %v327
      %v339 = vunpack.c.l.bf16 %v328
      %v340 = vunpack.c.h.bf16 %v328
      %v341 = vunpack.c.l.bf16 %v329
      %354 = vrot.lane.b32.xlu0 %v330, 126
      %v355 = vpop.permute.xlu0 %354
      %356 = vrot.lane.b32.xlu0 %v331, 126
      %v357 = vpop.permute.xlu0 %356
      %358 = vrot.lane.b32.xlu0 %v332, 126
      %v359 = vpop.permute.xlu0 %358
      %360 = vrot.lane.b32.xlu0 %v333, 126
      %v361 = vpop.permute.xlu0 %360
      %362 = vrot.lane.b32.xlu0 %v334, 126
      %v363 = vpop.permute.xlu0 %362
      %364 = vrot.lane.b32.xlu0 %v335, 126
      %v365 = vpop.permute.xlu0 %364
      %366 = vrot.lane.b32.xlu0 %v336, 126
      %v367 = vpop.permute.xlu0 %366
      %368 = vrot.lane.b32.xlu0 %v337, 126
      %v369 = vpop.permute.xlu0 %368
      %370 = vrot.lane.b32.xlu0 %v338, 126
      %v371 = vpop.permute.xlu0 %370
      %372 = vrot.lane.b32.xlu0 %v339, 126
      %v373 = vpop.permute.xlu0 %372
      %374 = vrot.lane.b32.xlu0 %v340, 126
      %v375 = vpop.permute.xlu0 %374
      %376 = vrot.lane.b32.xlu0 %v341, 126
      %v377 = vpop.permute.xlu0 %376
      %vm378 = vcmask 1031168
      %v379 = vsel %vm378, %v355, %v357
      %v380 = vsel %vm378, %v357, %v359
      %v381 = vsel %vm378, %v361, %v363
      %v382 = vsel %vm378, %v363, %v365
      %v383 = vsel %vm378, %v367, %v369
      %v384 = vsel %vm378, %v369, %v371
      %v385 = vsel %vm378, %v373, %v375
      %v386 = vsel %vm378, %v375, %v377
      %399 = vst [vmem:[#allocation2 + $0xc0] sm:$0xff] %v379
      %400 = vst [vmem:[#allocation2 + $0xc8] sm:$0xff] %v380
      %401 = vst.msk [vmem:[#allocation2 + $0xd0] sm:$0xff] %vm222, %v359
      %402 = vst [vmem:[#allocation2 + $0xd8] sm:$0xff] %v381
      %403 = vst [vmem:[#allocation2 + $0xe0] sm:$0xff] %v382
      %404 = vst.msk [vmem:[#allocation2 + $0xe8] sm:$0xff] %vm222, %v365
      %405 = vst [vmem:[#allocation2 + $0xf0] sm:$0xff] %v383
      %406 = vst [vmem:[#allocation2 + $0xf8] sm:$0xff] %v384
      %407 = vst.msk [vmem:[#allocation2 + $0x100] sm:$0xff] %vm222, %v371
      %408 = vst [vmem:[#allocation2 + $0x108] sm:$0xff] %v385
      %409 = vst [vmem:[#allocation2 + $0x110] sm:$0xff] %v386
      %410 = vst.msk [vmem:[#allocation2 + $0x118] sm:$0xff] %vm222, %v377
      %v411 = vld [vmem:[%s192] sm:$0xff]
      %v412 = vld [vmem:[%s192 + $0x8] sm:$0xf]
      %v413 = vld [vmem:[%s192 + $0xc] sm:$0xff]
      %v414 = vld [vmem:[%s192 + $0x14] sm:$0xf]
      %v415 = vld [vmem:[%s192 + $0x18] sm:$0xff]
      %v416 = vld [vmem:[%s192 + $0x20] sm:$0xf]
      %v417 = vld [vmem:[%s192 + $0x24] sm:$0xff]
      %v418 = vld [vmem:[%s192 + $0x2c] sm:$0xf]
      %v419 = vunpack.c.l.bf16 %v411
      %v420 = vunpack.c.h.bf16 %v411
      %v421 = vunpack.c.l.bf16 %v412
      %v422 = vunpack.c.l.bf16 %v413
      %v423 = vunpack.c.h.bf16 %v413
      %v424 = vunpack.c.l.bf16 %v414
      %v425 = vunpack.c.l.bf16 %v415
      %v426 = vunpack.c.h.bf16 %v415
      %v427 = vunpack.c.l.bf16 %v416
      %v428 = vunpack.c.l.bf16 %v417
      %v429 = vunpack.c.h.bf16 %v417
      %v430 = vunpack.c.l.bf16 %v418
      %443 = vrot.lane.b32.xlu0 %v419, 110
      %v444 = vpop.permute.xlu0 %443
      %445 = vrot.lane.b32.xlu0 %v420, 110
      %v446 = vpop.permute.xlu0 %445
      %447 = vrot.lane.b32.xlu0 %v421, 110
      %v448 = vpop.permute.xlu0 %447
      %449 = vrot.lane.b32.xlu0 %v422, 110
      %v450 = vpop.permute.xlu0 %449
      %451 = vrot.lane.b32.xlu0 %v423, 110
      %v452 = vpop.permute.xlu0 %451
      %453 = vrot.lane.b32.xlu0 %v424, 110
      %v454 = vpop.permute.xlu0 %453
      %455 = vrot.lane.b32.xlu0 %v425, 110
      %v456 = vpop.permute.xlu0 %455
      %457 = vrot.lane.b32.xlu0 %v426, 110
      %v458 = vpop.permute.xlu0 %457
      %459 = vrot.lane.b32.xlu0 %v427, 110
      %v460 = vpop.permute.xlu0 %459
      %461 = vrot.lane.b32.xlu0 %v428, 110
      %v462 = vpop.permute.xlu0 %461
      %463 = vrot.lane.b32.xlu0 %v429, 110
      %v464 = vpop.permute.xlu0 %463
      %465 = vrot.lane.b32.xlu0 %v430, 110
      %v466 = vpop.permute.xlu0 %465
      %vm467 = vcmask 900096
      %v468 = vsel %vm467, %v444, %v446
      %v469 = vsel %vm467, %v446, %v448
      %v470 = vsel %vm467, %v450, %v452
      %v471 = vsel %vm467, %v452, %v454
      %v472 = vsel %vm467, %v456, %v458
      %v473 = vsel %vm467, %v458, %v460
      %v474 = vsel %vm467, %v462, %v464
      %v475 = vsel %vm467, %v464, %v466
      %488 = vst [vmem:[#allocation2 + $0x120] sm:$0xff] %v468
      %489 = vst [vmem:[#allocation2 + $0x128] sm:$0xff] %v469
      %490 = vst.msk [vmem:[#allocation2 + $0x130] sm:$0xff] %vm222, %v448
      %491 = vst [vmem:[#allocation2 + $0x138] sm:$0xff] %v470
      %492 = vst [vmem:[#allocation2 + $0x140] sm:$0xff] %v471
      %493 = vst.msk [vmem:[#allocation2 + $0x148] sm:$0xff] %vm222, %v454
      %494 = vst [vmem:[#allocation2 + $0x150] sm:$0xff] %v472
      %495 = vst [vmem:[#allocation2 + $0x158] sm:$0xff] %v473
      %496 = vst.msk [vmem:[#allocation2 + $0x160] sm:$0xff] %vm222, %v460
      %497 = vst [vmem:[#allocation2 + $0x168] sm:$0xff] %v474
      %498 = vst [vmem:[#allocation2 + $0x170] sm:$0xff] %v475
      %499 = vst.msk [vmem:[#allocation2 + $0x178] sm:$0xff] %vm222, %v466
      %v500 = vld [vmem:[%s192] sm:$0xff]
      %v501 = vld [vmem:[%s192 + $0x8] sm:$0xf]
      %v502 = vld [vmem:[%s192 + $0xc] sm:$0xff]
      %v503 = vld [vmem:[%s192 + $0x14] sm:$0xf]
      %v504 = vld [vmem:[%s192 + $0x18] sm:$0xff]
      %v505 = vld [vmem:[%s192 + $0x20] sm:$0xf]
      %v506 = vld [vmem:[%s192 + $0x24] sm:$0xff]
      %v507 = vld [vmem:[%s192 + $0x2c] sm:$0xf]
      %v508 = vunpack.c.l.bf16 %v500
      %v509 = vunpack.c.h.bf16 %v500
      %v510 = vunpack.c.l.bf16 %v501
      %v511 = vunpack.c.l.bf16 %v502
      %v512 = vunpack.c.h.bf16 %v502
      %v513 = vunpack.c.l.bf16 %v503
      %v514 = vunpack.c.l.bf16 %v504
      %v515 = vunpack.c.h.bf16 %v504
      %v516 = vunpack.c.l.bf16 %v505
      %v517 = vunpack.c.l.bf16 %v506
      %v518 = vunpack.c.h.bf16 %v506
      %v519 = vunpack.c.l.bf16 %v507
      %532 = vrot.lane.b32.xlu0 %v508, 109
      %v533 = vpop.permute.xlu0 %532
      %534 = vrot.lane.b32.xlu0 %v509, 109
      %v535 = vpop.permute.xlu0 %534
      %536 = vrot.lane.b32.xlu0 %v510, 109
      %v537 = vpop.permute.xlu0 %536
      %538 = vrot.lane.b32.xlu0 %v511, 109
      %v539 = vpop.permute.xlu0 %538
      %540 = vrot.lane.b32.xlu0 %v512, 109
      %v541 = vpop.permute.xlu0 %540
      %542 = vrot.lane.b32.xlu0 %v513, 109
      %v543 = vpop.permute.xlu0 %542
      %544 = vrot.lane.b32.xlu0 %v514, 109
      %v545 = vpop.permute.xlu0 %544
      %546 = vrot.lane.b32.xlu0 %v515, 109
      %v547 = vpop.permute.xlu0 %546
      %548 = vrot.lane.b32.xlu0 %v516, 109
      %v549 = vpop.permute.xlu0 %548
      %550 = vrot.lane.b32.xlu0 %v517, 109
      %v551 = vpop.permute.xlu0 %550
      %552 = vrot.lane.b32.xlu0 %v518, 109
      %v553 = vpop.permute.xlu0 %552
      %554 = vrot.lane.b32.xlu0 %v519, 109
      %v555 = vpop.permute.xlu0 %554
      %vm556 = vcmask 891904
      %v557 = vsel %vm556, %v533, %v535
      %v558 = vsel %vm556, %v535, %v537
      %v559 = vsel %vm556, %v539, %v541
      %v560 = vsel %vm556, %v541, %v543
      %v561 = vsel %vm556, %v545, %v547
      %v562 = vsel %vm556, %v547, %v549
      %v563 = vsel %vm556, %v551, %v553
      %v564 = vsel %vm556, %v553, %v555
      %577 = vst [vmem:[#allocation2 + $0x180] sm:$0xff] %v557
      %578 = vst [vmem:[#allocation2 + $0x188] sm:$0xff] %v558
      %579 = vst.msk [vmem:[#allocation2 + $0x190] sm:$0xff] %vm222, %v537
      %580 = vst [vmem:[#allocation2 + $0x198] sm:$0xff] %v559
      %581 = vst [vmem:[#allocation2 + $0x1a0] sm:$0xff] %v560
      %582 = vst.msk [vmem:[#allocation2 + $0x1a8] sm:$0xff] %vm222, %v543
      %583 = vst [vmem:[#allocation2 + $0x1b0] sm:$0xff] %v561
      %584 = vst [vmem:[#allocation2 + $0x1b8] sm:$0xff] %v562
      %585 = vst.msk [vmem:[#allocation2 + $0x1c0] sm:$0xff] %vm222, %v549
      %586 = vst [vmem:[#allocation2 + $0x1c8] sm:$0xff] %v563
      %587 = vst [vmem:[#allocation2 + $0x1d0] sm:$0xff] %v564
      %588 = vst.msk [vmem:[#allocation2 + $0x1d8] sm:$0xff] %vm222, %v555
      %v589 = vld [vmem:[%s192] sm:$0xff]
      %v590 = vld [vmem:[%s192 + $0x8] sm:$0xf]
      %v591 = vld [vmem:[%s192 + $0xc] sm:$0xff]
      %v592 = vld [vmem:[%s192 + $0x14] sm:$0xf]
      %v593 = vld [vmem:[%s192 + $0x18] sm:$0xff]
      %v594 = vld [vmem:[%s192 + $0x20] sm:$0xf]
      %v595 = vld [vmem:[%s192 + $0x24] sm:$0xff]
      %v596 = vld [vmem:[%s192 + $0x2c] sm:$0xf]
      %v597 = vunpack.c.l.bf16 %v589
      %v598 = vunpack.c.h.bf16 %v589
      %v599 = vunpack.c.l.bf16 %v590
      %v600 = vunpack.c.l.bf16 %v591
      %v601 = vunpack.c.h.bf16 %v591
      %v602 = vunpack.c.l.bf16 %v592
      %v603 = vunpack.c.l.bf16 %v593
      %v604 = vunpack.c.h.bf16 %v593
      %v605 = vunpack.c.l.bf16 %v594
      %v606 = vunpack.c.l.bf16 %v595
      %v607 = vunpack.c.h.bf16 %v595
      %v608 = vunpack.c.l.bf16 %v596
      %621 = vrot.lane.b32.xlu0 %v597, 108
      %v622 = vpop.permute.xlu0 %621
      %623 = vrot.lane.b32.xlu0 %v598, 108
      %v624 = vpop.permute.xlu0 %623
      %625 = vrot.lane.b32.xlu0 %v599, 108
      %v626 = vpop.permute.xlu0 %625
      %627 = vrot.lane.b32.xlu0 %v600, 108
      %v628 = vpop.permute.xlu0 %627
      %629 = vrot.lane.b32.xlu0 %v601, 108
      %v630 = vpop.permute.xlu0 %629
      %631 = vrot.lane.b32.xlu0 %v602, 108
      %v632 = vpop.permute.xlu0 %631
      %633 = vrot.lane.b32.xlu0 %v603, 108
      %v634 = vpop.permute.xlu0 %633
      %635 = vrot.lane.b32.xlu0 %v604, 108
      %v636 = vpop.permute.xlu0 %635
      %637 = vrot.lane.b32.xlu0 %v605, 108
      %v638 = vpop.permute.xlu0 %637
      %639 = vrot.lane.b32.xlu0 %v606, 108
      %v640 = vpop.permute.xlu0 %639
      %641 = vrot.lane.b32.xlu0 %v607, 108
      %v642 = vpop.permute.xlu0 %641
      %643 = vrot.lane.b32.xlu0 %v608, 108
      %v644 = vpop.permute.xlu0 %643
      %vm645 = vcmask 883712
      %v646 = vsel %vm645, %v622, %v624
      %v647 = vsel %vm645, %v624, %v626
      %v648 = vsel %vm645, %v628, %v630
      %v649 = vsel %vm645, %v630, %v632
      %v650 = vsel %vm645, %v634, %v636
      %v651 = vsel %vm645, %v636, %v638
      %v652 = vsel %vm645, %v640, %v642
      %v653 = vsel %vm645, %v642, %v644
      %666 = vst [vmem:[#allocation2 + $0x1e0] sm:$0xff] %v646
      %667 = vst [vmem:[#allocation2 + $0x1e8] sm:$0xff] %v647
      %668 = vst.msk [vmem:[#allocation2 + $0x1f0] sm:$0xff] %vm222, %v626
      %669 = vst [vmem:[#allocation2 + $0x1f8] sm:$0xff] %v648
      %670 = vst [vmem:[#allocation2 + $0x200] sm:$0xff] %v649
      %671 = vst.msk [vmem:[#allocation2 + $0x208] sm:$0xff] %vm222, %v632
      %672 = vst [vmem:[#allocation2 + $0x210] sm:$0xff] %v650
      %673 = vst [vmem:[#allocation2 + $0x218] sm:$0xff] %v651
      %674 = vst.msk [vmem:[#allocation2 + $0x220] sm:$0xff] %vm222, %v638
      %675 = vst [vmem:[#allocation2 + $0x228] sm:$0xff] %v652
      %676 = vst [vmem:[#allocation2 + $0x230] sm:$0xff] %v653
      %677 = vst.msk [vmem:[#allocation2 + $0x238] sm:$0xff] %vm222, %v644
      %v678 = vld [vmem:[%s192] sm:$0xff]
      %v679 = vld [vmem:[%s192 + $0x8] sm:$0xf]
      %v680 = vld [vmem:[%s192 + $0xc] sm:$0xff]
      %v681 = vld [vmem:[%s192 + $0x14] sm:$0xf]
      %v682 = vld [vmem:[%s192 + $0x18] sm:$0xff]
      %v683 = vld [vmem:[%s192 + $0x20] sm:$0xf]
      %v684 = vld [vmem:[%s192 + $0x24] sm:$0xff]
      %v685 = vld [vmem:[%s192 + $0x2c] sm:$0xf]
      %v686 = vunpack.c.l.bf16 %v678
      %v687 = vunpack.c.h.bf16 %v678
      %v688 = vunpack.c.l.bf16 %v679
      %v689 = vunpack.c.l.bf16 %v680
      %v690 = vunpack.c.h.bf16 %v680
      %v691 = vunpack.c.l.bf16 %v681
      %v692 = vunpack.c.l.bf16 %v682
      %v693 = vunpack.c.h.bf16 %v682
      %v694 = vunpack.c.l.bf16 %v683
      %v695 = vunpack.c.l.bf16 %v684
      %v696 = vunpack.c.h.bf16 %v684
      %v697 = vunpack.c.l.bf16 %v685
      %710 = vrot.lane.b32.xlu0 %v686, 92
      %v711 = vpop.permute.xlu0 %710
      %712 = vrot.lane.b32.xlu0 %v687, 92
      %v713 = vpop.permute.xlu0 %712
      %714 = vrot.lane.b32.xlu0 %v688, 92
      %v715 = vpop.permute.xlu0 %714
      %716 = vrot.lane.b32.xlu0 %v689, 92
      %v717 = vpop.permute.xlu0 %716
      %718 = vrot.lane.b32.xlu0 %v690, 92
      %v719 = vpop.permute.xlu0 %718
      %720 = vrot.lane.b32.xlu0 %v691, 92
      %v721 = vpop.permute.xlu0 %720
      %722 = vrot.lane.b32.xlu0 %v692, 92
      %v723 = vpop.permute.xlu0 %722
      %724 = vrot.lane.b32.xlu0 %v693, 92
      %v725 = vpop.permute.xlu0 %724
      %726 = vrot.lane.b32.xlu0 %v694, 92
      %v727 = vpop.permute.xlu0 %726
      %728 = vrot.lane.b32.xlu0 %v695, 92
      %v729 = vpop.permute.xlu0 %728
      %730 = vrot.lane.b32.xlu0 %v696, 92
      %v731 = vpop.permute.xlu0 %730
      %732 = vrot.lane.b32.xlu0 %v697, 92
      %v733 = vpop.permute.xlu0 %732
      %vm734 = vcmask 752640
      %v735 = vsel %vm734, %v711, %v713
      %v736 = vsel %vm734, %v713, %v715
      %v737 = vsel %vm734, %v717, %v719
      %v738 = vsel %vm734, %v719, %v721
      %v739 = vsel %vm734, %v723, %v725
      %v740 = vsel %vm734, %v725, %v727
      %v741 = vsel %vm734, %v729, %v731
      %v742 = vsel %vm734, %v731, %v733
      %755 = vst [vmem:[#allocation2 + $0x240] sm:$0xff] %v735
      %756 = vst [vmem:[#allocation2 + $0x248] sm:$0xff] %v736
      %757 = vst.msk [vmem:[#allocation2 + $0x250] sm:$0xff] %vm222, %v715
      %758 = vst [vmem:[#allocation2 + $0x258] sm:$0xff] %v737
      %759 = vst [vmem:[#allocation2 + $0x260] sm:$0xff] %v738
      %760 = vst.msk [vmem:[#allocation2 + $0x268] sm:$0xff] %vm222, %v721
      %761 = vst [vmem:[#allocation2 + $0x270] sm:$0xff] %v739
      %762 = vst [vmem:[#allocation2 + $0x278] sm:$0xff] %v740
      %763 = vst.msk [vmem:[#allocation2 + $0x280] sm:$0xff] %vm222, %v727
      %764 = vst [vmem:[#allocation2 + $0x288] sm:$0xff] %v741
      %765 = vst [vmem:[#allocation2 + $0x290] sm:$0xff] %v742
      %766 = vst.msk [vmem:[#allocation2 + $0x298] sm:$0xff] %vm222, %v733
      %v767 = vld [vmem:[%s192] sm:$0xff]
      %v768 = vld [vmem:[%s192 + $0x8] sm:$0xf]
      %v769 = vld [vmem:[%s192 + $0xc] sm:$0xff]
      %v770 = vld [vmem:[%s192 + $0x14] sm:$0xf]
      %v771 = vld [vmem:[%s192 + $0x18] sm:$0xff]
      %v772 = vld [vmem:[%s192 + $0x20] sm:$0xf]
      %v773 = vld [vmem:[%s192 + $0x24] sm:$0xff]
      %v774 = vld [vmem:[%s192 + $0x2c] sm:$0xf]
      %v775 = vunpack.c.l.bf16 %v767
      %v776 = vunpack.c.h.bf16 %v767
      %v777 = vunpack.c.l.bf16 %v768
      %v778 = vunpack.c.l.bf16 %v769
      %v779 = vunpack.c.h.bf16 %v769
      %v780 = vunpack.c.l.bf16 %v770
      %v781 = vunpack.c.l.bf16 %v771
      %v782 = vunpack.c.h.bf16 %v771
      %v783 = vunpack.c.l.bf16 %v772
      %v784 = vunpack.c.l.bf16 %v773
      %v785 = vunpack.c.h.bf16 %v773
      %v786 = vunpack.c.l.bf16 %v774
      %799 = vrot.lane.b32.xlu0 %v775, 91
      %v800 = vpop.permute.xlu0 %799
      %801 = vrot.lane.b32.xlu0 %v776, 91
      %v802 = vpop.permute.xlu0 %801
      %803 = vrot.lane.b32.xlu0 %v777, 91
      %v804 = vpop.permute.xlu0 %803
      %805 = vrot.lane.b32.xlu0 %v778, 91
      %v806 = vpop.permute.xlu0 %805
      %807 = vrot.lane.b32.xlu0 %v779, 91
      %v808 = vpop.permute.xlu0 %807
      %809 = vrot.lane.b32.xlu0 %v780, 91
      %v810 = vpop.permute.xlu0 %809
      %811 = vrot.lane.b32.xlu0 %v781, 91
      %v812 = vpop.permute.xlu0 %811
      %813 = vrot.lane.b32.xlu0 %v782, 91
      %v814 = vpop.permute.xlu0 %813
      %815 = vrot.lane.b32.xlu0 %v783, 91
      %v816 = vpop.permute.xlu0 %815
      %817 = vrot.lane.b32.xlu0 %v784, 91
      %v818 = vpop.permute.xlu0 %817
      %819 = vrot.lane.b32.xlu0 %v785, 91
      %v820 = vpop.permute.xlu0 %819
      %821 = vrot.lane.b32.xlu0 %v786, 91
      %v822 = vpop.permute.xlu0 %821
      %vm823 = vcmask 744448
      %v824 = vsel %vm823, %v800, %v802
      %v825 = vsel %vm823, %v802, %v804
      %v826 = vsel %vm823, %v806, %v808
      %v827 = vsel %vm823, %v808, %v810
      %v828 = vsel %vm823, %v812, %v814
      %v829 = vsel %vm823, %v814, %v816
      %v830 = vsel %vm823, %v818, %v820
      %v831 = vsel %vm823, %v820, %v822
      %844 = vst [vmem:[#allocation2 + $0x2a0] sm:$0xff] %v824
      %845 = vst [vmem:[#allocation2 + $0x2a8] sm:$0xff] %v825
      %846 = vst.msk [vmem:[#allocation2 + $0x2b0] sm:$0xff] %vm222, %v804
      %847 = vst [vmem:[#allocation2 + $0x2b8] sm:$0xff] %v826
      %848 = vst [vmem:[#allocation2 + $0x2c0] sm:$0xff] %v827
      %849 = vst.msk [vmem:[#allocation2 + $0x2c8] sm:$0xff] %vm222, %v810
      %850 = vst [vmem:[#allocation2 + $0x2d0] sm:$0xff] %v828
      %851 = vst [vmem:[#allocation2 + $0x2d8] sm:$0xff] %v829
      %852 = vst.msk [vmem:[#allocation2 + $0x2e0] sm:$0xff] %vm222, %v816
      %853 = vst [vmem:[#allocation2 + $0x2e8] sm:$0xff] %v830
      %854 = vst [vmem:[#allocation2 + $0x2f0] sm:$0xff] %v831
      %855 = vst.msk [vmem:[#allocation2 + $0x2f8] sm:$0xff] %vm222, %v822
      %v856 = vld [vmem:[%s192] sm:$0xff]
      %v857 = vld [vmem:[%s192 + $0x8] sm:$0xf]
      %v858 = vld [vmem:[%s192 + $0xc] sm:$0xff]
      %v859 = vld [vmem:[%s192 + $0x14] sm:$0xf]
      %v860 = vld [vmem:[%s192 + $0x18] sm:$0xff]
      %v861 = vld [vmem:[%s192 + $0x20] sm:$0xf]
      %v862 = vld [vmem:[%s192 + $0x24] sm:$0xff]
      %v863 = vld [vmem:[%s192 + $0x2c] sm:$0xf]
      %v864 = vunpack.c.l.bf16 %v856
      %v865 = vunpack.c.h.bf16 %v856
      %v866 = vunpack.c.l.bf16 %v857
      %v867 = vunpack.c.l.bf16 %v858
      %v868 = vunpack.c.h.bf16 %v858
      %v869 = vunpack.c.l.bf16 %v859
      %v870 = vunpack.c.l.bf16 %v860
      %v871 = vunpack.c.h.bf16 %v860
      %v872 = vunpack.c.l.bf16 %v861
      %v873 = vunpack.c.l.bf16 %v862
      %v874 = vunpack.c.h.bf16 %v862
      %v875 = vunpack.c.l.bf16 %v863
      %888 = vrot.lane.b32.xlu0 %v864, 90
      %v889 = vpop.permute.xlu0 %888
      %890 = vrot.lane.b32.xlu0 %v865, 90
      %v891 = vpop.permute.xlu0 %890
      %892 = vrot.lane.b32.xlu0 %v866, 90
      %v893 = vpop.permute.xlu0 %892
      %894 = vrot.lane.b32.xlu0 %v867, 90
      %v895 = vpop.permute.xlu0 %894
      %896 = vrot.lane.b32.xlu0 %v868, 90
      %v897 = vpop.permute.xlu0 %896
      %898 = vrot.lane.b32.xlu0 %v869, 90
      %v899 = vpop.permute.xlu0 %898
      %900 = vrot.lane.b32.xlu0 %v870, 90
      %v901 = vpop.permute.xlu0 %900
      %902 = vrot.lane.b32.xlu0 %v871, 90
      %v903 = vpop.permute.xlu0 %902
      %904 = vrot.lane.b32.xlu0 %v872, 90
      %v905 = vpop.permute.xlu0 %904
      %906 = vrot.lane.b32.xlu0 %v873, 90
      %v907 = vpop.permute.xlu0 %906
      %908 = vrot.lane.b32.xlu0 %v874, 90
      %v909 = vpop.permute.xlu0 %908
      %910 = vrot.lane.b32.xlu0 %v875, 90
      %v911 = vpop.permute.xlu0 %910
      %vm912 = vcmask 736256
      %v913 = vsel %vm912, %v889, %v891
      %v914 = vsel %vm912, %v891, %v893
      %v915 = vsel %vm912, %v895, %v897
      %v916 = vsel %vm912, %v897, %v899
      %v917 = vsel %vm912, %v901, %v903
      %v918 = vsel %vm912, %v903, %v905
      %v919 = vsel %vm912, %v907, %v909
      %v920 = vsel %vm912, %v909, %v911
      %933 = vst [vmem:[#allocation2 + $0x300] sm:$0xff] %v913
      %934 = vst [vmem:[#allocation2 + $0x308] sm:$0xff] %v914
      %935 = vst.msk [vmem:[#allocation2 + $0x310] sm:$0xff] %vm222, %v893
      %936 = vst [vmem:[#allocation2 + $0x318] sm:$0xff] %v915
      %937 = vst [vmem:[#allocation2 + $0x320] sm:$0xff] %v916
      %938 = vst.msk [vmem:[#allocation2 + $0x328] sm:$0xff] %vm222, %v899
      %939 = vst [vmem:[#allocation2 + $0x330] sm:$0xff] %v917
      %940 = vst [vmem:[#allocation2 + $0x338] sm:$0xff] %v918
      %941 = vst.msk [vmem:[#allocation2 + $0x340] sm:$0xff] %vm222, %v905
      %942 = vst [vmem:[#allocation2 + $0x348] sm:$0xff] %v919
      %943 = vst [vmem:[#allocation2 + $0x350] sm:$0xff] %v920
      %944 = vst.msk [vmem:[#allocation2 + $0x358] sm:$0xff] %vm222, %v911
      %v945 = vld [vmem:[%s1] sm:$0xff]
      %v946 = vld [vmem:[%s1 + $0x8] sm:$0xf]
      %v947 = vld [vmem:[%s1 + $0xc] sm:$0xff]
      %v948 = vld [vmem:[%s1 + $0x14] sm:$0xf]
      %v949 = vld [vmem:[#allocation2] sm:$0xff]
      %v950 = vld [vmem:[#allocation2 + $0x8] sm:$0xff]
      %v951 = vld [vmem:[#allocation2 + $0x10] sm:$0xff]
      %v952 = vld [vmem:[#allocation2 + $0x18] sm:$0xff]
      %v953 = vld [vmem:[#allocation2 + $0x20] sm:$0xff]
      %v954 = vld [vmem:[#allocation2 + $0x28] sm:$0xff]
      %v955 = vld [vmem:[#allocation2 + $0x30] sm:$0xff]
      %v956 = vld [vmem:[#allocation2 + $0x38] sm:$0xff]
      %v957 = vld [vmem:[#allocation2 + $0x40] sm:$0xff]
      %v958 = vld [vmem:[#allocation2 + $0x48] sm:$0xff]
      %v959 = vld [vmem:[#allocation2 + $0x50] sm:$0xff]
      %v960 = vld [vmem:[#allocation2 + $0x58] sm:$0xff]
      %v961 = vld [vmem:[#allocation2 + $0x60] sm:$0xff]
      %v962 = vld [vmem:[#allocation2 + $0x68] sm:$0xff]
      %v963 = vld [vmem:[#allocation2 + $0x70] sm:$0xff]
      %v964 = vld [vmem:[#allocation2 + $0x78] sm:$0xff]
      %v965 = vld [vmem:[#allocation2 + $0x80] sm:$0xff]
      %v966 = vld [vmem:[#allocation2 + $0x88] sm:$0xff]
      %v967 = vld [vmem:[#allocation2 + $0x90] sm:$0xff]
      %v968 = vld [vmem:[#allocation2 + $0x98] sm:$0xff]
      %v969 = vld [vmem:[#allocation2 + $0xa0] sm:$0xff]
      %v970 = vld [vmem:[#allocation2 + $0xa8] sm:$0xff]
      %v971 = vld [vmem:[#allocation2 + $0xb0] sm:$0xff]
      %v972 = vld [vmem:[#allocation2 + $0xb8] sm:$0xff]
      %v973 = vld [vmem:[#allocation2 + $0xc0] sm:$0xff]
      %v974 = vld [vmem:[#allocation2 + $0xc8] sm:$0xff]
      %v975 = vld [vmem:[#allocation2 + $0xd0] sm:$0xff]
      %v976 = vld [vmem:[#allocation2 + $0xd8] sm:$0xff]
      %v977 = vld [vmem:[#allocation2 + $0xe0] sm:$0xff]
      %v978 = vld [vmem:[#allocation2 + $0xe8] sm:$0xff]
      %v979 = vld [vmem:[#allocation2 + $0xf0] sm:$0xff]
      %v980 = vld [vmem:[#allocation2 + $0xf8] sm:$0xff]
      %v981 = vld [vmem:[#allocation2 + $0x100] sm:$0xff]
      %v982 = vld [vmem:[#allocation2 + $0x108] sm:$0xff]
      %v983 = vld [vmem:[#allocation2 + $0x110] sm:$0xff]
      %v984 = vld [vmem:[#allocation2 + $0x118] sm:$0xff]
      %v985 = vld [vmem:[#allocation2 + $0x120] sm:$0xff]
      %v986 = vld [vmem:[#allocation2 + $0x128] sm:$0xff]
      %v987 = vld [vmem:[#allocation2 + $0x130] sm:$0xff]
      %v988 = vld [vmem:[#allocation2 + $0x138] sm:$0xff]
      %v989 = vld [vmem:[#allocation2 + $0x140] sm:$0xff]
      %v990 = vld [vmem:[#allocation2 + $0x148] sm:$0xff]
      %v991 = vld [vmem:[#allocation2 + $0x150] sm:$0xff]
      %v992 = vld [vmem:[#allocation2 + $0x158] sm:$0xff]
      %v993 = vld [vmem:[#allocation2 + $0x160] sm:$0xff]
      %v994 = vld [vmem:[#allocation2 + $0x168] sm:$0xff]
      %v995 = vld [vmem:[#allocation2 + $0x170] sm:$0xff]
      %v996 = vld [vmem:[#allocation2 + $0x178] sm:$0xff]
      %v997 = vld [vmem:[#allocation2 + $0x180] sm:$0xff]
      %v998 = vld [vmem:[#allocation2 + $0x188] sm:$0xff]
      %v999 = vld [vmem:[#allocation2 + $0x190] sm:$0xff]
      %v1000 = vld [vmem:[#allocation2 + $0x198] sm:$0xff]
      %v1001 = vld [vmem:[#allocation2 + $0x1a0] sm:$0xff]
      %v1002 = vld [vmem:[#allocation2 + $0x1a8] sm:$0xff]
      %v1003 = vld [vmem:[#allocation2 + $0x1b0] sm:$0xff]
      %v1004 = vld [vmem:[#allocation2 + $0x1b8] sm:$0xff]
      %v1005 = vld [vmem:[#allocation2 + $0x1c0] sm:$0xff]
      %v1006 = vld [vmem:[#allocation2 + $0x1c8] sm:$0xff]
      %v1007 = vld [vmem:[#allocation2 + $0x1d0] sm:$0xff]
      %v1008 = vld [vmem:[#allocation2 + $0x1d8] sm:$0xff]
      %v1009 = vld [vmem:[#allocation2 + $0x1e0] sm:$0xff]
      %v1010 = vld [vmem:[#allocation2 + $0x1e8] sm:$0xff]
      %v1011 = vld [vmem:[#allocation2 + $0x1f0] sm:$0xff]
      %v1012 = vld [vmem:[#allocation2 + $0x1f8] sm:$0xff]
      %v1013 = vld [vmem:[#allocation2 + $0x200] sm:$0xff]
      %v1014 = vld [vmem:[#allocation2 + $0x208] sm:$0xff]
      %v1015 = vld [vmem:[#allocation2 + $0x210] sm:$0xff]
      %v1016 = vld [vmem:[#allocation2 + $0x218] sm:$0xff]
      %v1017 = vld [vmem:[#allocation2 + $0x220] sm:$0xff]
      %v1018 = vld [vmem:[#allocation2 + $0x228] sm:$0xff]
      %v1019 = vld [vmem:[#allocation2 + $0x230] sm:$0xff]
      %v1020 = vld [vmem:[#allocation2 + $0x238] sm:$0xff]
      %v1021 = vld [vmem:[#allocation2 + $0x240] sm:$0xff]
      %v1022 = vld [vmem:[#allocation2 + $0x248] sm:$0xff]
      %v1023 = vld [vmem:[#allocation2 + $0x250] sm:$0xff]
      %v1024 = vld [vmem:[#allocation2 + $0x258] sm:$0xff]
      %v1025 = vld [vmem:[#allocation2 + $0x260] sm:$0xff]
      %v1026 = vld [vmem:[#allocation2 + $0x268] sm:$0xff]
      %v1027 = vld [vmem:[#allocation2 + $0x270] sm:$0xff]
      %v1028 = vld [vmem:[#allocation2 + $0x278] sm:$0xff]
      %v1029 = vld [vmem:[#allocation2 + $0x280] sm:$0xff]
      %v1030 = vld [vmem:[#allocation2 + $0x288] sm:$0xff]
      %v1031 = vld [vmem:[#allocation2 + $0x290] sm:$0xff]
      %v1032 = vld [vmem:[#allocation2 + $0x298] sm:$0xff]
      %v1033 = vld [vmem:[#allocation2 + $0x2a0] sm:$0xff]
      %v1034 = vld [vmem:[#allocation2 + $0x2a8] sm:$0xff]
      %v1035 = vld [vmem:[#allocation2 + $0x2b0] sm:$0xff]
      %v1036 = vld [vmem:[#allocation2 + $0x2b8] sm:$0xff]
      %v1037 = vld [vmem:[#allocation2 + $0x2c0] sm:$0xff]
      %v1038 = vld [vmem:[#allocation2 + $0x2c8] sm:$0xff]
      %v1039 = vld [vmem:[#allocation2 + $0x2d0] sm:$0xff]
      %v1040 = vld [vmem:[#allocation2 + $0x2d8] sm:$0xff]
      %v1041 = vld [vmem:[#allocation2 + $0x2e0] sm:$0xff]
      %v1042 = vld [vmem:[#allocation2 + $0x2e8] sm:$0xff]
      %v1043 = vld [vmem:[#allocation2 + $0x2f0] sm:$0xff]
      %v1044 = vld [vmem:[#allocation2 + $0x2f8] sm:$0xff]
      %v1045 = vld [vmem:[#allocation2 + $0x300] sm:$0xff]
      %v1046 = vld [vmem:[#allocation2 + $0x308] sm:$0xff]
      %v1047 = vld [vmem:[#allocation2 + $0x310] sm:$0xff]
      %v1048 = vld [vmem:[#allocation2 + $0x318] sm:$0xff]
      %v1049 = vld [vmem:[#allocation2 + $0x320] sm:$0xff]
      %v1050 = vld [vmem:[#allocation2 + $0x328] sm:$0xff]
      %v1051 = vld [vmem:[#allocation2 + $0x330] sm:$0xff]
      %v1052 = vld [vmem:[#allocation2 + $0x338] sm:$0xff]
      %v1053 = vld [vmem:[#allocation2 + $0x340] sm:$0xff]
      %v1054 = vld [vmem:[#allocation2 + $0x348] sm:$0xff]
      %v1055 = vld [vmem:[#allocation2 + $0x350] sm:$0xff]
      %v1056 = vld [vmem:[#allocation2 + $0x358] sm:$0xff]
      %v1057 = vpack.c.bf16 %v952, %v949
      %v1058 = vpack.c.bf16 %v953, %v950
      %v1059 = vpack.c.bf16 %v954, %v951
      %v1060 = vpack.c.bf16 %v958, %v955
      %v1061 = vpack.c.bf16 %v959, %v956
      %v1062 = vpack.c.bf16 %v960, %v957
      %v1063 = vpack.c.bf16 %v964, %v961
      %v1064 = vpack.c.bf16 %v965, %v962
      %v1065 = vpack.c.bf16 %v966, %v963
      %v1066 = vpack.c.bf16 %v970, %v967
      %v1067 = vpack.c.bf16 %v971, %v968
      %v1068 = vpack.c.bf16 %v972, %v969
      %v1069 = vpack.c.bf16 %v976, %v973
      %v1070 = vpack.c.bf16 %v977, %v974
      %v1071 = vpack.c.bf16 %v978, %v975
      %v1072 = vpack.c.bf16 %v982, %v979
      %v1073 = vpack.c.bf16 %v983, %v980
      %v1074 = vpack.c.bf16 %v984, %v981
      %v1075 = vpack.c.bf16 %v988, %v985
      %v1076 = vpack.c.bf16 %v989, %v986
      %v1077 = vpack.c.bf16 %v990, %v987
      %v1078 = vpack.c.bf16 %v994, %v991
      %v1079 = vpack.c.bf16 %v995, %v992
      %v1080 = vpack.c.bf16 %v996, %v993
      %v1081 = vpack.c.bf16 %v1000, %v997
      %v1082 = vpack.c.bf16 %v1001, %v998
      %v1083 = vpack.c.bf16 %v1002, %v999
      %v1084 = vpack.c.bf16 %v1006, %v1003
      %v1085 = vpack.c.bf16 %v1007, %v1004
      %v1086 = vpack.c.bf16 %v1008, %v1005
      %v1087 = vpack.c.bf16 %v1012, %v1009
      %v1088 = vpack.c.bf16 %v1013, %v1010
      %v1089 = vpack.c.bf16 %v1014, %v1011
      %v1090 = vpack.c.bf16 %v1018, %v1015
      %v1091 = vpack.c.bf16 %v1019, %v1016
      %v1092 = vpack.c.bf16 %v1020, %v1017
      %v1093 = vpack.c.bf16 %v1024, %v1021
      %v1094 = vpack.c.bf16 %v1025, %v1022
      %v1095 = vpack.c.bf16 %v1026, %v1023
      %v1096 = vpack.c.bf16 %v1030, %v1027
      %v1097 = vpack.c.bf16 %v1031, %v1028
      %v1098 = vpack.c.bf16 %v1032, %v1029
      %v1099 = vpack.c.bf16 %v1036, %v1033
      %v1100 = vpack.c.bf16 %v1037, %v1034
      %v1101 = vpack.c.bf16 %v1038, %v1035
      %v1102 = vpack.c.bf16 %v1042, %v1039
      %v1103 = vpack.c.bf16 %v1043, %v1040
      %v1104 = vpack.c.bf16 %v1044, %v1041
      %v1105 = vpack.c.bf16 %v1048, %v1045
      %v1106 = vpack.c.bf16 %v1049, %v1046
      %v1107 = vpack.c.bf16 %v1050, %v1047
      %v1108 = vpack.c.bf16 %v1054, %v1051
      %v1109 = vpack.c.bf16 %v1055, %v1052
      %v1110 = vpack.c.bf16 %v1056, %v1053
      %v1115 = vunpack.c.l.b16 %v945
      %v1116 = vunpack.c.h.b16 %v945
      %v1117 = vunpack.c.l.b16 %v946
      %v1118 = vunpack.c.l.b16 %v947
      %v1119 = vunpack.c.h.b16 %v947
      %v1120 = vunpack.c.l.b16 %v948
      %v1121 = vpack.c.b16 %v1118, %v1115
      %v1122 = vpack.c.b16 %v1119, %v1116
      %v1123 = vpack.c.b16 %v1120, %v1117
      %vm1126 = vcmask 261120
      %v1128 = vsel %vm1126, %v1123, 0
      %1130 = vmatprep.subr.bf16.mxu0 %v1079
      %1131 = vmatpush1.bf16.msra.mxu0 %v1078
      %1132 = vmatprep.subr.bf16.mxu0 %v1076
      %1133 = vmatpush1.bf16.msra.mxu0 %v1075
      %1134 = vmatprep.subr.bf16.mxu0 %v1073
      %1135 = vmatpush1.bf16.msra.mxu0 %v1072
      %1136 = vmatprep.subr.bf16.mxu0 %v1070
      %1137 = vmatpush1.bf16.msra.mxu0 %v1069
      %1138 = vmatprep.subr.bf16.mxu0 %v1067
      %1139 = vmatpush1.bf16.msra.mxu0 %v1066
      %1140 = vmatprep.subr.bf16.mxu0 %v1064
      %1141 = vmatpush1.bf16.msra.mxu0 %v1063
      %1142 = vmatprep.subr.bf16.mxu0 %v1061
      %1143 = vmatpush1.bf16.msra.mxu0 %v1060
      %1144 = vmatprep.subr.bf16.mxu0 %v1058
      %1145 = vmatpush1.bf16.msra.mxu0 %v1057
      %1146 = vmatprep.subr.bf16.mxu0 %v1103
      %1147 = vmatpush2.bf16.msra.mxu0 %v1102
      %1148 = vmatprep.subr.bf16.mxu0 %v1100
      %1149 = vmatpush2.bf16.msra.mxu0 %v1099
      %1150 = vmatprep.subr.bf16.mxu0 %v1097
      %1151 = vmatpush2.bf16.msra.mxu0 %v1096
      %1152 = vmatprep.subr.bf16.mxu0 %v1094
      %1153 = vmatpush2.bf16.msra.mxu0 %v1093
      %1154 = vmatprep.subr.bf16.mxu0 %v1091
      %1155 = vmatpush2.bf16.msra.mxu0 %v1090
      %1156 = vmatprep.subr.bf16.mxu0 %v1088
      %1157 = vmatpush2.bf16.msra.mxu0 %v1087
      %1158 = vmatprep.subr.bf16.mxu0 %v1085
      %1159 = vmatpush2.bf16.msra.mxu0 %v1084
      %1160 = vmatprep.subr.bf16.mxu0 %v1082
      %1161 = vmatpush2.bf16.msra.mxu0 %v1081
      %1162 = vmatprep.mubr.bf16.mxu0 %v1122
      %1163 = vmatmul.mubr.bf16.gmra.mxu0 %v1121
      %v1164 = vpop.f32.mrf.mxu0
      %v1165 = vadd.f32 0.0, %v1164
      %v1166 = vpop.f32.mrf.mxu0
      %v1167 = vadd.f32 0.0, %v1166
      %v1168 = vpop.f32.mrf.mxu0
      %v1169 = vadd.f32 0.0, %v1168
      %v1170 = vpop.f32.mrf.mxu0
      %v1171 = vadd.f32 0.0, %v1170
      %1172 = vdwg.mxu0
      %1173 = vmatprep.subr.bf16.mxu0 0
      %1174 = vmatpush1.bf16.msra.mxu0 0
      %1175 = vmatprep.subr.bf16.mxu0 0
      %1176 = vmatpush1.bf16.msra.mxu0 0
      %1177 = vmatprep.subr.bf16.mxu0 0
      %1178 = vmatpush1.bf16.msra.mxu0 0
      %1179 = vmatprep.subr.bf16.mxu0 0
      %1180 = vmatpush1.bf16.msra.mxu0 0
      %1181 = vmatprep.subr.bf16.mxu0 0
      %1182 = vmatpush1.bf16.msra.mxu0 0
      %1183 = vmatprep.subr.bf16.mxu0 0
      %1184 = vmatpush1.bf16.msra.mxu0 0
      %1185 = vmatprep.subr.bf16.mxu0 %v1109
      %1186 = vmatpush1.bf16.msra.mxu0 %v1108
      %1187 = vmatprep.subr.bf16.mxu0 %v1106
      %1188 = vmatpush1.bf16.msra.mxu0 %v1105
      %1189 = vmatprep.subr.bf16.mxu0 0
      %1190 = vmatpush2.bf16.msra.mxu0 0
      %1191 = vmatprep.subr.bf16.mxu0 0
      %1192 = vmatpush2.bf16.msra.mxu0 0
      %1193 = vmatprep.subr.bf16.mxu0 0
      %1194 = vmatpush2.bf16.msra.mxu0 0
      %1195 = vmatprep.subr.bf16.mxu0 0
      %1196 = vmatpush2.bf16.msra.mxu0 0
      %1197 = vmatprep.subr.bf16.mxu0 0
      %1198 = vmatpush2.bf16.msra.mxu0 0
      %1199 = vmatprep.subr.bf16.mxu0 0
      %1200 = vmatpush2.bf16.msra.mxu0 0
      %1201 = vmatprep.subr.bf16.mxu0 0
      %1202 = vmatpush2.bf16.msra.mxu0 0
      %1203 = vmatprep.subr.bf16.mxu0 0
      %1204 = vmatpush2.bf16.msra.mxu0 0
      %1205 = vmatprep.mubr.bf16.mxu0 0
      %1206 = vmatmul.mubr.bf16.gmra.mxu0 %v1128
      %v1207 = vpop.f32.mrf.mxu0
      %v1208 = vadd.f32 %v1165, %v1207
      %v1209 = vpop.f32.mrf.mxu0
      %v1210 = vadd.f32 %v1167, %v1209
      %v1211 = vpop.f32.mrf.mxu0
      %v1212 = vadd.f32 %v1169, %v1211
      %v1213 = vpop.f32.mrf.mxu0
      %v1214 = vadd.f32 %v1171, %v1213
      %1215 = vdwg.mxu0
      %1216 = vmatprep.subr.bf16.mxu0 0
      %1217 = vmatpush1.bf16.msra.mxu0 %v1080
      %1218 = vmatprep.subr.bf16.mxu0 0
      %1219 = vmatpush1.bf16.msra.mxu0 %v1077
      %1220 = vmatprep.subr.bf16.mxu0 0
      %1221 = vmatpush1.bf16.msra.mxu0 %v1074
      %1222 = vmatprep.subr.bf16.mxu0 0
      %1223 = vmatpush1.bf16.msra.mxu0 %v1071
      %1224 = vmatprep.subr.bf16.mxu0 0
      %1225 = vmatpush1.bf16.msra.mxu0 %v1068
      %1226 = vmatprep.subr.bf16.mxu0 0
      %1227 = vmatpush1.bf16.msra.mxu0 %v1065
      %1228 = vmatprep.subr.bf16.mxu0 0
      %1229 = vmatpush1.bf16.msra.mxu0 %v1062
      %1230 = vmatprep.subr.bf16.mxu0 0
      %1231 = vmatpush1.bf16.msra.mxu0 %v1059
      %1232 = vmatprep.subr.bf16.mxu0 0
      %1233 = vmatpush2.bf16.msra.mxu0 %v1104
      %1234 = vmatprep.subr.bf16.mxu0 0
      %1235 = vmatpush2.bf16.msra.mxu0 %v1101
      %1236 = vmatprep.subr.bf16.mxu0 0
      %1237 = vmatpush2.bf16.msra.mxu0 %v1098
      %1238 = vmatprep.subr.bf16.mxu0 0
      %1239 = vmatpush2.bf16.msra.mxu0 %v1095
      %1240 = vmatprep.subr.bf16.mxu0 0
      %1241 = vmatpush2.bf16.msra.mxu0 %v1092
      %1242 = vmatprep.subr.bf16.mxu0 0
      %1243 = vmatpush2.bf16.msra.mxu0 %v1089
      %1244 = vmatprep.subr.bf16.mxu0 0
      %1245 = vmatpush2.bf16.msra.mxu0 %v1086
      %1246 = vmatprep.subr.bf16.mxu0 0
      %1247 = vmatpush2.bf16.msra.mxu0 %v1083
      %1248 = vmatprep.mubr.bf16.mxu0 %v1122
      %1249 = vmatmul.mubr.bf16.gmra.mxu0 %v1121
      %v1250 = vpop.f32.mrf.mxu0
      %v1251 = vadd.f32 0.0, %v1250
      %v1252 = vpop.f32.mrf.mxu0
      %v1253 = vpop.f32.mrf.mxu0
      %v1254 = vadd.f32 0.0, %v1253
      %v1255 = vpop.f32.mrf.mxu0
      %1256 = vdwg.mxu0
      %1257 = vmatprep.subr.bf16.mxu0 0
      %1258 = vmatpush1.bf16.msra.mxu0 0
      %1259 = vmatprep.subr.bf16.mxu0 0
      %1260 = vmatpush1.bf16.msra.mxu0 0
      %1261 = vmatprep.subr.bf16.mxu0 0
      %1262 = vmatpush1.bf16.msra.mxu0 0
      %1263 = vmatprep.subr.bf16.mxu0 0
      %1264 = vmatpush1.bf16.msra.mxu0 0
      %1265 = vmatprep.subr.bf16.mxu0 0
      %1266 = vmatpush1.bf16.msra.mxu0 0
      %1267 = vmatprep.subr.bf16.mxu0 0
      %1268 = vmatpush1.bf16.msra.mxu0 0
      %1269 = vmatprep.subr.bf16.mxu0 0
      %1270 = vmatpush1.bf16.msra.mxu0 %v1110
      %1271 = vmatprep.subr.bf16.mxu0 0
      %1272 = vmatpush1.bf16.msra.mxu0 %v1107
      %1273 = vmatprep.subr.bf16.mxu0 0
      %1274 = vmatpush2.bf16.msra.mxu0 0
      %1275 = vmatprep.subr.bf16.mxu0 0
      %1276 = vmatpush2.bf16.msra.mxu0 0
      %1277 = vmatprep.subr.bf16.mxu0 0
      %1278 = vmatpush2.bf16.msra.mxu0 0
      %1279 = vmatprep.subr.bf16.mxu0 0
      %1280 = vmatpush2.bf16.msra.mxu0 0
      %1281 = vmatprep.subr.bf16.mxu0 0
      %1282 = vmatpush2.bf16.msra.mxu0 0
      %1283 = vmatprep.subr.bf16.mxu0 0
      %1284 = vmatpush2.bf16.msra.mxu0 0
      %1285 = vmatprep.subr.bf16.mxu0 0
      %1286 = vmatpush2.bf16.msra.mxu0 0
      %1287 = vmatprep.subr.bf16.mxu0 0
      %1288 = vmatpush2.bf16.msra.mxu0 0
      %1289 = vmatprep.mubr.bf16.mxu0 0
      %1290 = vmatmul.mubr.bf16.gmra.mxu0 %v1128
      %v1291 = vpop.f32.mrf.mxu0
      %v1292 = vadd.f32 %v1251, %v1291
      %v1293 = vpop.f32.mrf.mxu0
      %v1294 = vpop.f32.mrf.mxu0
      %v1295 = vadd.f32 %v1254, %v1294
      %v1296 = vpop.f32.mrf.mxu0
      %1297 = vdwg.mxu0
      %v1299 = vlaneseq
      %v1300 = vshrl.u32 %v1299, 7
      %v1301 = vsub.s32 0, %v1300
      %v1302 = vrot.slane %v199, %v1301
      %v1303 = vlaneseq
      %v1304 = vshrl.u32 %v1303, 7
      %v1305 = vsub.s32 1, %v1304
      %v1306 = vrot.slane %v199, %v1305
      %v1307 = vlaneseq
      %v1308 = vshrl.u32 %v1307, 7
      %v1309 = vsub.s32 2, %v1308
      %v1310 = vrot.slane %v199, %v1309
      %v1314 = vmul.f32 %v1208, %v1302
      %v1315 = vmul.f32 %v1210, %v1306
      %v1316 = vmul.f32 %v1292, %v1310
      %v1317 = vmul.f32 %v1212, %v1302
      %v1318 = vmul.f32 %v1214, %v1306
      %v1319 = vmul.f32 %v1295, %v1310
      %v1320 = vadd.f32 %v1314, %v1315
      %v1321 = vsel %vm222, %v1316, 0.0
      %v1322 = vadd.f32 %v1320, %v1321
      %1323 = vadd.xlane.f32.xlu0 %v1322
      %v1324 = vpop.xlane.xlu0 %1323
      %v1325 = vadd.f32 %v1317, %v1318
      %v1326 = vsel %vm222, %v1319, 0.0
      %v1327 = vadd.f32 %v1325, %v1326
      %1328 = vadd.xlane.f32.xlu0 %v1327
      %v1329 = vpop.xlane.xlu0 %1328
      %v1330 = vmul.f32 %v1324, 0.00390625
      %v1331 = vmul.f32 %v1329, 0.00390625
      %v1332 = vsub.f32 %v1208, %v1330
      %v1333 = vsub.f32 %v1210, %v1330
      %v1334 = vsub.f32 %v1292, %v1330
      %v1335 = vsub.f32 %v1212, %v1331
      %v1336 = vsub.f32 %v1214, %v1331
      %v1337 = vsub.f32 %v1295, %v1331
      %v1338 = vmul.f32 %v1332, %v1302
      %v1339 = vmul.f32 %v1333, %v1306
      %v1340 = vmul.f32 %v1334, %v1310
      %v1341 = vmul.f32 %v1335, %v1302
      %v1342 = vmul.f32 %v1336, %v1306
      %v1343 = vmul.f32 %v1337, %v1310
      %v1344 = vmul.f32 %v1338, %v1338
      %v1345 = vmul.f32 %v1339, %v1339
      %v1346 = vmul.f32 %v1340, %v1340
      %v1347 = vmul.f32 %v1341, %v1341
      %v1348 = vmul.f32 %v1342, %v1342
      %v1349 = vmul.f32 %v1343, %v1343
      %v1350 = vadd.f32 %v1344, %v1345
      %v1351 = vsel %vm222, %v1346, 0.0
      %v1352 = vadd.f32 %v1350, %v1351
      %1353 = vadd.xlane.f32.xlu0 %v1352
      %v1354 = vpop.xlane.xlu0 %1353
      %v1355 = vadd.f32 %v1347, %v1348
      %v1356 = vsel %vm222, %v1349, 0.0
      %v1357 = vadd.f32 %v1355, %v1356
      %1358 = vadd.xlane.f32.xlu0 %v1357
      %v1359 = vpop.xlane.xlu0 %1358
      %v1360 = vmul.f32 %v1354, 0.00390625
      %v1361 = vmul.f32 %v1359, 0.00390625
      %v1362 = vadd.f32 %v1360, 1e-05
      %v1363 = vadd.f32 %v1361, 1e-05
      %v1364 = vrsqrt.pop %v1362
      %v1365 = vrsqrt.pop %v1363
      %v1366 = vmul.f32 %v1338, %v1364
      %v1367 = vmul.f32 %v1339, %v1364
      %v1368 = vmul.f32 %v1340, %v1364
      %v1369 = vmul.f32 %v1341, %v1365
      %v1370 = vmul.f32 %v1342, %v1365
      %v1371 = vmul.f32 %v1343, %v1365
      %v1372 = vmax.f32 %v1366, 0.0
      %v1373 = vmax.f32 %v1367, 0.0
      %v1374 = vmax.f32 %v1368, 0.0
      %v1375 = vmax.f32 %v1369, 0.0
      %v1376 = vmax.f32 %v1370, 0.0
      %v1377 = vmax.f32 %v1371, 0.0
      %vm1378 = vcmask 154624
      %1379 = vst.msk [vmem:[#allocation3] sm:$0xff] %vm1378, 0.0
      %1380 = vst.msk [vmem:[#allocation3 + $0x18] sm:$0xff] %vm1378, 0.0
      %1387 = vrot.lane.b32.xlu0 %v1372, 19
      %v1388 = vpop.permute.xlu0 %1387
      %1389 = vrot.lane.b32.xlu0 %v1373, 19
      %v1390 = vpop.permute.xlu0 %1389
      %1391 = vrot.lane.b32.xlu0 %v1374, 19
      %v1392 = vpop.permute.xlu0 %1391
      %1393 = vrot.lane.b32.xlu0 %v1375, 19
      %v1394 = vpop.permute.xlu0 %1393
      %1395 = vrot.lane.b32.xlu0 %v1376, 19
      %v1396 = vpop.permute.xlu0 %1395
      %1397 = vrot.lane.b32.xlu0 %v1377, 19
      %v1398 = vpop.permute.xlu0 %1397
      %v1399 = vsel %vm1378, %v1388, %v1390
      %v1400 = vsel %vm1378, %v1390, %v1392
      %v1401 = vsel %vm1378, %v1394, %v1396
      %v1402 = vsel %vm1378, %v1396, %v1398
      %vm1409 = vcmask 1047704
      %1410 = vst.msk [vmem:[#allocation3] sm:$0xff] %vm1409, %v1388
      %1411 = vst [vmem:[#allocation3 + $0x8] sm:$0xff] %v1399
      %vm1412 = vcmask 711680
      %1413 = vst.msk [vmem:[#allocation3 + $0x10] sm:$0xff] %vm1412, %v1400
      %1414 = vst.msk [vmem:[#allocation3 + $0x18] sm:$0xff] %vm1409, %v1394
      %1415 = vst [vmem:[#allocation3 + $0x20] sm:$0xff] %v1401
      %1416 = vst.msk [vmem:[#allocation3 + $0x28] sm:$0xff] %vm1412, %v1402
      %vm1417 = vcmask 868024
      %1418 = vst.msk [vmem:[#allocation3 + $0x10] sm:$0xff] %vm1417, 0.0
      %1419 = vst.msk [vmem:[#allocation3 + $0x28] sm:$0xff] %vm1417, 0.0
      %v1420 = vld [vmem:[#allocation3] sm:$0xff]
      %v1421 = vld [vmem:[#allocation3 + $0x8] sm:$0xff]
      %v1422 = vld [vmem:[#allocation3 + $0x10] sm:$0xff]
      %v1423 = vld [vmem:[#allocation3 + $0x18] sm:$0xff]
      %v1424 = vld [vmem:[#allocation3 + $0x20] sm:$0xff]
      %v1425 = vld [vmem:[#allocation3 + $0x28] sm:$0xff]
      %1426 = vst [vmem:[#allocation4] sm:$0xff] %v1420
      %1427 = vst [vmem:[#allocation4 + $0x8] sm:$0xff] %v1421
      %1428 = vst.msk [vmem:[#allocation4 + $0x10] sm:$0xff] %vm222, %v1422
      %1429 = vst [vmem:[#allocation4 + $0x18] sm:$0xff] %v1423
      %1430 = vst [vmem:[#allocation4 + $0x20] sm:$0xff] %v1424
      %1431 = vst.msk [vmem:[#allocation4 + $0x28] sm:$0xff] %vm222, %v1425
      %v1432 = vld [vmem:[#allocation3] sm:$0xff]
      %v1433 = vld [vmem:[#allocation3 + $0x8] sm:$0xff]
      %v1434 = vld [vmem:[#allocation3 + $0x10] sm:$0xff]
      %v1435 = vld [vmem:[#allocation3 + $0x18] sm:$0xff]
      %v1436 = vld [vmem:[#allocation3 + $0x20] sm:$0xff]
      %v1437 = vld [vmem:[#allocation3 + $0x28] sm:$0xff]
      %1444 = vrot.lane.b32.xlu0 %v1432, 127
      %v1445 = vpop.permute.xlu0 %1444
      %1446 = vrot.lane.b32.xlu0 %v1433, 127
      %v1447 = vpop.permute.xlu0 %1446
      %1448 = vrot.lane.b32.xlu0 %v1434, 127
      %v1449 = vpop.permute.xlu0 %1448
      %1450 = vrot.lane.b32.xlu0 %v1435, 127
      %v1451 = vpop.permute.xlu0 %1450
      %1452 = vrot.lane.b32.xlu0 %v1436, 127
      %v1453 = vpop.permute.xlu0 %1452
      %1454 = vrot.lane.b32.xlu0 %v1437, 127
      %v1455 = vpop.permute.xlu0 %1454
      %v1456 = vsel %vm289, %v1445, %v1447
      %v1457 = vsel %vm289, %v1447, %v1449
      %v1458 = vsel %vm289, %v1451, %v1453
      %v1459 = vsel %vm289, %v1453, %v1455
      %1466 = vst [vmem:[#allocation4 + $0x30] sm:$0xff] %v1456
      %1467 = vst [vmem:[#allocation4 + $0x38] sm:$0xff] %v1457
      %1468 = vst.msk [vmem:[#allocation4 + $0x40] sm:$0xff] %vm222, %v1449
      %1469 = vst [vmem:[#allocation4 + $0x48] sm:$0xff] %v1458
      %1470 = vst [vmem:[#allocation4 + $0x50] sm:$0xff] %v1459
      %1471 = vst.msk [vmem:[#allocation4 + $0x58] sm:$0xff] %vm222, %v1455
      %v1472 = vld [vmem:[#allocation3] sm:$0xff]
      %v1473 = vld [vmem:[#allocation3 + $0x8] sm:$0xff]
      %v1474 = vld [vmem:[#allocation3 + $0x10] sm:$0xff]
      %v1475 = vld [vmem:[#allocation3 + $0x18] sm:$0xff]
      %v1476 = vld [vmem:[#allocation3 + $0x20] sm:$0xff]
      %v1477 = vld [vmem:[#allocation3 + $0x28] sm:$0xff]
      %1484 = vrot.lane.b32.xlu0 %v1472, 126
      %v1485 = vpop.permute.xlu0 %1484
      %1486 = vrot.lane.b32.xlu0 %v1473, 126
      %v1487 = vpop.permute.xlu0 %1486
      %1488 = vrot.lane.b32.xlu0 %v1474, 126
      %v1489 = vpop.permute.xlu0 %1488
      %1490 = vrot.lane.b32.xlu0 %v1475, 126
      %v1491 = vpop.permute.xlu0 %1490
      %1492 = vrot.lane.b32.xlu0 %v1476, 126
      %v1493 = vpop.permute.xlu0 %1492
      %1494 = vrot.lane.b32.xlu0 %v1477, 126
      %v1495 = vpop.permute.xlu0 %1494
      %v1496 = vsel %vm378, %v1485, %v1487
      %v1497 = vsel %vm378, %v1487, %v1489
      %v1498 = vsel %vm378, %v1491, %v1493
      %v1499 = vsel %vm378, %v1493, %v1495
      %1506 = vst [vmem:[#allocation4 + $0x60] sm:$0xff] %v1496
      %1507 = vst [vmem:[#allocation4 + $0x68] sm:$0xff] %v1497
      %1508 = vst.msk [vmem:[#allocation4 + $0x70] sm:$0xff] %vm222, %v1489
      %1509 = vst [vmem:[#allocation4 + $0x78] sm:$0xff] %v1498
      %1510 = vst [vmem:[#allocation4 + $0x80] sm:$0xff] %v1499
      %1511 = vst.msk [vmem:[#allocation4 + $0x88] sm:$0xff] %vm222, %v1495
      %v1512 = vld [vmem:[#allocation3] sm:$0xff]
      %v1513 = vld [vmem:[#allocation3 + $0x8] sm:$0xff]
      %v1514 = vld [vmem:[#allocation3 + $0x10] sm:$0xff]
      %v1515 = vld [vmem:[#allocation3 + $0x18] sm:$0xff]
      %v1516 = vld [vmem:[#allocation3 + $0x20] sm:$0xff]
      %v1517 = vld [vmem:[#allocation3 + $0x28] sm:$0xff]
      %1524 = vrot.lane.b32.xlu0 %v1512, 110
      %v1525 = vpop.permute.xlu0 %1524
      %1526 = vrot.lane.b32.xlu0 %v1513, 110
      %v1527 = vpop.permute.xlu0 %1526
      %1528 = vrot.lane.b32.xlu0 %v1514, 110
      %v1529 = vpop.permute.xlu0 %1528
      %1530 = vrot.lane.b32.xlu0 %v1515, 110
      %v1531 = vpop.permute.xlu0 %1530
      %1532 = vrot.lane.b32.xlu0 %v1516, 110
      %v1533 = vpop.permute.xlu0 %1532
      %1534 = vrot.lane.b32.xlu0 %v1517, 110
      %v1535 = vpop.permute.xlu0 %1534
      %v1536 = vsel %vm467, %v1525, %v1527
      %v1537 = vsel %vm467, %v1527, %v1529
      %v1538 = vsel %vm467, %v1531, %v1533
      %v1539 = vsel %vm467, %v1533, %v1535
      %1546 = vst [vmem:[#allocation4 + $0x90] sm:$0xff] %v1536
      %1547 = vst [vmem:[#allocation4 + $0x98] sm:$0xff] %v1537
      %1548 = vst.msk [vmem:[#allocation4 + $0xa0] sm:$0xff] %vm222, %v1529
      %1549 = vst [vmem:[#allocation4 + $0xa8] sm:$0xff] %v1538
      %1550 = vst [vmem:[#allocation4 + $0xb0] sm:$0xff] %v1539
      %1551 = vst.msk [vmem:[#allocation4 + $0xb8] sm:$0xff] %vm222, %v1535
      %v1552 = vld [vmem:[#allocation3] sm:$0xff]
      %v1553 = vld [vmem:[#allocation3 + $0x8] sm:$0xff]
      %v1554 = vld [vmem:[#allocation3 + $0x10] sm:$0xff]
      %v1555 = vld [vmem:[#allocation3 + $0x18] sm:$0xff]
      %v1556 = vld [vmem:[#allocation3 + $0x20] sm:$0xff]
      %v1557 = vld [vmem:[#allocation3 + $0x28] sm:$0xff]
      %1564 = vrot.lane.b32.xlu0 %v1552, 109
      %v1565 = vpop.permute.xlu0 %1564
      %1566 = vrot.lane.b32.xlu0 %v1553, 109
      %v1567 = vpop.permute.xlu0 %1566
      %1568 = vrot.lane.b32.xlu0 %v1554, 109
      %v1569 = vpop.permute.xlu0 %1568
      %1570 = vrot.lane.b32.xlu0 %v1555, 109
      %v1571 = vpop.permute.xlu0 %1570
      %1572 = vrot.lane.b32.xlu0 %v1556, 109
      %v1573 = vpop.permute.xlu0 %1572
      %1574 = vrot.lane.b32.xlu0 %v1557, 109
      %v1575 = vpop.permute.xlu0 %1574
      %v1576 = vsel %vm556, %v1565, %v1567
      %v1577 = vsel %vm556, %v1567, %v1569
      %v1578 = vsel %vm556, %v1571, %v1573
      %v1579 = vsel %vm556, %v1573, %v1575
      %1586 = vst [vmem:[#allocation4 + $0xc0] sm:$0xff] %v1576
      %1587 = vst [vmem:[#allocation4 + $0xc8] sm:$0xff] %v1577
      %1588 = vst.msk [vmem:[#allocation4 + $0xd0] sm:$0xff] %vm222, %v1569
      %1589 = vst [vmem:[#allocation4 + $0xd8] sm:$0xff] %v1578
      %1590 = vst [vmem:[#allocation4 + $0xe0] sm:$0xff] %v1579
      %1591 = vst.msk [vmem:[#allocation4 + $0xe8] sm:$0xff] %vm222, %v1575
      %v1592 = vld [vmem:[#allocation3] sm:$0xff]
      %v1593 = vld [vmem:[#allocation3 + $0x8] sm:$0xff]
      %v1594 = vld [vmem:[#allocation3 + $0x10] sm:$0xff]
      %v1595 = vld [vmem:[#allocation3 + $0x18] sm:$0xff]
      %v1596 = vld [vmem:[#allocation3 + $0x20] sm:$0xff]
      %v1597 = vld [vmem:[#allocation3 + $0x28] sm:$0xff]
      %1604 = vrot.lane.b32.xlu0 %v1592, 108
      %v1605 = vpop.permute.xlu0 %1604
      %1606 = vrot.lane.b32.xlu0 %v1593, 108
      %v1607 = vpop.permute.xlu0 %1606
      %1608 = vrot.lane.b32.xlu0 %v1594, 108
      %v1609 = vpop.permute.xlu0 %1608
      %1610 = vrot.lane.b32.xlu0 %v1595, 108
      %v1611 = vpop.permute.xlu0 %1610
      %1612 = vrot.lane.b32.xlu0 %v1596, 108
      %v1613 = vpop.permute.xlu0 %1612
      %1614 = vrot.lane.b32.xlu0 %v1597, 108
      %v1615 = vpop.permute.xlu0 %1614
      %v1616 = vsel %vm645, %v1605, %v1607
      %v1617 = vsel %vm645, %v1607, %v1609
      %v1618 = vsel %vm645, %v1611, %v1613
      %v1619 = vsel %vm645, %v1613, %v1615
      %1626 = vst [vmem:[#allocation4 + $0xf0] sm:$0xff] %v1616
      %1627 = vst [vmem:[#allocation4 + $0xf8] sm:$0xff] %v1617
      %1628 = vst.msk [vmem:[#allocation4 + $0x100] sm:$0xff] %vm222, %v1609
      %1629 = vst [vmem:[#allocation4 + $0x108] sm:$0xff] %v1618
      %1630 = vst [vmem:[#allocation4 + $0x110] sm:$0xff] %v1619
      %1631 = vst.msk [vmem:[#allocation4 + $0x118] sm:$0xff] %vm222, %v1615
      %v1632 = vld [vmem:[#allocation3] sm:$0xff]
      %v1633 = vld [vmem:[#allocation3 + $0x8] sm:$0xff]
      %v1634 = vld [vmem:[#allocation3 + $0x10] sm:$0xff]
      %v1635 = vld [vmem:[#allocation3 + $0x18] sm:$0xff]
      %v1636 = vld [vmem:[#allocation3 + $0x20] sm:$0xff]
      %v1637 = vld [vmem:[#allocation3 + $0x28] sm:$0xff]
      %1644 = vrot.lane.b32.xlu0 %v1632, 92
      %v1645 = vpop.permute.xlu0 %1644
      %1646 = vrot.lane.b32.xlu0 %v1633, 92
      %v1647 = vpop.permute.xlu0 %1646
      %1648 = vrot.lane.b32.xlu0 %v1634, 92
      %v1649 = vpop.permute.xlu0 %1648
      %1650 = vrot.lane.b32.xlu0 %v1635, 92
      %v1651 = vpop.permute.xlu0 %1650
      %1652 = vrot.lane.b32.xlu0 %v1636, 92
      %v1653 = vpop.permute.xlu0 %1652
      %1654 = vrot.lane.b32.xlu0 %v1637, 92
      %v1655 = vpop.permute.xlu0 %1654
      %v1656 = vsel %vm734, %v1645, %v1647
      %v1657 = vsel %vm734, %v1647, %v1649
      %v1658 = vsel %vm734, %v1651, %v1653
      %v1659 = vsel %vm734, %v1653, %v1655
      %1666 = vst [vmem:[#allocation4 + $0x120] sm:$0xff] %v1656
      %1667 = vst [vmem:[#allocation4 + $0x128] sm:$0xff] %v1657
      %1668 = vst.msk [vmem:[#allocation4 + $0x130] sm:$0xff] %vm222, %v1649
      %1669 = vst [vmem:[#allocation4 + $0x138] sm:$0xff] %v1658
      %1670 = vst [vmem:[#allocation4 + $0x140] sm:$0xff] %v1659
      %1671 = vst.msk [vmem:[#allocation4 + $0x148] sm:$0xff] %vm222, %v1655
      %v1672 = vld [vmem:[#allocation3] sm:$0xff]
      %v1673 = vld [vmem:[#allocation3 + $0x8] sm:$0xff]
      %v1674 = vld [vmem:[#allocation3 + $0x10] sm:$0xff]
      %v1675 = vld [vmem:[#allocation3 + $0x18] sm:$0xff]
      %v1676 = vld [vmem:[#allocation3 + $0x20] sm:$0xff]
      %v1677 = vld [vmem:[#allocation3 + $0x28] sm:$0xff]
      %1684 = vrot.lane.b32.xlu0 %v1672, 91
      %v1685 = vpop.permute.xlu0 %1684
      %1686 = vrot.lane.b32.xlu0 %v1673, 91
      %v1687 = vpop.permute.xlu0 %1686
      %1688 = vrot.lane.b32.xlu0 %v1674, 91
      %v1689 = vpop.permute.xlu0 %1688
      %1690 = vrot.lane.b32.xlu0 %v1675, 91
      %v1691 = vpop.permute.xlu0 %1690
      %1692 = vrot.lane.b32.xlu0 %v1676, 91
      %v1693 = vpop.permute.xlu0 %1692
      %1694 = vrot.lane.b32.xlu0 %v1677, 91
      %v1695 = vpop.permute.xlu0 %1694
      %v1696 = vsel %vm823, %v1685, %v1687
      %v1697 = vsel %vm823, %v1687, %v1689
      %v1698 = vsel %vm823, %v1691, %v1693
      %v1699 = vsel %vm823, %v1693, %v1695
      %1706 = vst [vmem:[#allocation4 + $0x150] sm:$0xff] %v1696
      %1707 = vst [vmem:[#allocation4 + $0x158] sm:$0xff] %v1697
      %1708 = vst.msk [vmem:[#allocation4 + $0x160] sm:$0xff] %vm222, %v1689
      %1709 = vst [vmem:[#allocation4 + $0x168] sm:$0xff] %v1698
      %1710 = vst [vmem:[#allocation4 + $0x170] sm:$0xff] %v1699
      %1711 = vst.msk [vmem:[#allocation4 + $0x178] sm:$0xff] %vm222, %v1695
      %v1712 = vld [vmem:[#allocation3] sm:$0xff]
      %v1713 = vld [vmem:[#allocation3 + $0x8] sm:$0xff]
      %v1714 = vld [vmem:[#allocation3 + $0x10] sm:$0xff]
      %v1715 = vld [vmem:[#allocation3 + $0x18] sm:$0xff]
      %v1716 = vld [vmem:[#allocation3 + $0x20] sm:$0xff]
      %v1717 = vld [vmem:[#allocation3 + $0x28] sm:$0xff]
      %1724 = vrot.lane.b32.xlu0 %v1712, 90
      %v1725 = vpop.permute.xlu0 %1724
      %1726 = vrot.lane.b32.xlu0 %v1713, 90
      %v1727 = vpop.permute.xlu0 %1726
      %1728 = vrot.lane.b32.xlu0 %v1714, 90
      %v1729 = vpop.permute.xlu0 %1728
      %1730 = vrot.lane.b32.xlu0 %v1715, 90
      %v1731 = vpop.permute.xlu0 %1730
      %1732 = vrot.lane.b32.xlu0 %v1716, 90
      %v1733 = vpop.permute.xlu0 %1732
      %1734 = vrot.lane.b32.xlu0 %v1717, 90
      %v1735 = vpop.permute.xlu0 %1734
      %v1736 = vsel %vm912, %v1725, %v1727
      %v1737 = vsel %vm912, %v1727, %v1729
      %v1738 = vsel %vm912, %v1731, %v1733
      %v1739 = vsel %vm912, %v1733, %v1735
      %1746 = vst [vmem:[#allocation4 + $0x180] sm:$0xff] %v1736
      %1747 = vst [vmem:[#allocation4 + $0x188] sm:$0xff] %v1737
      %1748 = vst.msk [vmem:[#allocation4 + $0x190] sm:$0xff] %vm222, %v1729
      %1749 = vst [vmem:[#allocation4 + $0x198] sm:$0xff] %v1738
      %1750 = vst [vmem:[#allocation4 + $0x1a0] sm:$0xff] %v1739
      %1751 = vst.msk [vmem:[#allocation4 + $0x1a8] sm:$0xff] %vm222, %v1735
      %v1752 = vld [vmem:[%s2] sm:$0xff]
      %v1753 = vld [vmem:[%s2 + $0x8] sm:$0xff]
      %v1754 = vld [vmem:[#allocation4] sm:$0xff]
      %v1755 = vld [vmem:[#allocation4 + $0x8] sm:$0xff]
      %v1756 = vld [vmem:[#allocation4 + $0x10] sm:$0xff]
      %v1757 = vld [vmem:[#allocation4 + $0x18] sm:$0xff]
      %v1758 = vld [vmem:[#allocation4 + $0x20] sm:$0xff]
      %v1759 = vld [vmem:[#allocation4 + $0x28] sm:$0xff]
      %v1760 = vld [vmem:[#allocation4 + $0x30] sm:$0xff]
      %v1761 = vld [vmem:[#allocation4 + $0x38] sm:$0xff]
      %v1762 = vld [vmem:[#allocation4 + $0x40] sm:$0xff]
      %v1763 = vld [vmem:[#allocation4 + $0x48] sm:$0xff]
      %v1764 = vld [vmem:[#allocation4 + $0x50] sm:$0xff]
      %v1765 = vld [vmem:[#allocation4 + $0x58] sm:$0xff]
      %v1766 = vld [vmem:[#allocation4 + $0x60] sm:$0xff]
      %v1767 = vld [vmem:[#allocation4 + $0x68] sm:$0xff]
      %v1768 = vld [vmem:[#allocation4 + $0x70] sm:$0xff]
      %v1769 = vld [vmem:[#allocation4 + $0x78] sm:$0xff]
      %v1770 = vld [vmem:[#allocation4 + $0x80] sm:$0xff]
      %v1771 = vld [vmem:[#allocation4 + $0x88] sm:$0xff]
      %v1772 = vld [vmem:[#allocation4 + $0x90] sm:$0xff]
      %v1773 = vld [vmem:[#allocation4 + $0x98] sm:$0xff]
      %v1774 = vld [vmem:[#allocation4 + $0xa0] sm:$0xff]
      %v1775 = vld [vmem:[#allocation4 + $0xa8] sm:$0xff]
      %v1776 = vld [vmem:[#allocation4 + $0xb0] sm:$0xff]
      %v1777 = vld [vmem:[#allocation4 + $0xb8] sm:$0xff]
      %v1778 = vld [vmem:[#allocation4 + $0xc0] sm:$0xff]
      %v1779 = vld [vmem:[#allocation4 + $0xc8] sm:$0xff]
      %v1780 = vld [vmem:[#allocation4 + $0xd0] sm:$0xff]
      %v1781 = vld [vmem:[#allocation4 + $0xd8] sm:$0xff]
      %v1782 = vld [vmem:[#allocation4 + $0xe0] sm:$0xff]
      %v1783 = vld [vmem:[#allocation4 + $0xe8] sm:$0xff]
      %v1784 = vld [vmem:[#allocation4 + $0xf0] sm:$0xff]
      %v1785 = vld [vmem:[#allocation4 + $0xf8] sm:$0xff]
      %v1786 = vld [vmem:[#allocation4 + $0x100] sm:$0xff]
      %v1787 = vld [vmem:[#allocation4 + $0x108] sm:$0xff]
      %v1788 = vld [vmem:[#allocation4 + $0x110] sm:$0xff]
      %v1789 = vld [vmem:[#allocation4 + $0x118] sm:$0xff]
      %v1790 = vld [vmem:[#allocation4 + $0x120] sm:$0xff]
      %v1791 = vld [vmem:[#allocation4 + $0x128] sm:$0xff]
      %v1792 = vld [vmem:[#allocation4 + $0x130] sm:$0xff]
      %v1793 = vld [vmem:[#allocation4 + $0x138] sm:$0xff]
      %v1794 = vld [vmem:[#allocation4 + $0x140] sm:$0xff]
      %v1795 = vld [vmem:[#allocation4 + $0x148] sm:$0xff]
      %v1796 = vld [vmem:[#allocation4 + $0x150] sm:$0xff]
      %v1797 = vld [vmem:[#allocation4 + $0x158] sm:$0xff]
      %v1798 = vld [vmem:[#allocation4 + $0x160] sm:$0xff]
      %v1799 = vld [vmem:[#allocation4 + $0x168] sm:$0xff]
      %v1800 = vld [vmem:[#allocation4 + $0x170] sm:$0xff]
      %v1801 = vld [vmem:[#allocation4 + $0x178] sm:$0xff]
      %v1802 = vld [vmem:[#allocation4 + $0x180] sm:$0xff]
      %v1803 = vld [vmem:[#allocation4 + $0x188] sm:$0xff]
      %v1804 = vld [vmem:[#allocation4 + $0x190] sm:$0xff]
      %v1805 = vld [vmem:[#allocation4 + $0x198] sm:$0xff]
      %v1806 = vld [vmem:[#allocation4 + $0x1a0] sm:$0xff]
      %v1807 = vld [vmem:[#allocation4 + $0x1a8] sm:$0xff]
      %v1808 = vpack.c.bf16 %v1757, %v1754
      %v1809 = vpack.c.bf16 %v1758, %v1755
      %v1810 = vpack.c.bf16 %v1759, %v1756
      %v1811 = vpack.c.bf16 %v1763, %v1760
      %v1812 = vpack.c.bf16 %v1764, %v1761
      %v1813 = vpack.c.bf16 %v1765, %v1762
      %v1814 = vpack.c.bf16 %v1769, %v1766
      %v1815 = vpack.c.bf16 %v1770, %v1767
      %v1816 = vpack.c.bf16 %v1771, %v1768
      %v1817 = vpack.c.bf16 %v1775, %v1772
      %v1818 = vpack.c.bf16 %v1776, %v1773
      %v1819 = vpack.c.bf16 %v1777, %v1774
      %v1820 = vpack.c.bf16 %v1781, %v1778
      %v1821 = vpack.c.bf16 %v1782, %v1779
      %v1822 = vpack.c.bf16 %v1783, %v1780
      %v1823 = vpack.c.bf16 %v1787, %v1784
      %v1824 = vpack.c.bf16 %v1788, %v1785
      %v1825 = vpack.c.bf16 %v1789, %v1786
      %v1826 = vpack.c.bf16 %v1793, %v1790
      %v1827 = vpack.c.bf16 %v1794, %v1791
      %v1828 = vpack.c.bf16 %v1795, %v1792
      %v1829 = vpack.c.bf16 %v1799, %v1796
      %v1830 = vpack.c.bf16 %v1800, %v1797
      %v1831 = vpack.c.bf16 %v1801, %v1798
      %v1832 = vpack.c.bf16 %v1805, %v1802
      %v1833 = vpack.c.bf16 %v1806, %v1803
      %v1834 = vpack.c.bf16 %v1807, %v1804
      %v1837 = vunpack.c.l.b16 %v1752
      %v1838 = vunpack.c.h.b16 %v1752
      %v1839 = vunpack.c.l.b16 %v1753
      %v1840 = vunpack.c.h.b16 %v1753
      %v1841 = vpack.c.b16 %v1839, %v1837
      %v1842 = vpack.c.b16 %v1840, %v1838
      %vm1844 = vcmask 130048
      %v1846 = vsel %vm1844, %v1842, 0
      %1848 = vmatprep.subr.bf16.mxu0 %v1830
      %1849 = vmatpush1.bf16.msra.mxu0 %v1829
      %1850 = vmatprep.subr.bf16.mxu0 %v1827
      %1851 = vmatpush1.bf16.msra.mxu0 %v1826
      %1852 = vmatprep.subr.bf16.mxu0 %v1824
      %1853 = vmatpush1.bf16.msra.mxu0 %v1823
      %1854 = vmatprep.subr.bf16.mxu0 %v1821
      %1855 = vmatpush1.bf16.msra.mxu0 %v1820
      %1856 = vmatprep.subr.bf16.mxu0 %v1818
      %1857 = vmatpush1.bf16.msra.mxu0 %v1817
      %1858 = vmatprep.subr.bf16.mxu0 %v1815
      %1859 = vmatpush1.bf16.msra.mxu0 %v1814
      %1860 = vmatprep.subr.bf16.mxu0 %v1812
      %1861 = vmatpush1.bf16.msra.mxu0 %v1811
      %1862 = vmatprep.subr.bf16.mxu0 %v1809
      %1863 = vmatpush1.bf16.msra.mxu0 %v1808
      %1864 = vmatprep.subr.bf16.mxu0 0
      %1865 = vmatpush2.bf16.msra.mxu0 0
      %1866 = vmatprep.subr.bf16.mxu0 0
      %1867 = vmatpush2.bf16.msra.mxu0 0
      %1868 = vmatprep.subr.bf16.mxu0 0
      %1869 = vmatpush2.bf16.msra.mxu0 0
      %1870 = vmatprep.subr.bf16.mxu0 0
      %1871 = vmatpush2.bf16.msra.mxu0 0
      %1872 = vmatprep.subr.bf16.mxu0 0
      %1873 = vmatpush2.bf16.msra.mxu0 0
      %1874 = vmatprep.subr.bf16.mxu0 0
      %1875 = vmatpush2.bf16.msra.mxu0 0
      %1876 = vmatprep.subr.bf16.mxu0 0
      %1877 = vmatpush2.bf16.msra.mxu0 0
      %1878 = vmatprep.subr.bf16.mxu0 %v1833
      %1879 = vmatpush2.bf16.msra.mxu0 %v1832
      %1880 = vmatprep.mubr.bf16.mxu0 %v1846
      %1881 = vmatmul.mubr.bf16.gmra.mxu0 %v1841
      %v1882 = vpop.f32.mrf.mxu0
      %v1883 = vadd.f32 0.0, %v1882
      %v1884 = vpop.f32.mrf.mxu0
      %v1885 = vadd.f32 0.0, %v1884
      %v1886 = vpop.f32.mrf.mxu0
      %v1887 = vadd.f32 0.0, %v1886
      %v1888 = vpop.f32.mrf.mxu0
      %v1889 = vadd.f32 0.0, %v1888
      %1890 = vdwg.mxu0
      %1891 = vmatprep.subr.bf16.mxu0 0
      %1892 = vmatpush1.bf16.msra.mxu0 %v1831
      %1893 = vmatprep.subr.bf16.mxu0 0
      %1894 = vmatpush1.bf16.msra.mxu0 %v1828
      %1895 = vmatprep.subr.bf16.mxu0 0
      %1896 = vmatpush1.bf16.msra.mxu0 %v1825
      %1897 = vmatprep.subr.bf16.mxu0 0
      %1898 = vmatpush1.bf16.msra.mxu0 %v1822
      %1899 = vmatprep.subr.bf16.mxu0 0
      %1900 = vmatpush1.bf16.msra.mxu0 %v1819
      %1901 = vmatprep.subr.bf16.mxu0 0
      %1902 = vmatpush1.bf16.msra.mxu0 %v1816
      %1903 = vmatprep.subr.bf16.mxu0 0
      %1904 = vmatpush1.bf16.msra.mxu0 %v1813
      %1905 = vmatprep.subr.bf16.mxu0 0
      %1906 = vmatpush1.bf16.msra.mxu0 %v1810
      %1907 = vmatprep.subr.bf16.mxu0 0
      %1908 = vmatpush2.bf16.msra.mxu0 0
      %1909 = vmatprep.subr.bf16.mxu0 0
      %1910 = vmatpush2.bf16.msra.mxu0 0
      %1911 = vmatprep.subr.bf16.mxu0 0
      %1912 = vmatpush2.bf16.msra.mxu0 0
      %1913 = vmatprep.subr.bf16.mxu0 0
      %1914 = vmatpush2.bf16.msra.mxu0 0
      %1915 = vmatprep.subr.bf16.mxu0 0
      %1916 = vmatpush2.bf16.msra.mxu0 0
      %1917 = vmatprep.subr.bf16.mxu0 0
      %1918 = vmatpush2.bf16.msra.mxu0 0
      %1919 = vmatprep.subr.bf16.mxu0 0
      %1920 = vmatpush2.bf16.msra.mxu0 0
      %1921 = vmatprep.subr.bf16.mxu0 0
      %1922 = vmatpush2.bf16.msra.mxu0 %v1834
      %1923 = vmatprep.mubr.bf16.mxu0 %v1846
      %1924 = vmatmul.mubr.bf16.gmra.mxu0 %v1841
      %v1925 = vpop.f32.mrf.mxu0
      %v1926 = vadd.f32 0.0, %v1925
      %v1927 = vpop.f32.mrf.mxu0
      %v1928 = vpop.f32.mrf.mxu0
      %v1929 = vadd.f32 0.0, %v1928
      %v1930 = vpop.f32.mrf.mxu0
      %1931 = vdwg.mxu0
      %v1932 = vmul.f32 %v1883, %v1302
      %v1933 = vmul.f32 %v1885, %v1306
      %v1934 = vmul.f32 %v1926, %v1310
      %v1935 = vmul.f32 %v1887, %v1302
      %v1936 = vmul.f32 %v1889, %v1306
      %v1937 = vmul.f32 %v1929, %v1310
      %v1938 = vadd.f32 %v1932, %v1933
      %v1939 = vsel %vm222, %v1934, 0.0
      %v1940 = vadd.f32 %v1938, %v1939
      %1941 = vadd.xlane.f32.xlu0 %v1940
      %v1942 = vpop.xlane.xlu0 %1941
      %v1943 = vadd.f32 %v1935, %v1936
      %v1944 = vsel %vm222, %v1937, 0.0
      %v1945 = vadd.f32 %v1943, %v1944
      %1946 = vadd.xlane.f32.xlu0 %v1945
      %v1947 = vpop.xlane.xlu0 %1946
      %v1948 = vmul.f32 %v1942, 0.00390625
      %v1949 = vmul.f32 %v1947, 0.00390625
      %v1950 = vsub.f32 %v1883, %v1948
      %v1951 = vsub.f32 %v1885, %v1948
      %v1952 = vsub.f32 %v1926, %v1948
      %v1953 = vsub.f32 %v1887, %v1949
      %v1954 = vsub.f32 %v1889, %v1949
      %v1955 = vsub.f32 %v1929, %v1949
      %v1956 = vmul.f32 %v1950, %v1302
      %v1957 = vmul.f32 %v1951, %v1306
      %v1958 = vmul.f32 %v1952, %v1310
      %v1959 = vmul.f32 %v1953, %v1302
      %v1960 = vmul.f32 %v1954, %v1306
      %v1961 = vmul.f32 %v1955, %v1310
      %v1962 = vmul.f32 %v1956, %v1956
      %v1963 = vmul.f32 %v1957, %v1957
      %v1964 = vmul.f32 %v1958, %v1958
      %v1965 = vmul.f32 %v1959, %v1959
      %v1966 = vmul.f32 %v1960, %v1960
      %v1967 = vmul.f32 %v1961, %v1961
      %v1968 = vadd.f32 %v1962, %v1963
      %v1969 = vsel %vm222, %v1964, 0.0
      %v1970 = vadd.f32 %v1968, %v1969
      %1971 = vadd.xlane.f32.xlu0 %v1970
      %v1972 = vpop.xlane.xlu0 %1971
      %v1973 = vadd.f32 %v1965, %v1966
      %v1974 = vsel %vm222, %v1967, 0.0
      %v1975 = vadd.f32 %v1973, %v1974
      %1976 = vadd.xlane.f32.xlu0 %v1975
      %v1977 = vpop.xlane.xlu0 %1976
      %v1978 = vmul.f32 %v1972, 0.00390625
      %v1979 = vmul.f32 %v1977, 0.00390625
      %v1980 = vadd.f32 %v1978, 1e-05
      %v1981 = vadd.f32 %v1979, 1e-05
      %v1982 = vrsqrt.pop %v1980
      %v1983 = vrsqrt.pop %v1981
      %v1984 = vmul.f32 %v1956, %v1982
      %v1985 = vmul.f32 %v1957, %v1982
      %v1986 = vmul.f32 %v1958, %v1982
      %v1987 = vmul.f32 %v1959, %v1983
      %v1988 = vmul.f32 %v1960, %v1983
      %v1989 = vmul.f32 %v1961, %v1983
      %v1990 = vmax.f32 %v1984, 0.0
      %v1991 = vmax.f32 %v1985, 0.0
      %v1992 = vmax.f32 %v1986, 0.0
      %v1993 = vmax.f32 %v1987, 0.0
      %v1994 = vmax.f32 %v1988, 0.0
      %v1995 = vmax.f32 %v1989, 0.0
      %vm1996 = vcmask 150528
      %1997 = vst.msk [vmem:[%s197] sm:$0xf] %vm1996, 0
      %1998 = vst.msk [vmem:[%s197 + $0xc] sm:$0xf] %vm1996, 0
      %v1999 = vpack.c.bf16 %v1993, %v1990
      %v2000 = vpack.c.bf16 %v1994, %v1991
      %v2001 = vpack.c.bf16 %v1995, %v1992
      %v2005 = vunpack.c.l.b16 %v1999
      %v2006 = vunpack.c.l.b16 %v2000
      %v2007 = vunpack.c.l.b16 %v2001
      %v2008 = vunpack.c.h.b16 %v1999
      %v2009 = vunpack.c.h.b16 %v2000
      %v2010 = vunpack.c.h.b16 %v2001
      %v2011 = vpack.c.b16 %v2006, %v2005
      %v2012 = vpack.c.b16 %v2007, %v2007
      %v2013 = vpack.c.b16 %v2009, %v2008
      %v2014 = vpack.c.b16 %v2010, %v2010
      %2015 = vrot.lane.b32.xlu0 %v2011, 19
      %v2016 = vpop.permute.xlu0 %2015
      %2017 = vrot.lane.b32.xlu0 %v2012, 19
      %v2018 = vpop.permute.xlu0 %2017
      %2019 = vrot.lane.b32.xlu0 %v2013, 19
      %v2020 = vpop.permute.xlu0 %2019
      %2021 = vrot.lane.b32.xlu0 %v2014, 19
      %v2022 = vpop.permute.xlu0 %2021
      %v2023 = vrot.slane %v2016, 4
      %v2024 = vrot.slane %v2020, 4
      %vm2025 = vcmask 154624
      %v2026 = vsel %vm2025, %v2023, %v2016
      %v2027 = vsel %vm2025, %v2023, %v2018
      %v2028 = vsel %vm2025, %v2024, %v2020
      %v2029 = vsel %vm2025, %v2024, %v2022
      %vm2034 = vcmask 1043608
      %vm2035 = vcmask 1047556
      %vm2036 = vmor %vm2035, %vm2034
      %2037 = vst.msk [vmem:[%s197] sm:$0xff] %vm2036, %v2026
      %vm2038 = vcmask 707584
      %2039 = vst.msk [vmem:[%s197 + $0x8] sm:$0xf] %vm2038, %v2027
      %2040 = vst.msk [vmem:[%s197 + $0xc] sm:$0xff] %vm2036, %v2028
      %2041 = vst.msk [vmem:[%s197 + $0x14] sm:$0xf] %vm2038, %v2029
      %vm2042 = vcmask 863928
      %2043 = vst.msk [vmem:[%s197 + $0x8] sm:$0xf] %vm2042, 0
      %2044 = vst.msk [vmem:[%s197 + $0x14] sm:$0xf] %vm2042, 0
      %p2045 = scmp.lt.s32.totalorder %s15, 1
      %s2046 = scalar_select %p2045, %s15, 1
      %s2047 = smul.addr %s2046, 6
      %s2048 = smul.addr %s2047, 4
      %s2049 = scalar_lea.vmem %s4, %s2048
      // Predicated region
      $region37: #{upsampler_forward.8} parent=35 // pred_check
        %p2050 = pneg %p122
      $region38: #{upsampler_forward.8} parent=35 // pred_check_branch
        %2052 = sbr.rel (%p2050) target = $region40
      $region39: #{upsampler_forward.8} parent=35 // pred_region
        _
      $region40: #{upsampler_forward.8} parent=35 // pred_fallthru
        _
    $region36: #{upsampler_forward.8} parent=5 // pred_fallthru
      _
    %p2053 = scmp.le.s32.totalorder 2, %s10
    // Predicated region
    $region41: #{upsampler_forward.8} parent=5 // pred_check
      %p2054 = pneg %p2053
    $region42: #{upsampler_forward.8} parent=5 // pred_check_branch
      %2056 = sbr.rel (%p2054) target = $region44
    $region43: #{upsampler_forward.8} parent=5 // pred_region
      %s2057 = ssub.s32 %s10, 2
      // Predicated region
      $region45: #{upsampler_forward.8} parent=43 // pred_check
        %p2058 = pneg %p128
      $region46: #{upsampler_forward.8} parent=43 // pred_check_branch
        %2060 = sbr.rel (%p2058) target = $region48
      $region47: #{upsampler_forward.8} parent=43 // pred_region
        %p2061 = scmp.lt.s32.totalorder %s16, 1
        %s2062 = scalar_select %p2061, %s16, 1
        %s2063 = smul.addr %s2062, 6
        %s2064 = smul.addr %s2063, 4
        %s2065 = scalar_lea.vmem %s4, %s2064
      $region48: #{upsampler_forward.8} parent=43 // pred_fallthru
        _
    $region44: #{upsampler_forward.8} parent=5 // pred_fallthru
      _
  $region6: #{upsampler_forward.8} parent=0 // loop_footer
    %s14 = sadd.s32 1, %s10
  $region7: #{upsampler_forward.8} parent=0 // loop_footer_branch
    %9 = sbr.rel target = $region3
  $region8: #{upsampler_forward.8} parent=0 // loop_exit
    _

// kernel: upsampler_forward.9
$region0: #{upsampler_forward.9}
  #allocation0 [shape = 'u32[]', space=smem, size = 0x4, offset = 0x4, fixed_abs, tag = 'smem constant byte address 0x4 - core index']
  #allocation1 [shape = 'u32[144,128]{1,0:T(1,128)}', space=vmem, size = 0x12000, scoped, tag = 'internal scratch']
  %s0 = inlined_call_operand.vmem [shape: bf16[2,16,362], index: 0, kind: input, shape index: {}]
  %s1 = inlined_call_operand.vmem [shape: bf16[324,1156], index: 1, kind: input, shape index: {}]
  %s2 = inlined_call_operand.vmem [shape: bf16[2,16,1226], index: 2, kind: output, shape index: {}]
  %s3 = sld [smem:[#allocation0]]
  $region41: #{upsampler_forward.9} parent=0
    _
  %s5 = ssub.s32 1, %s3
  %s6 = scalar_select 0, %s5, %s3
  loop: start=0, step=1, limit=4
  $region2: #{upsampler_forward.9} parent=0 // loop_pre_header
    _
  $region3: #{upsampler_forward.9} parent=0 // loop_header
    %s8 = sphi 0, %s12
    %p9 = scmp.ge.s32.totalorder %s8, 4
    %s18 = sphi 0, %s20
    %s21 = sphi 0, %s18
    %s22 = sphi 0, %s21
    %s38 = sphi 0, %s22
    %s42 = sphi 0, %s42
    %s44 = sphi 0, %s42
    %s45 = sphi 0, %s44
    %s59 = sphi 0, %s45
    %s65 = sphi 0, %s67
    %s68 = sphi 0, %s65
    %s69 = sphi 0, %s68
    %s85 = sphi 0, %s69
  $region4: #{upsampler_forward.9} parent=0 // loop_header_branch
    %11 = sbr.rel (%p9) target = $region8
  $region5: #{upsampler_forward.9} parent=0 // loop_body
    %s13 = ssub.s32 %s8, 1
    %s14 = ssub.s32 %s8, 2
    %s15 = sadd.s32 %s8, 1
    %s16 = ssub.s32 %s8, %s15
    %p17 = scmp.eq.s32.totalorder %s16, 0
    %s19 = sadd.s32 %s18, 1
    %s20 = scalar_select %p17, %s18, %s19
    %p23 = pneg %p17
    %p24 = scmp.eq.s32.totalorder %s8, 1
    %p25 = por %p23, %p24
    %p26 = scmp.ne.s32.totalorder %s18, %s21
    %p27 = scmp.eq.s32.totalorder %s8, 0
    %p28 = por %p26, %p27
    %p29 = scmp.ne.s32.totalorder %s18, %s21
    %p30 = scmp.eq.s32.totalorder %s13, 1
    %p31 = por %p29, %p30
    %p32 = scmp.ne.s32.totalorder %s21, %s22
    %p33 = scmp.eq.s32.totalorder %s13, 0
    %p34 = por %p32, %p33
    %p35 = scmp.ne.s32.totalorder %s21, %s22
    %p36 = scmp.eq.s32.totalorder %s14, 1
    %p37 = por %p35, %p36
    %p39 = scmp.ne.s32.totalorder %s22, %s38
    %p40 = scmp.eq.s32.totalorder %s14, 0
    %p41 = por %p39, %p40
    %s43 = sadd.s32 %s42, 1
    %p46 = scmp.eq.s32.totalorder %s8, 1
    %p47 = scmp.ne.s32.totalorder %s42, %s44
    %p48 = scmp.eq.s32.totalorder %s8, 0
    %p49 = por %p47, %p48
    %p50 = scmp.ne.s32.totalorder %s42, %s44
    %p51 = scmp.eq.s32.totalorder %s13, 1
    %p52 = por %p50, %p51
    %p53 = scmp.ne.s32.totalorder %s44, %s45
    %p54 = scmp.eq.s32.totalorder %s13, 0
    %p55 = por %p53, %p54
    %p56 = scmp.ne.s32.totalorder %s44, %s45
    %p57 = scmp.eq.s32.totalorder %s14, 1
    %p58 = por %p56, %p57
    %p60 = scmp.ne.s32.totalorder %s45, %s59
    %p61 = scmp.eq.s32.totalorder %s14, 0
    %p62 = por %p60, %p61
    %s63 = ssub.s32 %s8, %s15
    %p64 = scmp.eq.s32.totalorder %s63, 0
    %s66 = sadd.s32 %s65, 1
    %s67 = scalar_select %p64, %s65, %s66
    %p70 = pneg %p64
    %p71 = scmp.eq.s32.totalorder %s8, 1
    %p72 = por %p70, %p71
    %p73 = scmp.ne.s32.totalorder %s65, %s68
    %p74 = scmp.eq.s32.totalorder %s8, 0
    %p75 = por %p73, %p74
    %p76 = scmp.ne.s32.totalorder %s65, %s68
    %p77 = scmp.eq.s32.totalorder %s13, 1
    %p78 = por %p76, %p77
    %p79 = scmp.ne.s32.totalorder %s68, %s69
    %p80 = scmp.eq.s32.totalorder %s13, 0
    %p81 = por %p79, %p80
    %p82 = scmp.ne.s32.totalorder %s68, %s69
    %p83 = scmp.eq.s32.totalorder %s14, 1
    %p84 = por %p82, %p83
    %p86 = scmp.ne.s32.totalorder %s69, %s85
    %p87 = scmp.eq.s32.totalorder %s14, 0
    %p88 = por %p86, %p87
    %p89 = scmp.le.s32.totalorder 1, %s8
    %p90 = scmp.lt.s32.totalorder %s8, 3
    %p91 = pnand %p89, %p90
    %p92 = pneg %p91
    // Predicated region
    $region9: #{upsampler_forward.9} parent=5 // pred_check
      _
    $region10: #{upsampler_forward.9} parent=5 // pred_check_branch
      %94 = sbr.rel (%p91) target = $region12
    $region11: #{upsampler_forward.9} parent=5 // pred_region
      %s95 = ssub.s32 %s8, 1
      // Predicated region
      $region13: #{upsampler_forward.9} parent=11 // pred_check
        %p96 = pneg %p55
      $region14: #{upsampler_forward.9} parent=11 // pred_check_branch
        %98 = sbr.rel (%p96) target = $region16
      $region15: #{upsampler_forward.9} parent=11 // pred_region
        _
      $region16: #{upsampler_forward.9} parent=11 // pred_fallthru
        _
    $region12: #{upsampler_forward.9} parent=5 // pred_fallthru
      _
    %p99 = scmp.lt.s32.totalorder %s8, 2
    // Predicated region
    $region17: #{upsampler_forward.9} parent=5 // pred_check
      %p100 = pneg %p99
    $region18: #{upsampler_forward.9} parent=5 // pred_check_branch
      %102 = sbr.rel (%p100) target = $region20
    $region19: #{upsampler_forward.9} parent=5 // pred_region
      // Predicated region
      $region21: #{upsampler_forward.9} parent=19 // pred_check
        %p103 = pneg %p28
      $region22: #{upsampler_forward.9} parent=19 // pred_check_branch
        %105 = sbr.rel (%p103) target = $region24
      $region23: #{upsampler_forward.9} parent=19 // pred_region
        %p106 = scmp.lt.s32.totalorder %s8, 1
        %s107 = scalar_select %p106, %s8, 1
        %s108 = smul.addr %s107, 6
        %s109 = smul.addr %s108, 4
        %s110 = scalar_lea.vmem %s0, %s109
      $region24: #{upsampler_forward.9} parent=19 // pred_fallthru
        _
    $region20: #{upsampler_forward.9} parent=5 // pred_fallthru
      _
    %p111 = scmp.le.s32.totalorder 1, %s8
    %p112 = scmp.lt.s32.totalorder %s8, 3
    %p113 = pnand %p111, %p112
    %p114 = pneg %p113
    // Predicated region
    $region25: #{upsampler_forward.9} parent=5 // pred_check
      _
    $region26: #{upsampler_forward.9} parent=5 // pred_check_branch
      %116 = sbr.rel (%p113) target = $region28
    $region27: #{upsampler_forward.9} parent=5 // pred_region
      %s117 = ssub.s32 %s8, 1
      %p118 = scmp.lt.s32.totalorder %s13, 1
      %s119 = scalar_select %p118, %s13, 1
      %s120 = smul.addr %s119, 6
      %s121 = smul.addr %s120, 4
      %s122 = scalar_lea.vmem %s0, %s121
      %p123 = pneg %p34
      %p124 = pneg %p31
      %p125 = pneg %p55
      %p126 = pneg %p52
      %p127 = pneg %p81
      %p128 = pneg %p78
      %p129 = scmp.lt.s32.totalorder %s13, 1
      %s130 = scalar_select %p129, %s13, 1
      %s131 = smul.addr %s130, 20
      %s132 = smul.addr %s131, 4
      %s133 = scalar_lea.vmem %s2, %s132
      %p134 = scmp.lt.s32.totalorder %s13, 1
      %s135 = scalar_select %p134, %s13, 1
      %s136 = smul.addr %s135, 6
      %s137 = smul.addr %s136, 4
      %s138 = scalar_lea.vmem %s0, %s137
      %p139 = scmp.lt.s32.totalorder %s13, 1
      %s140 = scalar_select %p139, %s13, 1
      %s141 = smul.addr %s140, 20
      %s142 = smul.addr %s141, 4
      %s143 = scalar_lea.vmem %s2, %s142
      %v145 = vld [vmem:[%s138] sm:$0xff]
      %v146 = vld [vmem:[%s138 + $0x8] sm:$0xf]
      %v147 = vld [vmem:[%s138 + $0xc] sm:$0xff]
      %v148 = vld [vmem:[%s138 + $0x14] sm:$0xf]
      %v149 = vld [vmem:[%s1] sm:$0xff]
      %v150 = vld [vmem:[%s1 + $0x8] sm:$0xff]
      %v151 = vld [vmem:[%s1 + $0x10] sm:$0xff]
      %v152 = vld [vmem:[%s1 + $0x18] sm:$0xff]
      %v153 = vld [vmem:[%s1 + $0x20] sm:$0xff]
      %v154 = vld [vmem:[%s1 + $0x28] sm:$0xff]
      %v155 = vld [vmem:[%s1 + $0x30] sm:$0xff]
      %v156 = vld [vmem:[%s1 + $0x38] sm:$0xff]
      %v157 = vld [vmem:[%s1 + $0x40] sm:$0xff]
      %v158 = vld [vmem:[%s1 + $0x48] sm:$0xff]
      %v159 = vld [vmem:[%s1 + $0x50] sm:$0xff]
      %v160 = vld [vmem:[%s1 + $0x58] sm:$0xff]
      %v161 = vld [vmem:[%s1 + $0x60] sm:$0xff]
      %v162 = vld [vmem:[%s1 + $0x68] sm:$0xff]
      %v163 = vld [vmem:[%s1 + $0x70] sm:$0xff]
      %v164 = vld [vmem:[%s1 + $0x78] sm:$0xff]
      %v165 = vld [vmem:[%s1 + $0x80] sm:$0xff]
      %v166 = vld [vmem:[%s1 + $0x88] sm:$0xff]
      %v167 = vld [vmem:[%s1 + $0x90] sm:$0xff]
      %v168 = vld [vmem:[%s1 + $0x98] sm:$0xff]
      %v169 = vld [vmem:[%s1 + $0xa0] sm:$0xff]
      %v170 = vld [vmem:[%s1 + $0xa8] sm:$0xff]
      %v171 = vld [vmem:[%s1 + $0xb0] sm:$0xff]
      %v172 = vld [vmem:[%s1 + $0xb8] sm:$0xff]
      %v173 = vld [vmem:[%s1 + $0xc0] sm:$0xff]
      %v174 = vld [vmem:[%s1 + $0xc8] sm:$0xff]
      %v175 = vld [vmem:[%s1 + $0xd0] sm:$0xff]
      %v176 = vld [vmem:[%s1 + $0xd8] sm:$0xff]
      %v177 = vld [vmem:[%s1 + $0xe0] sm:$0xff]
      %v178 = vld [vmem:[%s1 + $0xe8] sm:$0xff]
      %v179 = vld [vmem:[%s1 + $0xf0] sm:$0xff]
      %v180 = vld [vmem:[%s1 + $0xf8] sm:$0xff]
      %v181 = vld [vmem:[%s1 + $0x100] sm:$0xff]
      %v182 = vld [vmem:[%s1 + $0x108] sm:$0xff]
      %v183 = vld [vmem:[%s1 + $0x110] sm:$0xff]
      %v184 = vld [vmem:[%s1 + $0x118] sm:$0xff]
      %v185 = vld [vmem:[%s1 + $0x120] sm:$0xff]
      %v186 = vld [vmem:[%s1 + $0x128] sm:$0xff]
      %v187 = vld [vmem:[%s1 + $0x130] sm:$0xff]
      %v188 = vld [vmem:[%s1 + $0x138] sm:$0xff]
      %v189 = vld [vmem:[%s1 + $0x140] sm:$0xff]
      %v190 = vld [vmem:[%s1 + $0x148] sm:$0xff]
      %v191 = vld [vmem:[%s1 + $0x150] sm:$0xff]
      %v192 = vld [vmem:[%s1 + $0x158] sm:$0xff]
      %v193 = vld [vmem:[%s1 + $0x160] sm:$0xff]
      %v194 = vld [vmem:[%s1 + $0x168] sm:$0xff]
      %v195 = vld [vmem:[%s1 + $0x170] sm:$0xff]
      %v196 = vld [vmem:[%s1 + $0x178] sm:$0xff]
      %v197 = vld [vmem:[%s1 + $0x180] sm:$0xff]
      %v198 = vld [vmem:[%s1 + $0x188] sm:$0xff]
      %v199 = vld [vmem:[%s1 + $0x190] sm:$0xff]
      %v200 = vld [vmem:[%s1 + $0x198] sm:$0xff]
      %v201 = vld [vmem:[%s1 + $0x1a0] sm:$0xff]
      %v202 = vld [vmem:[%s1 + $0x1a8] sm:$0xff]
      %v203 = vld [vmem:[%s1 + $0x1b0] sm:$0xff]
      %v204 = vld [vmem:[%s1 + $0x1b8] sm:$0xff]
      %v205 = vld [vmem:[%s1 + $0x1c0] sm:$0xff]
      %v206 = vld [vmem:[%s1 + $0x1c8] sm:$0xff]
      %v207 = vld [vmem:[%s1 + $0x1d0] sm:$0xff]
      %v208 = vld [vmem:[%s1 + $0x1d8] sm:$0xff]
      %v209 = vld [vmem:[%s1 + $0x1e0] sm:$0xff]
      %v210 = vld [vmem:[%s1 + $0x1e8] sm:$0xff]
      %v211 = vld [vmem:[%s1 + $0x1f0] sm:$0xff]
      %v212 = vld [vmem:[%s1 + $0x1f8] sm:$0xff]
      %v213 = vld [vmem:[%s1 + $0x200] sm:$0xff]
      %v214 = vld [vmem:[%s1 + $0x208] sm:$0xff]
      %v215 = vld [vmem:[%s1 + $0x210] sm:$0xff]
      %v216 = vld [vmem:[%s1 + $0x218] sm:$0xff]
      %v217 = vld [vmem:[%s1 + $0x220] sm:$0xff]
      %v218 = vld [vmem:[%s1 + $0x228] sm:$0xff]
      %v219 = vld [vmem:[%s1 + $0x230] sm:$0xff]
      %v220 = vld [vmem:[%s1 + $0x238] sm:$0xff]
      %v221 = vld [vmem:[%s1 + $0x240] sm:$0xff]
      %v222 = vld [vmem:[%s1 + $0x248] sm:$0xff]
      %v223 = vld [vmem:[%s1 + $0x250] sm:$0xff]
      %v224 = vld [vmem:[%s1 + $0x258] sm:$0xff]
      %v225 = vld [vmem:[%s1 + $0x260] sm:$0xff]
      %v226 = vld [vmem:[%s1 + $0x268] sm:$0xff]
      %v227 = vld [vmem:[%s1 + $0x270] sm:$0xff]
      %v228 = vld [vmem:[%s1 + $0x278] sm:$0xff]
      %v229 = vld [vmem:[%s1 + $0x280] sm:$0xff]
      %v230 = vld [vmem:[%s1 + $0x288] sm:$0xff]
      %v231 = vld [vmem:[%s1 + $0x290] sm:$0xff]
      %v232 = vld [vmem:[%s1 + $0x298] sm:$0xff]
      %v233 = vld [vmem:[%s1 + $0x2a0] sm:$0xff]
      %v234 = vld [vmem:[%s1 + $0x2a8] sm:$0xff]
      %v235 = vld [vmem:[%s1 + $0x2b0] sm:$0xff]
      %v236 = vld [vmem:[%s1 + $0x2b8] sm:$0xff]
      %v237 = vld [vmem:[%s1 + $0x2c0] sm:$0xff]
      %v238 = vld [vmem:[%s1 + $0x2c8] sm:$0xff]
      %v239 = vld [vmem:[%s1 + $0x2d0] sm:$0xff]
      %v240 = vld [vmem:[%s1 + $0x2d8] sm:$0xff]
      %v241 = vld [vmem:[%s1 + $0x2e0] sm:$0xff]
      %v242 = vld [vmem:[%s1 + $0x2e8] sm:$0xff]
      %v243 = vld [vmem:[%s1 + $0x2f0] sm:$0xff]
      %v244 = vld [vmem:[%s1 + $0x2f8] sm:$0xff]
      %v245 = vld [vmem:[%s1 + $0x300] sm:$0xff]
      %v246 = vld [vmem:[%s1 + $0x308] sm:$0xff]
      %v247 = vld [vmem:[%s1 + $0x310] sm:$0xff]
      %v248 = vld [vmem:[%s1 + $0x318] sm:$0xff]
      %v249 = vld [vmem:[%s1 + $0x320] sm:$0xff]
      %v250 = vld [vmem:[%s1 + $0x328] sm:$0xff]
      %v251 = vld [vmem:[%s1 + $0x330] sm:$0xff]
      %v252 = vld [vmem:[%s1 + $0x338] sm:$0xff]
      %v253 = vld [vmem:[%s1 + $0x340] sm:$0xff]
      %v254 = vld [vmem:[%s1 + $0x348] sm:$0xff]
      %v255 = vld [vmem:[%s1 + $0x350] sm:$0xff]
      %v256 = vld [vmem:[%s1 + $0x358] sm:$0xff]
      %v257 = vld [vmem:[%s1 + $0x360] sm:$0xff]
      %v258 = vld [vmem:[%s1 + $0x368] sm:$0xff]
      %v259 = vld [vmem:[%s1 + $0x370] sm:$0xff]
      %v260 = vld [vmem:[%s1 + $0x378] sm:$0xff]
      %v261 = vld [vmem:[%s1 + $0x380] sm:$0xff]
      %v262 = vld [vmem:[%s1 + $0x388] sm:$0xff]
      %v263 = vld [vmem:[%s1 + $0x390] sm:$0xff]
      %v264 = vld [vmem:[%s1 + $0x398] sm:$0xff]
      %v265 = vld [vmem:[%s1 + $0x3a0] sm:$0xff]
      %v266 = vld [vmem:[%s1 + $0x3a8] sm:$0xff]
      %v267 = vld [vmem:[%s1 + $0x3b0] sm:$0xff]
      %v268 = vld [vmem:[%s1 + $0x3b8] sm:$0xff]
      %v269 = vld [vmem:[%s1 + $0x3c0] sm:$0xff]
      %v270 = vld [vmem:[%s1 + $0x3c8] sm:$0xff]
      %v271 = vld [vmem:[%s1 + $0x3d0] sm:$0xff]
      %v272 = vld [vmem:[%s1 + $0x3d8] sm:$0xff]
      %v273 = vld [vmem:[%s1 + $0x3e0] sm:$0xff]
      %v274 = vld [vmem:[%s1 + $0x3e8] sm:$0xff]
      %v275 = vld [vmem:[%s1 + $0x3f0] sm:$0xff]
      %v276 = vld [vmem:[%s1 + $0x3f8] sm:$0xff]
      %v277 = vld [vmem:[%s1 + $0x400] sm:$0xff]
      %v278 = vld [vmem:[%s1 + $0x408] sm:$0xff]
      %v279 = vld [vmem:[%s1 + $0x410] sm:$0xff]
      %v280 = vld [vmem:[%s1 + $0x418] sm:$0xff]
      %v281 = vld [vmem:[%s1 + $0x420] sm:$0xff]
      %v282 = vld [vmem:[%s1 + $0x428] sm:$0xff]
      %v283 = vld [vmem:[%s1 + $0x430] sm:$0xff]
      %v284 = vld [vmem:[%s1 + $0x438] sm:$0xff]
      %v285 = vld [vmem:[%s1 + $0x440] sm:$0xff]
      %v286 = vld [vmem:[%s1 + $0x448] sm:$0xff]
      %v287 = vld [vmem:[%s1 + $0x450] sm:$0xff]
      %v288 = vld [vmem:[%s1 + $0x458] sm:$0xff]
      %v289 = vld [vmem:[%s1 + $0x460] sm:$0xff]
      %v290 = vld [vmem:[%s1 + $0x468] sm:$0xff]
      %v291 = vld [vmem:[%s1 + $0x470] sm:$0xff]
      %v292 = vld [vmem:[%s1 + $0x478] sm:$0xff]
      %v293 = vld [vmem:[%s1 + $0x480] sm:$0xff]
      %v294 = vld [vmem:[%s1 + $0x488] sm:$0xff]
      %v295 = vld [vmem:[%s1 + $0x490] sm:$0xff]
      %v296 = vld [vmem:[%s1 + $0x498] sm:$0xff]
      %v297 = vld [vmem:[%s1 + $0x4a0] sm:$0xff]
      %v298 = vld [vmem:[%s1 + $0x4a8] sm:$0xff]
      %v299 = vld [vmem:[%s1 + $0x4b0] sm:$0xff]
      %v300 = vld [vmem:[%s1 + $0x4b8] sm:$0xff]
      %v301 = vld [vmem:[%s1 + $0x4c0] sm:$0xff]
      %v302 = vld [vmem:[%s1 + $0x4c8] sm:$0xff]
      %v303 = vld [vmem:[%s1 + $0x4d0] sm:$0xff]
      %v304 = vld [vmem:[%s1 + $0x4d8] sm:$0xff]
      %v305 = vld [vmem:[%s1 + $0x4e0] sm:$0xff]
      %v306 = vld [vmem:[%s1 + $0x4e8] sm:$0xff]
      %v307 = vld [vmem:[%s1 + $0x4f0] sm:$0xff]
      %v308 = vld [vmem:[%s1 + $0x4f8] sm:$0xff]
      %v309 = vld [vmem:[%s1 + $0x500] sm:$0xff]
      %v310 = vld [vmem:[%s1 + $0x508] sm:$0xff]
      %v311 = vld [vmem:[%s1 + $0x510] sm:$0xff]
      %v312 = vld [vmem:[%s1 + $0x518] sm:$0xff]
      %v313 = vld [vmem:[%s1 + $0x520] sm:$0xff]
      %v314 = vld [vmem:[%s1 + $0x528] sm:$0xff]
      %v315 = vld [vmem:[%s1 + $0x530] sm:$0xff]
      %v316 = vld [vmem:[%s1 + $0x538] sm:$0xff]
      %v317 = vld [vmem:[%s1 + $0x540] sm:$0xff]
      %v318 = vld [vmem:[%s1 + $0x548] sm:$0xff]
      %v319 = vld [vmem:[%s1 + $0x550] sm:$0xff]
      %v320 = vld [vmem:[%s1 + $0x558] sm:$0xff]
      %v321 = vld [vmem:[%s1 + $0x560] sm:$0xff]
      %v322 = vld [vmem:[%s1 + $0x568] sm:$0xff]
      %v323 = vld [vmem:[%s1 + $0x570] sm:$0xff]
      %v324 = vld [vmem:[%s1 + $0x578] sm:$0xff]
      %v325 = vld [vmem:[%s1 + $0x580] sm:$0xff]
      %v326 = vld [vmem:[%s1 + $0x588] sm:$0xff]
      %v327 = vld [vmem:[%s1 + $0x590] sm:$0xff]
      %v328 = vld [vmem:[%s1 + $0x598] sm:$0xff]
      %v329 = vld [vmem:[%s1 + $0x5a0] sm:$0xff]
      %v330 = vld [vmem:[%s1 + $0x5a8] sm:$0xff]
      %v331 = vld [vmem:[%s1 + $0x5b0] sm:$0xff]
      %v332 = vld [vmem:[%s1 + $0x5b8] sm:$0xff]
      %v333 = vld [vmem:[%s1 + $0x5c0] sm:$0xff]
      %v334 = vld [vmem:[%s1 + $0x5c8] sm:$0xff]
      %v335 = vld [vmem:[%s1 + $0x5d0] sm:$0xff]
      %v336 = vld [vmem:[%s1 + $0x5d8] sm:$0xff]
      %v337 = vld [vmem:[%s1 + $0x5e0] sm:$0xff]
      %v338 = vld [vmem:[%s1 + $0x5e8] sm:$0xff]
      %v339 = vld [vmem:[%s1 + $0x5f0] sm:$0xff]
      %v340 = vld [vmem:[%s1 + $0x5f8] sm:$0xff]
      %v341 = vld [vmem:[%s1 + $0x600] sm:$0xff]
      %v342 = vld [vmem:[%s1 + $0x608] sm:$0xff]
      %v343 = vld [vmem:[%s1 + $0x610] sm:$0xff]
      %v344 = vld [vmem:[%s1 + $0x618] sm:$0xff]
      %v345 = vld [vmem:[%s1 + $0x620] sm:$0xff]
      %v346 = vld [vmem:[%s1 + $0x628] sm:$0xff]
      %v347 = vld [vmem:[%s1 + $0x630] sm:$0xff]
      %v348 = vld [vmem:[%s1 + $0x638] sm:$0xff]
      %v349 = vld [vmem:[%s1 + $0x640] sm:$0x33]
      %v350 = vld [vmem:[%s1 + $0x648] sm:$0x33]
      %v351 = vld [vmem:[%s1 + $0x650] sm:$0x33]
      %v352 = vld [vmem:[%s1 + $0x658] sm:$0x33]
      %v353 = vld [vmem:[%s1 + $0x660] sm:$0x33]
      %v358 = vunpack.c.l.b16 %v145
      %v359 = vunpack.c.h.b16 %v145
      %v360 = vunpack.c.l.b16 %v146
      %v361 = vunpack.c.l.b16 %v147
      %v362 = vunpack.c.h.b16 %v147
      %v363 = vunpack.c.l.b16 %v148
      %v364 = vpack.c.b16 %v361, %v358
      %v365 = vpack.c.b16 %v362, %v359
      %v366 = vpack.c.b16 %v363, %v360
      %367 = vrot.lane.b32.xlu0 %v364, 109
      %v368 = vpop.permute.xlu0 %367
      %369 = vrot.lane.b32.xlu0 %v365, 109
      %v370 = vpop.permute.xlu0 %369
      %371 = vrot.lane.b32.xlu0 %v366, 109
      %v372 = vpop.permute.xlu0 %371
      %vm373 = vcmask 891904
      %v374 = vsel %vm373, %v368, %v370
      %v375 = vsel %vm373, %v370, %v372
      %v583 = vunpack.c.l.b16 %v149
      %v584 = vunpack.c.h.b16 %v149
      %v585 = vunpack.c.l.b16 %v150
      %v586 = vunpack.c.h.b16 %v150
      %v587 = vunpack.c.l.b16 %v151
      %v588 = vunpack.c.h.b16 %v151
      %v589 = vunpack.c.l.b16 %v152
      %v590 = vunpack.c.h.b16 %v152
      %v591 = vunpack.c.l.b16 %v153
      %v592 = vunpack.c.h.b16 %v153
      %v593 = vunpack.c.l.b16 %v154
      %v594 = vunpack.c.h.b16 %v154
      %v595 = vunpack.c.l.b16 %v155
      %v596 = vunpack.c.h.b16 %v155
      %v597 = vunpack.c.l.b16 %v156
      %v598 = vunpack.c.h.b16 %v156
      %v599 = vunpack.c.l.b16 %v157
      %v600 = vunpack.c.h.b16 %v157
      %v601 = vunpack.c.l.b16 %v158
      %v602 = vunpack.c.h.b16 %v158
      %v603 = vunpack.c.l.b16 %v159
      %v604 = vunpack.c.h.b16 %v159
      %v605 = vunpack.c.l.b16 %v160
      %v606 = vunpack.c.h.b16 %v160
      %v607 = vunpack.c.l.b16 %v161
      %v608 = vunpack.c.h.b16 %v161
      %v609 = vunpack.c.l.b16 %v162
      %v610 = vunpack.c.h.b16 %v162
      %v611 = vunpack.c.l.b16 %v163
      %v612 = vunpack.c.h.b16 %v163
      %v613 = vunpack.c.l.b16 %v164
      %v614 = vunpack.c.h.b16 %v164
      %v615 = vunpack.c.l.b16 %v165
      %v616 = vunpack.c.h.b16 %v165
      %v617 = vunpack.c.l.b16 %v166
      %v618 = vunpack.c.h.b16 %v166
      %v619 = vunpack.c.l.b16 %v167
      %v620 = vunpack.c.h.b16 %v167
      %v621 = vunpack.c.l.b16 %v168
      %v622 = vunpack.c.h.b16 %v168
      %v623 = vunpack.c.l.b16 %v169
      %v624 = vunpack.c.h.b16 %v169
      %v625 = vunpack.c.l.b16 %v170
      %v626 = vunpack.c.h.b16 %v170
      %v627 = vunpack.c.l.b16 %v171
      %v628 = vunpack.c.h.b16 %v171
      %v629 = vunpack.c.l.b16 %v172
      %v630 = vunpack.c.h.b16 %v172
      %v631 = vunpack.c.l.b16 %v173
      %v632 = vunpack.c.h.b16 %v173
      %v633 = vunpack.c.l.b16 %v174
      %v634 = vunpack.c.h.b16 %v174
      %v635 = vunpack.c.l.b16 %v175
      %v636 = vunpack.c.h.b16 %v175
      %v637 = vunpack.c.l.b16 %v176
      %v638 = vunpack.c.h.b16 %v176
      %v639 = vunpack.c.l.b16 %v177
      %v640 = vunpack.c.h.b16 %v177
      %v641 = vunpack.c.l.b16 %v178
      %v642 = vunpack.c.h.b16 %v178
      %v643 = vunpack.c.l.b16 %v179
      %v644 = vunpack.c.h.b16 %v179
      %v645 = vunpack.c.l.b16 %v180
      %v646 = vunpack.c.h.b16 %v180
      %v647 = vunpack.c.l.b16 %v181
      %v648 = vunpack.c.h.b16 %v181
      %v649 = vunpack.c.l.b16 %v182
      %v650 = vunpack.c.h.b16 %v182
      %v651 = vunpack.c.l.b16 %v183
      %v652 = vunpack.c.h.b16 %v183
      %v653 = vunpack.c.l.b16 %v184
      %v654 = vunpack.c.h.b16 %v184
      %v655 = vunpack.c.l.b16 %v185
      %v656 = vunpack.c.h.b16 %v185
      %v657 = vunpack.c.l.b16 %v186
      %v658 = vunpack.c.h.b16 %v186
      %v659 = vunpack.c.l.b16 %v187
      %v660 = vunpack.c.h.b16 %v187
      %v661 = vunpack.c.l.b16 %v188
      %v662 = vunpack.c.h.b16 %v188
      %v663 = vunpack.c.l.b16 %v189
      %v664 = vunpack.c.h.b16 %v189
      %v665 = vunpack.c.l.b16 %v190
      %v666 = vunpack.c.h.b16 %v190
      %v667 = vunpack.c.l.b16 %v191
      %v668 = vunpack.c.h.b16 %v191
      %v669 = vunpack.c.l.b16 %v192
      %v670 = vunpack.c.h.b16 %v192
      %v671 = vunpack.c.l.b16 %v193
      %v672 = vunpack.c.h.b16 %v193
      %v673 = vunpack.c.l.b16 %v194
      %v674 = vunpack.c.h.b16 %v194
      %v675 = vunpack.c.l.b16 %v195
      %v676 = vunpack.c.h.b16 %v195
      %v677 = vunpack.c.l.b16 %v196
      %v678 = vunpack.c.h.b16 %v196
      %v679 = vunpack.c.l.b16 %v197
      %v680 = vunpack.c.h.b16 %v197
      %v681 = vunpack.c.l.b16 %v198
      %v682 = vunpack.c.h.b16 %v198
      %v683 = vunpack.c.l.b16 %v199
      %v684 = vunpack.c.h.b16 %v199
      %v685 = vunpack.c.l.b16 %v200
      %v686 = vunpack.c.h.b16 %v200
      %v687 = vunpack.c.l.b16 %v201
      %v688 = vunpack.c.h.b16 %v201
      %v689 = vunpack.c.l.b16 %v202
      %v690 = vunpack.c.h.b16 %v202
      %v691 = vunpack.c.l.b16 %v203
      %v692 = vunpack.c.h.b16 %v203
      %v693 = vunpack.c.l.b16 %v204
      %v694 = vunpack.c.h.b16 %v204
      %v695 = vunpack.c.l.b16 %v205
      %v696 = vunpack.c.h.b16 %v205
      %v697 = vunpack.c.l.b16 %v206
      %v698 = vunpack.c.h.b16 %v206
      %v699 = vunpack.c.l.b16 %v207
      %v700 = vunpack.c.h.b16 %v207
      %v701 = vunpack.c.l.b16 %v208
      %v702 = vunpack.c.h.b16 %v208
      %v703 = vunpack.c.l.b16 %v209
      %v704 = vunpack.c.h.b16 %v209
      %v705 = vunpack.c.l.b16 %v210
      %v706 = vunpack.c.h.b16 %v210
      %v707 = vunpack.c.l.b16 %v211
      %v708 = vunpack.c.h.b16 %v211
      %v709 = vunpack.c.l.b16 %v212
      %v710 = vunpack.c.h.b16 %v212
      %v711 = vunpack.c.l.b16 %v213
      %v712 = vunpack.c.h.b16 %v213
      %v713 = vunpack.c.l.b16 %v214
      %v714 = vunpack.c.h.b16 %v214
      %v715 = vunpack.c.l.b16 %v215
      %v716 = vunpack.c.h.b16 %v215
      %v717 = vunpack.c.l.b16 %v216
      %v718 = vunpack.c.h.b16 %v216
      %v719 = vunpack.c.l.b16 %v217
      %v720 = vunpack.c.h.b16 %v217
      %v721 = vunpack.c.l.b16 %v218
      %v722 = vunpack.c.h.b16 %v218
      %v723 = vunpack.c.l.b16 %v219
      %v724 = vunpack.c.h.b16 %v219
      %v725 = vunpack.c.l.b16 %v220
      %v726 = vunpack.c.h.b16 %v220
      %v727 = vunpack.c.l.b16 %v221
      %v728 = vunpack.c.h.b16 %v221
      %v729 = vunpack.c.l.b16 %v222
      %v730 = vunpack.c.h.b16 %v222
      %v731 = vunpack.c.l.b16 %v223
      %v732 = vunpack.c.h.b16 %v223
      %v733 = vunpack.c.l.b16 %v224
      %v734 = vunpack.c.h.b16 %v224
      %v735 = vunpack.c.l.b16 %v225
      %v736 = vunpack.c.h.b16 %v225
      %v737 = vunpack.c.l.b16 %v226
      %v738 = vunpack.c.h.b16 %v226
      %v739 = vunpack.c.l.b16 %v227
      %v740 = vunpack.c.h.b16 %v227
      %v741 = vunpack.c.l.b16 %v228
      %v742 = vunpack.c.h.b16 %v228
      %v743 = vunpack.c.l.b16 %v229
      %v744 = vunpack.c.h.b16 %v229
      %v745 = vunpack.c.l.b16 %v230
      %v746 = vunpack.c.h.b16 %v230
      %v747 = vunpack.c.l.b16 %v231
      %v748 = vunpack.c.h.b16 %v231
      %v749 = vunpack.c.l.b16 %v232
      %v750 = vunpack.c.h.b16 %v232
      %v751 = vunpack.c.l.b16 %v233
      %v752 = vunpack.c.h.b16 %v233
      %v753 = vunpack.c.l.b16 %v234
      %v754 = vunpack.c.h.b16 %v234
      %v755 = vunpack.c.l.b16 %v235
      %v756 = vunpack.c.h.b16 %v235
      %v757 = vunpack.c.l.b16 %v236
      %v758 = vunpack.c.h.b16 %v236
      %v759 = vunpack.c.l.b16 %v237
      %v760 = vunpack.c.h.b16 %v237
      %v761 = vunpack.c.l.b16 %v238
      %v762 = vunpack.c.h.b16 %v238
      %v763 = vunpack.c.l.b16 %v239
      %v764 = vunpack.c.h.b16 %v239
      %v765 = vunpack.c.l.b16 %v240
      %v766 = vunpack.c.h.b16 %v240
      %v767 = vunpack.c.l.b16 %v241
      %v768 = vunpack.c.h.b16 %v241
      %v769 = vunpack.c.l.b16 %v242
      %v770 = vunpack.c.h.b16 %v242
      %v771 = vunpack.c.l.b16 %v243
      %v772 = vunpack.c.h.b16 %v243
      %v773 = vunpack.c.l.b16 %v244
      %v774 = vunpack.c.h.b16 %v244
      %v775 = vunpack.c.l.b16 %v245
      %v776 = vunpack.c.h.b16 %v245
      %v777 = vunpack.c.l.b16 %v246
      %v778 = vunpack.c.h.b16 %v246
      %v779 = vunpack.c.l.b16 %v247
      %v780 = vunpack.c.h.b16 %v247
      %v781 = vunpack.c.l.b16 %v248
      %v782 = vunpack.c.h.b16 %v248
      %v783 = vunpack.c.l.b16 %v249
      %v784 = vunpack.c.h.b16 %v249
      %v785 = vunpack.c.l.b16 %v250
      %v786 = vunpack.c.h.b16 %v250
      %v787 = vunpack.c.l.b16 %v251
      %v788 = vunpack.c.h.b16 %v251
      %v789 = vunpack.c.l.b16 %v252
      %v790 = vunpack.c.h.b16 %v252
      %v791 = vunpack.c.l.b16 %v253
      %v792 = vunpack.c.h.b16 %v253
      %v793 = vunpack.c.l.b16 %v254
      %v794 = vunpack.c.h.b16 %v254
      %v795 = vunpack.c.l.b16 %v255
      %v796 = vunpack.c.h.b16 %v255
      %v797 = vunpack.c.l.b16 %v256
      %v798 = vunpack.c.h.b16 %v256
      %v799 = vunpack.c.l.b16 %v257
      %v800 = vunpack.c.h.b16 %v257
      %v801 = vunpack.c.l.b16 %v258
      %v802 = vunpack.c.h.b16 %v258
      %v803 = vunpack.c.l.b16 %v259
      %v804 = vunpack.c.h.b16 %v259
      %v805 = vunpack.c.l.b16 %v260
      %v806 = vunpack.c.h.b16 %v260
      %v807 = vunpack.c.l.b16 %v261
      %v808 = vunpack.c.h.b16 %v261
      %v809 = vunpack.c.l.b16 %v262
      %v810 = vunpack.c.h.b16 %v262
      %v811 = vunpack.c.l.b16 %v263
      %v812 = vunpack.c.h.b16 %v263
      %v813 = vunpack.c.l.b16 %v264
      %v814 = vunpack.c.h.b16 %v264
      %v815 = vunpack.c.l.b16 %v265
      %v816 = vunpack.c.h.b16 %v265
      %v817 = vunpack.c.l.b16 %v266
      %v818 = vunpack.c.h.b16 %v266
      %v819 = vunpack.c.l.b16 %v267
      %v820 = vunpack.c.h.b16 %v267
      %v821 = vunpack.c.l.b16 %v268
      %v822 = vunpack.c.h.b16 %v268
      %v823 = vunpack.c.l.b16 %v269
      %v824 = vunpack.c.h.b16 %v269
      %v825 = vunpack.c.l.b16 %v270
      %v826 = vunpack.c.h.b16 %v270
      %v827 = vunpack.c.l.b16 %v271
      %v828 = vunpack.c.h.b16 %v271
      %v829 = vunpack.c.l.b16 %v272
      %v830 = vunpack.c.h.b16 %v272
      %v831 = vunpack.c.l.b16 %v273
      %v832 = vunpack.c.h.b16 %v273
      %v833 = vunpack.c.l.b16 %v274
      %v834 = vunpack.c.h.b16 %v274
      %v835 = vunpack.c.l.b16 %v275
      %v836 = vunpack.c.h.b16 %v275
      %v837 = vunpack.c.l.b16 %v276
      %v838 = vunpack.c.h.b16 %v276
      %v839 = vunpack.c.l.b16 %v277
      %v840 = vunpack.c.h.b16 %v277
      %v841 = vunpack.c.l.b16 %v278
      %v842 = vunpack.c.h.b16 %v278
      %v843 = vunpack.c.l.b16 %v279
      %v844 = vunpack.c.h.b16 %v279
      %v845 = vunpack.c.l.b16 %v280
      %v846 = vunpack.c.h.b16 %v280
      %v847 = vunpack.c.l.b16 %v281
      %v848 = vunpack.c.h.b16 %v281
      %v849 = vunpack.c.l.b16 %v282
      %v850 = vunpack.c.h.b16 %v282
      %v851 = vunpack.c.l.b16 %v283
      %v852 = vunpack.c.h.b16 %v283
      %v853 = vunpack.c.l.b16 %v284
      %v854 = vunpack.c.h.b16 %v284
      %v855 = vunpack.c.l.b16 %v285
      %v856 = vunpack.c.h.b16 %v285
      %v857 = vunpack.c.l.b16 %v286
      %v858 = vunpack.c.h.b16 %v286
      %v859 = vunpack.c.l.b16 %v287
      %v860 = vunpack.c.h.b16 %v287
      %v861 = vunpack.c.l.b16 %v288
      %v862 = vunpack.c.h.b16 %v288
      %v863 = vunpack.c.l.b16 %v289
      %v864 = vunpack.c.h.b16 %v289
      %v865 = vunpack.c.l.b16 %v290
      %v866 = vunpack.c.h.b16 %v290
      %v867 = vunpack.c.l.b16 %v291
      %v868 = vunpack.c.h.b16 %v291
      %v869 = vunpack.c.l.b16 %v292
      %v870 = vunpack.c.h.b16 %v292
      %v871 = vunpack.c.l.b16 %v293
      %v872 = vunpack.c.h.b16 %v293
      %v873 = vunpack.c.l.b16 %v294
      %v874 = vunpack.c.h.b16 %v294
      %v875 = vunpack.c.l.b16 %v295
      %v876 = vunpack.c.h.b16 %v295
      %v877 = vunpack.c.l.b16 %v296
      %v878 = vunpack.c.h.b16 %v296
      %v879 = vunpack.c.l.b16 %v297
      %v880 = vunpack.c.h.b16 %v297
      %v881 = vunpack.c.l.b16 %v298
      %v882 = vunpack.c.h.b16 %v298
      %v883 = vunpack.c.l.b16 %v299
      %v884 = vunpack.c.h.b16 %v299
      %v885 = vunpack.c.l.b16 %v300
      %v886 = vunpack.c.h.b16 %v300
      %v887 = vunpack.c.l.b16 %v301
      %v888 = vunpack.c.h.b16 %v301
      %v889 = vunpack.c.l.b16 %v302
      %v890 = vunpack.c.h.b16 %v302
      %v891 = vunpack.c.l.b16 %v303
      %v892 = vunpack.c.h.b16 %v303
      %v893 = vunpack.c.l.b16 %v304
      %v894 = vunpack.c.h.b16 %v304
      %v895 = vunpack.c.l.b16 %v305
      %v896 = vunpack.c.h.b16 %v305
      %v897 = vunpack.c.l.b16 %v306
      %v898 = vunpack.c.h.b16 %v306
      %v899 = vunpack.c.l.b16 %v307
      %v900 = vunpack.c.h.b16 %v307
      %v901 = vunpack.c.l.b16 %v308
      %v902 = vunpack.c.h.b16 %v308
      %v903 = vunpack.c.l.b16 %v309
      %v904 = vunpack.c.h.b16 %v309
      %v905 = vunpack.c.l.b16 %v310
      %v906 = vunpack.c.h.b16 %v310
      %v907 = vunpack.c.l.b16 %v311
      %v908 = vunpack.c.h.b16 %v311
      %v909 = vunpack.c.l.b16 %v312
      %v910 = vunpack.c.h.b16 %v312
      %v911 = vunpack.c.l.b16 %v313
      %v912 = vunpack.c.h.b16 %v313
      %v913 = vunpack.c.l.b16 %v314
      %v914 = vunpack.c.h.b16 %v314
      %v915 = vunpack.c.l.b16 %v315
      %v916 = vunpack.c.h.b16 %v315
      %v917 = vunpack.c.l.b16 %v316
      %v918 = vunpack.c.h.b16 %v316
      %v919 = vunpack.c.l.b16 %v317
      %v920 = vunpack.c.h.b16 %v317
      %v921 = vunpack.c.l.b16 %v318
      %v922 = vunpack.c.h.b16 %v318
      %v923 = vunpack.c.l.b16 %v319
      %v924 = vunpack.c.h.b16 %v319
      %v925 = vunpack.c.l.b16 %v320
      %v926 = vunpack.c.h.b16 %v320
      %v927 = vunpack.c.l.b16 %v321
      %v928 = vunpack.c.h.b16 %v321
      %v929 = vunpack.c.l.b16 %v322
      %v930 = vunpack.c.h.b16 %v322
      %v931 = vunpack.c.l.b16 %v323
      %v932 = vunpack.c.h.b16 %v323
      %v933 = vunpack.c.l.b16 %v324
      %v934 = vunpack.c.h.b16 %v324
      %v935 = vunpack.c.l.b16 %v325
      %v936 = vunpack.c.h.b16 %v325
      %v937 = vunpack.c.l.b16 %v326
      %v938 = vunpack.c.h.b16 %v326
      %v939 = vunpack.c.l.b16 %v327
      %v940 = vunpack.c.h.b16 %v327
      %v941 = vunpack.c.l.b16 %v328
      %v942 = vunpack.c.h.b16 %v328
      %v943 = vunpack.c.l.b16 %v329
      %v944 = vunpack.c.h.b16 %v329
      %v945 = vunpack.c.l.b16 %v330
      %v946 = vunpack.c.h.b16 %v330
      %v947 = vunpack.c.l.b16 %v331
      %v948 = vunpack.c.h.b16 %v331
      %v949 = vunpack.c.l.b16 %v332
      %v950 = vunpack.c.h.b16 %v332
      %v951 = vunpack.c.l.b16 %v333
      %v952 = vunpack.c.h.b16 %v333
      %v953 = vunpack.c.l.b16 %v334
      %v954 = vunpack.c.h.b16 %v334
      %v955 = vunpack.c.l.b16 %v335
      %v956 = vunpack.c.h.b16 %v335
      %v957 = vunpack.c.l.b16 %v336
      %v958 = vunpack.c.h.b16 %v336
      %v959 = vunpack.c.l.b16 %v337
      %v960 = vunpack.c.h.b16 %v337
      %v961 = vunpack.c.l.b16 %v338
      %v962 = vunpack.c.h.b16 %v338
      %v963 = vunpack.c.l.b16 %v339
      %v964 = vunpack.c.h.b16 %v339
      %v965 = vunpack.c.l.b16 %v340
      %v966 = vunpack.c.h.b16 %v340
      %v967 = vunpack.c.l.b16 %v341
      %v968 = vunpack.c.h.b16 %v341
      %v969 = vunpack.c.l.b16 %v342
      %v970 = vunpack.c.h.b16 %v342
      %v971 = vunpack.c.l.b16 %v343
      %v972 = vunpack.c.h.b16 %v343
      %v973 = vunpack.c.l.b16 %v344
      %v974 = vunpack.c.h.b16 %v344
      %v975 = vunpack.c.l.b16 %v345
      %v976 = vunpack.c.h.b16 %v345
      %v977 = vunpack.c.l.b16 %v346
      %v978 = vunpack.c.h.b16 %v346
      %v979 = vunpack.c.l.b16 %v347
      %v980 = vunpack.c.h.b16 %v347
      %v981 = vunpack.c.l.b16 %v348
      %v982 = vunpack.c.h.b16 %v348
      %v983 = vunpack.c.l.b16 %v349
      %v984 = vunpack.c.h.b16 %v349
      %v985 = vunpack.c.l.b16 %v350
      %v986 = vunpack.c.h.b16 %v350
      %v987 = vunpack.c.l.b16 %v351
      %v988 = vunpack.c.h.b16 %v351
      %v989 = vunpack.c.l.b16 %v352
      %v990 = vunpack.c.h.b16 %v352
      %v991 = vunpack.c.l.b16 %v353
      %v992 = vunpack.c.h.b16 %v353
      %v993 = vpack.c.b16 %v593, %v583
      %v994 = vpack.c.b16 %v594, %v584
      %v995 = vpack.c.b16 %v595, %v585
      %v996 = vpack.c.b16 %v596, %v586
      %v997 = vpack.c.b16 %v597, %v587
      %v998 = vpack.c.b16 %v598, %v588
      %v999 = vpack.c.b16 %v599, %v589
      %v1000 = vpack.c.b16 %v600, %v590
      %v1001 = vpack.c.b16 %v601, %v591
      %v1002 = vpack.c.b16 %v602, %v592
      %v1003 = vpack.c.b16 %v613, %v603
      %v1004 = vpack.c.b16 %v614, %v604
      %v1005 = vpack.c.b16 %v615, %v605
      %v1006 = vpack.c.b16 %v616, %v606
      %v1007 = vpack.c.b16 %v617, %v607
      %v1008 = vpack.c.b16 %v618, %v608
      %v1009 = vpack.c.b16 %v619, %v609
      %v1010 = vpack.c.b16 %v620, %v610
      %v1011 = vpack.c.b16 %v621, %v611
      %v1012 = vpack.c.b16 %v622, %v612
      %v1013 = vpack.c.b16 %v633, %v623
      %v1014 = vpack.c.b16 %v634, %v624
      %v1015 = vpack.c.b16 %v635, %v625
      %v1016 = vpack.c.b16 %v636, %v626
      %v1017 = vpack.c.b16 %v637, %v627
      %v1018 = vpack.c.b16 %v638, %v628
      %v1019 = vpack.c.b16 %v639, %v629
      %v1020 = vpack.c.b16 %v640, %v630
      %v1021 = vpack.c.b16 %v641, %v631
      %v1022 = vpack.c.b16 %v642, %v632
      %v1023 = vpack.c.b16 %v653, %v643
      %v1024 = vpack.c.b16 %v654, %v644
      %v1025 = vpack.c.b16 %v655, %v645
      %v1026 = vpack.c.b16 %v656, %v646
      %v1027 = vpack.c.b16 %v657, %v647
      %v1028 = vpack.c.b16 %v658, %v648
      %v1029 = vpack.c.b16 %v659, %v649
      %v1030 = vpack.c.b16 %v660, %v650
      %v1031 = vpack.c.b16 %v661, %v651
      %v1032 = vpack.c.b16 %v662, %v652
      %v1033 = vpack.c.b16 %v673, %v663
      %v1034 = vpack.c.b16 %v674, %v664
      %v1035 = vpack.c.b16 %v675, %v665
      %v1036 = vpack.c.b16 %v676, %v666
      %v1037 = vpack.c.b16 %v677, %v667
      %v1038 = vpack.c.b16 %v678, %v668
      %v1039 = vpack.c.b16 %v679, %v669
      %v1040 = vpack.c.b16 %v680, %v670
      %v1041 = vpack.c.b16 %v681, %v671
      %v1042 = vpack.c.b16 %v682, %v672
      %v1043 = vpack.c.b16 %v693, %v683
      %v1044 = vpack.c.b16 %v694, %v684
      %v1045 = vpack.c.b16 %v695, %v685
      %v1046 = vpack.c.b16 %v696, %v686
      %v1047 = vpack.c.b16 %v697, %v687
      %v1048 = vpack.c.b16 %v698, %v688
      %v1049 = vpack.c.b16 %v699, %v689
      %v1050 = vpack.c.b16 %v700, %v690
      %v1051 = vpack.c.b16 %v701, %v691
      %v1052 = vpack.c.b16 %v702, %v692
      %v1053 = vpack.c.b16 %v713, %v703
      %v1054 = vpack.c.b16 %v714, %v704
      %v1055 = vpack.c.b16 %v715, %v705
      %v1056 = vpack.c.b16 %v716, %v706
      %v1057 = vpack.c.b16 %v717, %v707
      %v1058 = vpack.c.b16 %v718, %v708
      %v1059 = vpack.c.b16 %v719, %v709
      %v1060 = vpack.c.b16 %v720, %v710
      %v1061 = vpack.c.b16 %v721, %v711
      %v1062 = vpack.c.b16 %v722, %v712
      %v1063 = vpack.c.b16 %v733, %v723
      %v1064 = vpack.c.b16 %v734, %v724
      %v1065 = vpack.c.b16 %v735, %v725
      %v1066 = vpack.c.b16 %v736, %v726
      %v1067 = vpack.c.b16 %v737, %v727
      %v1068 = vpack.c.b16 %v738, %v728
      %v1069 = vpack.c.b16 %v739, %v729
      %v1070 = vpack.c.b16 %v740, %v730
      %v1071 = vpack.c.b16 %v741, %v731
      %v1072 = vpack.c.b16 %v742, %v732
      %v1073 = vpack.c.b16 %v753, %v743
      %v1074 = vpack.c.b16 %v754, %v744
      %v1075 = vpack.c.b16 %v755, %v745
      %v1076 = vpack.c.b16 %v756, %v746
      %v1077 = vpack.c.b16 %v757, %v747
      %v1078 = vpack.c.b16 %v758, %v748
      %v1079 = vpack.c.b16 %v759, %v749
      %v1080 = vpack.c.b16 %v760, %v750
      %v1081 = vpack.c.b16 %v761, %v751
      %v1082 = vpack.c.b16 %v762, %v752
      %v1083 = vpack.c.b16 %v773, %v763
      %v1084 = vpack.c.b16 %v774, %v764
      %v1085 = vpack.c.b16 %v775, %v765
      %v1086 = vpack.c.b16 %v776, %v766
      %v1087 = vpack.c.b16 %v777, %v767
      %v1088 = vpack.c.b16 %v778, %v768
      %v1089 = vpack.c.b16 %v779, %v769
      %v1090 = vpack.c.b16 %v780, %v770
      %v1091 = vpack.c.b16 %v781, %v771
      %v1092 = vpack.c.b16 %v782, %v772
      %v1093 = vpack.c.b16 %v793, %v783
      %v1094 = vpack.c.b16 %v794, %v784
      %v1095 = vpack.c.b16 %v795, %v785
      %v1096 = vpack.c.b16 %v796, %v786
      %v1097 = vpack.c.b16 %v797, %v787
      %v1098 = vpack.c.b16 %v798, %v788
      %v1099 = vpack.c.b16 %v799, %v789
      %v1100 = vpack.c.b16 %v800, %v790
      %v1101 = vpack.c.b16 %v801, %v791
      %v1102 = vpack.c.b16 %v802, %v792
      %v1103 = vpack.c.b16 %v813, %v803
      %v1104 = vpack.c.b16 %v814, %v804
      %v1105 = vpack.c.b16 %v815, %v805
      %v1106 = vpack.c.b16 %v816, %v806
      %v1107 = vpack.c.b16 %v817, %v807
      %v1108 = vpack.c.b16 %v818, %v808
      %v1109 = vpack.c.b16 %v819, %v809
      %v1110 = vpack.c.b16 %v820, %v810
      %v1111 = vpack.c.b16 %v821, %v811
      %v1112 = vpack.c.b16 %v822, %v812
      %v1113 = vpack.c.b16 %v833, %v823
      %v1114 = vpack.c.b16 %v834, %v824
      %v1115 = vpack.c.b16 %v835, %v825
      %v1116 = vpack.c.b16 %v836, %v826
      %v1117 = vpack.c.b16 %v837, %v827
      %v1118 = vpack.c.b16 %v838, %v828
      %v1119 = vpack.c.b16 %v839, %v829
      %v1120 = vpack.c.b16 %v840, %v830
      %v1121 = vpack.c.b16 %v841, %v831
      %v1122 = vpack.c.b16 %v842, %v832
      %v1123 = vpack.c.b16 %v853, %v843
      %v1124 = vpack.c.b16 %v854, %v844
      %v1125 = vpack.c.b16 %v855, %v845
      %v1126 = vpack.c.b16 %v856, %v846
      %v1127 = vpack.c.b16 %v857, %v847
      %v1128 = vpack.c.b16 %v858, %v848
      %v1129 = vpack.c.b16 %v859, %v849
      %v1130 = vpack.c.b16 %v860, %v850
      %v1131 = vpack.c.b16 %v861, %v851
      %v1132 = vpack.c.b16 %v862, %v852
      %v1133 = vpack.c.b16 %v873, %v863
      %v1134 = vpack.c.b16 %v874, %v864
      %v1135 = vpack.c.b16 %v875, %v865
      %v1136 = vpack.c.b16 %v876, %v866
      %v1137 = vpack.c.b16 %v877, %v867
      %v1138 = vpack.c.b16 %v878, %v868
      %v1139 = vpack.c.b16 %v879, %v869
      %v1140 = vpack.c.b16 %v880, %v870
      %v1141 = vpack.c.b16 %v881, %v871
      %v1142 = vpack.c.b16 %v882, %v872
      %v1143 = vpack.c.b16 %v893, %v883
      %v1144 = vpack.c.b16 %v894, %v884
      %v1145 = vpack.c.b16 %v895, %v885
      %v1146 = vpack.c.b16 %v896, %v886
      %v1147 = vpack.c.b16 %v897, %v887
      %v1148 = vpack.c.b16 %v898, %v888
      %v1149 = vpack.c.b16 %v899, %v889
      %v1150 = vpack.c.b16 %v900, %v890
      %v1151 = vpack.c.b16 %v901, %v891
      %v1152 = vpack.c.b16 %v902, %v892
      %v1153 = vpack.c.b16 %v913, %v903
      %v1154 = vpack.c.b16 %v914, %v904
      %v1155 = vpack.c.b16 %v915, %v905
      %v1156 = vpack.c.b16 %v916, %v906
      %v1157 = vpack.c.b16 %v917, %v907
      %v1158 = vpack.c.b16 %v918, %v908
      %v1159 = vpack.c.b16 %v919, %v909
      %v1160 = vpack.c.b16 %v920, %v910
      %v1161 = vpack.c.b16 %v921, %v911
      %v1162 = vpack.c.b16 %v922, %v912
      %v1163 = vpack.c.b16 %v933, %v923
      %v1164 = vpack.c.b16 %v934, %v924
      %v1165 = vpack.c.b16 %v935, %v925
      %v1166 = vpack.c.b16 %v936, %v926
      %v1167 = vpack.c.b16 %v937, %v927
      %v1168 = vpack.c.b16 %v938, %v928
      %v1169 = vpack.c.b16 %v939, %v929
      %v1170 = vpack.c.b16 %v940, %v930
      %v1171 = vpack.c.b16 %v941, %v931
      %v1172 = vpack.c.b16 %v942, %v932
      %v1173 = vpack.c.b16 %v953, %v943
      %v1174 = vpack.c.b16 %v954, %v944
      %v1175 = vpack.c.b16 %v955, %v945
      %v1176 = vpack.c.b16 %v956, %v946
      %v1177 = vpack.c.b16 %v957, %v947
      %v1178 = vpack.c.b16 %v958, %v948
      %v1179 = vpack.c.b16 %v959, %v949
      %v1180 = vpack.c.b16 %v960, %v950
      %v1181 = vpack.c.b16 %v961, %v951
      %v1182 = vpack.c.b16 %v962, %v952
      %v1183 = vpack.c.b16 %v973, %v963
      %v1184 = vpack.c.b16 %v974, %v964
      %v1185 = vpack.c.b16 %v975, %v965
      %v1186 = vpack.c.b16 %v976, %v966
      %v1187 = vpack.c.b16 %v977, %v967
      %v1188 = vpack.c.b16 %v978, %v968
      %v1189 = vpack.c.b16 %v979, %v969
      %v1190 = vpack.c.b16 %v980, %v970
      %v1191 = vpack.c.b16 %v981, %v971
      %v1192 = vpack.c.b16 %v982, %v972
      %v1193 = vpack.c.b16 %v983, %v983
      %v1194 = vpack.c.b16 %v984, %v984
      %v1195 = vpack.c.b16 %v985, %v985
      %v1196 = vpack.c.b16 %v986, %v986
      %v1197 = vpack.c.b16 %v987, %v987
      %v1198 = vpack.c.b16 %v988, %v988
      %v1199 = vpack.c.b16 %v989, %v989
      %v1200 = vpack.c.b16 %v990, %v990
      %v1201 = vpack.c.b16 %v991, %v991
      %v1202 = vpack.c.b16 %v992, %v992
      %vm1403 = vcmask 556032
      %v1405 = vsel %vm1403, %v372, 0
      %vm1407 = vcmask 1041408
      %v1409 = vsel %vm1407, %v1193, 0
      %v1412 = vsel %vm1407, %v1194, 0
      %v1415 = vsel %vm1407, %v1195, 0
      %v1418 = vsel %vm1407, %v1196, 0
      %v1421 = vsel %vm1407, %v1197, 0
      %v1424 = vsel %vm1407, %v1198, 0
      %v1427 = vsel %vm1407, %v1199, 0
      %v1430 = vsel %vm1407, %v1200, 0
      %v1433 = vsel %vm1407, %v1201, 0
      %v1436 = vsel %vm1407, %v1202, 0
      %1438 = vmatprep.subr.bf16.mxu0 %v1064
      %1439 = vmatpush1.bf16.msra.mxu0 %v1063
      %1440 = vmatprep.subr.bf16.mxu0 %v1054
      %1441 = vmatpush1.bf16.msra.mxu0 %v1053
      %1442 = vmatprep.subr.bf16.mxu0 %v1044
      %1443 = vmatpush1.bf16.msra.mxu0 %v1043
      %1444 = vmatprep.subr.bf16.mxu0 %v1034
      %1445 = vmatpush1.bf16.msra.mxu0 %v1033
      %1446 = vmatprep.subr.bf16.mxu0 %v1024
      %1447 = vmatpush1.bf16.msra.mxu0 %v1023
      %1448 = vmatprep.subr.bf16.mxu0 %v1014
      %1449 = vmatpush1.bf16.msra.mxu0 %v1013
      %1450 = vmatprep.subr.bf16.mxu0 %v1004
      %1451 = vmatpush1.bf16.msra.mxu0 %v1003
      %1452 = vmatprep.subr.bf16.mxu0 %v994
      %1453 = vmatpush1.bf16.msra.mxu0 %v993
      %1454 = vmatprep.subr.bf16.mxu0 %v1144
      %1455 = vmatpush2.bf16.msra.mxu0 %v1143
      %1456 = vmatprep.subr.bf16.mxu0 %v1134
      %1457 = vmatpush2.bf16.msra.mxu0 %v1133
      %1458 = vmatprep.subr.bf16.mxu0 %v1124
      %1459 = vmatpush2.bf16.msra.mxu0 %v1123
      %1460 = vmatprep.subr.bf16.mxu0 %v1114
      %1461 = vmatpush2.bf16.msra.mxu0 %v1113
      %1462 = vmatprep.subr.bf16.mxu0 %v1104
      %1463 = vmatpush2.bf16.msra.mxu0 %v1103
      %1464 = vmatprep.subr.bf16.mxu0 %v1094
      %1465 = vmatpush2.bf16.msra.mxu0 %v1093
      %1466 = vmatprep.subr.bf16.mxu0 %v1084
      %1467 = vmatpush2.bf16.msra.mxu0 %v1083
      %1468 = vmatprep.subr.bf16.mxu0 %v1074
      %1469 = vmatpush2.bf16.msra.mxu0 %v1073
      %1470 = vmatprep.mubr.bf16.mxu0 %v375
      %1471 = vmatmul.mubr.bf16.gmra.mxu0 %v374
      %v1472 = vpop.f32.mrf.mxu0
      %v1473 = vadd.f32 0.0, %v1472
      %v1474 = vpop.f32.mrf.mxu0
      %v1475 = vadd.f32 0.0, %v1474
      %v1476 = vpop.f32.mrf.mxu0
      %v1477 = vadd.f32 0.0, %v1476
      %v1478 = vpop.f32.mrf.mxu0
      %v1479 = vadd.f32 0.0, %v1478
      %1480 = vdwg.mxu0
      %1481 = vmatprep.subr.bf16.mxu0 0
      %1482 = vmatpush1.bf16.msra.mxu0 0
      %1483 = vmatprep.subr.bf16.mxu0 0
      %1484 = vmatpush1.bf16.msra.mxu0 0
      %1485 = vmatprep.subr.bf16.mxu0 0
      %1486 = vmatpush1.bf16.msra.mxu0 0
      %1487 = vmatprep.subr.bf16.mxu0 %v1412
      %1488 = vmatpush1.bf16.msra.mxu0 %v1409
      %1489 = vmatprep.subr.bf16.mxu0 %v1184
      %1490 = vmatpush1.bf16.msra.mxu0 %v1183
      %1491 = vmatprep.subr.bf16.mxu0 %v1174
      %1492 = vmatpush1.bf16.msra.mxu0 %v1173
      %1493 = vmatprep.subr.bf16.mxu0 %v1164
      %1494 = vmatpush1.bf16.msra.mxu0 %v1163
      %1495 = vmatprep.subr.bf16.mxu0 %v1154
      %1496 = vmatpush1.bf16.msra.mxu0 %v1153
      %1497 = vmatprep.subr.bf16.mxu0 0
      %1498 = vmatpush2.bf16.msra.mxu0 0
      %1499 = vmatprep.subr.bf16.mxu0 0
      %1500 = vmatpush2.bf16.msra.mxu0 0
      %1501 = vmatprep.subr.bf16.mxu0 0
      %1502 = vmatpush2.bf16.msra.mxu0 0
      %1503 = vmatprep.subr.bf16.mxu0 0
      %1504 = vmatpush2.bf16.msra.mxu0 0
      %1505 = vmatprep.subr.bf16.mxu0 0
      %1506 = vmatpush2.bf16.msra.mxu0 0
      %1507 = vmatprep.subr.bf16.mxu0 0
      %1508 = vmatpush2.bf16.msra.mxu0 0
      %1509 = vmatprep.subr.bf16.mxu0 0
      %1510 = vmatpush2.bf16.msra.mxu0 0
      %1511 = vmatprep.subr.bf16.mxu0 0
      %1512 = vmatpush2.bf16.msra.mxu0 0
      %1513 = vmatprep.mubr.bf16.mxu0 0
      %1514 = vmatmul.mubr.bf16.gmra.mxu0 %v1405
      %v1515 = vpop.f32.mrf.mxu0
      %v1516 = vadd.f32 %v1473, %v1515
      %v1517 = vpop.f32.mrf.mxu0
      %v1518 = vadd.f32 %v1475, %v1517
      %v1519 = vpop.f32.mrf.mxu0
      %v1520 = vadd.f32 %v1477, %v1519
      %v1521 = vpop.f32.mrf.mxu0
      %v1522 = vadd.f32 %v1479, %v1521
      %1523 = vdwg.mxu0
      %1524 = vmatprep.subr.bf16.mxu0 %v1066
      %1525 = vmatpush1.bf16.msra.mxu0 %v1065
      %1526 = vmatprep.subr.bf16.mxu0 %v1056
      %1527 = vmatpush1.bf16.msra.mxu0 %v1055
      %1528 = vmatprep.subr.bf16.mxu0 %v1046
      %1529 = vmatpush1.bf16.msra.mxu0 %v1045
      %1530 = vmatprep.subr.bf16.mxu0 %v1036
      %1531 = vmatpush1.bf16.msra.mxu0 %v1035
      %1532 = vmatprep.subr.bf16.mxu0 %v1026
      %1533 = vmatpush1.bf16.msra.mxu0 %v1025
      %1534 = vmatprep.subr.bf16.mxu0 %v1016
      %1535 = vmatpush1.bf16.msra.mxu0 %v1015
      %1536 = vmatprep.subr.bf16.mxu0 %v1006
      %1537 = vmatpush1.bf16.msra.mxu0 %v1005
      %1538 = vmatprep.subr.bf16.mxu0 %v996
      %1539 = vmatpush1.bf16.msra.mxu0 %v995
      %1540 = vmatprep.subr.bf16.mxu0 %v1146
      %1541 = vmatpush2.bf16.msra.mxu0 %v1145
      %1542 = vmatprep.subr.bf16.mxu0 %v1136
      %1543 = vmatpush2.bf16.msra.mxu0 %v1135
      %1544 = vmatprep.subr.bf16.mxu0 %v1126
      %1545 = vmatpush2.bf16.msra.mxu0 %v1125
      %1546 = vmatprep.subr.bf16.mxu0 %v1116
      %1547 = vmatpush2.bf16.msra.mxu0 %v1115
      %1548 = vmatprep.subr.bf16.mxu0 %v1106
      %1549 = vmatpush2.bf16.msra.mxu0 %v1105
      %1550 = vmatprep.subr.bf16.mxu0 %v1096
      %1551 = vmatpush2.bf16.msra.mxu0 %v1095
      %1552 = vmatprep.subr.bf16.mxu0 %v1086
      %1553 = vmatpush2.bf16.msra.mxu0 %v1085
      %1554 = vmatprep.subr.bf16.mxu0 %v1076
      %1555 = vmatpush2.bf16.msra.mxu0 %v1075
      %1556 = vmatprep.mubr.bf16.mxu0 %v375
      %1557 = vmatmul.mubr.bf16.gmra.mxu0 %v374
      %v1558 = vpop.f32.mrf.mxu0
      %v1559 = vadd.f32 0.0, %v1558
      %v1560 = vpop.f32.mrf.mxu0
      %v1561 = vadd.f32 0.0, %v1560
      %v1562 = vpop.f32.mrf.mxu0
      %v1563 = vadd.f32 0.0, %v1562
      %v1564 = vpop.f32.mrf.mxu0
      %v1565 = vadd.f32 0.0, %v1564
      %1566 = vdwg.mxu0
      %1567 = vmatprep.subr.bf16.mxu0 0
      %1568 = vmatpush1.bf16.msra.mxu0 0
      %1569 = vmatprep.subr.bf16.mxu0 0
      %1570 = vmatpush1.bf16.msra.mxu0 0
      %1571 = vmatprep.subr.bf16.mxu0 0
      %1572 = vmatpush1.bf16.msra.mxu0 0
      %1573 = vmatprep.subr.bf16.mxu0 %v1418
      %1574 = vmatpush1.bf16.msra.mxu0 %v1415
      %1575 = vmatprep.subr.bf16.mxu0 %v1186
      %1576 = vmatpush1.bf16.msra.mxu0 %v1185
      %1577 = vmatprep.subr.bf16.mxu0 %v1176
      %1578 = vmatpush1.bf16.msra.mxu0 %v1175
      %1579 = vmatprep.subr.bf16.mxu0 %v1166
      %1580 = vmatpush1.bf16.msra.mxu0 %v1165
      %1581 = vmatprep.subr.bf16.mxu0 %v1156
      %1582 = vmatpush1.bf16.msra.mxu0 %v1155
      %1583 = vmatprep.subr.bf16.mxu0 0
      %1584 = vmatpush2.bf16.msra.mxu0 0
      %1585 = vmatprep.subr.bf16.mxu0 0
      %1586 = vmatpush2.bf16.msra.mxu0 0
      %1587 = vmatprep.subr.bf16.mxu0 0
      %1588 = vmatpush2.bf16.msra.mxu0 0
      %1589 = vmatprep.subr.bf16.mxu0 0
      %1590 = vmatpush2.bf16.msra.mxu0 0
      %1591 = vmatprep.subr.bf16.mxu0 0
      %1592 = vmatpush2.bf16.msra.mxu0 0
      %1593 = vmatprep.subr.bf16.mxu0 0
      %1594 = vmatpush2.bf16.msra.mxu0 0
      %1595 = vmatprep.subr.bf16.mxu0 0
      %1596 = vmatpush2.bf16.msra.mxu0 0
      %1597 = vmatprep.subr.bf16.mxu0 0
      %1598 = vmatpush2.bf16.msra.mxu0 0
      %1599 = vmatprep.mubr.bf16.mxu0 0
      %1600 = vmatmul.mubr.bf16.gmra.mxu0 %v1405
      %v1601 = vpop.f32.mrf.mxu0
      %v1602 = vadd.f32 %v1559, %v1601
      %v1603 = vpop.f32.mrf.mxu0
      %v1604 = vadd.f32 %v1561, %v1603
      %v1605 = vpop.f32.mrf.mxu0
      %v1606 = vadd.f32 %v1563, %v1605
      %v1607 = vpop.f32.mrf.mxu0
      %v1608 = vadd.f32 %v1565, %v1607
      %1609 = vdwg.mxu0
      %1610 = vmatprep.subr.bf16.mxu0 %v1068
      %1611 = vmatpush1.bf16.msra.mxu0 %v1067
      %1612 = vmatprep.subr.bf16.mxu0 %v1058
      %1613 = vmatpush1.bf16.msra.mxu0 %v1057
      %1614 = vmatprep.subr.bf16.mxu0 %v1048
      %1615 = vmatpush1.bf16.msra.mxu0 %v1047
      %1616 = vmatprep.subr.bf16.mxu0 %v1038
      %1617 = vmatpush1.bf16.msra.mxu0 %v1037
      %1618 = vmatprep.subr.bf16.mxu0 %v1028
      %1619 = vmatpush1.bf16.msra.mxu0 %v1027
      %1620 = vmatprep.subr.bf16.mxu0 %v1018
      %1621 = vmatpush1.bf16.msra.mxu0 %v1017
      %1622 = vmatprep.subr.bf16.mxu0 %v1008
      %1623 = vmatpush1.bf16.msra.mxu0 %v1007
      %1624 = vmatprep.subr.bf16.mxu0 %v998
      %1625 = vmatpush1.bf16.msra.mxu0 %v997
      %1626 = vmatprep.subr.bf16.mxu0 %v1148
      %1627 = vmatpush2.bf16.msra.mxu0 %v1147
      %1628 = vmatprep.subr.bf16.mxu0 %v1138
      %1629 = vmatpush2.bf16.msra.mxu0 %v1137
      %1630 = vmatprep.subr.bf16.mxu0 %v1128
      %1631 = vmatpush2.bf16.msra.mxu0 %v1127
      %1632 = vmatprep.subr.bf16.mxu0 %v1118
      %1633 = vmatpush2.bf16.msra.mxu0 %v1117
      %1634 = vmatprep.subr.bf16.mxu0 %v1108
      %1635 = vmatpush2.bf16.msra.mxu0 %v1107
      %1636 = vmatprep.subr.bf16.mxu0 %v1098
      %1637 = vmatpush2.bf16.msra.mxu0 %v1097
      %1638 = vmatprep.subr.bf16.mxu0 %v1088
      %1639 = vmatpush2.bf16.msra.mxu0 %v1087
      %1640 = vmatprep.subr.bf16.mxu0 %v1078
      %1641 = vmatpush2.bf16.msra.mxu0 %v1077
      %1642 = vmatprep.mubr.bf16.mxu0 %v375
      %1643 = vmatmul.mubr.bf16.gmra.mxu0 %v374
      %v1644 = vpop.f32.mrf.mxu0
      %v1645 = vadd.f32 0.0, %v1644
      %v1646 = vpop.f32.mrf.mxu0
      %v1647 = vadd.f32 0.0, %v1646
      %v1648 = vpop.f32.mrf.mxu0
      %v1649 = vadd.f32 0.0, %v1648
      %v1650 = vpop.f32.mrf.mxu0
      %v1651 = vadd.f32 0.0, %v1650
      %1652 = vdwg.mxu0
      %1653 = vmatprep.subr.bf16.mxu0 0
      %1654 = vmatpush1.bf16.msra.mxu0 0
      %1655 = vmatprep.subr.bf16.mxu0 0
      %1656 = vmatpush1.bf16.msra.mxu0 0
      %1657 = vmatprep.subr.bf16.mxu0 0
      %1658 = vmatpush1.bf16.msra.mxu0 0
      %1659 = vmatprep.subr.bf16.mxu0 %v1424
      %1660 = vmatpush1.bf16.msra.mxu0 %v1421
      %1661 = vmatprep.subr.bf16.mxu0 %v1188
      %1662 = vmatpush1.bf16.msra.mxu0 %v1187
      %1663 = vmatprep.subr.bf16.mxu0 %v1178
      %1664 = vmatpush1.bf16.msra.mxu0 %v1177
      %1665 = vmatprep.subr.bf16.mxu0 %v1168
      %1666 = vmatpush1.bf16.msra.mxu0 %v1167
      %1667 = vmatprep.subr.bf16.mxu0 %v1158
      %1668 = vmatpush1.bf16.msra.mxu0 %v1157
      %1669 = vmatprep.subr.bf16.mxu0 0
      %1670 = vmatpush2.bf16.msra.mxu0 0
      %1671 = vmatprep.subr.bf16.mxu0 0
      %1672 = vmatpush2.bf16.msra.mxu0 0
      %1673 = vmatprep.subr.bf16.mxu0 0
      %1674 = vmatpush2.bf16.msra.mxu0 0
      %1675 = vmatprep.subr.bf16.mxu0 0
      %1676 = vmatpush2.bf16.msra.mxu0 0
      %1677 = vmatprep.subr.bf16.mxu0 0
      %1678 = vmatpush2.bf16.msra.mxu0 0
      %1679 = vmatprep.subr.bf16.mxu0 0
      %1680 = vmatpush2.bf16.msra.mxu0 0
      %1681 = vmatprep.subr.bf16.mxu0 0
      %1682 = vmatpush2.bf16.msra.mxu0 0
      %1683 = vmatprep.subr.bf16.mxu0 0
      %1684 = vmatpush2.bf16.msra.mxu0 0
      %1685 = vmatprep.mubr.bf16.mxu0 0
      %1686 = vmatmul.mubr.bf16.gmra.mxu0 %v1405
      %v1687 = vpop.f32.mrf.mxu0
      %v1688 = vadd.f32 %v1645, %v1687
      %v1689 = vpop.f32.mrf.mxu0
      %v1690 = vadd.f32 %v1647, %v1689
      %v1691 = vpop.f32.mrf.mxu0
      %v1692 = vadd.f32 %v1649, %v1691
      %v1693 = vpop.f32.mrf.mxu0
      %v1694 = vadd.f32 %v1651, %v1693
      %1695 = vdwg.mxu0
      %1696 = vmatprep.subr.bf16.mxu0 %v1070
      %1697 = vmatpush1.bf16.msra.mxu0 %v1069
      %1698 = vmatprep.subr.bf16.mxu0 %v1060
      %1699 = vmatpush1.bf16.msra.mxu0 %v1059
      %1700 = vmatprep.subr.bf16.mxu0 %v1050
      %1701 = vmatpush1.bf16.msra.mxu0 %v1049
      %1702 = vmatprep.subr.bf16.mxu0 %v1040
      %1703 = vmatpush1.bf16.msra.mxu0 %v1039
      %1704 = vmatprep.subr.bf16.mxu0 %v1030
      %1705 = vmatpush1.bf16.msra.mxu0 %v1029
      %1706 = vmatprep.subr.bf16.mxu0 %v1020
      %1707 = vmatpush1.bf16.msra.mxu0 %v1019
      %1708 = vmatprep.subr.bf16.mxu0 %v1010
      %1709 = vmatpush1.bf16.msra.mxu0 %v1009
      %1710 = vmatprep.subr.bf16.mxu0 %v1000
      %1711 = vmatpush1.bf16.msra.mxu0 %v999
      %1712 = vmatprep.subr.bf16.mxu0 %v1150
      %1713 = vmatpush2.bf16.msra.mxu0 %v1149
      %1714 = vmatprep.subr.bf16.mxu0 %v1140
      %1715 = vmatpush2.bf16.msra.mxu0 %v1139
      %1716 = vmatprep.subr.bf16.mxu0 %v1130
      %1717 = vmatpush2.bf16.msra.mxu0 %v1129
      %1718 = vmatprep.subr.bf16.mxu0 %v1120
      %1719 = vmatpush2.bf16.msra.mxu0 %v1119
      %1720 = vmatprep.subr.bf16.mxu0 %v1110
      %1721 = vmatpush2.bf16.msra.mxu0 %v1109
      %1722 = vmatprep.subr.bf16.mxu0 %v1100
      %1723 = vmatpush2.bf16.msra.mxu0 %v1099
      %1724 = vmatprep.subr.bf16.mxu0 %v1090
      %1725 = vmatpush2.bf16.msra.mxu0 %v1089
      %1726 = vmatprep.subr.bf16.mxu0 %v1080
      %1727 = vmatpush2.bf16.msra.mxu0 %v1079
      %1728 = vmatprep.mubr.bf16.mxu0 %v375
      %1729 = vmatmul.mubr.bf16.gmra.mxu0 %v374
      %v1730 = vpop.f32.mrf.mxu0
      %v1731 = vadd.f32 0.0, %v1730
      %v1732 = vpop.f32.mrf.mxu0
      %v1733 = vadd.f32 0.0, %v1732
      %v1734 = vpop.f32.mrf.mxu0
      %v1735 = vadd.f32 0.0, %v1734
      %v1736 = vpop.f32.mrf.mxu0
      %v1737 = vadd.f32 0.0, %v1736
      %1738 = vdwg.mxu0
      %1739 = vmatprep.subr.bf16.mxu0 0
      %1740 = vmatpush1.bf16.msra.mxu0 0
      %1741 = vmatprep.subr.bf16.mxu0 0
      %1742 = vmatpush1.bf16.msra.mxu0 0
      %1743 = vmatprep.subr.bf16.mxu0 0
      %1744 = vmatpush1.bf16.msra.mxu0 0
      %1745 = vmatprep.subr.bf16.mxu0 %v1430
      %1746 = vmatpush1.bf16.msra.mxu0 %v1427
      %1747 = vmatprep.subr.bf16.mxu0 %v1190
      %1748 = vmatpush1.bf16.msra.mxu0 %v1189
      %1749 = vmatprep.subr.bf16.mxu0 %v1180
      %1750 = vmatpush1.bf16.msra.mxu0 %v1179
      %1751 = vmatprep.subr.bf16.mxu0 %v1170
      %1752 = vmatpush1.bf16.msra.mxu0 %v1169
      %1753 = vmatprep.subr.bf16.mxu0 %v1160
      %1754 = vmatpush1.bf16.msra.mxu0 %v1159
      %1755 = vmatprep.subr.bf16.mxu0 0
      %1756 = vmatpush2.bf16.msra.mxu0 0
      %1757 = vmatprep.subr.bf16.mxu0 0
      %1758 = vmatpush2.bf16.msra.mxu0 0
      %1759 = vmatprep.subr.bf16.mxu0 0
      %1760 = vmatpush2.bf16.msra.mxu0 0
      %1761 = vmatprep.subr.bf16.mxu0 0
      %1762 = vmatpush2.bf16.msra.mxu0 0
      %1763 = vmatprep.subr.bf16.mxu0 0
      %1764 = vmatpush2.bf16.msra.mxu0 0
      %1765 = vmatprep.subr.bf16.mxu0 0
      %1766 = vmatpush2.bf16.msra.mxu0 0
      %1767 = vmatprep.subr.bf16.mxu0 0
      %1768 = vmatpush2.bf16.msra.mxu0 0
      %1769 = vmatprep.subr.bf16.mxu0 0
      %1770 = vmatpush2.bf16.msra.mxu0 0
      %1771 = vmatprep.mubr.bf16.mxu0 0
      %1772 = vmatmul.mubr.bf16.gmra.mxu0 %v1405
      %v1773 = vpop.f32.mrf.mxu0
      %v1774 = vadd.f32 %v1731, %v1773
      %v1775 = vpop.f32.mrf.mxu0
      %v1776 = vadd.f32 %v1733, %v1775
      %v1777 = vpop.f32.mrf.mxu0
      %v1778 = vadd.f32 %v1735, %v1777
      %v1779 = vpop.f32.mrf.mxu0
      %v1780 = vadd.f32 %v1737, %v1779
      %1781 = vdwg.mxu0
      %1782 = vmatprep.subr.bf16.mxu0 %v1072
      %1783 = vmatpush1.bf16.msra.mxu0 %v1071
      %1784 = vmatprep.subr.bf16.mxu0 %v1062
      %1785 = vmatpush1.bf16.msra.mxu0 %v1061
      %1786 = vmatprep.subr.bf16.mxu0 %v1052
      %1787 = vmatpush1.bf16.msra.mxu0 %v1051
      %1788 = vmatprep.subr.bf16.mxu0 %v1042
      %1789 = vmatpush1.bf16.msra.mxu0 %v1041
      %1790 = vmatprep.subr.bf16.mxu0 %v1032
      %1791 = vmatpush1.bf16.msra.mxu0 %v1031
      %1792 = vmatprep.subr.bf16.mxu0 %v1022
      %1793 = vmatpush1.bf16.msra.mxu0 %v1021
      %1794 = vmatprep.subr.bf16.mxu0 %v1012
      %1795 = vmatpush1.bf16.msra.mxu0 %v1011
      %1796 = vmatprep.subr.bf16.mxu0 %v1002
      %1797 = vmatpush1.bf16.msra.mxu0 %v1001
      %1798 = vmatprep.subr.bf16.mxu0 %v1152
      %1799 = vmatpush2.bf16.msra.mxu0 %v1151
      %1800 = vmatprep.subr.bf16.mxu0 %v1142
      %1801 = vmatpush2.bf16.msra.mxu0 %v1141
      %1802 = vmatprep.subr.bf16.mxu0 %v1132
      %1803 = vmatpush2.bf16.msra.mxu0 %v1131
      %1804 = vmatprep.subr.bf16.mxu0 %v1122
      %1805 = vmatpush2.bf16.msra.mxu0 %v1121
      %1806 = vmatprep.subr.bf16.mxu0 %v1112
      %1807 = vmatpush2.bf16.msra.mxu0 %v1111
      %1808 = vmatprep.subr.bf16.mxu0 %v1102
      %1809 = vmatpush2.bf16.msra.mxu0 %v1101
      %1810 = vmatprep.subr.bf16.mxu0 %v1092
      %1811 = vmatpush2.bf16.msra.mxu0 %v1091
      %1812 = vmatprep.subr.bf16.mxu0 %v1082
      %1813 = vmatpush2.bf16.msra.mxu0 %v1081
      %1814 = vmatprep.mubr.bf16.mxu0 %v375
      %1815 = vmatmul.mubr.bf16.gmra.mxu0 %v374
      %v1816 = vpop.f32.mrf.mxu0
      %v1817 = vadd.f32 0.0, %v1816
      %v1818 = vpop.f32.mrf.mxu0
      %v1819 = vadd.f32 0.0, %v1818
      %v1820 = vpop.f32.mrf.mxu0
      %v1821 = vadd.f32 0.0, %v1820
      %v1822 = vpop.f32.mrf.mxu0
      %v1823 = vadd.f32 0.0, %v1822
      %1824 = vdwg.mxu0
      %1825 = vmatprep.subr.bf16.mxu0 0
      %1826 = vmatpush1.bf16.msra.mxu0 0
      %1827 = vmatprep.subr.bf16.mxu0 0
      %1828 = vmatpush1.bf16.msra.mxu0 0
      %1829 = vmatprep.subr.bf16.mxu0 0
      %1830 = vmatpush1.bf16.msra.mxu0 0
      %1831 = vmatprep.subr.bf16.mxu0 %v1436
      %1832 = vmatpush1.bf16.msra.mxu0 %v1433
      %1833 = vmatprep.subr.bf16.mxu0 %v1192
      %1834 = vmatpush1.bf16.msra.mxu0 %v1191
      %1835 = vmatprep.subr.bf16.mxu0 %v1182
      %1836 = vmatpush1.bf16.msra.mxu0 %v1181
      %1837 = vmatprep.subr.bf16.mxu0 %v1172
      %1838 = vmatpush1.bf16.msra.mxu0 %v1171
      %1839 = vmatprep.subr.bf16.mxu0 %v1162
      %1840 = vmatpush1.bf16.msra.mxu0 %v1161
      %1841 = vmatprep.subr.bf16.mxu0 0
      %1842 = vmatpush2.bf16.msra.mxu0 0
      %1843 = vmatprep.subr.bf16.mxu0 0
      %1844 = vmatpush2.bf16.msra.mxu0 0
      %1845 = vmatprep.subr.bf16.mxu0 0
      %1846 = vmatpush2.bf16.msra.mxu0 0
      %1847 = vmatprep.subr.bf16.mxu0 0
      %1848 = vmatpush2.bf16.msra.mxu0 0
      %1849 = vmatprep.subr.bf16.mxu0 0
      %1850 = vmatpush2.bf16.msra.mxu0 0
      %1851 = vmatprep.subr.bf16.mxu0 0
      %1852 = vmatpush2.bf16.msra.mxu0 0
      %1853 = vmatprep.subr.bf16.mxu0 0
      %1854 = vmatpush2.bf16.msra.mxu0 0
      %1855 = vmatprep.subr.bf16.mxu0 0
      %1856 = vmatpush2.bf16.msra.mxu0 0
      %1857 = vmatprep.mubr.bf16.mxu0 0
      %1858 = vmatmul.mubr.bf16.gmra.mxu0 %v1405
      %v1859 = vpop.f32.mrf.mxu0
      %v1860 = vadd.f32 %v1817, %v1859
      %v1861 = vpop.f32.mrf.mxu0
      %v1862 = vadd.f32 %v1819, %v1861
      %v1863 = vpop.f32.mrf.mxu0
      %v1864 = vadd.f32 %v1821, %v1863
      %v1865 = vpop.f32.mrf.mxu0
      %v1866 = vadd.f32 %v1823, %v1865
      %1867 = vdwg.mxu0
      %vm1868 = vcmask 281600
      %1869 = vst.msk [vmem:[%s143] sm:$0xf] %vm1868, 0
      %1870 = vst.msk [vmem:[%s143 + $0x28] sm:$0xf] %vm1868, 0
      %v1871 = vpack.c.bf16 %v1520, %v1516
      %v1872 = vpack.c.bf16 %v1522, %v1518
      %v1873 = vpack.c.bf16 %v1606, %v1602
      %v1874 = vpack.c.bf16 %v1608, %v1604
      %v1875 = vpack.c.bf16 %v1692, %v1688
      %v1876 = vpack.c.bf16 %v1694, %v1690
      %v1877 = vpack.c.bf16 %v1778, %v1774
      %v1878 = vpack.c.bf16 %v1780, %v1776
      %v1879 = vpack.c.bf16 %v1864, %v1860
      %v1880 = vpack.c.bf16 %v1866, %v1862
      %v1891 = vunpack.c.l.b16 %v1871
      %v1892 = vunpack.c.l.b16 %v1872
      %v1893 = vunpack.c.l.b16 %v1873
      %v1894 = vunpack.c.l.b16 %v1874
      %v1895 = vunpack.c.l.b16 %v1875
      %v1896 = vunpack.c.l.b16 %v1876
      %v1897 = vunpack.c.l.b16 %v1877
      %v1898 = vunpack.c.l.b16 %v1878
      %v1899 = vunpack.c.l.b16 %v1879
      %v1900 = vunpack.c.l.b16 %v1880
      %v1901 = vunpack.c.h.b16 %v1871
      %v1902 = vunpack.c.h.b16 %v1872
      %v1903 = vunpack.c.h.b16 %v1873
      %v1904 = vunpack.c.h.b16 %v1874
      %v1905 = vunpack.c.h.b16 %v1875
      %v1906 = vunpack.c.h.b16 %v1876
      %v1907 = vunpack.c.h.b16 %v1877
      %v1908 = vunpack.c.h.b16 %v1878
      %v1909 = vunpack.c.h.b16 %v1879
      %v1910 = vunpack.c.h.b16 %v1880
      %v1911 = vpack.c.b16 %v1892, %v1891
      %v1912 = vpack.c.b16 %v1894, %v1893
      %v1913 = vpack.c.b16 %v1896, %v1895
      %v1914 = vpack.c.b16 %v1898, %v1897
      %v1915 = vpack.c.b16 %v1900, %v1899
      %v1916 = vpack.c.b16 %v1902, %v1901
      %v1917 = vpack.c.b16 %v1904, %v1903
      %v1918 = vpack.c.b16 %v1906, %v1905
      %v1919 = vpack.c.b16 %v1908, %v1907
      %v1920 = vpack.c.b16 %v1910, %v1909
      %1921 = vrot.lane.b32.xlu0 %v1911, 35
      %v1922 = vpop.permute.xlu0 %1921
      %1923 = vrot.lane.b32.xlu0 %v1912, 35
      %v1924 = vpop.permute.xlu0 %1923
      %1925 = vrot.lane.b32.xlu0 %v1913, 35
      %v1926 = vpop.permute.xlu0 %1925
      %1927 = vrot.lane.b32.xlu0 %v1914, 35
      %v1928 = vpop.permute.xlu0 %1927
      %1929 = vrot.lane.b32.xlu0 %v1915, 35
      %v1930 = vpop.permute.xlu0 %1929
      %1931 = vrot.lane.b32.xlu0 %v1916, 35
      %v1932 = vpop.permute.xlu0 %1931
      %1933 = vrot.lane.b32.xlu0 %v1917, 35
      %v1934 = vpop.permute.xlu0 %1933
      %1935 = vrot.lane.b32.xlu0 %v1918, 35
      %v1936 = vpop.permute.xlu0 %1935
      %1937 = vrot.lane.b32.xlu0 %v1919, 35
      %v1938 = vpop.permute.xlu0 %1937
      %1939 = vrot.lane.b32.xlu0 %v1920, 35
      %v1940 = vpop.permute.xlu0 %1939
      %v1941 = vrot.slane %v1922, 4
      %v1942 = vrot.slane %v1924, 4
      %v1943 = vrot.slane %v1926, 4
      %v1944 = vrot.slane %v1928, 4
      %v1945 = vrot.slane %v1930, 4
      %v1946 = vrot.slane %v1932, 4
      %v1947 = vrot.slane %v1934, 4
      %v1948 = vrot.slane %v1936, 4
      %v1949 = vrot.slane %v1938, 4
      %v1950 = vrot.slane %v1940, 4
      %vm1951 = vcmask 285696
      %v1952 = vsel %vm1951, %v1941, %v1922
      %vm1953 = vcmask 1043456
      %v1954 = vsel %vm1953, %v1941, %v1942
      %v1955 = vsel %vm1951, %v1954, %v1924
      %v1956 = vsel %vm1953, %v1942, %v1943
      %v1957 = vsel %vm1951, %v1956, %v1926
      %v1958 = vsel %vm1953, %v1943, %v1944
      %v1959 = vsel %vm1951, %v1958, %v1928
      %v1960 = vsel %vm1953, %v1944, %v1945
      %v1961 = vsel %vm1951, %v1960, %v1930
      %v1962 = vsel %vm1951, %v1946, %v1932
      %v1963 = vsel %vm1953, %v1946, %v1947
      %v1964 = vsel %vm1951, %v1963, %v1934
      %v1965 = vsel %vm1953, %v1947, %v1948
      %v1966 = vsel %vm1951, %v1965, %v1936
      %v1967 = vsel %vm1953, %v1948, %v1949
      %v1968 = vsel %vm1951, %v1967, %v1938
      %v1969 = vsel %vm1953, %v1949, %v1950
      %v1970 = vsel %vm1951, %v1969, %v1940
      %vm1981 = vcmask 1043736
      %vm1982 = vcmask 1047556
      %vm1983 = vmor %vm1982, %vm1981
      %1984 = vst.msk [vmem:[%s143] sm:$0xff] %vm1983, %v1952
      %1985 = vst [vmem:[%s143 + $0x8] sm:$0xff] %v1955
      %1986 = vst [vmem:[%s143 + $0x10] sm:$0xff] %v1957
      %1987 = vst [vmem:[%s143 + $0x18] sm:$0xff] %v1959
      %vm1988 = vcmask 1043456
      %vm1989 = vcmask 318468
      %vm1990 = vmor %vm1989, %vm1988
      %1991 = vst.msk [vmem:[%s143 + $0x20] sm:$0xff] %vm1990, %v1961
      %1992 = vst.msk [vmem:[%s143 + $0x28] sm:$0xff] %vm1983, %v1962
      %1993 = vst [vmem:[%s143 + $0x30] sm:$0xff] %v1964
      %1994 = vst [vmem:[%s143 + $0x38] sm:$0xff] %v1966
      %1995 = vst [vmem:[%s143 + $0x40] sm:$0xff] %v1968
      %1996 = vst.msk [vmem:[%s143 + $0x48] sm:$0xff] %vm1990, %v1970
      %vm1997 = vcmask 601400
      %1998 = vst.msk [vmem:[%s143 + $0x24] sm:$0xf] %vm1997, 0
      %1999 = vst.msk [vmem:[%s143 + $0x4c] sm:$0xf] %vm1997, 0
      %p2000 = scmp.lt.s32.totalorder %s13, 1
      %s2001 = scalar_select %p2000, %s13, 1
      %s2002 = smul.addr %s2001, 20
      %s2003 = smul.addr %s2002, 4
      %s2004 = scalar_lea.vmem %s2, %s2003
      // Predicated region
      $region29: #{upsampler_forward.9} parent=27 // pred_check
        %p2005 = pneg %p78
      $region30: #{upsampler_forward.9} parent=27 // pred_check_branch
        %2007 = sbr.rel (%p2005) target = $region32
      $region31: #{upsampler_forward.9} parent=27 // pred_region
        _
      $region32: #{upsampler_forward.9} parent=27 // pred_fallthru
        _
    $region28: #{upsampler_forward.9} parent=5 // pred_fallthru
      _
    %p2008 = scmp.le.s32.totalorder 2, %s8
    // Predicated region
    $region33: #{upsampler_forward.9} parent=5 // pred_check
      %p2009 = pneg %p2008
    $region34: #{upsampler_forward.9} parent=5 // pred_check_branch
      %2011 = sbr.rel (%p2009) target = $region36
    $region35: #{upsampler_forward.9} parent=5 // pred_region
      %s2012 = ssub.s32 %s8, 2
      // Predicated region
      $region37: #{upsampler_forward.9} parent=35 // pred_check
        %p2013 = pneg %p84
      $region38: #{upsampler_forward.9} parent=35 // pred_check_branch
        %2015 = sbr.rel (%p2013) target = $region40
      $region39: #{upsampler_forward.9} parent=35 // pred_region
        %p2016 = scmp.lt.s32.totalorder %s14, 1
        %s2017 = scalar_select %p2016, %s14, 1
        %s2018 = smul.addr %s2017, 20
        %s2019 = smul.addr %s2018, 4
        %s2020 = scalar_lea.vmem %s2, %s2019
      $region40: #{upsampler_forward.9} parent=35 // pred_fallthru
        _
    $region36: #{upsampler_forward.9} parent=5 // pred_fallthru
      _
  $region6: #{upsampler_forward.9} parent=0 // loop_footer
    %s12 = sadd.s32 1, %s8
  $region7: #{upsampler_forward.9} parent=0 // loop_footer_branch
    %7 = sbr.rel target = $region3
  $region8: #{upsampler_forward.9} parent=0 // loop_exit
    _

// kernel: upsampler_forward.11
$region0: #{upsampler_forward.11}
  #allocation0 [shape = 'u32[]', space=smem, size = 0x4, offset = 0x4, fixed_abs, tag = 'smem constant byte address 0x4 - core index']
  #allocation1 [shape = 'u32[144,128]{1,0:T(1,128)}', space=vmem, size = 0x12000, scoped, tag = 'internal scratch']
  %s0 = inlined_call_operand.vmem [shape: bf16[8,2312], index: 0, kind: input, shape index: {}]
  %s1 = inlined_call_operand.vmem [shape: bf16[3,8], index: 1, kind: input, shape index: {}]
  %s2 = inlined_call_operand.vmem [shape: f32[3,1], index: 2, kind: input, shape index: {}]
  %s3 = inlined_call_operand.vmem [shape: f32[3,2312], index: 3, kind: output, shape index: {}]
  %s4 = sld [smem:[#allocation0]]
  $region22: #{upsampler_forward.11} parent=0
    _
  %s6 = ssub.s32 1, %s4
  %s7 = scalar_select 0, %s6, %s4
  // Predicated region
  $region2: #{upsampler_forward.11} parent=0 // pred_check
    _
  $region3: #{upsampler_forward.11} parent=0 // pred_check_branch
    %9 = sbr.rel (0) target = $region5
  $region4: #{upsampler_forward.11} parent=0 // pred_region
    _
  $region5: #{upsampler_forward.11} parent=0 // pred_fallthru
    _
  // Predicated region
  $region6: #{upsampler_forward.11} parent=0 // pred_check
    _
  $region7: #{upsampler_forward.11} parent=0 // pred_check_branch
    %11 = sbr.rel (0) target = $region9
  $region8: #{upsampler_forward.11} parent=0 // pred_region
    _
  $region9: #{upsampler_forward.11} parent=0 // pred_fallthru
    _
  // Predicated region
  $region10: #{upsampler_forward.11} parent=0 // pred_check
    _
  $region11: #{upsampler_forward.11} parent=0 // pred_check_branch
    %13 = sbr.rel (0) target = $region13
  $region12: #{upsampler_forward.11} parent=0 // pred_region
    _
  $region13: #{upsampler_forward.11} parent=0 // pred_fallthru
    _
  %v15 = vld [vmem:[%s1] sm:$0x3]
  %v16 = vld [vmem:[%s0] sm:$0xff]
  %v17 = vld [vmem:[%s0 + $0x8] sm:$0xff]
  %v18 = vld [vmem:[%s0 + $0x10] sm:$0xff]
  %v19 = vld [vmem:[%s0 + $0x18] sm:$0xff]
  %v20 = vld [vmem:[%s0 + $0x20] sm:$0xff]
  %v21 = vld [vmem:[%s0 + $0x28] sm:$0xff]
  %v22 = vld [vmem:[%s0 + $0x30] sm:$0xff]
  %v23 = vld [vmem:[%s0 + $0x38] sm:$0xff]
  %v24 = vld [vmem:[%s0 + $0x40] sm:$0xff]
  %v25 = vld [vmem:[%s0 + $0x48] sm:$0xf]
  %v26 = vld [vmem:[%s2] sm:$0x7]
  %28 = vset.pattern.permute.xlu0 0
  %29 = vperm.xlu0 %28, %v26
  %v30 = vpop.permute.xlu0 %29
  %v42 = vunpack.c.l.b16 %v16
  %v43 = vunpack.c.h.b16 %v16
  %v44 = vunpack.c.l.b16 %v17
  %v45 = vunpack.c.h.b16 %v17
  %v46 = vunpack.c.l.b16 %v18
  %v47 = vunpack.c.h.b16 %v18
  %v48 = vunpack.c.l.b16 %v19
  %v49 = vunpack.c.h.b16 %v19
  %v50 = vunpack.c.l.b16 %v20
  %v51 = vunpack.c.h.b16 %v20
  %v52 = vunpack.c.l.b16 %v21
  %v53 = vunpack.c.h.b16 %v21
  %v54 = vunpack.c.l.b16 %v22
  %v55 = vunpack.c.h.b16 %v22
  %v56 = vunpack.c.l.b16 %v23
  %v57 = vunpack.c.h.b16 %v23
  %v58 = vunpack.c.l.b16 %v24
  %v59 = vunpack.c.h.b16 %v24
  %v60 = vunpack.c.l.b16 %v25
  %v61 = vpack.c.b16 %v42, %v42
  %v62 = vpack.c.b16 %v43, %v43
  %v63 = vpack.c.b16 %v44, %v44
  %v64 = vpack.c.b16 %v45, %v45
  %v65 = vpack.c.b16 %v46, %v46
  %v66 = vpack.c.b16 %v47, %v47
  %v67 = vpack.c.b16 %v48, %v48
  %v68 = vpack.c.b16 %v49, %v49
  %v69 = vpack.c.b16 %v50, %v50
  %v70 = vpack.c.b16 %v51, %v51
  %v71 = vpack.c.b16 %v52, %v52
  %v72 = vpack.c.b16 %v53, %v53
  %v73 = vpack.c.b16 %v54, %v54
  %v74 = vpack.c.b16 %v55, %v55
  %v75 = vpack.c.b16 %v56, %v56
  %v76 = vpack.c.b16 %v57, %v57
  %v77 = vpack.c.b16 %v58, %v58
  %v78 = vpack.c.b16 %v59, %v59
  %v79 = vpack.c.b16 %v60, %v60
  %vm80 = vcmask 64512
  %v82 = vsel %vm80, %v15, 0
  %vm84 = vcmask 1043456
  %v86 = vsel %vm84, %v61, 0
  %v89 = vsel %vm84, %v62, 0
  %v92 = vsel %vm84, %v63, 0
  %v95 = vsel %vm84, %v64, 0
  %v98 = vsel %vm84, %v65, 0
  %v101 = vsel %vm84, %v66, 0
  %v104 = vsel %vm84, %v67, 0
  %v107 = vsel %vm84, %v68, 0
  %v110 = vsel %vm84, %v69, 0
  %v113 = vsel %vm84, %v70, 0
  %v116 = vsel %vm84, %v71, 0
  %v119 = vsel %vm84, %v72, 0
  %v122 = vsel %vm84, %v73, 0
  %v125 = vsel %vm84, %v74, 0
  %v128 = vsel %vm84, %v75, 0
  %v131 = vsel %vm84, %v76, 0
  %v134 = vsel %vm84, %v77, 0
  %v137 = vsel %vm84, %v78, 0
  %v140 = vsel %vm84, %v79, 0
  %142 = vmatprep.subr.bf16.mxu0 0
  %143 = vmatpush1.bf16.msra.mxu0 0
  %144 = vmatprep.subr.bf16.mxu0 0
  %145 = vmatpush1.bf16.msra.mxu0 0
  %146 = vmatprep.subr.bf16.mxu0 0
  %147 = vmatpush1.bf16.msra.mxu0 0
  %148 = vmatprep.subr.bf16.mxu0 0
  %149 = vmatpush1.bf16.msra.mxu0 0
  %150 = vmatprep.subr.bf16.mxu0 0
  %151 = vmatpush1.bf16.msra.mxu0 0
  %152 = vmatprep.subr.bf16.mxu0 0
  %153 = vmatpush1.bf16.msra.mxu0 0
  %154 = vmatprep.subr.bf16.mxu0 0
  %155 = vmatpush1.bf16.msra.mxu0 0
  %156 = vmatprep.subr.bf16.mxu0 %v89
  %157 = vmatpush1.bf16.msra.mxu0 %v86
  %158 = vmatprep.subr.bf16.mxu0 0
  %159 = vmatpush2.bf16.msra.mxu0 0
  %160 = vmatprep.subr.bf16.mxu0 0
  %161 = vmatpush2.bf16.msra.mxu0 0
  %162 = vmatprep.subr.bf16.mxu0 0
  %163 = vmatpush2.bf16.msra.mxu0 0
  %164 = vmatprep.subr.bf16.mxu0 0
  %165 = vmatpush2.bf16.msra.mxu0 0
  %166 = vmatprep.subr.bf16.mxu0 0
  %167 = vmatpush2.bf16.msra.mxu0 0
  %168 = vmatprep.subr.bf16.mxu0 0
  %169 = vmatpush2.bf16.msra.mxu0 0
  %170 = vmatprep.subr.bf16.mxu0 0
  %171 = vmatpush2.bf16.msra.mxu0 0
  %172 = vmatprep.subr.bf16.mxu0 0
  %173 = vmatpush2.bf16.msra.mxu0 0
  %174 = vmatprep.mubr.bf16.mxu0 0
  %175 = vmatmul.mubr.bf16.gmra.mxu0 %v82
  %v176 = vpop.f32.mrf.mxu0
  %v177 = vadd.f32 %v30, %v176
  %v178 = vpop.f32.mrf.mxu0
  %v179 = vadd.f32 %v30, %v178
  %v180 = vpop.f32.mrf.mxu0
  %v181 = vpop.f32.mrf.mxu0
  %182 = vdwg.mxu0
  %183 = vmatprep.subr.bf16.mxu0 0
  %184 = vmatpush1.bf16.msra.mxu0 0
  %185 = vmatprep.subr.bf16.mxu0 0
  %186 = vmatpush1.bf16.msra.mxu0 0
  %187 = vmatprep.subr.bf16.mxu0 0
  %188 = vmatpush1.bf16.msra.mxu0 0
  %189 = vmatprep.subr.bf16.mxu0 0
  %190 = vmatpush1.bf16.msra.mxu0 0
  %191 = vmatprep.subr.bf16.mxu0 0
  %192 = vmatpush1.bf16.msra.mxu0 0
  %193 = vmatprep.subr.bf16.mxu0 0
  %194 = vmatpush1.bf16.msra.mxu0 0
  %195 = vmatprep.subr.bf16.mxu0 0
  %196 = vmatpush1.bf16.msra.mxu0 0
  %197 = vmatprep.subr.bf16.mxu0 %v95
  %198 = vmatpush1.bf16.msra.mxu0 %v92
  %199 = vmatprep.subr.bf16.mxu0 0
  %200 = vmatpush2.bf16.msra.mxu0 0
  %201 = vmatprep.subr.bf16.mxu0 0
  %202 = vmatpush2.bf16.msra.mxu0 0
  %203 = vmatprep.subr.bf16.mxu0 0
  %204 = vmatpush2.bf16.msra.mxu0 0
  %205 = vmatprep.subr.bf16.mxu0 0
  %206 = vmatpush2.bf16.msra.mxu0 0
  %207 = vmatprep.subr.bf16.mxu0 0
  %208 = vmatpush2.bf16.msra.mxu0 0
  %209 = vmatprep.subr.bf16.mxu0 0
  %210 = vmatpush2.bf16.msra.mxu0 0
  %211 = vmatprep.subr.bf16.mxu0 0
  %212 = vmatpush2.bf16.msra.mxu0 0
  %213 = vmatprep.subr.bf16.mxu0 0
  %214 = vmatpush2.bf16.msra.mxu0 0
  %215 = vmatprep.mubr.bf16.mxu0 0
  %216 = vmatmul.mubr.bf16.gmra.mxu0 %v82
  %v217 = vpop.f32.mrf.mxu0
  %v218 = vadd.f32 %v30, %v217
  %v219 = vpop.f32.mrf.mxu0
  %v220 = vadd.f32 %v30, %v219
  %v221 = vpop.f32.mrf.mxu0
  %v222 = vpop.f32.mrf.mxu0
  %223 = vdwg.mxu0
  %224 = vmatprep.subr.bf16.mxu0 0
  %225 = vmatpush1.bf16.msra.mxu0 0
  %226 = vmatprep.subr.bf16.mxu0 0
  %227 = vmatpush1.bf16.msra.mxu0 0
  %228 = vmatprep.subr.bf16.mxu0 0
  %229 = vmatpush1.bf16.msra.mxu0 0
  %230 = vmatprep.subr.bf16.mxu0 0
  %231 = vmatpush1.bf16.msra.mxu0 0
  %232 = vmatprep.subr.bf16.mxu0 0
  %233 = vmatpush1.bf16.msra.mxu0 0
  %234 = vmatprep.subr.bf16.mxu0 0
  %235 = vmatpush1.bf16.msra.mxu0 0
  %236 = vmatprep.subr.bf16.mxu0 0
  %237 = vmatpush1.bf16.msra.mxu0 0
  %238 = vmatprep.subr.bf16.mxu0 %v101
  %239 = vmatpush1.bf16.msra.mxu0 %v98
  %240 = vmatprep.subr.bf16.mxu0 0
  %241 = vmatpush2.bf16.msra.mxu0 0
  %242 = vmatprep.subr.bf16.mxu0 0
  %243 = vmatpush2.bf16.msra.mxu0 0
  %244 = vmatprep.subr.bf16.mxu0 0
  %245 = vmatpush2.bf16.msra.mxu0 0
  %246 = vmatprep.subr.bf16.mxu0 0
  %247 = vmatpush2.bf16.msra.mxu0 0
  %248 = vmatprep.subr.bf16.mxu0 0
  %249 = vmatpush2.bf16.msra.mxu0 0
  %250 = vmatprep.subr.bf16.mxu0 0
  %251 = vmatpush2.bf16.msra.mxu0 0
  %252 = vmatprep.subr.bf16.mxu0 0
  %253 = vmatpush2.bf16.msra.mxu0 0
  %254 = vmatprep.subr.bf16.mxu0 0
  %255 = vmatpush2.bf16.msra.mxu0 0
  %256 = vmatprep.mubr.bf16.mxu0 0
  %257 = vmatmul.mubr.bf16.gmra.mxu0 %v82
  %v258 = vpop.f32.mrf.mxu0
  %v259 = vadd.f32 %v30, %v258
  %v260 = vpop.f32.mrf.mxu0
  %v261 = vadd.f32 %v30, %v260
  %v262 = vpop.f32.mrf.mxu0
  %v263 = vpop.f32.mrf.mxu0
  %264 = vdwg.mxu0
  %265 = vmatprep.subr.bf16.mxu0 0
  %266 = vmatpush1.bf16.msra.mxu0 0
  %267 = vmatprep.subr.bf16.mxu0 0
  %268 = vmatpush1.bf16.msra.mxu0 0
  %269 = vmatprep.subr.bf16.mxu0 0
  %270 = vmatpush1.bf16.msra.mxu0 0
  %271 = vmatprep.subr.bf16.mxu0 0
  %272 = vmatpush1.bf16.msra.mxu0 0
  %273 = vmatprep.subr.bf16.mxu0 0
  %274 = vmatpush1.bf16.msra.mxu0 0
  %275 = vmatprep.subr.bf16.mxu0 0
  %276 = vmatpush1.bf16.msra.mxu0 0
  %277 = vmatprep.subr.bf16.mxu0 0
  %278 = vmatpush1.bf16.msra.mxu0 0
  %279 = vmatprep.subr.bf16.mxu0 %v107
  %280 = vmatpush1.bf16.msra.mxu0 %v104
  %281 = vmatprep.subr.bf16.mxu0 0
  %282 = vmatpush2.bf16.msra.mxu0 0
  %283 = vmatprep.subr.bf16.mxu0 0
  %284 = vmatpush2.bf16.msra.mxu0 0
  %285 = vmatprep.subr.bf16.mxu0 0
  %286 = vmatpush2.bf16.msra.mxu0 0
  %287 = vmatprep.subr.bf16.mxu0 0
  %288 = vmatpush2.bf16.msra.mxu0 0
  %289 = vmatprep.subr.bf16.mxu0 0
  %290 = vmatpush2.bf16.msra.mxu0 0
  %291 = vmatprep.subr.bf16.mxu0 0
  %292 = vmatpush2.bf16.msra.mxu0 0
  %293 = vmatprep.subr.bf16.mxu0 0
  %294 = vmatpush2.bf16.msra.mxu0 0
  %295 = vmatprep.subr.bf16.mxu0 0
  %296 = vmatpush2.bf16.msra.mxu0 0
  %297 = vmatprep.mubr.bf16.mxu0 0
  %298 = vmatmul.mubr.bf16.gmra.mxu0 %v82
  %v299 = vpop.f32.mrf.mxu0
  %v300 = vadd.f32 %v30, %v299
  %v301 = vpop.f32.mrf.mxu0
  %v302 = vadd.f32 %v30, %v301
  %v303 = vpop.f32.mrf.mxu0
  %v304 = vpop.f32.mrf.mxu0
  %305 = vdwg.mxu0
  %306 = vmatprep.subr.bf16.mxu0 0
  %307 = vmatpush1.bf16.msra.mxu0 0
  %308 = vmatprep.subr.bf16.mxu0 0
  %309 = vmatpush1.bf16.msra.mxu0 0
  %310 = vmatprep.subr.bf16.mxu0 0
  %311 = vmatpush1.bf16.msra.mxu0 0
  %312 = vmatprep.subr.bf16.mxu0 0
  %313 = vmatpush1.bf16.msra.mxu0 0
  %314 = vmatprep.subr.bf16.mxu0 0
  %315 = vmatpush1.bf16.msra.mxu0 0
  %316 = vmatprep.subr.bf16.mxu0 0
  %317 = vmatpush1.bf16.msra.mxu0 0
  %318 = vmatprep.subr.bf16.mxu0 0
  %319 = vmatpush1.bf16.msra.mxu0 0
  %320 = vmatprep.subr.bf16.mxu0 %v113
  %321 = vmatpush1.bf16.msra.mxu0 %v110
  %322 = vmatprep.subr.bf16.mxu0 0
  %323 = vmatpush2.bf16.msra.mxu0 0
  %324 = vmatprep.subr.bf16.mxu0 0
  %325 = vmatpush2.bf16.msra.mxu0 0
  %326 = vmatprep.subr.bf16.mxu0 0
  %327 = vmatpush2.bf16.msra.mxu0 0
  %328 = vmatprep.subr.bf16.mxu0 0
  %329 = vmatpush2.bf16.msra.mxu0 0
  %330 = vmatprep.subr.bf16.mxu0 0
  %331 = vmatpush2.bf16.msra.mxu0 0
  %332 = vmatprep.subr.bf16.mxu0 0
  %333 = vmatpush2.bf16.msra.mxu0 0
  %334 = vmatprep.subr.bf16.mxu0 0
  %335 = vmatpush2.bf16.msra.mxu0 0
  %336 = vmatprep.subr.bf16.mxu0 0
  %337 = vmatpush2.bf16.msra.mxu0 0
  %338 = vmatprep.mubr.bf16.mxu0 0
  %339 = vmatmul.mubr.bf16.gmra.mxu0 %v82
  %v340 = vpop.f32.mrf.mxu0
  %v341 = vadd.f32 %v30, %v340
  %v342 = vpop.f32.mrf.mxu0
  %v343 = vadd.f32 %v30, %v342
  %v344 = vpop.f32.mrf.mxu0
  %v345 = vpop.f32.mrf.mxu0
  %346 = vdwg.mxu0
  %347 = vmatprep.subr.bf16.mxu0 0
  %348 = vmatpush1.bf16.msra.mxu0 0
  %349 = vmatprep.subr.bf16.mxu0 0
  %350 = vmatpush1.bf16.msra.mxu0 0
  %351 = vmatprep.subr.bf16.mxu0 0
  %352 = vmatpush1.bf16.msra.mxu0 0
  %353 = vmatprep.subr.bf16.mxu0 0
  %354 = vmatpush1.bf16.msra.mxu0 0
  %355 = vmatprep.subr.bf16.mxu0 0
  %356 = vmatpush1.bf16.msra.mxu0 0
  %357 = vmatprep.subr.bf16.mxu0 0
  %358 = vmatpush1.bf16.msra.mxu0 0
  %359 = vmatprep.subr.bf16.mxu0 0
  %360 = vmatpush1.bf16.msra.mxu0 0
  %361 = vmatprep.subr.bf16.mxu0 %v119
  %362 = vmatpush1.bf16.msra.mxu0 %v116
  %363 = vmatprep.subr.bf16.mxu0 0
  %364 = vmatpush2.bf16.msra.mxu0 0
  %365 = vmatprep.subr.bf16.mxu0 0
  %366 = vmatpush2.bf16.msra.mxu0 0
  %367 = vmatprep.subr.bf16.mxu0 0
  %368 = vmatpush2.bf16.msra.mxu0 0
  %369 = vmatprep.subr.bf16.mxu0 0
  %370 = vmatpush2.bf16.msra.mxu0 0
  %371 = vmatprep.subr.bf16.mxu0 0
  %372 = vmatpush2.bf16.msra.mxu0 0
  %373 = vmatprep.subr.bf16.mxu0 0
  %374 = vmatpush2.bf16.msra.mxu0 0
  %375 = vmatprep.subr.bf16.mxu0 0
  %376 = vmatpush2.bf16.msra.mxu0 0
  %377 = vmatprep.subr.bf16.mxu0 0
  %378 = vmatpush2.bf16.msra.mxu0 0
  %379 = vmatprep.mubr.bf16.mxu0 0
  %380 = vmatmul.mubr.bf16.gmra.mxu0 %v82
  %v381 = vpop.f32.mrf.mxu0
  %v382 = vadd.f32 %v30, %v381
  %v383 = vpop.f32.mrf.mxu0
  %v384 = vadd.f32 %v30, %v383
  %v385 = vpop.f32.mrf.mxu0
  %v386 = vpop.f32.mrf.mxu0
  %387 = vdwg.mxu0
  %388 = vmatprep.subr.bf16.mxu0 0
  %389 = vmatpush1.bf16.msra.mxu0 0
  %390 = vmatprep.subr.bf16.mxu0 0
  %391 = vmatpush1.bf16.msra.mxu0 0
  %392 = vmatprep.subr.bf16.mxu0 0
  %393 = vmatpush1.bf16.msra.mxu0 0
  %394 = vmatprep.subr.bf16.mxu0 0
  %395 = vmatpush1.bf16.msra.mxu0 0
  %396 = vmatprep.subr.bf16.mxu0 0
  %397 = vmatpush1.bf16.msra.mxu0 0
  %398 = vmatprep.subr.bf16.mxu0 0
  %399 = vmatpush1.bf16.msra.mxu0 0
  %400 = vmatprep.subr.bf16.mxu0 0
  %401 = vmatpush1.bf16.msra.mxu0 0
  %402 = vmatprep.subr.bf16.mxu0 %v125
  %403 = vmatpush1.bf16.msra.mxu0 %v122
  %404 = vmatprep.subr.bf16.mxu0 0
  %405 = vmatpush2.bf16.msra.mxu0 0
  %406 = vmatprep.subr.bf16.mxu0 0
  %407 = vmatpush2.bf16.msra.mxu0 0
  %408 = vmatprep.subr.bf16.mxu0 0
  %409 = vmatpush2.bf16.msra.mxu0 0
  %410 = vmatprep.subr.bf16.mxu0 0
  %411 = vmatpush2.bf16.msra.mxu0 0
  %412 = vmatprep.subr.bf16.mxu0 0
  %413 = vmatpush2.bf16.msra.mxu0 0
  %414 = vmatprep.subr.bf16.mxu0 0
  %415 = vmatpush2.bf16.msra.mxu0 0
  %416 = vmatprep.subr.bf16.mxu0 0
  %417 = vmatpush2.bf16.msra.mxu0 0
  %418 = vmatprep.subr.bf16.mxu0 0
  %419 = vmatpush2.bf16.msra.mxu0 0
  %420 = vmatprep.mubr.bf16.mxu0 0
  %421 = vmatmul.mubr.bf16.gmra.mxu0 %v82
  %v422 = vpop.f32.mrf.mxu0
  %v423 = vadd.f32 %v30, %v422
  %v424 = vpop.f32.mrf.mxu0
  %v425 = vadd.f32 %v30, %v424
  %v426 = vpop.f32.mrf.mxu0
  %v427 = vpop.f32.mrf.mxu0
  %428 = vdwg.mxu0
  %429 = vmatprep.subr.bf16.mxu0 0
  %430 = vmatpush1.bf16.msra.mxu0 0
  %431 = vmatprep.subr.bf16.mxu0 0
  %432 = vmatpush1.bf16.msra.mxu0 0
  %433 = vmatprep.subr.bf16.mxu0 0
  %434 = vmatpush1.bf16.msra.mxu0 0
  %435 = vmatprep.subr.bf16.mxu0 0
  %436 = vmatpush1.bf16.msra.mxu0 0
  %437 = vmatprep.subr.bf16.mxu0 0
  %438 = vmatpush1.bf16.msra.mxu0 0
  %439 = vmatprep.subr.bf16.mxu0 0
  %440 = vmatpush1.bf16.msra.mxu0 0
  %441 = vmatprep.subr.bf16.mxu0 0
  %442 = vmatpush1.bf16.msra.mxu0 0
  %443 = vmatprep.subr.bf16.mxu0 %v131
  %444 = vmatpush1.bf16.msra.mxu0 %v128
  %445 = vmatprep.subr.bf16.mxu0 0
  %446 = vmatpush2.bf16.msra.mxu0 0
  %447 = vmatprep.subr.bf16.mxu0 0
  %448 = vmatpush2.bf16.msra.mxu0 0
  %449 = vmatprep.subr.bf16.mxu0 0
  %450 = vmatpush2.bf16.msra.mxu0 0
  %451 = vmatprep.subr.bf16.mxu0 0
  %452 = vmatpush2.bf16.msra.mxu0 0
  %453 = vmatprep.subr.bf16.mxu0 0
  %454 = vmatpush2.bf16.msra.mxu0 0
  %455 = vmatprep.subr.bf16.mxu0 0
  %456 = vmatpush2.bf16.msra.mxu0 0
  %457 = vmatprep.subr.bf16.mxu0 0
  %458 = vmatpush2.bf16.msra.mxu0 0
  %459 = vmatprep.subr.bf16.mxu0 0
  %460 = vmatpush2.bf16.msra.mxu0 0
  %461 = vmatprep.mubr.bf16.mxu0 0
  %462 = vmatmul.mubr.bf16.gmra.mxu0 %v82
  %v463 = vpop.f32.mrf.mxu0
  %v464 = vadd.f32 %v30, %v463
  %v465 = vpop.f32.mrf.mxu0
  %v466 = vadd.f32 %v30, %v465
  %v467 = vpop.f32.mrf.mxu0
  %v468 = vpop.f32.mrf.mxu0
  %469 = vdwg.mxu0
  %470 = vmatprep.subr.bf16.mxu0 0
  %471 = vmatpush1.bf16.msra.mxu0 0
  %472 = vmatprep.subr.bf16.mxu0 0
  %473 = vmatpush1.bf16.msra.mxu0 0
  %474 = vmatprep.subr.bf16.mxu0 0
  %475 = vmatpush1.bf16.msra.mxu0 0
  %476 = vmatprep.subr.bf16.mxu0 0
  %477 = vmatpush1.bf16.msra.mxu0 0
  %478 = vmatprep.subr.bf16.mxu0 0
  %479 = vmatpush1.bf16.msra.mxu0 0
  %480 = vmatprep.subr.bf16.mxu0 0
  %481 = vmatpush1.bf16.msra.mxu0 0
  %482 = vmatprep.subr.bf16.mxu0 0
  %483 = vmatpush1.bf16.msra.mxu0 0
  %484 = vmatprep.subr.bf16.mxu0 %v137
  %485 = vmatpush1.bf16.msra.mxu0 %v134
  %486 = vmatprep.subr.bf16.mxu0 0
  %487 = vmatpush2.bf16.msra.mxu0 0
  %488 = vmatprep.subr.bf16.mxu0 0
  %489 = vmatpush2.bf16.msra.mxu0 0
  %490 = vmatprep.subr.bf16.mxu0 0
  %491 = vmatpush2.bf16.msra.mxu0 0
  %492 = vmatprep.subr.bf16.mxu0 0
  %493 = vmatpush2.bf16.msra.mxu0 0
  %494 = vmatprep.subr.bf16.mxu0 0
  %495 = vmatpush2.bf16.msra.mxu0 0
  %496 = vmatprep.subr.bf16.mxu0 0
  %497 = vmatpush2.bf16.msra.mxu0 0
  %498 = vmatprep.subr.bf16.mxu0 0
  %499 = vmatpush2.bf16.msra.mxu0 0
  %500 = vmatprep.subr.bf16.mxu0 0
  %501 = vmatpush2.bf16.msra.mxu0 0
  %502 = vmatprep.mubr.bf16.mxu0 0
  %503 = vmatmul.mubr.bf16.gmra.mxu0 %v82
  %v504 = vpop.f32.mrf.mxu0
  %v505 = vadd.f32 %v30, %v504
  %v506 = vpop.f32.mrf.mxu0
  %v507 = vadd.f32 %v30, %v506
  %v508 = vpop.f32.mrf.mxu0
  %v509 = vpop.f32.mrf.mxu0
  %510 = vdwg.mxu0
  %511 = vmatprep.subr.bf16.mxu0 0
  %512 = vmatpush1.bf16.msra.mxu0 0
  %513 = vmatprep.subr.bf16.mxu0 0
  %514 = vmatpush1.bf16.msra.mxu0 0
  %515 = vmatprep.subr.bf16.mxu0 0
  %516 = vmatpush1.bf16.msra.mxu0 0
  %517 = vmatprep.subr.bf16.mxu0 0
  %518 = vmatpush1.bf16.msra.mxu0 0
  %519 = vmatprep.subr.bf16.mxu0 0
  %520 = vmatpush1.bf16.msra.mxu0 0
  %521 = vmatprep.subr.bf16.mxu0 0
  %522 = vmatpush1.bf16.msra.mxu0 0
  %523 = vmatprep.subr.bf16.mxu0 0
  %524 = vmatpush1.bf16.msra.mxu0 0
  %525 = vmatprep.subr.bf16.mxu0 0
  %526 = vmatpush1.bf16.msra.mxu0 %v140
  %527 = vmatprep.subr.bf16.mxu0 0
  %528 = vmatpush2.bf16.msra.mxu0 0
  %529 = vmatprep.subr.bf16.mxu0 0
  %530 = vmatpush2.bf16.msra.mxu0 0
  %531 = vmatprep.subr.bf16.mxu0 0
  %532 = vmatpush2.bf16.msra.mxu0 0
  %533 = vmatprep.subr.bf16.mxu0 0
  %534 = vmatpush2.bf16.msra.mxu0 0
  %535 = vmatprep.subr.bf16.mxu0 0
  %536 = vmatpush2.bf16.msra.mxu0 0
  %537 = vmatprep.subr.bf16.mxu0 0
  %538 = vmatpush2.bf16.msra.mxu0 0
  %539 = vmatprep.subr.bf16.mxu0 0
  %540 = vmatpush2.bf16.msra.mxu0 0
  %541 = vmatprep.subr.bf16.mxu0 0
  %542 = vmatpush2.bf16.msra.mxu0 0
  %543 = vmatprep.mubr.bf16.mxu0 0
  %544 = vmatmul.mubr.bf16.gmra.mxu0 %v82
  %v545 = vpop.f32.mrf.mxu0
  %v546 = vadd.f32 %v30, %v545
  %v547 = vpop.f32.mrf.mxu0
  %v548 = vpop.f32.mrf.mxu0
  %v549 = vpop.f32.mrf.mxu0
  %550 = vdwg.mxu0
  %v551 = vsub.f32 0.0, %v177
  %v552 = vsub.f32 0.0, %v179
  %v553 = vsub.f32 0.0, %v218
  %v554 = vsub.f32 0.0, %v220
  %v555 = vsub.f32 0.0, %v259
  %v556 = vsub.f32 0.0, %v261
  %v557 = vsub.f32 0.0, %v300
  %v558 = vsub.f32 0.0, %v302
  %v559 = vsub.f32 0.0, %v341
  %v560 = vsub.f32 0.0, %v343
  %v561 = vsub.f32 0.0, %v382
  %v562 = vsub.f32 0.0, %v384
  %v563 = vsub.f32 0.0, %v423
  %v564 = vsub.f32 0.0, %v425
  %v565 = vsub.f32 0.0, %v464
  %v566 = vsub.f32 0.0, %v466
  %v567 = vsub.f32 0.0, %v505
  %v568 = vsub.f32 0.0, %v507
  %v569 = vsub.f32 0.0, %v546
  %v570 = vmul.f32 %v551, 1.442695
  %v571 = vpow.pop %v570
  %v572 = vmul.f32 %v552, 1.442695
  %v573 = vpow.pop %v572
  %v574 = vmul.f32 %v553, 1.442695
  %v575 = vpow.pop %v574
  %v576 = vmul.f32 %v554, 1.442695
  %v577 = vpow.pop %v576
  %v578 = vmul.f32 %v555, 1.442695
  %v579 = vpow.pop %v578
  %v580 = vmul.f32 %v556, 1.442695
  %v581 = vpow.pop %v580
  %v582 = vmul.f32 %v557, 1.442695
  %v583 = vpow.pop %v582
  %v584 = vmul.f32 %v558, 1.442695
  %v585 = vpow.pop %v584
  %v586 = vmul.f32 %v559, 1.442695
  %v587 = vpow.pop %v586
  %v588 = vmul.f32 %v560, 1.442695
  %v589 = vpow.pop %v588
  %v590 = vmul.f32 %v561, 1.442695
  %v591 = vpow.pop %v590
  %v592 = vmul.f32 %v562, 1.442695
  %v593 = vpow.pop %v592
  %v594 = vmul.f32 %v563, 1.442695
  %v595 = vpow.pop %v594
  %v596 = vmul.f32 %v564, 1.442695
  %v597 = vpow.pop %v596
  %v598 = vmul.f32 %v565, 1.442695
  %v599 = vpow.pop %v598
  %v600 = vmul.f32 %v566, 1.442695
  %v601 = vpow.pop %v600
  %v602 = vmul.f32 %v567, 1.442695
  %v603 = vpow.pop %v602
  %v604 = vmul.f32 %v568, 1.442695
  %v605 = vpow.pop %v604
  %v606 = vmul.f32 %v569, 1.442695
  %v607 = vpow.pop %v606
  %v608 = vadd.f32 %v571, 1.0
  %v609 = vadd.f32 %v573, 1.0
  %v610 = vadd.f32 %v575, 1.0
  %v611 = vadd.f32 %v577, 1.0
  %v612 = vadd.f32 %v579, 1.0
  %v613 = vadd.f32 %v581, 1.0
  %v614 = vadd.f32 %v583, 1.0
  %v615 = vadd.f32 %v585, 1.0
  %v616 = vadd.f32 %v587, 1.0
  %v617 = vadd.f32 %v589, 1.0
  %v618 = vadd.f32 %v591, 1.0
  %v619 = vadd.f32 %v593, 1.0
  %v620 = vadd.f32 %v595, 1.0
  %v621 = vadd.f32 %v597, 1.0
  %v622 = vadd.f32 %v599, 1.0
  %v623 = vadd.f32 %v601, 1.0
  %v624 = vadd.f32 %v603, 1.0
  %v625 = vadd.f32 %v605, 1.0
  %v626 = vadd.f32 %v607, 1.0
  %v627 = vrcp.pop %v608
  %v628 = vrcp.pop %v609
  %v629 = vrcp.pop %v610
  %v630 = vrcp.pop %v611
  %v631 = vrcp.pop %v612
  %v632 = vrcp.pop %v613
  %v633 = vrcp.pop %v614
  %v634 = vrcp.pop %v615
  %v635 = vrcp.pop %v616
  %v636 = vrcp.pop %v617
  %v637 = vrcp.pop %v618
  %v638 = vrcp.pop %v619
  %v639 = vrcp.pop %v620
  %v640 = vrcp.pop %v621
  %v641 = vrcp.pop %v622
  %v642 = vrcp.pop %v623
  %v643 = vrcp.pop %v624
  %v644 = vrcp.pop %v625
  %v645 = vrcp.pop %v626
  %v664 = vcombine.low %v627, %v628
  %v665 = vcombine.low %v629, %v630
  %v666 = vcombine.low %v631, %v632
  %v667 = vcombine.low %v633, %v634
  %v668 = vcombine.low %v635, %v636
  %v669 = vcombine.low %v637, %v638
  %v670 = vcombine.low %v639, %v640
  %v671 = vcombine.low %v641, %v642
  %v672 = vcombine.low %v643, %v644
  %682 = vst [vmem:[%s3] sm:$0x77] %v664
  %683 = vst [vmem:[%s3 + $0x8] sm:$0x77] %v665
  %684 = vst [vmem:[%s3 + $0x10] sm:$0x77] %v666
  %685 = vst [vmem:[%s3 + $0x18] sm:$0x77] %v667
  %686 = vst [vmem:[%s3 + $0x20] sm:$0x77] %v668
  %687 = vst [vmem:[%s3 + $0x28] sm:$0x77] %v669
  %688 = vst [vmem:[%s3 + $0x30] sm:$0x77] %v670
  %689 = vst [vmem:[%s3 + $0x38] sm:$0x77] %v671
  %690 = vst [vmem:[%s3 + $0x40] sm:$0x77] %v672
  %vm691 = vcmask 59392
  %692 = vst.msk [vmem:[%s3 + $0x48] sm:$0x7] %vm691, %v645
  // Predicated region
  $region14: #{upsampler_forward.11} parent=0 // pred_check
    _
  $region15: #{upsampler_forward.11} parent=0 // pred_check_branch
    %694 = sbr.rel (0) target = $region17
  $region16: #{upsampler_forward.11} parent=0 // pred_region
    _
  $region17: #{upsampler_forward.11} parent=0 // pred_fallthru
    _
  // Predicated region
  $region18: #{upsampler_forward.11} parent=0 // pred_check
    _
  $region19: #{upsampler_forward.11} parent=0 // pred_check_branch
    %696 = sbr.rel (0) target = $region21
  $region20: #{upsampler_forward.11} parent=0 // pred_region
    _
  $region21: #{upsampler_forward.11} parent=0 // pred_fallthru
    _

// kernel: upsampler_forward.10
$region0: #{upsampler_forward.10}
  #allocation0 [shape = 'u32[]', space=smem, size = 0x4, offset = 0x4, fixed_abs, tag = 'smem constant byte address 0x4 - core index']
  #allocation1 [shape = 'u32[144,128]{1,0:T(1,128)}', space=vmem, size = 0x12000, scoped, tag = 'internal scratch']
  #allocation2 [shape = 'f32[144,1156]{1,0:T(8,128)}', space=vmem, size = 0xb4000, scoped, tag = 'scratch operand']
  #allocation3 [shape = 'f32[8,1226]{1,0:T(8,128)}', space=vmem, size = 0xa000, scoped, tag = 'scratch operand']
  #allocation4 [shape = 'f32[72,1156]{1,0:T(8,128)}', space=vmem, size = 0x5a000, scoped, tag = 'scratch operand']
  %s0 = inlined_call_operand.vmem [shape: bf16[2,16,1226], index: 0, kind: input, shape index: {}]
  %s1 = inlined_call_operand.vmem [shape: bf16[8,144], index: 1, kind: input, shape index: {}]
  %s2 = inlined_call_operand.vmem [shape: bf16[8,72], index: 2, kind: input, shape index: {}]
  %s3 = inlined_call_operand.vmem [shape: f32[1,1156], index: 3, kind: input, shape index: {}]
  %s4 = inlined_call_operand.vmem [shape: bf16[2,8,1226], index: 4, kind: output, shape index: {}]
  %s5 = sld [smem:[#allocation0]]
  $region49: #{upsampler_forward.10} parent=0
    _
  %s7 = ssub.s32 1, %s5
  %s8 = scalar_select 0, %s7, %s5
  loop: start=0, step=1, limit=4
  $region2: #{upsampler_forward.10} parent=0 // loop_pre_header
    _
  $region3: #{upsampler_forward.10} parent=0 // loop_header
    %s10 = sphi 0, %s14
    %p11 = scmp.ge.s32.totalorder %s10, 4
    %s20 = sphi 0, %s22
    %s23 = sphi 0, %s20
    %s24 = sphi 0, %s23
    %s40 = sphi 0, %s24
    %s44 = sphi 0, %s44
    %s46 = sphi 0, %s44
    %s47 = sphi 0, %s46
    %s61 = sphi 0, %s47
    %s65 = sphi 0, %s65
    %s67 = sphi 0, %s65
    %s68 = sphi 0, %s67
    %s82 = sphi 0, %s68
    %s86 = sphi 0, %s86
    %s88 = sphi 0, %s86
    %s89 = sphi 0, %s88
    %s103 = sphi 0, %s89
    %s109 = sphi 0, %s111
    %s112 = sphi 0, %s109
    %s113 = sphi 0, %s112
    %s129 = sphi 0, %s113
  $region4: #{upsampler_forward.10} parent=0 // loop_header_branch
    %13 = sbr.rel (%p11) target = $region8
  $region5: #{upsampler_forward.10} parent=0 // loop_body
    %s15 = ssub.s32 %s10, 1
    %s16 = ssub.s32 %s10, 2
    %s17 = sadd.s32 %s10, 1
    %s18 = ssub.s32 %s10, %s17
    %p19 = scmp.eq.s32.totalorder %s18, 0
    %s21 = sadd.s32 %s20, 1
    %s22 = scalar_select %p19, %s20, %s21
    %p25 = pneg %p19
    %p26 = scmp.eq.s32.totalorder %s10, 1
    %p27 = por %p25, %p26
    %p28 = scmp.ne.s32.totalorder %s20, %s23
    %p29 = scmp.eq.s32.totalorder %s10, 0
    %p30 = por %p28, %p29
    %p31 = scmp.ne.s32.totalorder %s20, %s23
    %p32 = scmp.eq.s32.totalorder %s15, 1
    %p33 = por %p31, %p32
    %p34 = scmp.ne.s32.totalorder %s23, %s24
    %p35 = scmp.eq.s32.totalorder %s15, 0
    %p36 = por %p34, %p35
    %p37 = scmp.ne.s32.totalorder %s23, %s24
    %p38 = scmp.eq.s32.totalorder %s16, 1
    %p39 = por %p37, %p38
    %p41 = scmp.ne.s32.totalorder %s24, %s40
    %p42 = scmp.eq.s32.totalorder %s16, 0
    %p43 = por %p41, %p42
    %s45 = sadd.s32 %s44, 1
    %p48 = scmp.eq.s32.totalorder %s10, 1
    %p49 = scmp.ne.s32.totalorder %s44, %s46
    %p50 = scmp.eq.s32.totalorder %s10, 0
    %p51 = por %p49, %p50
    %p52 = scmp.ne.s32.totalorder %s44, %s46
    %p53 = scmp.eq.s32.totalorder %s15, 1
    %p54 = por %p52, %p53
    %p55 = scmp.ne.s32.totalorder %s46, %s47
    %p56 = scmp.eq.s32.totalorder %s15, 0
    %p57 = por %p55, %p56
    %p58 = scmp.ne.s32.totalorder %s46, %s47
    %p59 = scmp.eq.s32.totalorder %s16, 1
    %p60 = por %p58, %p59
    %p62 = scmp.ne.s32.totalorder %s47, %s61
    %p63 = scmp.eq.s32.totalorder %s16, 0
    %p64 = por %p62, %p63
    %s66 = sadd.s32 %s65, 1
    %p69 = scmp.eq.s32.totalorder %s10, 1
    %p70 = scmp.ne.s32.totalorder %s65, %s67
    %p71 = scmp.eq.s32.totalorder %s10, 0
    %p72 = por %p70, %p71
    %p73 = scmp.ne.s32.totalorder %s65, %s67
    %p74 = scmp.eq.s32.totalorder %s15, 1
    %p75 = por %p73, %p74
    %p76 = scmp.ne.s32.totalorder %s67, %s68
    %p77 = scmp.eq.s32.totalorder %s15, 0
    %p78 = por %p76, %p77
    %p79 = scmp.ne.s32.totalorder %s67, %s68
    %p80 = scmp.eq.s32.totalorder %s16, 1
    %p81 = por %p79, %p80
    %p83 = scmp.ne.s32.totalorder %s68, %s82
    %p84 = scmp.eq.s32.totalorder %s16, 0
    %p85 = por %p83, %p84
    %s87 = sadd.s32 %s86, 1
    %p90 = scmp.eq.s32.totalorder %s10, 1
    %p91 = scmp.ne.s32.totalorder %s86, %s88
    %p92 = scmp.eq.s32.totalorder %s10, 0
    %p93 = por %p91, %p92
    %p94 = scmp.ne.s32.totalorder %s86, %s88
    %p95 = scmp.eq.s32.totalorder %s15, 1
    %p96 = por %p94, %p95
    %p97 = scmp.ne.s32.totalorder %s88, %s89
    %p98 = scmp.eq.s32.totalorder %s15, 0
    %p99 = por %p97, %p98
    %p100 = scmp.ne.s32.totalorder %s88, %s89
    %p101 = scmp.eq.s32.totalorder %s16, 1
    %p102 = por %p100, %p101
    %p104 = scmp.ne.s32.totalorder %s89, %s103
    %p105 = scmp.eq.s32.totalorder %s16, 0
    %p106 = por %p104, %p105
    %s107 = ssub.s32 %s10, %s17
    %p108 = scmp.eq.s32.totalorder %s107, 0
    %s110 = sadd.s32 %s109, 1
    %s111 = scalar_select %p108, %s109, %s110
    %p114 = pneg %p108
    %p115 = scmp.eq.s32.totalorder %s10, 1
    %p116 = por %p114, %p115
    %p117 = scmp.ne.s32.totalorder %s109, %s112
    %p118 = scmp.eq.s32.totalorder %s10, 0
    %p119 = por %p117, %p118
    %p120 = scmp.ne.s32.totalorder %s109, %s112
    %p121 = scmp.eq.s32.totalorder %s15, 1
    %p122 = por %p120, %p121
    %p123 = scmp.ne.s32.totalorder %s112, %s113
    %p124 = scmp.eq.s32.totalorder %s15, 0
    %p125 = por %p123, %p124
    %p126 = scmp.ne.s32.totalorder %s112, %s113
    %p127 = scmp.eq.s32.totalorder %s16, 1
    %p128 = por %p126, %p127
    %p130 = scmp.ne.s32.totalorder %s113, %s129
    %p131 = scmp.eq.s32.totalorder %s16, 0
    %p132 = por %p130, %p131
    %p133 = scmp.le.s32.totalorder 1, %s10
    %p134 = scmp.lt.s32.totalorder %s10, 3
    %p135 = pnand %p133, %p134
    %p136 = pneg %p135
    // Predicated region
    $region9: #{upsampler_forward.10} parent=5 // pred_check
      _
    $region10: #{upsampler_forward.10} parent=5 // pred_check_branch
      %138 = sbr.rel (%p135) target = $region12
    $region11: #{upsampler_forward.10} parent=5 // pred_region
      %s139 = ssub.s32 %s10, 1
      // Predicated region
      $region13: #{upsampler_forward.10} parent=11 // pred_check
        %p140 = pneg %p57
      $region14: #{upsampler_forward.10} parent=11 // pred_check_branch
        %142 = sbr.rel (%p140) target = $region16
      $region15: #{upsampler_forward.10} parent=11 // pred_region
        _
      $region16: #{upsampler_forward.10} parent=11 // pred_fallthru
        _
      // Predicated region
      $region17: #{upsampler_forward.10} parent=11 // pred_check
        %p143 = pneg %p78
      $region18: #{upsampler_forward.10} parent=11 // pred_check_branch
        %145 = sbr.rel (%p143) target = $region20
      $region19: #{upsampler_forward.10} parent=11 // pred_region
        _
      $region20: #{upsampler_forward.10} parent=11 // pred_fallthru
        _
      // Predicated region
      $region21: #{upsampler_forward.10} parent=11 // pred_check
        %p146 = pneg %p99
      $region22: #{upsampler_forward.10} parent=11 // pred_check_branch
        %148 = sbr.rel (%p146) target = $region24
      $region23: #{upsampler_forward.10} parent=11 // pred_region
        _
      $region24: #{upsampler_forward.10} parent=11 // pred_fallthru
        _
    $region12: #{upsampler_forward.10} parent=5 // pred_fallthru
      _
    %p149 = scmp.lt.s32.totalorder %s10, 2
    // Predicated region
    $region25: #{upsampler_forward.10} parent=5 // pred_check
      %p150 = pneg %p149
    $region26: #{upsampler_forward.10} parent=5 // pred_check_branch
      %152 = sbr.rel (%p150) target = $region28
    $region27: #{upsampler_forward.10} parent=5 // pred_region
      // Predicated region
      $region29: #{upsampler_forward.10} parent=27 // pred_check
        %p153 = pneg %p30
      $region30: #{upsampler_forward.10} parent=27 // pred_check_branch
        %155 = sbr.rel (%p153) target = $region32
      $region31: #{upsampler_forward.10} parent=27 // pred_region
        %p156 = scmp.lt.s32.totalorder %s10, 1
        %s157 = scalar_select %p156, %s10, 1
        %s158 = smul.addr %s157, 20
        %s159 = smul.addr %s158, 4
        %s160 = scalar_lea.vmem %s0, %s159
      $region32: #{upsampler_forward.10} parent=27 // pred_fallthru
        _
    $region28: #{upsampler_forward.10} parent=5 // pred_fallthru
      _
    %p161 = scmp.le.s32.totalorder 1, %s10
    %p162 = scmp.lt.s32.totalorder %s10, 3
    %p163 = pnand %p161, %p162
    %p164 = pneg %p163
    // Predicated region
    $region33: #{upsampler_forward.10} parent=5 // pred_check
      _
    $region34: #{upsampler_forward.10} parent=5 // pred_check_branch
      %166 = sbr.rel (%p163) target = $region36
    $region35: #{upsampler_forward.10} parent=5 // pred_region
      %s167 = ssub.s32 %s10, 1
      %p168 = scmp.lt.s32.totalorder %s15, 1
      %s169 = scalar_select %p168, %s15, 1
      %s170 = smul.addr %s169, 20
      %s171 = smul.addr %s170, 4
      %s172 = scalar_lea.vmem %s0, %s171
      %p173 = pneg %p36
      %p174 = pneg %p33
      %p175 = pneg %p57
      %p176 = pneg %p54
      %p177 = pneg %p78
      %p178 = pneg %p75
      %p179 = pneg %p99
      %p180 = pneg %p96
      %p181 = pneg %p125
      %p182 = pneg %p122
      %p183 = scmp.lt.s32.totalorder %s15, 1
      %s184 = scalar_select %p183, %s15, 1
      %s185 = smul.addr %s184, 10
      %s186 = smul.addr %s185, 4
      %s187 = scalar_lea.vmem %s4, %s186
      %p188 = scmp.lt.s32.totalorder %s15, 1
      %s189 = scalar_select %p188, %s15, 1
      %s190 = smul.addr %s189, 20
      %s191 = smul.addr %s190, 4
      %s192 = scalar_lea.vmem %s0, %s191
      %p193 = scmp.lt.s32.totalorder %s15, 1
      %s194 = scalar_select %p193, %s15, 1
      %s195 = smul.addr %s194, 10
      %s196 = smul.addr %s195, 4
      %s197 = scalar_lea.vmem %s4, %s196
      %v199 = vld [vmem:[%s3] sm:$0xff]
      %v200 = vld [vmem:[%s3 + $0x8] sm:$0x3]
      %v201 = vld [vmem:[%s192] sm:$0xff]
      %v202 = vld [vmem:[%s192 + $0x8] sm:$0xff]
      %v203 = vld [vmem:[%s192 + $0x10] sm:$0xff]
      %v204 = vld [vmem:[%s192 + $0x18] sm:$0xff]
      %v205 = vld [vmem:[%s192 + $0x20] sm:$0xff]
      %v206 = vld [vmem:[%s192 + $0x28] sm:$0xff]
      %v207 = vld [vmem:[%s192 + $0x30] sm:$0xff]
      %v208 = vld [vmem:[%s192 + $0x38] sm:$0xff]
      %v209 = vld [vmem:[%s192 + $0x40] sm:$0xff]
      %v210 = vld [vmem:[%s192 + $0x48] sm:$0xff]
      %v211 = vunpack.c.l.bf16 %v201
      %v212 = vunpack.c.h.bf16 %v201
      %v213 = vunpack.c.l.bf16 %v202
      %v214 = vunpack.c.h.bf16 %v202
      %v215 = vunpack.c.l.bf16 %v203
      %v216 = vunpack.c.h.bf16 %v203
      %v217 = vunpack.c.l.bf16 %v204
      %v218 = vunpack.c.h.bf16 %v204
      %v219 = vunpack.c.l.bf16 %v205
      %v220 = vunpack.c.h.bf16 %v205
      %v221 = vunpack.c.l.bf16 %v206
      %v222 = vunpack.c.h.bf16 %v206
      %v223 = vunpack.c.l.bf16 %v207
      %v224 = vunpack.c.h.bf16 %v207
      %v225 = vunpack.c.l.bf16 %v208
      %v226 = vunpack.c.h.bf16 %v208
      %v227 = vunpack.c.l.bf16 %v209
      %v228 = vunpack.c.h.bf16 %v209
      %v229 = vunpack.c.l.bf16 %v210
      %v230 = vunpack.c.h.bf16 %v210
      %231 = vst [vmem:[#allocation2] sm:$0xff] %v211
      %232 = vst [vmem:[#allocation2 + $0x8] sm:$0xff] %v212
      %233 = vst [vmem:[#allocation2 + $0x10] sm:$0xff] %v213
      %234 = vst [vmem:[#allocation2 + $0x18] sm:$0xff] %v214
      %235 = vst [vmem:[#allocation2 + $0x20] sm:$0xff] %v215
      %236 = vst [vmem:[#allocation2 + $0x28] sm:$0xff] %v216
      %237 = vst [vmem:[#allocation2 + $0x30] sm:$0xff] %v217
      %238 = vst [vmem:[#allocation2 + $0x38] sm:$0xff] %v218
      %239 = vst [vmem:[#allocation2 + $0x40] sm:$0xff] %v219
      %vm240 = vcmask 31744
      %241 = vst.msk [vmem:[#allocation2 + $0x48] sm:$0xff] %vm240, %v220
      %242 = vst [vmem:[#allocation2 + $0x50] sm:$0xff] %v221
      %243 = vst [vmem:[#allocation2 + $0x58] sm:$0xff] %v222
      %244 = vst [vmem:[#allocation2 + $0x60] sm:$0xff] %v223
      %245 = vst [vmem:[#allocation2 + $0x68] sm:$0xff] %v224
      %246 = vst [vmem:[#allocation2 + $0x70] sm:$0xff] %v225
      %247 = vst [vmem:[#allocation2 + $0x78] sm:$0xff] %v226
      %248 = vst [vmem:[#allocation2 + $0x80] sm:$0xff] %v227
      %249 = vst [vmem:[#allocation2 + $0x88] sm:$0xff] %v228
      %250 = vst [vmem:[#allocation2 + $0x90] sm:$0xff] %v229
      %251 = vst.msk [vmem:[#allocation2 + $0x98] sm:$0xff] %vm240, %v230
      %v252 = vld [vmem:[%s192] sm:$0xff]
      %v253 = vld [vmem:[%s192 + $0x8] sm:$0xff]
      %v254 = vld [vmem:[%s192 + $0x10] sm:$0xff]
      %v255 = vld [vmem:[%s192 + $0x18] sm:$0xff]
      %v256 = vld [vmem:[%s192 + $0x20] sm:$0xff]
      %v257 = vld [vmem:[%s192 + $0x28] sm:$0xff]
      %v258 = vld [vmem:[%s192 + $0x30] sm:$0xff]
      %v259 = vld [vmem:[%s192 + $0x38] sm:$0xff]
      %v260 = vld [vmem:[%s192 + $0x40] sm:$0xff]
      %v261 = vld [vmem:[%s192 + $0x48] sm:$0xff]
      %v262 = vunpack.c.l.bf16 %v252
      %v263 = vunpack.c.h.bf16 %v252
      %v264 = vunpack.c.l.bf16 %v253
      %v265 = vunpack.c.h.bf16 %v253
      %v266 = vunpack.c.l.bf16 %v254
      %v267 = vunpack.c.h.bf16 %v254
      %v268 = vunpack.c.l.bf16 %v255
      %v269 = vunpack.c.h.bf16 %v255
      %v270 = vunpack.c.l.bf16 %v256
      %v271 = vunpack.c.h.bf16 %v256
      %v272 = vunpack.c.l.bf16 %v257
      %v273 = vunpack.c.h.bf16 %v257
      %v274 = vunpack.c.l.bf16 %v258
      %v275 = vunpack.c.h.bf16 %v258
      %v276 = vunpack.c.l.bf16 %v259
      %v277 = vunpack.c.h.bf16 %v259
      %v278 = vunpack.c.l.bf16 %v260
      %v279 = vunpack.c.h.bf16 %v260
      %v280 = vunpack.c.l.bf16 %v261
      %v281 = vunpack.c.h.bf16 %v261
      %302 = vrot.lane.b32.xlu0 %v262, 127
      %v303 = vpop.permute.xlu0 %302
      %304 = vrot.lane.b32.xlu0 %v263, 127
      %v305 = vpop.permute.xlu0 %304
      %306 = vrot.lane.b32.xlu0 %v264, 127
      %v307 = vpop.permute.xlu0 %306
      %308 = vrot.lane.b32.xlu0 %v265, 127
      %v309 = vpop.permute.xlu0 %308
      %310 = vrot.lane.b32.xlu0 %v266, 127
      %v311 = vpop.permute.xlu0 %310
      %312 = vrot.lane.b32.xlu0 %v267, 127
      %v313 = vpop.permute.xlu0 %312
      %314 = vrot.lane.b32.xlu0 %v268, 127
      %v315 = vpop.permute.xlu0 %314
      %316 = vrot.lane.b32.xlu0 %v269, 127
      %v317 = vpop.permute.xlu0 %316
      %318 = vrot.lane.b32.xlu0 %v270, 127
      %v319 = vpop.permute.xlu0 %318
      %320 = vrot.lane.b32.xlu0 %v271, 127
      %v321 = vpop.permute.xlu0 %320
      %322 = vrot.lane.b32.xlu0 %v272, 127
      %v323 = vpop.permute.xlu0 %322
      %324 = vrot.lane.b32.xlu0 %v273, 127
      %v325 = vpop.permute.xlu0 %324
      %326 = vrot.lane.b32.xlu0 %v274, 127
      %v327 = vpop.permute.xlu0 %326
      %328 = vrot.lane.b32.xlu0 %v275, 127
      %v329 = vpop.permute.xlu0 %328
      %330 = vrot.lane.b32.xlu0 %v276, 127
      %v331 = vpop.permute.xlu0 %330
      %332 = vrot.lane.b32.xlu0 %v277, 127
      %v333 = vpop.permute.xlu0 %332
      %334 = vrot.lane.b32.xlu0 %v278, 127
      %v335 = vpop.permute.xlu0 %334
      %336 = vrot.lane.b32.xlu0 %v279, 127
      %v337 = vpop.permute.xlu0 %336
      %338 = vrot.lane.b32.xlu0 %v280, 127
      %v339 = vpop.permute.xlu0 %338
      %340 = vrot.lane.b32.xlu0 %v281, 127
      %v341 = vpop.permute.xlu0 %340
      %vm342 = vcmask 1039360
      %v343 = vsel %vm342, %v303, %v305
      %v344 = vsel %vm342, %v305, %v307
      %v345 = vsel %vm342, %v307, %v309
      %v346 = vsel %vm342, %v309, %v311
      %v347 = vsel %vm342, %v311, %v313
      %v348 = vsel %vm342, %v313, %v315
      %v349 = vsel %vm342, %v315, %v317
      %v350 = vsel %vm342, %v317, %v319
      %v351 = vsel %vm342, %v319, %v321
      %v352 = vsel %vm342, %v323, %v325
      %v353 = vsel %vm342, %v325, %v327
      %v354 = vsel %vm342, %v327, %v329
      %v355 = vsel %vm342, %v329, %v331
      %v356 = vsel %vm342, %v331, %v333
      %v357 = vsel %vm342, %v333, %v335
      %v358 = vsel %vm342, %v335, %v337
      %v359 = vsel %vm342, %v337, %v339
      %v360 = vsel %vm342, %v339, %v341
      %381 = vst [vmem:[#allocation2 + $0xa0] sm:$0xff] %v343
      %382 = vst [vmem:[#allocation2 + $0xa8] sm:$0xff] %v344
      %383 = vst [vmem:[#allocation2 + $0xb0] sm:$0xff] %v345
      %384 = vst [vmem:[#allocation2 + $0xb8] sm:$0xff] %v346
      %385 = vst [vmem:[#allocation2 + $0xc0] sm:$0xff] %v347
      %386 = vst [vmem:[#allocation2 + $0xc8] sm:$0xff] %v348
      %387 = vst [vmem:[#allocation2 + $0xd0] sm:$0xff] %v349
      %388 = vst [vmem:[#allocation2 + $0xd8] sm:$0xff] %v350
      %389 = vst [vmem:[#allocation2 + $0xe0] sm:$0xff] %v351
      %390 = vst.msk [vmem:[#allocation2 + $0xe8] sm:$0xff] %vm240, %v321
      %391 = vst [vmem:[#allocation2 + $0xf0] sm:$0xff] %v352
      %392 = vst [vmem:[#allocation2 + $0xf8] sm:$0xff] %v353
      %393 = vst [vmem:[#allocation2 + $0x100] sm:$0xff] %v354
      %394 = vst [vmem:[#allocation2 + $0x108] sm:$0xff] %v355
      %395 = vst [vmem:[#allocation2 + $0x110] sm:$0xff] %v356
      %396 = vst [vmem:[#allocation2 + $0x118] sm:$0xff] %v357
      %397 = vst [vmem:[#allocation2 + $0x120] sm:$0xff] %v358
      %398 = vst [vmem:[#allocation2 + $0x128] sm:$0xff] %v359
      %399 = vst [vmem:[#allocation2 + $0x130] sm:$0xff] %v360
      %400 = vst.msk [vmem:[#allocation2 + $0x138] sm:$0xff] %vm240, %v341
      %v401 = vld [vmem:[%s192] sm:$0xff]
      %v402 = vld [vmem:[%s192 + $0x8] sm:$0xff]
      %v403 = vld [vmem:[%s192 + $0x10] sm:$0xff]
      %v404 = vld [vmem:[%s192 + $0x18] sm:$0xff]
      %v405 = vld [vmem:[%s192 + $0x20] sm:$0xff]
      %v406 = vld [vmem:[%s192 + $0x28] sm:$0xff]
      %v407 = vld [vmem:[%s192 + $0x30] sm:$0xff]
      %v408 = vld [vmem:[%s192 + $0x38] sm:$0xff]
      %v409 = vld [vmem:[%s192 + $0x40] sm:$0xff]
      %v410 = vld [vmem:[%s192 + $0x48] sm:$0xff]
      %v411 = vunpack.c.l.bf16 %v401
      %v412 = vunpack.c.h.bf16 %v401
      %v413 = vunpack.c.l.bf16 %v402
      %v414 = vunpack.c.h.bf16 %v402
      %v415 = vunpack.c.l.bf16 %v403
      %v416 = vunpack.c.h.bf16 %v403
      %v417 = vunpack.c.l.bf16 %v404
      %v418 = vunpack.c.h.bf16 %v404
      %v419 = vunpack.c.l.bf16 %v405
      %v420 = vunpack.c.h.bf16 %v405
      %v421 = vunpack.c.l.bf16 %v406
      %v422 = vunpack.c.h.bf16 %v406
      %v423 = vunpack.c.l.bf16 %v407
      %v424 = vunpack.c.h.bf16 %v407
      %v425 = vunpack.c.l.bf16 %v408
      %v426 = vunpack.c.h.bf16 %v408
      %v427 = vunpack.c.l.bf16 %v409
      %v428 = vunpack.c.h.bf16 %v409
      %v429 = vunpack.c.l.bf16 %v410
      %v430 = vunpack.c.h.bf16 %v410
      %451 = vrot.lane.b32.xlu0 %v411, 126
      %v452 = vpop.permute.xlu0 %451
      %453 = vrot.lane.b32.xlu0 %v412, 126
      %v454 = vpop.permute.xlu0 %453
      %455 = vrot.lane.b32.xlu0 %v413, 126
      %v456 = vpop.permute.xlu0 %455
      %457 = vrot.lane.b32.xlu0 %v414, 126
      %v458 = vpop.permute.xlu0 %457
      %459 = vrot.lane.b32.xlu0 %v415, 126
      %v460 = vpop.permute.xlu0 %459
      %461 = vrot.lane.b32.xlu0 %v416, 126
      %v462 = vpop.permute.xlu0 %461
      %463 = vrot.lane.b32.xlu0 %v417, 126
      %v464 = vpop.permute.xlu0 %463
      %465 = vrot.lane.b32.xlu0 %v418, 126
      %v466 = vpop.permute.xlu0 %465
      %467 = vrot.lane.b32.xlu0 %v419, 126
      %v468 = vpop.permute.xlu0 %467
      %469 = vrot.lane.b32.xlu0 %v420, 126
      %v470 = vpop.permute.xlu0 %469
      %471 = vrot.lane.b32.xlu0 %v421, 126
      %v472 = vpop.permute.xlu0 %471
      %473 = vrot.lane.b32.xlu0 %v422, 126
      %v474 = vpop.permute.xlu0 %473
      %475 = vrot.lane.b32.xlu0 %v423, 126
      %v476 = vpop.permute.xlu0 %475
      %477 = vrot.lane.b32.xlu0 %v424, 126
      %v478 = vpop.permute.xlu0 %477
      %479 = vrot.lane.b32.xlu0 %v425, 126
      %v480 = vpop.permute.xlu0 %479
      %481 = vrot.lane.b32.xlu0 %v426, 126
      %v482 = vpop.permute.xlu0 %481
      %483 = vrot.lane.b32.xlu0 %v427, 126
      %v484 = vpop.permute.xlu0 %483
      %485 = vrot.lane.b32.xlu0 %v428, 126
      %v486 = vpop.permute.xlu0 %485
      %487 = vrot.lane.b32.xlu0 %v429, 126
      %v488 = vpop.permute.xlu0 %487
      %489 = vrot.lane.b32.xlu0 %v430, 126
      %v490 = vpop.permute.xlu0 %489
      %vm491 = vcmask 1031168
      %v492 = vsel %vm491, %v452, %v454
      %v493 = vsel %vm491, %v454, %v456
      %v494 = vsel %vm491, %v456, %v458
      %v495 = vsel %vm491, %v458, %v460
      %v496 = vsel %vm491, %v460, %v462
      %v497 = vsel %vm491, %v462, %v464
      %v498 = vsel %vm491, %v464, %v466
      %v499 = vsel %vm491, %v466, %v468
      %v500 = vsel %vm491, %v468, %v470
      %v501 = vsel %vm491, %v472, %v474
      %v502 = vsel %vm491, %v474, %v476
      %v503 = vsel %vm491, %v476, %v478
      %v504 = vsel %vm491, %v478, %v480
      %v505 = vsel %vm491, %v480, %v482
      %v506 = vsel %vm491, %v482, %v484
      %v507 = vsel %vm491, %v484, %v486
      %v508 = vsel %vm491, %v486, %v488
      %v509 = vsel %vm491, %v488, %v490
      %530 = vst [vmem:[#allocation2 + $0x140] sm:$0xff] %v492
      %531 = vst [vmem:[#allocation2 + $0x148] sm:$0xff] %v493
      %532 = vst [vmem:[#allocation2 + $0x150] sm:$0xff] %v494
      %533 = vst [vmem:[#allocation2 + $0x158] sm:$0xff] %v495
      %534 = vst [vmem:[#allocation2 + $0x160] sm:$0xff] %v496
      %535 = vst [vmem:[#allocation2 + $0x168] sm:$0xff] %v497
      %536 = vst [vmem:[#allocation2 + $0x170] sm:$0xff] %v498
      %537 = vst [vmem:[#allocation2 + $0x178] sm:$0xff] %v499
      %538 = vst [vmem:[#allocation2 + $0x180] sm:$0xff] %v500
      %539 = vst.msk [vmem:[#allocation2 + $0x188] sm:$0xff] %vm240, %v470
      %540 = vst [vmem:[#allocation2 + $0x190] sm:$0xff] %v501
      %541 = vst [vmem:[#allocation2 + $0x198] sm:$0xff] %v502
      %542 = vst [vmem:[#allocation2 + $0x1a0] sm:$0xff] %v503
      %543 = vst [vmem:[#allocation2 + $0x1a8] sm:$0xff] %v504
      %544 = vst [vmem:[#allocation2 + $0x1b0] sm:$0xff] %v505
      %545 = vst [vmem:[#allocation2 + $0x1b8] sm:$0xff] %v506
      %546 = vst [vmem:[#allocation2 + $0x1c0] sm:$0xff] %v507
      %547 = vst [vmem:[#allocation2 + $0x1c8] sm:$0xff] %v508
      %548 = vst [vmem:[#allocation2 + $0x1d0] sm:$0xff] %v509
      %549 = vst.msk [vmem:[#allocation2 + $0x1d8] sm:$0xff] %vm240, %v490
      %v550 = vld [vmem:[%s192] sm:$0xff]
      %v551 = vld [vmem:[%s192 + $0x8] sm:$0xff]
      %v552 = vld [vmem:[%s192 + $0x10] sm:$0xff]
      %v553 = vld [vmem:[%s192 + $0x18] sm:$0xff]
      %v554 = vld [vmem:[%s192 + $0x20] sm:$0xff]
      %v555 = vld [vmem:[%s192 + $0x28] sm:$0xff]
      %v556 = vld [vmem:[%s192 + $0x30] sm:$0xff]
      %v557 = vld [vmem:[%s192 + $0x38] sm:$0xff]
      %v558 = vld [vmem:[%s192 + $0x40] sm:$0xff]
      %v559 = vld [vmem:[%s192 + $0x48] sm:$0xff]
      %v560 = vunpack.c.l.bf16 %v550
      %v561 = vunpack.c.h.bf16 %v550
      %v562 = vunpack.c.l.bf16 %v551
      %v563 = vunpack.c.h.bf16 %v551
      %v564 = vunpack.c.l.bf16 %v552
      %v565 = vunpack.c.h.bf16 %v552
      %v566 = vunpack.c.l.bf16 %v553
      %v567 = vunpack.c.h.bf16 %v553
      %v568 = vunpack.c.l.bf16 %v554
      %v569 = vunpack.c.h.bf16 %v554
      %v570 = vunpack.c.l.bf16 %v555
      %v571 = vunpack.c.h.bf16 %v555
      %v572 = vunpack.c.l.bf16 %v556
      %v573 = vunpack.c.h.bf16 %v556
      %v574 = vunpack.c.l.bf16 %v557
      %v575 = vunpack.c.h.bf16 %v557
      %v576 = vunpack.c.l.bf16 %v558
      %v577 = vunpack.c.h.bf16 %v558
      %v578 = vunpack.c.l.bf16 %v559
      %v579 = vunpack.c.h.bf16 %v559
      %600 = vrot.lane.b32.xlu0 %v560, 94
      %v601 = vpop.permute.xlu0 %600
      %602 = vrot.lane.b32.xlu0 %v561, 94
      %v603 = vpop.permute.xlu0 %602
      %604 = vrot.lane.b32.xlu0 %v562, 94
      %v605 = vpop.permute.xlu0 %604
      %606 = vrot.lane.b32.xlu0 %v563, 94
      %v607 = vpop.permute.xlu0 %606
      %608 = vrot.lane.b32.xlu0 %v564, 94
      %v609 = vpop.permute.xlu0 %608
      %610 = vrot.lane.b32.xlu0 %v565, 94
      %v611 = vpop.permute.xlu0 %610
      %612 = vrot.lane.b32.xlu0 %v566, 94
      %v613 = vpop.permute.xlu0 %612
      %614 = vrot.lane.b32.xlu0 %v567, 94
      %v615 = vpop.permute.xlu0 %614
      %616 = vrot.lane.b32.xlu0 %v568, 94
      %v617 = vpop.permute.xlu0 %616
      %618 = vrot.lane.b32.xlu0 %v569, 94
      %v619 = vpop.permute.xlu0 %618
      %620 = vrot.lane.b32.xlu0 %v570, 94
      %v621 = vpop.permute.xlu0 %620
      %622 = vrot.lane.b32.xlu0 %v571, 94
      %v623 = vpop.permute.xlu0 %622
      %624 = vrot.lane.b32.xlu0 %v572, 94
      %v625 = vpop.permute.xlu0 %624
      %626 = vrot.lane.b32.xlu0 %v573, 94
      %v627 = vpop.permute.xlu0 %626
      %628 = vrot.lane.b32.xlu0 %v574, 94
      %v629 = vpop.permute.xlu0 %628
      %630 = vrot.lane.b32.xlu0 %v575, 94
      %v631 = vpop.permute.xlu0 %630
      %632 = vrot.lane.b32.xlu0 %v576, 94
      %v633 = vpop.permute.xlu0 %632
      %634 = vrot.lane.b32.xlu0 %v577, 94
      %v635 = vpop.permute.xlu0 %634
      %636 = vrot.lane.b32.xlu0 %v578, 94
      %v637 = vpop.permute.xlu0 %636
      %638 = vrot.lane.b32.xlu0 %v579, 94
      %v639 = vpop.permute.xlu0 %638
      %vm640 = vcmask 769024
      %v641 = vsel %vm640, %v601, %v603
      %v642 = vsel %vm640, %v603, %v605
      %v643 = vsel %vm640, %v605, %v607
      %v644 = vsel %vm640, %v607, %v609
      %v645 = vsel %vm640, %v609, %v611
      %v646 = vsel %vm640, %v611, %v613
      %v647 = vsel %vm640, %v613, %v615
      %v648 = vsel %vm640, %v615, %v617
      %v649 = vsel %vm640, %v617, %v619
      %v650 = vsel %vm640, %v621, %v623
      %v651 = vsel %vm640, %v623, %v625
      %v652 = vsel %vm640, %v625, %v627
      %v653 = vsel %vm640, %v627, %v629
      %v654 = vsel %vm640, %v629, %v631
      %v655 = vsel %vm640, %v631, %v633
      %v656 = vsel %vm640, %v633, %v635
      %v657 = vsel %vm640, %v635, %v637
      %v658 = vsel %vm640, %v637, %v639
      %679 = vst [vmem:[#allocation2 + $0x1e0] sm:$0xff] %v641
      %680 = vst [vmem:[#allocation2 + $0x1e8] sm:$0xff] %v642
      %681 = vst [vmem:[#allocation2 + $0x1f0] sm:$0xff] %v643
      %682 = vst [vmem:[#allocation2 + $0x1f8] sm:$0xff] %v644
      %683 = vst [vmem:[#allocation2 + $0x200] sm:$0xff] %v645
      %684 = vst [vmem:[#allocation2 + $0x208] sm:$0xff] %v646
      %685 = vst [vmem:[#allocation2 + $0x210] sm:$0xff] %v647
      %686 = vst [vmem:[#allocation2 + $0x218] sm:$0xff] %v648
      %687 = vst [vmem:[#allocation2 + $0x220] sm:$0xff] %v649
      %688 = vst.msk [vmem:[#allocation2 + $0x228] sm:$0xff] %vm240, %v619
      %689 = vst [vmem:[#allocation2 + $0x230] sm:$0xff] %v650
      %690 = vst [vmem:[#allocation2 + $0x238] sm:$0xff] %v651
      %691 = vst [vmem:[#allocation2 + $0x240] sm:$0xff] %v652
      %692 = vst [vmem:[#allocation2 + $0x248] sm:$0xff] %v653
      %693 = vst [vmem:[#allocation2 + $0x250] sm:$0xff] %v654
      %694 = vst [vmem:[#allocation2 + $0x258] sm:$0xff] %v655
      %695 = vst [vmem:[#allocation2 + $0x260] sm:$0xff] %v656
      %696 = vst [vmem:[#allocation2 + $0x268] sm:$0xff] %v657
      %697 = vst [vmem:[#allocation2 + $0x270] sm:$0xff] %v658
      %698 = vst.msk [vmem:[#allocation2 + $0x278] sm:$0xff] %vm240, %v639
      %v699 = vld [vmem:[%s192] sm:$0xff]
      %v700 = vld [vmem:[%s192 + $0x8] sm:$0xff]
      %v701 = vld [vmem:[%s192 + $0x10] sm:$0xff]
      %v702 = vld [vmem:[%s192 + $0x18] sm:$0xff]
      %v703 = vld [vmem:[%s192 + $0x20] sm:$0xff]
      %v704 = vld [vmem:[%s192 + $0x28] sm:$0xff]
      %v705 = vld [vmem:[%s192 + $0x30] sm:$0xff]
      %v706 = vld [vmem:[%s192 + $0x38] sm:$0xff]
      %v707 = vld [vmem:[%s192 + $0x40] sm:$0xff]
      %v708 = vld [vmem:[%s192 + $0x48] sm:$0xff]
      %v709 = vunpack.c.l.bf16 %v699
      %v710 = vunpack.c.h.bf16 %v699
      %v711 = vunpack.c.l.bf16 %v700
      %v712 = vunpack.c.h.bf16 %v700
      %v713 = vunpack.c.l.bf16 %v701
      %v714 = vunpack.c.h.bf16 %v701
      %v715 = vunpack.c.l.bf16 %v702
      %v716 = vunpack.c.h.bf16 %v702
      %v717 = vunpack.c.l.bf16 %v703
      %v718 = vunpack.c.h.bf16 %v703
      %v719 = vunpack.c.l.bf16 %v704
      %v720 = vunpack.c.h.bf16 %v704
      %v721 = vunpack.c.l.bf16 %v705
      %v722 = vunpack.c.h.bf16 %v705
      %v723 = vunpack.c.l.bf16 %v706
      %v724 = vunpack.c.h.bf16 %v706
      %v725 = vunpack.c.l.bf16 %v707
      %v726 = vunpack.c.h.bf16 %v707
      %v727 = vunpack.c.l.bf16 %v708
      %v728 = vunpack.c.h.bf16 %v708
      %749 = vrot.lane.b32.xlu0 %v709, 93
      %v750 = vpop.permute.xlu0 %749
      %751 = vrot.lane.b32.xlu0 %v710, 93
      %v752 = vpop.permute.xlu0 %751
      %753 = vrot.lane.b32.xlu0 %v711, 93
      %v754 = vpop.permute.xlu0 %753
      %755 = vrot.lane.b32.xlu0 %v712, 93
      %v756 = vpop.permute.xlu0 %755
      %757 = vrot.lane.b32.xlu0 %v713, 93
      %v758 = vpop.permute.xlu0 %757
      %759 = vrot.lane.b32.xlu0 %v714, 93
      %v760 = vpop.permute.xlu0 %759
      %761 = vrot.lane.b32.xlu0 %v715, 93
      %v762 = vpop.permute.xlu0 %761
      %763 = vrot.lane.b32.xlu0 %v716, 93
      %v764 = vpop.permute.xlu0 %763
      %765 = vrot.lane.b32.xlu0 %v717, 93
      %v766 = vpop.permute.xlu0 %765
      %767 = vrot.lane.b32.xlu0 %v718, 93
      %v768 = vpop.permute.xlu0 %767
      %769 = vrot.lane.b32.xlu0 %v719, 93
      %v770 = vpop.permute.xlu0 %769
      %771 = vrot.lane.b32.xlu0 %v720, 93
      %v772 = vpop.permute.xlu0 %771
      %773 = vrot.lane.b32.xlu0 %v721, 93
      %v774 = vpop.permute.xlu0 %773
      %775 = vrot.lane.b32.xlu0 %v722, 93
      %v776 = vpop.permute.xlu0 %775
      %777 = vrot.lane.b32.xlu0 %v723, 93
      %v778 = vpop.permute.xlu0 %777
      %779 = vrot.lane.b32.xlu0 %v724, 93
      %v780 = vpop.permute.xlu0 %779
      %781 = vrot.lane.b32.xlu0 %v725, 93
      %v782 = vpop.permute.xlu0 %781
      %783 = vrot.lane.b32.xlu0 %v726, 93
      %v784 = vpop.permute.xlu0 %783
      %785 = vrot.lane.b32.xlu0 %v727, 93
      %v786 = vpop.permute.xlu0 %785
      %787 = vrot.lane.b32.xlu0 %v728, 93
      %v788 = vpop.permute.xlu0 %787
      %vm789 = vcmask 760832
      %v790 = vsel %vm789, %v750, %v752
      %v791 = vsel %vm789, %v752, %v754
      %v792 = vsel %vm789, %v754, %v756
      %v793 = vsel %vm789, %v756, %v758
      %v794 = vsel %vm789, %v758, %v760
      %v795 = vsel %vm789, %v760, %v762
      %v796 = vsel %vm789, %v762, %v764
      %v797 = vsel %vm789, %v764, %v766
      %v798 = vsel %vm789, %v766, %v768
      %v799 = vsel %vm789, %v770, %v772
      %v800 = vsel %vm789, %v772, %v774
      %v801 = vsel %vm789, %v774, %v776
      %v802 = vsel %vm789, %v776, %v778
      %v803 = vsel %vm789, %v778, %v780
      %v804 = vsel %vm789, %v780, %v782
      %v805 = vsel %vm789, %v782, %v784
      %v806 = vsel %vm789, %v784, %v786
      %v807 = vsel %vm789, %v786, %v788
      %828 = vst [vmem:[#allocation2 + $0x280] sm:$0xff] %v790
      %829 = vst [vmem:[#allocation2 + $0x288] sm:$0xff] %v791
      %830 = vst [vmem:[#allocation2 + $0x290] sm:$0xff] %v792
      %831 = vst [vmem:[#allocation2 + $0x298] sm:$0xff] %v793
      %832 = vst [vmem:[#allocation2 + $0x2a0] sm:$0xff] %v794
      %833 = vst [vmem:[#allocation2 + $0x2a8] sm:$0xff] %v795
      %834 = vst [vmem:[#allocation2 + $0x2b0] sm:$0xff] %v796
      %835 = vst [vmem:[#allocation2 + $0x2b8] sm:$0xff] %v797
      %836 = vst [vmem:[#allocation2 + $0x2c0] sm:$0xff] %v798
      %837 = vst.msk [vmem:[#allocation2 + $0x2c8] sm:$0xff] %vm240, %v768
      %838 = vst [vmem:[#allocation2 + $0x2d0] sm:$0xff] %v799
      %839 = vst [vmem:[#allocation2 + $0x2d8] sm:$0xff] %v800
      %840 = vst [vmem:[#allocation2 + $0x2e0] sm:$0xff] %v801
      %841 = vst [vmem:[#allocation2 + $0x2e8] sm:$0xff] %v802
      %842 = vst [vmem:[#allocation2 + $0x2f0] sm:$0xff] %v803
      %843 = vst [vmem:[#allocation2 + $0x2f8] sm:$0xff] %v804
      %844 = vst [vmem:[#allocation2 + $0x300] sm:$0xff] %v805
      %845 = vst [vmem:[#allocation2 + $0x308] sm:$0xff] %v806
      %846 = vst [vmem:[#allocation2 + $0x310] sm:$0xff] %v807
      %847 = vst.msk [vmem:[#allocation2 + $0x318] sm:$0xff] %vm240, %v788
      %v848 = vld [vmem:[%s192] sm:$0xff]
      %v849 = vld [vmem:[%s192 + $0x8] sm:$0xff]
      %v850 = vld [vmem:[%s192 + $0x10] sm:$0xff]
      %v851 = vld [vmem:[%s192 + $0x18] sm:$0xff]
      %v852 = vld [vmem:[%s192 + $0x20] sm:$0xff]
      %v853 = vld [vmem:[%s192 + $0x28] sm:$0xff]
      %v854 = vld [vmem:[%s192 + $0x30] sm:$0xff]
      %v855 = vld [vmem:[%s192 + $0x38] sm:$0xff]
      %v856 = vld [vmem:[%s192 + $0x40] sm:$0xff]
      %v857 = vld [vmem:[%s192 + $0x48] sm:$0xff]
      %v858 = vunpack.c.l.bf16 %v848
      %v859 = vunpack.c.h.bf16 %v848
      %v860 = vunpack.c.l.bf16 %v849
      %v861 = vunpack.c.h.bf16 %v849
      %v862 = vunpack.c.l.bf16 %v850
      %v863 = vunpack.c.h.bf16 %v850
      %v864 = vunpack.c.l.bf16 %v851
      %v865 = vunpack.c.h.bf16 %v851
      %v866 = vunpack.c.l.bf16 %v852
      %v867 = vunpack.c.h.bf16 %v852
      %v868 = vunpack.c.l.bf16 %v853
      %v869 = vunpack.c.h.bf16 %v853
      %v870 = vunpack.c.l.bf16 %v854
      %v871 = vunpack.c.h.bf16 %v854
      %v872 = vunpack.c.l.bf16 %v855
      %v873 = vunpack.c.h.bf16 %v855
      %v874 = vunpack.c.l.bf16 %v856
      %v875 = vunpack.c.h.bf16 %v856
      %v876 = vunpack.c.l.bf16 %v857
      %v877 = vunpack.c.h.bf16 %v857
      %898 = vrot.lane.b32.xlu0 %v858, 92
      %v899 = vpop.permute.xlu0 %898
      %900 = vrot.lane.b32.xlu0 %v859, 92
      %v901 = vpop.permute.xlu0 %900
      %902 = vrot.lane.b32.xlu0 %v860, 92
      %v903 = vpop.permute.xlu0 %902
      %904 = vrot.lane.b32.xlu0 %v861, 92
      %v905 = vpop.permute.xlu0 %904
      %906 = vrot.lane.b32.xlu0 %v862, 92
      %v907 = vpop.permute.xlu0 %906
      %908 = vrot.lane.b32.xlu0 %v863, 92
      %v909 = vpop.permute.xlu0 %908
      %910 = vrot.lane.b32.xlu0 %v864, 92
      %v911 = vpop.permute.xlu0 %910
      %912 = vrot.lane.b32.xlu0 %v865, 92
      %v913 = vpop.permute.xlu0 %912
      %914 = vrot.lane.b32.xlu0 %v866, 92
      %v915 = vpop.permute.xlu0 %914
      %916 = vrot.lane.b32.xlu0 %v867, 92
      %v917 = vpop.permute.xlu0 %916
      %918 = vrot.lane.b32.xlu0 %v868, 92
      %v919 = vpop.permute.xlu0 %918
      %920 = vrot.lane.b32.xlu0 %v869, 92
      %v921 = vpop.permute.xlu0 %920
      %922 = vrot.lane.b32.xlu0 %v870, 92
      %v923 = vpop.permute.xlu0 %922
      %924 = vrot.lane.b32.xlu0 %v871, 92
      %v925 = vpop.permute.xlu0 %924
      %926 = vrot.lane.b32.xlu0 %v872, 92
      %v927 = vpop.permute.xlu0 %926
      %928 = vrot.lane.b32.xlu0 %v873, 92
      %v929 = vpop.permute.xlu0 %928
      %930 = vrot.lane.b32.xlu0 %v874, 92
      %v931 = vpop.permute.xlu0 %930
      %932 = vrot.lane.b32.xlu0 %v875, 92
      %v933 = vpop.permute.xlu0 %932
      %934 = vrot.lane.b32.xlu0 %v876, 92
      %v935 = vpop.permute.xlu0 %934
      %936 = vrot.lane.b32.xlu0 %v877, 92
      %v937 = vpop.permute.xlu0 %936
      %vm938 = vcmask 752640
      %v939 = vsel %vm938, %v899, %v901
      %v940 = vsel %vm938, %v901, %v903
      %v941 = vsel %vm938, %v903, %v905
      %v942 = vsel %vm938, %v905, %v907
      %v943 = vsel %vm938, %v907, %v909
      %v944 = vsel %vm938, %v909, %v911
      %v945 = vsel %vm938, %v911, %v913
      %v946 = vsel %vm938, %v913, %v915
      %v947 = vsel %vm938, %v915, %v917
      %v948 = vsel %vm938, %v919, %v921
      %v949 = vsel %vm938, %v921, %v923
      %v950 = vsel %vm938, %v923, %v925
      %v951 = vsel %vm938, %v925, %v927
      %v952 = vsel %vm938, %v927, %v929
      %v953 = vsel %vm938, %v929, %v931
      %v954 = vsel %vm938, %v931, %v933
      %v955 = vsel %vm938, %v933, %v935
      %v956 = vsel %vm938, %v935, %v937
      %977 = vst [vmem:[#allocation2 + $0x320] sm:$0xff] %v939
      %978 = vst [vmem:[#allocation2 + $0x328] sm:$0xff] %v940
      %979 = vst [vmem:[#allocation2 + $0x330] sm:$0xff] %v941
      %980 = vst [vmem:[#allocation2 + $0x338] sm:$0xff] %v942
      %981 = vst [vmem:[#allocation2 + $0x340] sm:$0xff] %v943
      %982 = vst [vmem:[#allocation2 + $0x348] sm:$0xff] %v944
      %983 = vst [vmem:[#allocation2 + $0x350] sm:$0xff] %v945
      %984 = vst [vmem:[#allocation2 + $0x358] sm:$0xff] %v946
      %985 = vst [vmem:[#allocation2 + $0x360] sm:$0xff] %v947
      %986 = vst.msk [vmem:[#allocation2 + $0x368] sm:$0xff] %vm240, %v917
      %987 = vst [vmem:[#allocation2 + $0x370] sm:$0xff] %v948
      %988 = vst [vmem:[#allocation2 + $0x378] sm:$0xff] %v949
      %989 = vst [vmem:[#allocation2 + $0x380] sm:$0xff] %v950
      %990 = vst [vmem:[#allocation2 + $0x388] sm:$0xff] %v951
      %991 = vst [vmem:[#allocation2 + $0x390] sm:$0xff] %v952
      %992 = vst [vmem:[#allocation2 + $0x398] sm:$0xff] %v953
      %993 = vst [vmem:[#allocation2 + $0x3a0] sm:$0xff] %v954
      %994 = vst [vmem:[#allocation2 + $0x3a8] sm:$0xff] %v955
      %995 = vst [vmem:[#allocation2 + $0x3b0] sm:$0xff] %v956
      %996 = vst.msk [vmem:[#allocation2 + $0x3b8] sm:$0xff] %vm240, %v937
      %v997 = vld [vmem:[%s192] sm:$0xff]
      %v998 = vld [vmem:[%s192 + $0x8] sm:$0xff]
      %v999 = vld [vmem:[%s192 + $0x10] sm:$0xff]
      %v1000 = vld [vmem:[%s192 + $0x18] sm:$0xff]
      %v1001 = vld [vmem:[%s192 + $0x20] sm:$0xff]
      %v1002 = vld [vmem:[%s192 + $0x28] sm:$0xff]
      %v1003 = vld [vmem:[%s192 + $0x30] sm:$0xff]
      %v1004 = vld [vmem:[%s192 + $0x38] sm:$0xff]
      %v1005 = vld [vmem:[%s192 + $0x40] sm:$0xff]
      %v1006 = vld [vmem:[%s192 + $0x48] sm:$0xff]
      %v1007 = vunpack.c.l.bf16 %v997
      %v1008 = vunpack.c.h.bf16 %v997
      %v1009 = vunpack.c.l.bf16 %v998
      %v1010 = vunpack.c.h.bf16 %v998
      %v1011 = vunpack.c.l.bf16 %v999
      %v1012 = vunpack.c.h.bf16 %v999
      %v1013 = vunpack.c.l.bf16 %v1000
      %v1014 = vunpack.c.h.bf16 %v1000
      %v1015 = vunpack.c.l.bf16 %v1001
      %v1016 = vunpack.c.h.bf16 %v1001
      %v1017 = vunpack.c.l.bf16 %v1002
      %v1018 = vunpack.c.h.bf16 %v1002
      %v1019 = vunpack.c.l.bf16 %v1003
      %v1020 = vunpack.c.h.bf16 %v1003
      %v1021 = vunpack.c.l.bf16 %v1004
      %v1022 = vunpack.c.h.bf16 %v1004
      %v1023 = vunpack.c.l.bf16 %v1005
      %v1024 = vunpack.c.h.bf16 %v1005
      %v1025 = vunpack.c.l.bf16 %v1006
      %v1026 = vunpack.c.h.bf16 %v1006
      %1047 = vrot.lane.b32.xlu0 %v1007, 60
      %v1048 = vpop.permute.xlu0 %1047
      %1049 = vrot.lane.b32.xlu0 %v1008, 60
      %v1050 = vpop.permute.xlu0 %1049
      %1051 = vrot.lane.b32.xlu0 %v1009, 60
      %v1052 = vpop.permute.xlu0 %1051
      %1053 = vrot.lane.b32.xlu0 %v1010, 60
      %v1054 = vpop.permute.xlu0 %1053
      %1055 = vrot.lane.b32.xlu0 %v1011, 60
      %v1056 = vpop.permute.xlu0 %1055
      %1057 = vrot.lane.b32.xlu0 %v1012, 60
      %v1058 = vpop.permute.xlu0 %1057
      %1059 = vrot.lane.b32.xlu0 %v1013, 60
      %v1060 = vpop.permute.xlu0 %1059
      %1061 = vrot.lane.b32.xlu0 %v1014, 60
      %v1062 = vpop.permute.xlu0 %1061
      %1063 = vrot.lane.b32.xlu0 %v1015, 60
      %v1064 = vpop.permute.xlu0 %1063
      %1065 = vrot.lane.b32.xlu0 %v1016, 60
      %v1066 = vpop.permute.xlu0 %1065
      %1067 = vrot.lane.b32.xlu0 %v1017, 60
      %v1068 = vpop.permute.xlu0 %1067
      %1069 = vrot.lane.b32.xlu0 %v1018, 60
      %v1070 = vpop.permute.xlu0 %1069
      %1071 = vrot.lane.b32.xlu0 %v1019, 60
      %v1072 = vpop.permute.xlu0 %1071
      %1073 = vrot.lane.b32.xlu0 %v1020, 60
      %v1074 = vpop.permute.xlu0 %1073
      %1075 = vrot.lane.b32.xlu0 %v1021, 60
      %v1076 = vpop.permute.xlu0 %1075
      %1077 = vrot.lane.b32.xlu0 %v1022, 60
      %v1078 = vpop.permute.xlu0 %1077
      %1079 = vrot.lane.b32.xlu0 %v1023, 60
      %v1080 = vpop.permute.xlu0 %1079
      %1081 = vrot.lane.b32.xlu0 %v1024, 60
      %v1082 = vpop.permute.xlu0 %1081
      %1083 = vrot.lane.b32.xlu0 %v1025, 60
      %v1084 = vpop.permute.xlu0 %1083
      %1085 = vrot.lane.b32.xlu0 %v1026, 60
      %v1086 = vpop.permute.xlu0 %1085
      %vm1087 = vcmask 490496
      %v1088 = vsel %vm1087, %v1048, %v1050
      %v1089 = vsel %vm1087, %v1050, %v1052
      %v1090 = vsel %vm1087, %v1052, %v1054
      %v1091 = vsel %vm1087, %v1054, %v1056
      %v1092 = vsel %vm1087, %v1056, %v1058
      %v1093 = vsel %vm1087, %v1058, %v1060
      %v1094 = vsel %vm1087, %v1060, %v1062
      %v1095 = vsel %vm1087, %v1062, %v1064
      %v1096 = vsel %vm1087, %v1064, %v1066
      %v1097 = vsel %vm1087, %v1068, %v1070
      %v1098 = vsel %vm1087, %v1070, %v1072
      %v1099 = vsel %vm1087, %v1072, %v1074
      %v1100 = vsel %vm1087, %v1074, %v1076
      %v1101 = vsel %vm1087, %v1076, %v1078
      %v1102 = vsel %vm1087, %v1078, %v1080
      %v1103 = vsel %vm1087, %v1080, %v1082
      %v1104 = vsel %vm1087, %v1082, %v1084
      %v1105 = vsel %vm1087, %v1084, %v1086
      %1126 = vst [vmem:[#allocation2 + $0x3c0] sm:$0xff] %v1088
      %1127 = vst [vmem:[#allocation2 + $0x3c8] sm:$0xff] %v1089
      %1128 = vst [vmem:[#allocation2 + $0x3d0] sm:$0xff] %v1090
      %1129 = vst [vmem:[#allocation2 + $0x3d8] sm:$0xff] %v1091
      %1130 = vst [vmem:[#allocation2 + $0x3e0] sm:$0xff] %v1092
      %1131 = vst [vmem:[#allocation2 + $0x3e8] sm:$0xff] %v1093
      %1132 = vst [vmem:[#allocation2 + $0x3f0] sm:$0xff] %v1094
      %1133 = vst [vmem:[#allocation2 + $0x3f8] sm:$0xff] %v1095
      %1134 = vst [vmem:[#allocation2 + $0x400] sm:$0xff] %v1096
      %1135 = vst.msk [vmem:[#allocation2 + $0x408] sm:$0xff] %vm240, %v1066
      %1136 = vst [vmem:[#allocation2 + $0x410] sm:$0xff] %v1097
      %1137 = vst [vmem:[#allocation2 + $0x418] sm:$0xff] %v1098
      %1138 = vst [vmem:[#allocation2 + $0x420] sm:$0xff] %v1099
      %1139 = vst [vmem:[#allocation2 + $0x428] sm:$0xff] %v1100
      %1140 = vst [vmem:[#allocation2 + $0x430] sm:$0xff] %v1101
      %1141 = vst [vmem:[#allocation2 + $0x438] sm:$0xff] %v1102
      %1142 = vst [vmem:[#allocation2 + $0x440] sm:$0xff] %v1103
      %1143 = vst [vmem:[#allocation2 + $0x448] sm:$0xff] %v1104
      %1144 = vst [vmem:[#allocation2 + $0x450] sm:$0xff] %v1105
      %1145 = vst.msk [vmem:[#allocation2 + $0x458] sm:$0xff] %vm240, %v1086
      %v1146 = vld [vmem:[%s192] sm:$0xff]
      %v1147 = vld [vmem:[%s192 + $0x8] sm:$0xff]
      %v1148 = vld [vmem:[%s192 + $0x10] sm:$0xff]
      %v1149 = vld [vmem:[%s192 + $0x18] sm:$0xff]
      %v1150 = vld [vmem:[%s192 + $0x20] sm:$0xff]
      %v1151 = vld [vmem:[%s192 + $0x28] sm:$0xff]
      %v1152 = vld [vmem:[%s192 + $0x30] sm:$0xff]
      %v1153 = vld [vmem:[%s192 + $0x38] sm:$0xff]
      %v1154 = vld [vmem:[%s192 + $0x40] sm:$0xff]
      %v1155 = vld [vmem:[%s192 + $0x48] sm:$0xff]
      %v1156 = vunpack.c.l.bf16 %v1146
      %v1157 = vunpack.c.h.bf16 %v1146
      %v1158 = vunpack.c.l.bf16 %v1147
      %v1159 = vunpack.c.h.bf16 %v1147
      %v1160 = vunpack.c.l.bf16 %v1148
      %v1161 = vunpack.c.h.bf16 %v1148
      %v1162 = vunpack.c.l.bf16 %v1149
      %v1163 = vunpack.c.h.bf16 %v1149
      %v1164 = vunpack.c.l.bf16 %v1150
      %v1165 = vunpack.c.h.bf16 %v1150
      %v1166 = vunpack.c.l.bf16 %v1151
      %v1167 = vunpack.c.h.bf16 %v1151
      %v1168 = vunpack.c.l.bf16 %v1152
      %v1169 = vunpack.c.h.bf16 %v1152
      %v1170 = vunpack.c.l.bf16 %v1153
      %v1171 = vunpack.c.h.bf16 %v1153
      %v1172 = vunpack.c.l.bf16 %v1154
      %v1173 = vunpack.c.h.bf16 %v1154
      %v1174 = vunpack.c.l.bf16 %v1155
      %v1175 = vunpack.c.h.bf16 %v1155
      %1196 = vrot.lane.b32.xlu0 %v1156, 59
      %v1197 = vpop.permute.xlu0 %1196
      %1198 = vrot.lane.b32.xlu0 %v1157, 59
      %v1199 = vpop.permute.xlu0 %1198
      %1200 = vrot.lane.b32.xlu0 %v1158, 59
      %v1201 = vpop.permute.xlu0 %1200
      %1202 = vrot.lane.b32.xlu0 %v1159, 59
      %v1203 = vpop.permute.xlu0 %1202
      %1204 = vrot.lane.b32.xlu0 %v1160, 59
      %v1205 = vpop.permute.xlu0 %1204
      %1206 = vrot.lane.b32.xlu0 %v1161, 59
      %v1207 = vpop.permute.xlu0 %1206
      %1208 = vrot.lane.b32.xlu0 %v1162, 59
      %v1209 = vpop.permute.xlu0 %1208
      %1210 = vrot.lane.b32.xlu0 %v1163, 59
      %v1211 = vpop.permute.xlu0 %1210
      %1212 = vrot.lane.b32.xlu0 %v1164, 59
      %v1213 = vpop.permute.xlu0 %1212
      %1214 = vrot.lane.b32.xlu0 %v1165, 59
      %v1215 = vpop.permute.xlu0 %1214
      %1216 = vrot.lane.b32.xlu0 %v1166, 59
      %v1217 = vpop.permute.xlu0 %1216
      %1218 = vrot.lane.b32.xlu0 %v1167, 59
      %v1219 = vpop.permute.xlu0 %1218
      %1220 = vrot.lane.b32.xlu0 %v1168, 59
      %v1221 = vpop.permute.xlu0 %1220
      %1222 = vrot.lane.b32.xlu0 %v1169, 59
      %v1223 = vpop.permute.xlu0 %1222
      %1224 = vrot.lane.b32.xlu0 %v1170, 59
      %v1225 = vpop.permute.xlu0 %1224
      %1226 = vrot.lane.b32.xlu0 %v1171, 59
      %v1227 = vpop.permute.xlu0 %1226
      %1228 = vrot.lane.b32.xlu0 %v1172, 59
      %v1229 = vpop.permute.xlu0 %1228
      %1230 = vrot.lane.b32.xlu0 %v1173, 59
      %v1231 = vpop.permute.xlu0 %1230
      %1232 = vrot.lane.b32.xlu0 %v1174, 59
      %v1233 = vpop.permute.xlu0 %1232
      %1234 = vrot.lane.b32.xlu0 %v1175, 59
      %v1235 = vpop.permute.xlu0 %1234
      %vm1236 = vcmask 482304
      %v1237 = vsel %vm1236, %v1197, %v1199
      %v1238 = vsel %vm1236, %v1199, %v1201
      %v1239 = vsel %vm1236, %v1201, %v1203
      %v1240 = vsel %vm1236, %v1203, %v1205
      %v1241 = vsel %vm1236, %v1205, %v1207
      %v1242 = vsel %vm1236, %v1207, %v1209
      %v1243 = vsel %vm1236, %v1209, %v1211
      %v1244 = vsel %vm1236, %v1211, %v1213
      %v1245 = vsel %vm1236, %v1213, %v1215
      %v1246 = vsel %vm1236, %v1217, %v1219
      %v1247 = vsel %vm1236, %v1219, %v1221
      %v1248 = vsel %vm1236, %v1221, %v1223
      %v1249 = vsel %vm1236, %v1223, %v1225
      %v1250 = vsel %vm1236, %v1225, %v1227
      %v1251 = vsel %vm1236, %v1227, %v1229
      %v1252 = vsel %vm1236, %v1229, %v1231
      %v1253 = vsel %vm1236, %v1231, %v1233
      %v1254 = vsel %vm1236, %v1233, %v1235
      %1275 = vst [vmem:[#allocation2 + $0x460] sm:$0xff] %v1237
      %1276 = vst [vmem:[#allocation2 + $0x468] sm:$0xff] %v1238
      %1277 = vst [vmem:[#allocation2 + $0x470] sm:$0xff] %v1239
      %1278 = vst [vmem:[#allocation2 + $0x478] sm:$0xff] %v1240
      %1279 = vst [vmem:[#allocation2 + $0x480] sm:$0xff] %v1241
      %1280 = vst [vmem:[#allocation2 + $0x488] sm:$0xff] %v1242
      %1281 = vst [vmem:[#allocation2 + $0x490] sm:$0xff] %v1243
      %1282 = vst [vmem:[#allocation2 + $0x498] sm:$0xff] %v1244
      %1283 = vst [vmem:[#allocation2 + $0x4a0] sm:$0xff] %v1245
      %1284 = vst.msk [vmem:[#allocation2 + $0x4a8] sm:$0xff] %vm240, %v1215
      %1285 = vst [vmem:[#allocation2 + $0x4b0] sm:$0xff] %v1246
      %1286 = vst [vmem:[#allocation2 + $0x4b8] sm:$0xff] %v1247
      %1287 = vst [vmem:[#allocation2 + $0x4c0] sm:$0xff] %v1248
      %1288 = vst [vmem:[#allocation2 + $0x4c8] sm:$0xff] %v1249
      %1289 = vst [vmem:[#allocation2 + $0x4d0] sm:$0xff] %v1250
      %1290 = vst [vmem:[#allocation2 + $0x4d8] sm:$0xff] %v1251
      %1291 = vst [vmem:[#allocation2 + $0x4e0] sm:$0xff] %v1252
      %1292 = vst [vmem:[#allocation2 + $0x4e8] sm:$0xff] %v1253
      %1293 = vst [vmem:[#allocation2 + $0x4f0] sm:$0xff] %v1254
      %1294 = vst.msk [vmem:[#allocation2 + $0x4f8] sm:$0xff] %vm240, %v1235
      %v1295 = vld [vmem:[%s192] sm:$0xff]
      %v1296 = vld [vmem:[%s192 + $0x8] sm:$0xff]
      %v1297 = vld [vmem:[%s192 + $0x10] sm:$0xff]
      %v1298 = vld [vmem:[%s192 + $0x18] sm:$0xff]
      %v1299 = vld [vmem:[%s192 + $0x20] sm:$0xff]
      %v1300 = vld [vmem:[%s192 + $0x28] sm:$0xff]
      %v1301 = vld [vmem:[%s192 + $0x30] sm:$0xff]
      %v1302 = vld [vmem:[%s192 + $0x38] sm:$0xff]
      %v1303 = vld [vmem:[%s192 + $0x40] sm:$0xff]
      %v1304 = vld [vmem:[%s192 + $0x48] sm:$0xff]
      %v1305 = vunpack.c.l.bf16 %v1295
      %v1306 = vunpack.c.h.bf16 %v1295
      %v1307 = vunpack.c.l.bf16 %v1296
      %v1308 = vunpack.c.h.bf16 %v1296
      %v1309 = vunpack.c.l.bf16 %v1297
      %v1310 = vunpack.c.h.bf16 %v1297
      %v1311 = vunpack.c.l.bf16 %v1298
      %v1312 = vunpack.c.h.bf16 %v1298
      %v1313 = vunpack.c.l.bf16 %v1299
      %v1314 = vunpack.c.h.bf16 %v1299
      %v1315 = vunpack.c.l.bf16 %v1300
      %v1316 = vunpack.c.h.bf16 %v1300
      %v1317 = vunpack.c.l.bf16 %v1301
      %v1318 = vunpack.c.h.bf16 %v1301
      %v1319 = vunpack.c.l.bf16 %v1302
      %v1320 = vunpack.c.h.bf16 %v1302
      %v1321 = vunpack.c.l.bf16 %v1303
      %v1322 = vunpack.c.h.bf16 %v1303
      %v1323 = vunpack.c.l.bf16 %v1304
      %v1324 = vunpack.c.h.bf16 %v1304
      %1345 = vrot.lane.b32.xlu0 %v1305, 58
      %v1346 = vpop.permute.xlu0 %1345
      %1347 = vrot.lane.b32.xlu0 %v1306, 58
      %v1348 = vpop.permute.xlu0 %1347
      %1349 = vrot.lane.b32.xlu0 %v1307, 58
      %v1350 = vpop.permute.xlu0 %1349
      %1351 = vrot.lane.b32.xlu0 %v1308, 58
      %v1352 = vpop.permute.xlu0 %1351
      %1353 = vrot.lane.b32.xlu0 %v1309, 58
      %v1354 = vpop.permute.xlu0 %1353
      %1355 = vrot.lane.b32.xlu0 %v1310, 58
      %v1356 = vpop.permute.xlu0 %1355
      %1357 = vrot.lane.b32.xlu0 %v1311, 58
      %v1358 = vpop.permute.xlu0 %1357
      %1359 = vrot.lane.b32.xlu0 %v1312, 58
      %v1360 = vpop.permute.xlu0 %1359
      %1361 = vrot.lane.b32.xlu0 %v1313, 58
      %v1362 = vpop.permute.xlu0 %1361
      %1363 = vrot.lane.b32.xlu0 %v1314, 58
      %v1364 = vpop.permute.xlu0 %1363
      %1365 = vrot.lane.b32.xlu0 %v1315, 58
      %v1366 = vpop.permute.xlu0 %1365
      %1367 = vrot.lane.b32.xlu0 %v1316, 58
      %v1368 = vpop.permute.xlu0 %1367
      %1369 = vrot.lane.b32.xlu0 %v1317, 58
      %v1370 = vpop.permute.xlu0 %1369
      %1371 = vrot.lane.b32.xlu0 %v1318, 58
      %v1372 = vpop.permute.xlu0 %1371
      %1373 = vrot.lane.b32.xlu0 %v1319, 58
      %v1374 = vpop.permute.xlu0 %1373
      %1375 = vrot.lane.b32.xlu0 %v1320, 58
      %v1376 = vpop.permute.xlu0 %1375
      %1377 = vrot.lane.b32.xlu0 %v1321, 58
      %v1378 = vpop.permute.xlu0 %1377
      %1379 = vrot.lane.b32.xlu0 %v1322, 58
      %v1380 = vpop.permute.xlu0 %1379
      %1381 = vrot.lane.b32.xlu0 %v1323, 58
      %v1382 = vpop.permute.xlu0 %1381
      %1383 = vrot.lane.b32.xlu0 %v1324, 58
      %v1384 = vpop.permute.xlu0 %1383
      %vm1385 = vcmask 474112
      %v1386 = vsel %vm1385, %v1346, %v1348
      %v1387 = vsel %vm1385, %v1348, %v1350
      %v1388 = vsel %vm1385, %v1350, %v1352
      %v1389 = vsel %vm1385, %v1352, %v1354
      %v1390 = vsel %vm1385, %v1354, %v1356
      %v1391 = vsel %vm1385, %v1356, %v1358
      %v1392 = vsel %vm1385, %v1358, %v1360
      %v1393 = vsel %vm1385, %v1360, %v1362
      %v1394 = vsel %vm1385, %v1362, %v1364
      %v1395 = vsel %vm1385, %v1366, %v1368
      %v1396 = vsel %vm1385, %v1368, %v1370
      %v1397 = vsel %vm1385, %v1370, %v1372
      %v1398 = vsel %vm1385, %v1372, %v1374
      %v1399 = vsel %vm1385, %v1374, %v1376
      %v1400 = vsel %vm1385, %v1376, %v1378
      %v1401 = vsel %vm1385, %v1378, %v1380
      %v1402 = vsel %vm1385, %v1380, %v1382
      %v1403 = vsel %vm1385, %v1382, %v1384
      %1424 = vst [vmem:[#allocation2 + $0x500] sm:$0xff] %v1386
      %1425 = vst [vmem:[#allocation2 + $0x508] sm:$0xff] %v1387
      %1426 = vst [vmem:[#allocation2 + $0x510] sm:$0xff] %v1388
      %1427 = vst [vmem:[#allocation2 + $0x518] sm:$0xff] %v1389
      %1428 = vst [vmem:[#allocation2 + $0x520] sm:$0xff] %v1390
      %1429 = vst [vmem:[#allocation2 + $0x528] sm:$0xff] %v1391
      %1430 = vst [vmem:[#allocation2 + $0x530] sm:$0xff] %v1392
      %1431 = vst [vmem:[#allocation2 + $0x538] sm:$0xff] %v1393
      %1432 = vst [vmem:[#allocation2 + $0x540] sm:$0xff] %v1394
      %1433 = vst.msk [vmem:[#allocation2 + $0x548] sm:$0xff] %vm240, %v1364
      %1434 = vst [vmem:[#allocation2 + $0x550] sm:$0xff] %v1395
      %1435 = vst [vmem:[#allocation2 + $0x558] sm:$0xff] %v1396
      %1436 = vst [vmem:[#allocation2 + $0x560] sm:$0xff] %v1397
      %1437 = vst [vmem:[#allocation2 + $0x568] sm:$0xff] %v1398
      %1438 = vst [vmem:[#allocation2 + $0x570] sm:$0xff] %v1399
      %1439 = vst [vmem:[#allocation2 + $0x578] sm:$0xff] %v1400
      %1440 = vst [vmem:[#allocation2 + $0x580] sm:$0xff] %v1401
      %1441 = vst [vmem:[#allocation2 + $0x588] sm:$0xff] %v1402
      %1442 = vst [vmem:[#allocation2 + $0x590] sm:$0xff] %v1403
      %1443 = vst.msk [vmem:[#allocation2 + $0x598] sm:$0xff] %vm240, %v1384
      %v1444 = vld [vmem:[%s1] sm:$0xff]
      %v1445 = vld [vmem:[#allocation2] sm:$0xff]
      %v1446 = vld [vmem:[#allocation2 + $0x8] sm:$0xff]
      %v1447 = vld [vmem:[#allocation2 + $0x10] sm:$0xff]
      %v1448 = vld [vmem:[#allocation2 + $0x18] sm:$0xff]
      %v1449 = vld [vmem:[#allocation2 + $0x20] sm:$0xff]
      %v1450 = vld [vmem:[#allocation2 + $0x28] sm:$0xff]
      %v1451 = vld [vmem:[#allocation2 + $0x30] sm:$0xff]
      %v1452 = vld [vmem:[#allocation2 + $0x38] sm:$0xff]
      %v1453 = vld [vmem:[#allocation2 + $0x40] sm:$0xff]
      %v1454 = vld [vmem:[#allocation2 + $0x48] sm:$0xff]
      %v1455 = vld [vmem:[#allocation2 + $0x50] sm:$0xff]
      %v1456 = vld [vmem:[#allocation2 + $0x58] sm:$0xff]
      %v1457 = vld [vmem:[#allocation2 + $0x60] sm:$0xff]
      %v1458 = vld [vmem:[#allocation2 + $0x68] sm:$0xff]
      %v1459 = vld [vmem:[#allocation2 + $0x70] sm:$0xff]
      %v1460 = vld [vmem:[#allocation2 + $0x78] sm:$0xff]
      %v1461 = vld [vmem:[#allocation2 + $0x80] sm:$0xff]
      %v1462 = vld [vmem:[#allocation2 + $0x88] sm:$0xff]
      %v1463 = vld [vmem:[#allocation2 + $0x90] sm:$0xff]
      %v1464 = vld [vmem:[#allocation2 + $0x98] sm:$0xff]
      %v1465 = vld [vmem:[#allocation2 + $0xa0] sm:$0xff]
      %v1466 = vld [vmem:[#allocation2 + $0xa8] sm:$0xff]
      %v1467 = vld [vmem:[#allocation2 + $0xb0] sm:$0xff]
      %v1468 = vld [vmem:[#allocation2 + $0xb8] sm:$0xff]
      %v1469 = vld [vmem:[#allocation2 + $0xc0] sm:$0xff]
      %v1470 = vld [vmem:[#allocation2 + $0xc8] sm:$0xff]
      %v1471 = vld [vmem:[#allocation2 + $0xd0] sm:$0xff]
      %v1472 = vld [vmem:[#allocation2 + $0xd8] sm:$0xff]
      %v1473 = vld [vmem:[#allocation2 + $0xe0] sm:$0xff]
      %v1474 = vld [vmem:[#allocation2 + $0xe8] sm:$0xff]
      %v1475 = vld [vmem:[#allocation2 + $0xf0] sm:$0xff]
      %v1476 = vld [vmem:[#allocation2 + $0xf8] sm:$0xff]
      %v1477 = vld [vmem:[#allocation2 + $0x100] sm:$0xff]
      %v1478 = vld [vmem:[#allocation2 + $0x108] sm:$0xff]
      %v1479 = vld [vmem:[#allocation2 + $0x110] sm:$0xff]
      %v1480 = vld [vmem:[#allocation2 + $0x118] sm:$0xff]
      %v1481 = vld [vmem:[#allocation2 + $0x120] sm:$0xff]
      %v1482 = vld [vmem:[#allocation2 + $0x128] sm:$0xff]
      %v1483 = vld [vmem:[#allocation2 + $0x130] sm:$0xff]
      %v1484 = vld [vmem:[#allocation2 + $0x138] sm:$0xff]
      %v1485 = vld [vmem:[#allocation2 + $0x140] sm:$0xff]
      %v1486 = vld [vmem:[#allocation2 + $0x148] sm:$0xff]
      %v1487 = vld [vmem:[#allocation2 + $0x150] sm:$0xff]
      %v1488 = vld [vmem:[#allocation2 + $0x158] sm:$0xff]
      %v1489 = vld [vmem:[#allocation2 + $0x160] sm:$0xff]
      %v1490 = vld [vmem:[#allocation2 + $0x168] sm:$0xff]
      %v1491 = vld [vmem:[#allocation2 + $0x170] sm:$0xff]
      %v1492 = vld [vmem:[#allocation2 + $0x178] sm:$0xff]
      %v1493 = vld [vmem:[#allocation2 + $0x180] sm:$0xff]
      %v1494 = vld [vmem:[#allocation2 + $0x188] sm:$0xff]
      %v1495 = vld [vmem:[#allocation2 + $0x190] sm:$0xff]
      %v1496 = vld [vmem:[#allocation2 + $0x198] sm:$0xff]
      %v1497 = vld [vmem:[#allocation2 + $0x1a0] sm:$0xff]
      %v1498 = vld [vmem:[#allocation2 + $0x1a8] sm:$0xff]
      %v1499 = vld [vmem:[#allocation2 + $0x1b0] sm:$0xff]
      %v1500 = vld [vmem:[#allocation2 + $0x1b8] sm:$0xff]
      %v1501 = vld [vmem:[#allocation2 + $0x1c0] sm:$0xff]
      %v1502 = vld [vmem:[#allocation2 + $0x1c8] sm:$0xff]
      %v1503 = vld [vmem:[#allocation2 + $0x1d0] sm:$0xff]
      %v1504 = vld [vmem:[#allocation2 + $0x1d8] sm:$0xff]
      %v1505 = vld [vmem:[#allocation2 + $0x1e0] sm:$0xff]
      %v1506 = vld [vmem:[#allocation2 + $0x1e8] sm:$0xff]
      %v1507 = vld [vmem:[#allocation2 + $0x1f0] sm:$0xff]
      %v1508 = vld [vmem:[#allocation2 + $0x1f8] sm:$0xff]
      %v1509 = vld [vmem:[#allocation2 + $0x200] sm:$0xff]
      %v1510 = vld [vmem:[#allocation2 + $0x208] sm:$0xff]
      %v1511 = vld [vmem:[#allocation2 + $0x210] sm:$0xff]
      %v1512 = vld [vmem:[#allocation2 + $0x218] sm:$0xff]
      %v1513 = vld [vmem:[#allocation2 + $0x220] sm:$0xff]
      %v1514 = vld [vmem:[#allocation2 + $0x228] sm:$0xff]
      %v1515 = vld [vmem:[#allocation2 + $0x230] sm:$0xff]
      %v1516 = vld [vmem:[#allocation2 + $0x238] sm:$0xff]
      %v1517 = vld [vmem:[#allocation2 + $0x240] sm:$0xff]
      %v1518 = vld [vmem:[#allocation2 + $0x248] sm:$0xff]
      %v1519 = vld [vmem:[#allocation2 + $0x250] sm:$0xff]
      %v1520 = vld [vmem:[#allocation2 + $0x258] sm:$0xff]
      %v1521 = vld [vmem:[#allocation2 + $0x260] sm:$0xff]
      %v1522 = vld [vmem:[#allocation2 + $0x268] sm:$0xff]
      %v1523 = vld [vmem:[#allocation2 + $0x270] sm:$0xff]
      %v1524 = vld [vmem:[#allocation2 + $0x278] sm:$0xff]
      %v1525 = vld [vmem:[#allocation2 + $0x280] sm:$0xff]
      %v1526 = vld [vmem:[#allocation2 + $0x288] sm:$0xff]
      %v1527 = vld [vmem:[#allocation2 + $0x290] sm:$0xff]
      %v1528 = vld [vmem:[#allocation2 + $0x298] sm:$0xff]
      %v1529 = vld [vmem:[#allocation2 + $0x2a0] sm:$0xff]
      %v1530 = vld [vmem:[#allocation2 + $0x2a8] sm:$0xff]
      %v1531 = vld [vmem:[#allocation2 + $0x2b0] sm:$0xff]
      %v1532 = vld [vmem:[#allocation2 + $0x2b8] sm:$0xff]
      %v1533 = vld [vmem:[#allocation2 + $0x2c0] sm:$0xff]
      %v1534 = vld [vmem:[#allocation2 + $0x2c8] sm:$0xff]
      %v1535 = vld [vmem:[#allocation2 + $0x2d0] sm:$0xff]
      %v1536 = vld [vmem:[#allocation2 + $0x2d8] sm:$0xff]
      %v1537 = vld [vmem:[#allocation2 + $0x2e0] sm:$0xff]
      %v1538 = vld [vmem:[#allocation2 + $0x2e8] sm:$0xff]
      %v1539 = vld [vmem:[#allocation2 + $0x2f0] sm:$0xff]
      %v1540 = vld [vmem:[#allocation2 + $0x2f8] sm:$0xff]
      %v1541 = vld [vmem:[#allocation2 + $0x300] sm:$0xff]
      %v1542 = vld [vmem:[#allocation2 + $0x308] sm:$0xff]
      %v1543 = vld [vmem:[#allocation2 + $0x310] sm:$0xff]
      %v1544 = vld [vmem:[#allocation2 + $0x318] sm:$0xff]
      %v1545 = vld [vmem:[#allocation2 + $0x320] sm:$0xff]
      %v1546 = vld [vmem:[#allocation2 + $0x328] sm:$0xff]
      %v1547 = vld [vmem:[#allocation2 + $0x330] sm:$0xff]
      %v1548 = vld [vmem:[#allocation2 + $0x338] sm:$0xff]
      %v1549 = vld [vmem:[#allocation2 + $0x340] sm:$0xff]
      %v1550 = vld [vmem:[#allocation2 + $0x348] sm:$0xff]
      %v1551 = vld [vmem:[#allocation2 + $0x350] sm:$0xff]
      %v1552 = vld [vmem:[#allocation2 + $0x358] sm:$0xff]
      %v1553 = vld [vmem:[#allocation2 + $0x360] sm:$0xff]
      %v1554 = vld [vmem:[#allocation2 + $0x368] sm:$0xff]
      %v1555 = vld [vmem:[#allocation2 + $0x370] sm:$0xff]
      %v1556 = vld [vmem:[#allocation2 + $0x378] sm:$0xff]
      %v1557 = vld [vmem:[#allocation2 + $0x380] sm:$0xff]
      %v1558 = vld [vmem:[#allocation2 + $0x388] sm:$0xff]
      %v1559 = vld [vmem:[#allocation2 + $0x390] sm:$0xff]
      %v1560 = vld [vmem:[#allocation2 + $0x398] sm:$0xff]
      %v1561 = vld [vmem:[#allocation2 + $0x3a0] sm:$0xff]
      %v1562 = vld [vmem:[#allocation2 + $0x3a8] sm:$0xff]
      %v1563 = vld [vmem:[#allocation2 + $0x3b0] sm:$0xff]
      %v1564 = vld [vmem:[#allocation2 + $0x3b8] sm:$0xff]
      %v1565 = vld [vmem:[#allocation2 + $0x3c0] sm:$0xff]
      %v1566 = vld [vmem:[#allocation2 + $0x3c8] sm:$0xff]
      %v1567 = vld [vmem:[#allocation2 + $0x3d0] sm:$0xff]
      %v1568 = vld [vmem:[#allocation2 + $0x3d8] sm:$0xff]
      %v1569 = vld [vmem:[#allocation2 + $0x3e0] sm:$0xff]
      %v1570 = vld [vmem:[#allocation2 + $0x3e8] sm:$0xff]
      %v1571 = vld [vmem:[#allocation2 + $0x3f0] sm:$0xff]
      %v1572 = vld [vmem:[#allocation2 + $0x3f8] sm:$0xff]
      %v1573 = vld [vmem:[#allocation2 + $0x400] sm:$0xff]
      %v1574 = vld [vmem:[#allocation2 + $0x408] sm:$0xff]
      %v1575 = vld [vmem:[#allocation2 + $0x410] sm:$0xff]
      %v1576 = vld [vmem:[#allocation2 + $0x418] sm:$0xff]
      %v1577 = vld [vmem:[#allocation2 + $0x420] sm:$0xff]
      %v1578 = vld [vmem:[#allocation2 + $0x428] sm:$0xff]
      %v1579 = vld [vmem:[#allocation2 + $0x430] sm:$0xff]
      %v1580 = vld [vmem:[#allocation2 + $0x438] sm:$0xff]
      %v1581 = vld [vmem:[#allocation2 + $0x440] sm:$0xff]
      %v1582 = vld [vmem:[#allocation2 + $0x448] sm:$0xff]
      %v1583 = vld [vmem:[#allocation2 + $0x450] sm:$0xff]
      %v1584 = vld [vmem:[#allocation2 + $0x458] sm:$0xff]
      %v1585 = vld [vmem:[#allocation2 + $0x460] sm:$0xff]
      %v1586 = vld [vmem:[#allocation2 + $0x468] sm:$0xff]
      %v1587 = vld [vmem:[#allocation2 + $0x470] sm:$0xff]
      %v1588 = vld [vmem:[#allocation2 + $0x478] sm:$0xff]
      %v1589 = vld [vmem:[#allocation2 + $0x480] sm:$0xff]
      %v1590 = vld [vmem:[#allocation2 + $0x488] sm:$0xff]
      %v1591 = vld [vmem:[#allocation2 + $0x490] sm:$0xff]
      %v1592 = vld [vmem:[#allocation2 + $0x498] sm:$0xff]
      %v1593 = vld [vmem:[#allocation2 + $0x4a0] sm:$0xff]
      %v1594 = vld [vmem:[#allocation2 + $0x4a8] sm:$0xff]
      %v1595 = vld [vmem:[#allocation2 + $0x4b0] sm:$0xff]
      %v1596 = vld [vmem:[#allocation2 + $0x4b8] sm:$0xff]
      %v1597 = vld [vmem:[#allocation2 + $0x4c0] sm:$0xff]
      %v1598 = vld [vmem:[#allocation2 + $0x4c8] sm:$0xff]
      %v1599 = vld [vmem:[#allocation2 + $0x4d0] sm:$0xff]
      %v1600 = vld [vmem:[#allocation2 + $0x4d8] sm:$0xff]
      %v1601 = vld [vmem:[#allocation2 + $0x4e0] sm:$0xff]
      %v1602 = vld [vmem:[#allocation2 + $0x4e8] sm:$0xff]
      %v1603 = vld [vmem:[#allocation2 + $0x4f0] sm:$0xff]
      %v1604 = vld [vmem:[#allocation2 + $0x4f8] sm:$0xff]
      %v1605 = vld [vmem:[#allocation2 + $0x500] sm:$0xff]
      %v1606 = vld [vmem:[#allocation2 + $0x508] sm:$0xff]
      %v1607 = vld [vmem:[#allocation2 + $0x510] sm:$0xff]
      %v1608 = vld [vmem:[#allocation2 + $0x518] sm:$0xff]
      %v1609 = vld [vmem:[#allocation2 + $0x520] sm:$0xff]
      %v1610 = vld [vmem:[#allocation2 + $0x528] sm:$0xff]
      %v1611 = vld [vmem:[#allocation2 + $0x530] sm:$0xff]
      %v1612 = vld [vmem:[#allocation2 + $0x538] sm:$0xff]
      %v1613 = vld [vmem:[#allocation2 + $0x540] sm:$0xff]
      %v1614 = vld [vmem:[#allocation2 + $0x548] sm:$0xff]
      %v1615 = vld [vmem:[#allocation2 + $0x550] sm:$0xff]
      %v1616 = vld [vmem:[#allocation2 + $0x558] sm:$0xff]
      %v1617 = vld [vmem:[#allocation2 + $0x560] sm:$0xff]
      %v1618 = vld [vmem:[#allocation2 + $0x568] sm:$0xff]
      %v1619 = vld [vmem:[#allocation2 + $0x570] sm:$0xff]
      %v1620 = vld [vmem:[#allocation2 + $0x578] sm:$0xff]
      %v1621 = vld [vmem:[#allocation2 + $0x580] sm:$0xff]
      %v1622 = vld [vmem:[#allocation2 + $0x588] sm:$0xff]
      %v1623 = vld [vmem:[#allocation2 + $0x590] sm:$0xff]
      %v1624 = vld [vmem:[#allocation2 + $0x598] sm:$0xff]
      %v1625 = vpack.c.bf16 %v1455, %v1445
      %v1626 = vpack.c.bf16 %v1456, %v1446
      %v1627 = vpack.c.bf16 %v1457, %v1447
      %v1628 = vpack.c.bf16 %v1458, %v1448
      %v1629 = vpack.c.bf16 %v1459, %v1449
      %v1630 = vpack.c.bf16 %v1460, %v1450
      %v1631 = vpack.c.bf16 %v1461, %v1451
      %v1632 = vpack.c.bf16 %v1462, %v1452
      %v1633 = vpack.c.bf16 %v1463, %v1453
      %v1634 = vpack.c.bf16 %v1464, %v1454
      %v1635 = vpack.c.bf16 %v1475, %v1465
      %v1636 = vpack.c.bf16 %v1476, %v1466
      %v1637 = vpack.c.bf16 %v1477, %v1467
      %v1638 = vpack.c.bf16 %v1478, %v1468
      %v1639 = vpack.c.bf16 %v1479, %v1469
      %v1640 = vpack.c.bf16 %v1480, %v1470
      %v1641 = vpack.c.bf16 %v1481, %v1471
      %v1642 = vpack.c.bf16 %v1482, %v1472
      %v1643 = vpack.c.bf16 %v1483, %v1473
      %v1644 = vpack.c.bf16 %v1484, %v1474
      %v1645 = vpack.c.bf16 %v1495, %v1485
      %v1646 = vpack.c.bf16 %v1496, %v1486
      %v1647 = vpack.c.bf16 %v1497, %v1487
      %v1648 = vpack.c.bf16 %v1498, %v1488
      %v1649 = vpack.c.bf16 %v1499, %v1489
      %v1650 = vpack.c.bf16 %v1500, %v1490
      %v1651 = vpack.c.bf16 %v1501, %v1491
      %v1652 = vpack.c.bf16 %v1502, %v1492
      %v1653 = vpack.c.bf16 %v1503, %v1493
      %v1654 = vpack.c.bf16 %v1504, %v1494
      %v1655 = vpack.c.bf16 %v1515, %v1505
      %v1656 = vpack.c.bf16 %v1516, %v1506
      %v1657 = vpack.c.bf16 %v1517, %v1507
      %v1658 = vpack.c.bf16 %v1518, %v1508
      %v1659 = vpack.c.bf16 %v1519, %v1509
      %v1660 = vpack.c.bf16 %v1520, %v1510
      %v1661 = vpack.c.bf16 %v1521, %v1511
      %v1662 = vpack.c.bf16 %v1522, %v1512
      %v1663 = vpack.c.bf16 %v1523, %v1513
      %v1664 = vpack.c.bf16 %v1524, %v1514
      %v1665 = vpack.c.bf16 %v1535, %v1525
      %v1666 = vpack.c.bf16 %v1536, %v1526
      %v1667 = vpack.c.bf16 %v1537, %v1527
      %v1668 = vpack.c.bf16 %v1538, %v1528
      %v1669 = vpack.c.bf16 %v1539, %v1529
      %v1670 = vpack.c.bf16 %v1540, %v1530
      %v1671 = vpack.c.bf16 %v1541, %v1531
      %v1672 = vpack.c.bf16 %v1542, %v1532
      %v1673 = vpack.c.bf16 %v1543, %v1533
      %v1674 = vpack.c.bf16 %v1544, %v1534
      %v1675 = vpack.c.bf16 %v1555, %v1545
      %v1676 = vpack.c.bf16 %v1556, %v1546
      %v1677 = vpack.c.bf16 %v1557, %v1547
      %v1678 = vpack.c.bf16 %v1558, %v1548
      %v1679 = vpack.c.bf16 %v1559, %v1549
      %v1680 = vpack.c.bf16 %v1560, %v1550
      %v1681 = vpack.c.bf16 %v1561, %v1551
      %v1682 = vpack.c.bf16 %v1562, %v1552
      %v1683 = vpack.c.bf16 %v1563, %v1553
      %v1684 = vpack.c.bf16 %v1564, %v1554
      %v1685 = vpack.c.bf16 %v1575, %v1565
      %v1686 = vpack.c.bf16 %v1576, %v1566
      %v1687 = vpack.c.bf16 %v1577, %v1567
      %v1688 = vpack.c.bf16 %v1578, %v1568
      %v1689 = vpack.c.bf16 %v1579, %v1569
      %v1690 = vpack.c.bf16 %v1580, %v1570
      %v1691 = vpack.c.bf16 %v1581, %v1571
      %v1692 = vpack.c.bf16 %v1582, %v1572
      %v1693 = vpack.c.bf16 %v1583, %v1573
      %v1694 = vpack.c.bf16 %v1584, %v1574
      %v1695 = vpack.c.bf16 %v1595, %v1585
      %v1696 = vpack.c.bf16 %v1596, %v1586
      %v1697 = vpack.c.bf16 %v1597, %v1587
      %v1698 = vpack.c.bf16 %v1598, %v1588
      %v1699 = vpack.c.bf16 %v1599, %v1589
      %v1700 = vpack.c.bf16 %v1600, %v1590
      %v1701 = vpack.c.bf16 %v1601, %v1591
      %v1702 = vpack.c.bf16 %v1602, %v1592
      %v1703 = vpack.c.bf16 %v1603, %v1593
      %v1704 = vpack.c.bf16 %v1604, %v1594
      %v1705 = vpack.c.bf16 %v1615, %v1605
      %v1706 = vpack.c.bf16 %v1616, %v1606
      %v1707 = vpack.c.bf16 %v1617, %v1607
      %v1708 = vpack.c.bf16 %v1618, %v1608
      %v1709 = vpack.c.bf16 %v1619, %v1609
      %v1710 = vpack.c.bf16 %v1620, %v1610
      %v1711 = vpack.c.bf16 %v1621, %v1611
      %v1712 = vpack.c.bf16 %v1622, %v1612
      %v1713 = vpack.c.bf16 %v1623, %v1613
      %v1714 = vpack.c.bf16 %v1624, %v1614
      %v1716 = vunpack.c.l.b16 %v1444
      %v1717 = vunpack.c.h.b16 %v1444
      %v1718 = vpack.c.b16 %v1716, %v1716
      %v1719 = vpack.c.b16 %v1717, %v1717
      %vm1721 = vcmask 130048
      %v1723 = vsel %vm1721, %v1719, 0
      %1725 = vmatprep.subr.bf16.mxu0 %v1696
      %1726 = vmatpush1.bf16.msra.mxu0 %v1695
      %1727 = vmatprep.subr.bf16.mxu0 %v1686
      %1728 = vmatpush1.bf16.msra.mxu0 %v1685
      %1729 = vmatprep.subr.bf16.mxu0 %v1676
      %1730 = vmatpush1.bf16.msra.mxu0 %v1675
      %1731 = vmatprep.subr.bf16.mxu0 %v1666
      %1732 = vmatpush1.bf16.msra.mxu0 %v1665
      %1733 = vmatprep.subr.bf16.mxu0 %v1656
      %1734 = vmatpush1.bf16.msra.mxu0 %v1655
      %1735 = vmatprep.subr.bf16.mxu0 %v1646
      %1736 = vmatpush1.bf16.msra.mxu0 %v1645
      %1737 = vmatprep.subr.bf16.mxu0 %v1636
      %1738 = vmatpush1.bf16.msra.mxu0 %v1635
      %1739 = vmatprep.subr.bf16.mxu0 %v1626
      %1740 = vmatpush1.bf16.msra.mxu0 %v1625
      %1741 = vmatprep.subr.bf16.mxu0 0
      %1742 = vmatpush2.bf16.msra.mxu0 0
      %1743 = vmatprep.subr.bf16.mxu0 0
      %1744 = vmatpush2.bf16.msra.mxu0 0
      %1745 = vmatprep.subr.bf16.mxu0 0
      %1746 = vmatpush2.bf16.msra.mxu0 0
      %1747 = vmatprep.subr.bf16.mxu0 0
      %1748 = vmatpush2.bf16.msra.mxu0 0
      %1749 = vmatprep.subr.bf16.mxu0 0
      %1750 = vmatpush2.bf16.msra.mxu0 0
      %1751 = vmatprep.subr.bf16.mxu0 0
      %1752 = vmatpush2.bf16.msra.mxu0 0
      %1753 = vmatprep.subr.bf16.mxu0 0
      %1754 = vmatpush2.bf16.msra.mxu0 0
      %1755 = vmatprep.subr.bf16.mxu0 %v1706
      %1756 = vmatpush2.bf16.msra.mxu0 %v1705
      %1757 = vmatprep.mubr.bf16.mxu0 %v1723
      %1758 = vmatmul.mubr.bf16.gmra.mxu0 %v1718
      %v1759 = vpop.f32.mrf.mxu0
      %v1760 = vadd.f32 0.0, %v1759
      %v1761 = vpop.f32.mrf.mxu0
      %v1762 = vadd.f32 0.0, %v1761
      %v1763 = vpop.f32.mrf.mxu0
      %v1764 = vpop.f32.mrf.mxu0
      %1765 = vdwg.mxu0
      %1766 = vmatprep.subr.bf16.mxu0 %v1698
      %1767 = vmatpush1.bf16.msra.mxu0 %v1697
      %1768 = vmatprep.subr.bf16.mxu0 %v1688
      %1769 = vmatpush1.bf16.msra.mxu0 %v1687
      %1770 = vmatprep.subr.bf16.mxu0 %v1678
      %1771 = vmatpush1.bf16.msra.mxu0 %v1677
      %1772 = vmatprep.subr.bf16.mxu0 %v1668
      %1773 = vmatpush1.bf16.msra.mxu0 %v1667
      %1774 = vmatprep.subr.bf16.mxu0 %v1658
      %1775 = vmatpush1.bf16.msra.mxu0 %v1657
      %1776 = vmatprep.subr.bf16.mxu0 %v1648
      %1777 = vmatpush1.bf16.msra.mxu0 %v1647
      %1778 = vmatprep.subr.bf16.mxu0 %v1638
      %1779 = vmatpush1.bf16.msra.mxu0 %v1637
      %1780 = vmatprep.subr.bf16.mxu0 %v1628
      %1781 = vmatpush1.bf16.msra.mxu0 %v1627
      %1782 = vmatprep.subr.bf16.mxu0 0
      %1783 = vmatpush2.bf16.msra.mxu0 0
      %1784 = vmatprep.subr.bf16.mxu0 0
      %1785 = vmatpush2.bf16.msra.mxu0 0
      %1786 = vmatprep.subr.bf16.mxu0 0
      %1787 = vmatpush2.bf16.msra.mxu0 0
      %1788 = vmatprep.subr.bf16.mxu0 0
      %1789 = vmatpush2.bf16.msra.mxu0 0
      %1790 = vmatprep.subr.bf16.mxu0 0
      %1791 = vmatpush2.bf16.msra.mxu0 0
      %1792 = vmatprep.subr.bf16.mxu0 0
      %1793 = vmatpush2.bf16.msra.mxu0 0
      %1794 = vmatprep.subr.bf16.mxu0 0
      %1795 = vmatpush2.bf16.msra.mxu0 0
      %1796 = vmatprep.subr.bf16.mxu0 %v1708
      %1797 = vmatpush2.bf16.msra.mxu0 %v1707
      %1798 = vmatprep.mubr.bf16.mxu0 %v1723
      %1799 = vmatmul.mubr.bf16.gmra.mxu0 %v1718
      %v1800 = vpop.f32.mrf.mxu0
      %v1801 = vadd.f32 0.0, %v1800
      %v1802 = vpop.f32.mrf.mxu0
      %v1803 = vadd.f32 0.0, %v1802
      %v1804 = vpop.f32.mrf.mxu0
      %v1805 = vpop.f32.mrf.mxu0
      %1806 = vdwg.mxu0
      %1807 = vmatprep.subr.bf16.mxu0 %v1700
      %1808 = vmatpush1.bf16.msra.mxu0 %v1699
      %1809 = vmatprep.subr.bf16.mxu0 %v1690
      %1810 = vmatpush1.bf16.msra.mxu0 %v1689
      %1811 = vmatprep.subr.bf16.mxu0 %v1680
      %1812 = vmatpush1.bf16.msra.mxu0 %v1679
      %1813 = vmatprep.subr.bf16.mxu0 %v1670
      %1814 = vmatpush1.bf16.msra.mxu0 %v1669
      %1815 = vmatprep.subr.bf16.mxu0 %v1660
      %1816 = vmatpush1.bf16.msra.mxu0 %v1659
      %1817 = vmatprep.subr.bf16.mxu0 %v1650
      %1818 = vmatpush1.bf16.msra.mxu0 %v1649
      %1819 = vmatprep.subr.bf16.mxu0 %v1640
      %1820 = vmatpush1.bf16.msra.mxu0 %v1639
      %1821 = vmatprep.subr.bf16.mxu0 %v1630
      %1822 = vmatpush1.bf16.msra.mxu0 %v1629
      %1823 = vmatprep.subr.bf16.mxu0 0
      %1824 = vmatpush2.bf16.msra.mxu0 0
      %1825 = vmatprep.subr.bf16.mxu0 0
      %1826 = vmatpush2.bf16.msra.mxu0 0
      %1827 = vmatprep.subr.bf16.mxu0 0
      %1828 = vmatpush2.bf16.msra.mxu0 0
      %1829 = vmatprep.subr.bf16.mxu0 0
      %1830 = vmatpush2.bf16.msra.mxu0 0
      %1831 = vmatprep.subr.bf16.mxu0 0
      %1832 = vmatpush2.bf16.msra.mxu0 0
      %1833 = vmatprep.subr.bf16.mxu0 0
      %1834 = vmatpush2.bf16.msra.mxu0 0
      %1835 = vmatprep.subr.bf16.mxu0 0
      %1836 = vmatpush2.bf16.msra.mxu0 0
      %1837 = vmatprep.subr.bf16.mxu0 %v1710
      %1838 = vmatpush2.bf16.msra.mxu0 %v1709
      %1839 = vmatprep.mubr.bf16.mxu0 %v1723
      %1840 = vmatmul.mubr.bf16.gmra.mxu0 %v1718
      %v1841 = vpop.f32.mrf.mxu0
      %v1842 = vadd.f32 0.0, %v1841
      %v1843 = vpop.f32.mrf.mxu0
      %v1844 = vadd.f32 0.0, %v1843
      %v1845 = vpop.f32.mrf.mxu0
      %v1846 = vpop.f32.mrf.mxu0
      %1847 = vdwg.mxu0
      %1848 = vmatprep.subr.bf16.mxu0 %v1702
      %1849 = vmatpush1.bf16.msra.mxu0 %v1701
      %1850 = vmatprep.subr.bf16.mxu0 %v1692
      %1851 = vmatpush1.bf16.msra.mxu0 %v1691
      %1852 = vmatprep.subr.bf16.mxu0 %v1682
      %1853 = vmatpush1.bf16.msra.mxu0 %v1681
      %1854 = vmatprep.subr.bf16.mxu0 %v1672
      %1855 = vmatpush1.bf16.msra.mxu0 %v1671
      %1856 = vmatprep.subr.bf16.mxu0 %v1662
      %1857 = vmatpush1.bf16.msra.mxu0 %v1661
      %1858 = vmatprep.subr.bf16.mxu0 %v1652
      %1859 = vmatpush1.bf16.msra.mxu0 %v1651
      %1860 = vmatprep.subr.bf16.mxu0 %v1642
      %1861 = vmatpush1.bf16.msra.mxu0 %v1641
      %1862 = vmatprep.subr.bf16.mxu0 %v1632
      %1863 = vmatpush1.bf16.msra.mxu0 %v1631
      %1864 = vmatprep.subr.bf16.mxu0 0
      %1865 = vmatpush2.bf16.msra.mxu0 0
      %1866 = vmatprep.subr.bf16.mxu0 0
      %1867 = vmatpush2.bf16.msra.mxu0 0
      %1868 = vmatprep.subr.bf16.mxu0 0
      %1869 = vmatpush2.bf16.msra.mxu0 0
      %1870 = vmatprep.subr.bf16.mxu0 0
      %1871 = vmatpush2.bf16.msra.mxu0 0
      %1872 = vmatprep.subr.bf16.mxu0 0
      %1873 = vmatpush2.bf16.msra.mxu0 0
      %1874 = vmatprep.subr.bf16.mxu0 0
      %1875 = vmatpush2.bf16.msra.mxu0 0
      %1876 = vmatprep.subr.bf16.mxu0 0
      %1877 = vmatpush2.bf16.msra.mxu0 0
      %1878 = vmatprep.subr.bf16.mxu0 %v1712
      %1879 = vmatpush2.bf16.msra.mxu0 %v1711
      %1880 = vmatprep.mubr.bf16.mxu0 %v1723
      %1881 = vmatmul.mubr.bf16.gmra.mxu0 %v1718
      %v1882 = vpop.f32.mrf.mxu0
      %v1883 = vadd.f32 0.0, %v1882
      %v1884 = vpop.f32.mrf.mxu0
      %v1885 = vadd.f32 0.0, %v1884
      %v1886 = vpop.f32.mrf.mxu0
      %v1887 = vpop.f32.mrf.mxu0
      %1888 = vdwg.mxu0
      %1889 = vmatprep.subr.bf16.mxu0 %v1704
      %1890 = vmatpush1.bf16.msra.mxu0 %v1703
      %1891 = vmatprep.subr.bf16.mxu0 %v1694
      %1892 = vmatpush1.bf16.msra.mxu0 %v1693
      %1893 = vmatprep.subr.bf16.mxu0 %v1684
      %1894 = vmatpush1.bf16.msra.mxu0 %v1683
      %1895 = vmatprep.subr.bf16.mxu0 %v1674
      %1896 = vmatpush1.bf16.msra.mxu0 %v1673
      %1897 = vmatprep.subr.bf16.mxu0 %v1664
      %1898 = vmatpush1.bf16.msra.mxu0 %v1663
      %1899 = vmatprep.subr.bf16.mxu0 %v1654
      %1900 = vmatpush1.bf16.msra.mxu0 %v1653
      %1901 = vmatprep.subr.bf16.mxu0 %v1644
      %1902 = vmatpush1.bf16.msra.mxu0 %v1643
      %1903 = vmatprep.subr.bf16.mxu0 %v1634
      %1904 = vmatpush1.bf16.msra.mxu0 %v1633
      %1905 = vmatprep.subr.bf16.mxu0 0
      %1906 = vmatpush2.bf16.msra.mxu0 0
      %1907 = vmatprep.subr.bf16.mxu0 0
      %1908 = vmatpush2.bf16.msra.mxu0 0
      %1909 = vmatprep.subr.bf16.mxu0 0
      %1910 = vmatpush2.bf16.msra.mxu0 0
      %1911 = vmatprep.subr.bf16.mxu0 0
      %1912 = vmatpush2.bf16.msra.mxu0 0
      %1913 = vmatprep.subr.bf16.mxu0 0
      %1914 = vmatpush2.bf16.msra.mxu0 0
      %1915 = vmatprep.subr.bf16.mxu0 0
      %1916 = vmatpush2.bf16.msra.mxu0 0
      %1917 = vmatprep.subr.bf16.mxu0 0
      %1918 = vmatpush2.bf16.msra.mxu0 0
      %1919 = vmatprep.subr.bf16.mxu0 %v1714
      %1920 = vmatpush2.bf16.msra.mxu0 %v1713
      %1921 = vmatprep.mubr.bf16.mxu0 %v1723
      %1922 = vmatmul.mubr.bf16.gmra.mxu0 %v1718
      %v1923 = vpop.f32.mrf.mxu0
      %v1924 = vadd.f32 0.0, %v1923
      %v1925 = vpop.f32.mrf.mxu0
      %v1926 = vadd.f32 0.0, %v1925
      %v1927 = vpop.f32.mrf.mxu0
      %v1928 = vpop.f32.mrf.mxu0
      %1929 = vdwg.mxu0
      %v1932 = vlaneseq
      %v1933 = vshrl.u32 %v1932, 7
      %v1934 = vsub.s32 0, %v1933
      %v1935 = vrot.slane %v199, %v1934
      %v1936 = vlaneseq
      %v1937 = vshrl.u32 %v1936, 7
      %v1938 = vsub.s32 1, %v1937
      %v1939 = vrot.slane %v199, %v1938
      %v1940 = vlaneseq
      %v1941 = vshrl.u32 %v1940, 7
      %v1942 = vsub.s32 2, %v1941
      %v1943 = vrot.slane %v199, %v1942
      %v1944 = vlaneseq
      %v1945 = vshrl.u32 %v1944, 7
      %v1946 = vsub.s32 3, %v1945
      %v1947 = vrot.slane %v199, %v1946
      %v1948 = vlaneseq
      %v1949 = vshrl.u32 %v1948, 7
      %v1950 = vsub.s32 4, %v1949
      %v1951 = vrot.slane %v199, %v1950
      %v1952 = vlaneseq
      %v1953 = vshrl.u32 %v1952, 7
      %v1954 = vsub.s32 5, %v1953
      %v1955 = vrot.slane %v199, %v1954
      %v1956 = vlaneseq
      %v1957 = vshrl.u32 %v1956, 7
      %v1958 = vsub.s32 6, %v1957
      %v1959 = vrot.slane %v199, %v1958
      %v1960 = vlaneseq
      %v1961 = vshrl.u32 %v1960, 7
      %v1962 = vsub.s32 7, %v1961
      %v1963 = vrot.slane %v199, %v1962
      %v1964 = vlaneseq
      %v1965 = vshrl.u32 %v1964, 7
      %v1966 = vsub.s32 0, %v1965
      %v1967 = vrot.slane %v200, %v1966
      %v1968 = vlaneseq
      %v1969 = vshrl.u32 %v1968, 7
      %v1970 = vsub.s32 1, %v1969
      %v1971 = vrot.slane %v200, %v1970
      %v1982 = vmul.f32 %v1760, %v1935
      %v1983 = vmul.f32 %v1762, %v1939
      %v1984 = vmul.f32 %v1801, %v1943
      %v1985 = vmul.f32 %v1803, %v1947
      %v1986 = vmul.f32 %v1842, %v1951
      %v1987 = vmul.f32 %v1844, %v1955
      %v1988 = vmul.f32 %v1883, %v1959
      %v1989 = vmul.f32 %v1885, %v1963
      %v1990 = vmul.f32 %v1924, %v1967
      %v1991 = vmul.f32 %v1926, %v1971
      %v1992 = vadd.f32 %v1982, %v1983
      %v1993 = vadd.f32 %v1992, %v1984
      %v1994 = vadd.f32 %v1993, %v1985
      %v1995 = vadd.f32 %v1994, %v1986
      %v1996 = vadd.f32 %v1995, %v1987
      %v1997 = vadd.f32 %v1996, %v1988
      %v1998 = vadd.f32 %v1997, %v1989
      %v1999 = vadd.f32 %v1998, %v1990
      %v2000 = vsel %vm240, %v1991, 0.0
      %v2001 = vadd.f32 %v1999, %v2000
      %2002 = vadd.xlane.f32.xlu0 %v2001
      %v2003 = vpop.xlane.xlu0 %2002
      %v2004 = vmul.f32 %v2003, 0.0009765625
      %v2005 = vsub.f32 %v1760, %v2004
      %v2006 = vsub.f32 %v1762, %v2004
      %v2007 = vsub.f32 %v1801, %v2004
      %v2008 = vsub.f32 %v1803, %v2004
      %v2009 = vsub.f32 %v1842, %v2004
      %v2010 = vsub.f32 %v1844, %v2004
      %v2011 = vsub.f32 %v1883, %v2004
      %v2012 = vsub.f32 %v1885, %v2004
      %v2013 = vsub.f32 %v1924, %v2004
      %v2014 = vsub.f32 %v1926, %v2004
      %v2015 = vmul.f32 %v2005, %v1935
      %v2016 = vmul.f32 %v2006, %v1939
      %v2017 = vmul.f32 %v2007, %v1943
      %v2018 = vmul.f32 %v2008, %v1947
      %v2019 = vmul.f32 %v2009, %v1951
      %v2020 = vmul.f32 %v2010, %v1955
      %v2021 = vmul.f32 %v2011, %v1959
      %v2022 = vmul.f32 %v2012, %v1963
      %v2023 = vmul.f32 %v2013, %v1967
      %v2024 = vmul.f32 %v2014, %v1971
      %v2025 = vmul.f32 %v2015, %v2015
      %v2026 = vmul.f32 %v2016, %v2016
      %v2027 = vmul.f32 %v2017, %v2017
      %v2028 = vmul.f32 %v2018, %v2018
      %v2029 = vmul.f32 %v2019, %v2019
      %v2030 = vmul.f32 %v2020, %v2020
      %v2031 = vmul.f32 %v2021, %v2021
      %v2032 = vmul.f32 %v2022, %v2022
      %v2033 = vmul.f32 %v2023, %v2023
      %v2034 = vmul.f32 %v2024, %v2024
      %v2035 = vadd.f32 %v2025, %v2026
      %v2036 = vadd.f32 %v2035, %v2027
      %v2037 = vadd.f32 %v2036, %v2028
      %v2038 = vadd.f32 %v2037, %v2029
      %v2039 = vadd.f32 %v2038, %v2030
      %v2040 = vadd.f32 %v2039, %v2031
      %v2041 = vadd.f32 %v2040, %v2032
      %v2042 = vadd.f32 %v2041, %v2033
      %v2043 = vsel %vm240, %v2034, 0.0
      %v2044 = vadd.f32 %v2042, %v2043
      %2045 = vadd.xlane.f32.xlu0 %v2044
      %v2046 = vpop.xlane.xlu0 %2045
      %v2047 = vmul.f32 %v2046, 0.0009765625
      %v2048 = vadd.f32 %v2047, 1e-05
      %v2049 = vrsqrt.pop %v2048
      %v2050 = vmul.f32 %v2015, %v2049
      %v2051 = vmul.f32 %v2016, %v2049
      %v2052 = vmul.f32 %v2017, %v2049
      %v2053 = vmul.f32 %v2018, %v2049
      %v2054 = vmul.f32 %v2019, %v2049
      %v2055 = vmul.f32 %v2020, %v2049
      %v2056 = vmul.f32 %v2021, %v2049
      %v2057 = vmul.f32 %v2022, %v2049
      %v2058 = vmul.f32 %v2023, %v2049
      %v2059 = vmul.f32 %v2024, %v2049
      %v2060 = vmax.f32 %v2050, 0.0
      %v2061 = vmax.f32 %v2051, 0.0
      %v2062 = vmax.f32 %v2052, 0.0
      %v2063 = vmax.f32 %v2053, 0.0
      %v2064 = vmax.f32 %v2054, 0.0
      %v2065 = vmax.f32 %v2055, 0.0
      %v2066 = vmax.f32 %v2056, 0.0
      %v2067 = vmax.f32 %v2057, 0.0
      %v2068 = vmax.f32 %v2058, 0.0
      %v2069 = vmax.f32 %v2059, 0.0
      %vm2070 = vcmask 285696
      %2071 = vst.msk [vmem:[#allocation3] sm:$0xff] %vm2070, 0.0
      %2082 = vrot.lane.b32.xlu0 %v2060, 35
      %v2083 = vpop.permute.xlu0 %2082
      %2084 = vrot.lane.b32.xlu0 %v2061, 35
      %v2085 = vpop.permute.xlu0 %2084
      %2086 = vrot.lane.b32.xlu0 %v2062, 35
      %v2087 = vpop.permute.xlu0 %2086
      %2088 = vrot.lane.b32.xlu0 %v2063, 35
      %v2089 = vpop.permute.xlu0 %2088
      %2090 = vrot.lane.b32.xlu0 %v2064, 35
      %v2091 = vpop.permute.xlu0 %2090
      %2092 = vrot.lane.b32.xlu0 %v2065, 35
      %v2093 = vpop.permute.xlu0 %2092
      %2094 = vrot.lane.b32.xlu0 %v2066, 35
      %v2095 = vpop.permute.xlu0 %2094
      %2096 = vrot.lane.b32.xlu0 %v2067, 35
      %v2097 = vpop.permute.xlu0 %2096
      %2098 = vrot.lane.b32.xlu0 %v2068, 35
      %v2099 = vpop.permute.xlu0 %2098
      %2100 = vrot.lane.b32.xlu0 %v2069, 35
      %v2101 = vpop.permute.xlu0 %2100
      %v2102 = vsel %vm2070, %v2083, %v2085
      %v2103 = vsel %vm2070, %v2085, %v2087
      %v2104 = vsel %vm2070, %v2087, %v2089
      %v2105 = vsel %vm2070, %v2089, %v2091
      %v2106 = vsel %vm2070, %v2091, %v2093
      %v2107 = vsel %vm2070, %v2093, %v2095
      %v2108 = vsel %vm2070, %v2095, %v2097
      %v2109 = vsel %vm2070, %v2097, %v2099
      %v2110 = vsel %vm2070, %v2099, %v2101
      %vm2121 = vcmask 1047832
      %2122 = vst.msk [vmem:[#allocation3] sm:$0xff] %vm2121, %v2083
      %2123 = vst [vmem:[#allocation3 + $0x8] sm:$0xff] %v2102
      %2124 = vst [vmem:[#allocation3 + $0x10] sm:$0xff] %v2103
      %2125 = vst [vmem:[#allocation3 + $0x18] sm:$0xff] %v2104
      %2126 = vst [vmem:[#allocation3 + $0x20] sm:$0xff] %v2105
      %2127 = vst [vmem:[#allocation3 + $0x28] sm:$0xff] %v2106
      %2128 = vst [vmem:[#allocation3 + $0x30] sm:$0xff] %v2107
      %2129 = vst [vmem:[#allocation3 + $0x38] sm:$0xff] %v2108
      %2130 = vst [vmem:[#allocation3 + $0x40] sm:$0xff] %v2109
      %vm2131 = vcmask 318464
      %2132 = vst.msk [vmem:[#allocation3 + $0x48] sm:$0xff] %vm2131, %v2110
      %vm2133 = vcmask 605496
      %2134 = vst.msk [vmem:[#allocation3 + $0x48] sm:$0xff] %vm2133, 0.0
      %v2135 = vld [vmem:[#allocation3] sm:$0xff]
      %v2136 = vld [vmem:[#allocation3 + $0x8] sm:$0xff]
      %v2137 = vld [vmem:[#allocation3 + $0x10] sm:$0xff]
      %v2138 = vld [vmem:[#allocation3 + $0x18] sm:$0xff]
      %v2139 = vld [vmem:[#allocation3 + $0x20] sm:$0xff]
      %v2140 = vld [vmem:[#allocation3 + $0x28] sm:$0xff]
      %v2141 = vld [vmem:[#allocation3 + $0x30] sm:$0xff]
      %v2142 = vld [vmem:[#allocation3 + $0x38] sm:$0xff]
      %v2143 = vld [vmem:[#allocation3 + $0x40] sm:$0xff]
      %v2144 = vld [vmem:[#allocation3 + $0x48] sm:$0xff]
      %2145 = vst [vmem:[#allocation4] sm:$0xff] %v2135
      %2146 = vst [vmem:[#allocation4 + $0x8] sm:$0xff] %v2136
      %2147 = vst [vmem:[#allocation4 + $0x10] sm:$0xff] %v2137
      %2148 = vst [vmem:[#allocation4 + $0x18] sm:$0xff] %v2138
      %2149 = vst [vmem:[#allocation4 + $0x20] sm:$0xff] %v2139
      %2150 = vst [vmem:[#allocation4 + $0x28] sm:$0xff] %v2140
      %2151 = vst [vmem:[#allocation4 + $0x30] sm:$0xff] %v2141
      %2152 = vst [vmem:[#allocation4 + $0x38] sm:$0xff] %v2142
      %2153 = vst [vmem:[#allocation4 + $0x40] sm:$0xff] %v2143
      %2154 = vst.msk [vmem:[#allocation4 + $0x48] sm:$0xff] %vm240, %v2144
      %v2155 = vld [vmem:[#allocation3] sm:$0xff]
      %v2156 = vld [vmem:[#allocation3 + $0x8] sm:$0xff]
      %v2157 = vld [vmem:[#allocation3 + $0x10] sm:$0xff]
      %v2158 = vld [vmem:[#allocation3 + $0x18] sm:$0xff]
      %v2159 = vld [vmem:[#allocation3 + $0x20] sm:$0xff]
      %v2160 = vld [vmem:[#allocation3 + $0x28] sm:$0xff]
      %v2161 = vld [vmem:[#allocation3 + $0x30] sm:$0xff]
      %v2162 = vld [vmem:[#allocation3 + $0x38] sm:$0xff]
      %v2163 = vld [vmem:[#allocation3 + $0x40] sm:$0xff]
      %v2164 = vld [vmem:[#allocation3 + $0x48] sm:$0xff]
      %2175 = vrot.lane.b32.xlu0 %v2155, 127
      %v2176 = vpop.permute.xlu0 %2175
      %2177 = vrot.lane.b32.xlu0 %v2156, 127
      %v2178 = vpop.permute.xlu0 %2177
      %2179 = vrot.lane.b32.xlu0 %v2157, 127
      %v2180 = vpop.permute.xlu0 %2179
      %2181 = vrot.lane.b32.xlu0 %v2158, 127
      %v2182 = vpop.permute.xlu0 %2181
      %2183 = vrot.lane.b32.xlu0 %v2159, 127
      %v2184 = vpop.permute.xlu0 %2183
      %2185 = vrot.lane.b32.xlu0 %v2160, 127
      %v2186 = vpop.permute.xlu0 %2185
      %2187 = vrot.lane.b32.xlu0 %v2161, 127
      %v2188 = vpop.permute.xlu0 %2187
      %2189 = vrot.lane.b32.xlu0 %v2162, 127
      %v2190 = vpop.permute.xlu0 %2189
      %2191 = vrot.lane.b32.xlu0 %v2163, 127
      %v2192 = vpop.permute.xlu0 %2191
      %2193 = vrot.lane.b32.xlu0 %v2164, 127
      %v2194 = vpop.permute.xlu0 %2193
      %v2195 = vsel %vm342, %v2176, %v2178
      %v2196 = vsel %vm342, %v2178, %v2180
      %v2197 = vsel %vm342, %v2180, %v2182
      %v2198 = vsel %vm342, %v2182, %v2184
      %v2199 = vsel %vm342, %v2184, %v2186
      %v2200 = vsel %vm342, %v2186, %v2188
      %v2201 = vsel %vm342, %v2188, %v2190
      %v2202 = vsel %vm342, %v2190, %v2192
      %v2203 = vsel %vm342, %v2192, %v2194
      %2214 = vst [vmem:[#allocation4 + $0x50] sm:$0xff] %v2195
      %2215 = vst [vmem:[#allocation4 + $0x58] sm:$0xff] %v2196
      %2216 = vst [vmem:[#allocation4 + $0x60] sm:$0xff] %v2197
      %2217 = vst [vmem:[#allocation4 + $0x68] sm:$0xff] %v2198
      %2218 = vst [vmem:[#allocation4 + $0x70] sm:$0xff] %v2199
      %2219 = vst [vmem:[#allocation4 + $0x78] sm:$0xff] %v2200
      %2220 = vst [vmem:[#allocation4 + $0x80] sm:$0xff] %v2201
      %2221 = vst [vmem:[#allocation4 + $0x88] sm:$0xff] %v2202
      %2222 = vst [vmem:[#allocation4 + $0x90] sm:$0xff] %v2203
      %2223 = vst.msk [vmem:[#allocation4 + $0x98] sm:$0xff] %vm240, %v2194
      %v2224 = vld [vmem:[#allocation3] sm:$0xff]
      %v2225 = vld [vmem:[#allocation3 + $0x8] sm:$0xff]
      %v2226 = vld [vmem:[#allocation3 + $0x10] sm:$0xff]
      %v2227 = vld [vmem:[#allocation3 + $0x18] sm:$0xff]
      %v2228 = vld [vmem:[#allocation3 + $0x20] sm:$0xff]
      %v2229 = vld [vmem:[#allocation3 + $0x28] sm:$0xff]
      %v2230 = vld [vmem:[#allocation3 + $0x30] sm:$0xff]
      %v2231 = vld [vmem:[#allocation3 + $0x38] sm:$0xff]
      %v2232 = vld [vmem:[#allocation3 + $0x40] sm:$0xff]
      %v2233 = vld [vmem:[#allocation3 + $0x48] sm:$0xff]
      %2244 = vrot.lane.b32.xlu0 %v2224, 126
      %v2245 = vpop.permute.xlu0 %2244
      %2246 = vrot.lane.b32.xlu0 %v2225, 126
      %v2247 = vpop.permute.xlu0 %2246
      %2248 = vrot.lane.b32.xlu0 %v2226, 126
      %v2249 = vpop.permute.xlu0 %2248
      %2250 = vrot.lane.b32.xlu0 %v2227, 126
      %v2251 = vpop.permute.xlu0 %2250
      %2252 = vrot.lane.b32.xlu0 %v2228, 126
      %v2253 = vpop.permute.xlu0 %2252
      %2254 = vrot.lane.b32.xlu0 %v2229, 126
      %v2255 = vpop.permute.xlu0 %2254
      %2256 = vrot.lane.b32.xlu0 %v2230, 126
      %v2257 = vpop.permute.xlu0 %2256
      %2258 = vrot.lane.b32.xlu0 %v2231, 126
      %v2259 = vpop.permute.xlu0 %2258
      %2260 = vrot.lane.b32.xlu0 %v2232, 126
      %v2261 = vpop.permute.xlu0 %2260
      %2262 = vrot.lane.b32.xlu0 %v2233, 126
      %v2263 = vpop.permute.xlu0 %2262
      %v2264 = vsel %vm491, %v2245, %v2247
      %v2265 = vsel %vm491, %v2247, %v2249
      %v2266 = vsel %vm491, %v2249, %v2251
      %v2267 = vsel %vm491, %v2251, %v2253
      %v2268 = vsel %vm491, %v2253, %v2255
      %v2269 = vsel %vm491, %v2255, %v2257
      %v2270 = vsel %vm491, %v2257, %v2259
      %v2271 = vsel %vm491, %v2259, %v2261
      %v2272 = vsel %vm491, %v2261, %v2263
      %2283 = vst [vmem:[#allocation4 + $0xa0] sm:$0xff] %v2264
      %2284 = vst [vmem:[#allocation4 + $0xa8] sm:$0xff] %v2265
      %2285 = vst [vmem:[#allocation4 + $0xb0] sm:$0xff] %v2266
      %2286 = vst [vmem:[#allocation4 + $0xb8] sm:$0xff] %v2267
      %2287 = vst [vmem:[#allocation4 + $0xc0] sm:$0xff] %v2268
      %2288 = vst [vmem:[#allocation4 + $0xc8] sm:$0xff] %v2269
      %2289 = vst [vmem:[#allocation4 + $0xd0] sm:$0xff] %v2270
      %2290 = vst [vmem:[#allocation4 + $0xd8] sm:$0xff] %v2271
      %2291 = vst [vmem:[#allocation4 + $0xe0] sm:$0xff] %v2272
      %2292 = vst.msk [vmem:[#allocation4 + $0xe8] sm:$0xff] %vm240, %v2263
      %v2293 = vld [vmem:[#allocation3] sm:$0xff]
      %v2294 = vld [vmem:[#allocation3 + $0x8] sm:$0xff]
      %v2295 = vld [vmem:[#allocation3 + $0x10] sm:$0xff]
      %v2296 = vld [vmem:[#allocation3 + $0x18] sm:$0xff]
      %v2297 = vld [vmem:[#allocation3 + $0x20] sm:$0xff]
      %v2298 = vld [vmem:[#allocation3 + $0x28] sm:$0xff]
      %v2299 = vld [vmem:[#allocation3 + $0x30] sm:$0xff]
      %v2300 = vld [vmem:[#allocation3 + $0x38] sm:$0xff]
      %v2301 = vld [vmem:[#allocation3 + $0x40] sm:$0xff]
      %v2302 = vld [vmem:[#allocation3 + $0x48] sm:$0xff]
      %2313 = vrot.lane.b32.xlu0 %v2293, 94
      %v2314 = vpop.permute.xlu0 %2313
      %2315 = vrot.lane.b32.xlu0 %v2294, 94
      %v2316 = vpop.permute.xlu0 %2315
      %2317 = vrot.lane.b32.xlu0 %v2295, 94
      %v2318 = vpop.permute.xlu0 %2317
      %2319 = vrot.lane.b32.xlu0 %v2296, 94
      %v2320 = vpop.permute.xlu0 %2319
      %2321 = vrot.lane.b32.xlu0 %v2297, 94
      %v2322 = vpop.permute.xlu0 %2321
      %2323 = vrot.lane.b32.xlu0 %v2298, 94
      %v2324 = vpop.permute.xlu0 %2323
      %2325 = vrot.lane.b32.xlu0 %v2299, 94
      %v2326 = vpop.permute.xlu0 %2325
      %2327 = vrot.lane.b32.xlu0 %v2300, 94
      %v2328 = vpop.permute.xlu0 %2327
      %2329 = vrot.lane.b32.xlu0 %v2301, 94
      %v2330 = vpop.permute.xlu0 %2329
      %2331 = vrot.lane.b32.xlu0 %v2302, 94
      %v2332 = vpop.permute.xlu0 %2331
      %v2333 = vsel %vm640, %v2314, %v2316
      %v2334 = vsel %vm640, %v2316, %v2318
      %v2335 = vsel %vm640, %v2318, %v2320
      %v2336 = vsel %vm640, %v2320, %v2322
      %v2337 = vsel %vm640, %v2322, %v2324
      %v2338 = vsel %vm640, %v2324, %v2326
      %v2339 = vsel %vm640, %v2326, %v2328
      %v2340 = vsel %vm640, %v2328, %v2330
      %v2341 = vsel %vm640, %v2330, %v2332
      %2352 = vst [vmem:[#allocation4 + $0xf0] sm:$0xff] %v2333
      %2353 = vst [vmem:[#allocation4 + $0xf8] sm:$0xff] %v2334
      %2354 = vst [vmem:[#allocation4 + $0x100] sm:$0xff] %v2335
      %2355 = vst [vmem:[#allocation4 + $0x108] sm:$0xff] %v2336
      %2356 = vst [vmem:[#allocation4 + $0x110] sm:$0xff] %v2337
      %2357 = vst [vmem:[#allocation4 + $0x118] sm:$0xff] %v2338
      %2358 = vst [vmem:[#allocation4 + $0x120] sm:$0xff] %v2339
      %2359 = vst [vmem:[#allocation4 + $0x128] sm:$0xff] %v2340
      %2360 = vst [vmem:[#allocation4 + $0x130] sm:$0xff] %v2341
      %2361 = vst.msk [vmem:[#allocation4 + $0x138] sm:$0xff] %vm240, %v2332
      %v2362 = vld [vmem:[#allocation3] sm:$0xff]
      %v2363 = vld [vmem:[#allocation3 + $0x8] sm:$0xff]
      %v2364 = vld [vmem:[#allocation3 + $0x10] sm:$0xff]
      %v2365 = vld [vmem:[#allocation3 + $0x18] sm:$0xff]
      %v2366 = vld [vmem:[#allocation3 + $0x20] sm:$0xff]
      %v2367 = vld [vmem:[#allocation3 + $0x28] sm:$0xff]
      %v2368 = vld [vmem:[#allocation3 + $0x30] sm:$0xff]
      %v2369 = vld [vmem:[#allocation3 + $0x38] sm:$0xff]
      %v2370 = vld [vmem:[#allocation3 + $0x40] sm:$0xff]
      %v2371 = vld [vmem:[#allocation3 + $0x48] sm:$0xff]
      %2382 = vrot.lane.b32.xlu0 %v2362, 93
      %v2383 = vpop.permute.xlu0 %2382
      %2384 = vrot.lane.b32.xlu0 %v2363, 93
      %v2385 = vpop.permute.xlu0 %2384
      %2386 = vrot.lane.b32.xlu0 %v2364, 93
      %v2387 = vpop.permute.xlu0 %2386
      %2388 = vrot.lane.b32.xlu0 %v2365, 93
      %v2389 = vpop.permute.xlu0 %2388
      %2390 = vrot.lane.b32.xlu0 %v2366, 93
      %v2391 = vpop.permute.xlu0 %2390
      %2392 = vrot.lane.b32.xlu0 %v2367, 93
      %v2393 = vpop.permute.xlu0 %2392
      %2394 = vrot.lane.b32.xlu0 %v2368, 93
      %v2395 = vpop.permute.xlu0 %2394
      %2396 = vrot.lane.b32.xlu0 %v2369, 93
      %v2397 = vpop.permute.xlu0 %2396
      %2398 = vrot.lane.b32.xlu0 %v2370, 93
      %v2399 = vpop.permute.xlu0 %2398
      %2400 = vrot.lane.b32.xlu0 %v2371, 93
      %v2401 = vpop.permute.xlu0 %2400
      %v2402 = vsel %vm789, %v2383, %v2385
      %v2403 = vsel %vm789, %v2385, %v2387
      %v2404 = vsel %vm789, %v2387, %v2389
      %v2405 = vsel %vm789, %v2389, %v2391
      %v2406 = vsel %vm789, %v2391, %v2393
      %v2407 = vsel %vm789, %v2393, %v2395
      %v2408 = vsel %vm789, %v2395, %v2397
      %v2409 = vsel %vm789, %v2397, %v2399
      %v2410 = vsel %vm789, %v2399, %v2401
      %2421 = vst [vmem:[#allocation4 + $0x140] sm:$0xff] %v2402
      %2422 = vst [vmem:[#allocation4 + $0x148] sm:$0xff] %v2403
      %2423 = vst [vmem:[#allocation4 + $0x150] sm:$0xff] %v2404
      %2424 = vst [vmem:[#allocation4 + $0x158] sm:$0xff] %v2405
      %2425 = vst [vmem:[#allocation4 + $0x160] sm:$0xff] %v2406
      %2426 = vst [vmem:[#allocation4 + $0x168] sm:$0xff] %v2407
      %2427 = vst [vmem:[#allocation4 + $0x170] sm:$0xff] %v2408
      %2428 = vst [vmem:[#allocation4 + $0x178] sm:$0xff] %v2409
      %2429 = vst [vmem:[#allocation4 + $0x180] sm:$0xff] %v2410
      %2430 = vst.msk [vmem:[#allocation4 + $0x188] sm:$0xff] %vm240, %v2401
      %v2431 = vld [vmem:[#allocation3] sm:$0xff]
      %v2432 = vld [vmem:[#allocation3 + $0x8] sm:$0xff]
      %v2433 = vld [vmem:[#allocation3 + $0x10] sm:$0xff]
      %v2434 = vld [vmem:[#allocation3 + $0x18] sm:$0xff]
      %v2435 = vld [vmem:[#allocation3 + $0x20] sm:$0xff]
      %v2436 = vld [vmem:[#allocation3 + $0x28] sm:$0xff]
      %v2437 = vld [vmem:[#allocation3 + $0x30] sm:$0xff]
      %v2438 = vld [vmem:[#allocation3 + $0x38] sm:$0xff]
      %v2439 = vld [vmem:[#allocation3 + $0x40] sm:$0xff]
      %v2440 = vld [vmem:[#allocation3 + $0x48] sm:$0xff]
      %2451 = vrot.lane.b32.xlu0 %v2431, 92
      %v2452 = vpop.permute.xlu0 %2451
      %2453 = vrot.lane.b32.xlu0 %v2432, 92
      %v2454 = vpop.permute.xlu0 %2453
      %2455 = vrot.lane.b32.xlu0 %v2433, 92
      %v2456 = vpop.permute.xlu0 %2455
      %2457 = vrot.lane.b32.xlu0 %v2434, 92
      %v2458 = vpop.permute.xlu0 %2457
      %2459 = vrot.lane.b32.xlu0 %v2435, 92
      %v2460 = vpop.permute.xlu0 %2459
      %2461 = vrot.lane.b32.xlu0 %v2436, 92
      %v2462 = vpop.permute.xlu0 %2461
      %2463 = vrot.lane.b32.xlu0 %v2437, 92
      %v2464 = vpop.permute.xlu0 %2463
      %2465 = vrot.lane.b32.xlu0 %v2438, 92
      %v2466 = vpop.permute.xlu0 %2465
      %2467 = vrot.lane.b32.xlu0 %v2439, 92
      %v2468 = vpop.permute.xlu0 %2467
      %2469 = vrot.lane.b32.xlu0 %v2440, 92
      %v2470 = vpop.permute.xlu0 %2469
      %v2471 = vsel %vm938, %v2452, %v2454
      %v2472 = vsel %vm938, %v2454, %v2456
      %v2473 = vsel %vm938, %v2456, %v2458
      %v2474 = vsel %vm938, %v2458, %v2460
      %v2475 = vsel %vm938, %v2460, %v2462
      %v2476 = vsel %vm938, %v2462, %v2464
      %v2477 = vsel %vm938, %v2464, %v2466
      %v2478 = vsel %vm938, %v2466, %v2468
      %v2479 = vsel %vm938, %v2468, %v2470
      %2490 = vst [vmem:[#allocation4 + $0x190] sm:$0xff] %v2471
      %2491 = vst [vmem:[#allocation4 + $0x198] sm:$0xff] %v2472
      %2492 = vst [vmem:[#allocation4 + $0x1a0] sm:$0xff] %v2473
      %2493 = vst [vmem:[#allocation4 + $0x1a8] sm:$0xff] %v2474
      %2494 = vst [vmem:[#allocation4 + $0x1b0] sm:$0xff] %v2475
      %2495 = vst [vmem:[#allocation4 + $0x1b8] sm:$0xff] %v2476
      %2496 = vst [vmem:[#allocation4 + $0x1c0] sm:$0xff] %v2477
      %2497 = vst [vmem:[#allocation4 + $0x1c8] sm:$0xff] %v2478
      %2498 = vst [vmem:[#allocation4 + $0x1d0] sm:$0xff] %v2479
      %2499 = vst.msk [vmem:[#allocation4 + $0x1d8] sm:$0xff] %vm240, %v2470
      %v2500 = vld [vmem:[#allocation3] sm:$0xff]
      %v2501 = vld [vmem:[#allocation3 + $0x8] sm:$0xff]
      %v2502 = vld [vmem:[#allocation3 + $0x10] sm:$0xff]
      %v2503 = vld [vmem:[#allocation3 + $0x18] sm:$0xff]
      %v2504 = vld [vmem:[#allocation3 + $0x20] sm:$0xff]
      %v2505 = vld [vmem:[#allocation3 + $0x28] sm:$0xff]
      %v2506 = vld [vmem:[#allocation3 + $0x30] sm:$0xff]
      %v2507 = vld [vmem:[#allocation3 + $0x38] sm:$0xff]
      %v2508 = vld [vmem:[#allocation3 + $0x40] sm:$0xff]
      %v2509 = vld [vmem:[#allocation3 + $0x48] sm:$0xff]
      %2520 = vrot.lane.b32.xlu0 %v2500, 60
      %v2521 = vpop.permute.xlu0 %2520
      %2522 = vrot.lane.b32.xlu0 %v2501, 60
      %v2523 = vpop.permute.xlu0 %2522
      %2524 = vrot.lane.b32.xlu0 %v2502, 60
      %v2525 = vpop.permute.xlu0 %2524
      %2526 = vrot.lane.b32.xlu0 %v2503, 60
      %v2527 = vpop.permute.xlu0 %2526
      %2528 = vrot.lane.b32.xlu0 %v2504, 60
      %v2529 = vpop.permute.xlu0 %2528
      %2530 = vrot.lane.b32.xlu0 %v2505, 60
      %v2531 = vpop.permute.xlu0 %2530
      %2532 = vrot.lane.b32.xlu0 %v2506, 60
      %v2533 = vpop.permute.xlu0 %2532
      %2534 = vrot.lane.b32.xlu0 %v2507, 60
      %v2535 = vpop.permute.xlu0 %2534
      %2536 = vrot.lane.b32.xlu0 %v2508, 60
      %v2537 = vpop.permute.xlu0 %2536
      %2538 = vrot.lane.b32.xlu0 %v2509, 60
      %v2539 = vpop.permute.xlu0 %2538
      %v2540 = vsel %vm1087, %v2521, %v2523
      %v2541 = vsel %vm1087, %v2523, %v2525
      %v2542 = vsel %vm1087, %v2525, %v2527
      %v2543 = vsel %vm1087, %v2527, %v2529
      %v2544 = vsel %vm1087, %v2529, %v2531
      %v2545 = vsel %vm1087, %v2531, %v2533
      %v2546 = vsel %vm1087, %v2533, %v2535
      %v2547 = vsel %vm1087, %v2535, %v2537
      %v2548 = vsel %vm1087, %v2537, %v2539
      %2559 = vst [vmem:[#allocation4 + $0x1e0] sm:$0xff] %v2540
      %2560 = vst [vmem:[#allocation4 + $0x1e8] sm:$0xff] %v2541
      %2561 = vst [vmem:[#allocation4 + $0x1f0] sm:$0xff] %v2542
      %2562 = vst [vmem:[#allocation4 + $0x1f8] sm:$0xff] %v2543
      %2563 = vst [vmem:[#allocation4 + $0x200] sm:$0xff] %v2544
      %2564 = vst [vmem:[#allocation4 + $0x208] sm:$0xff] %v2545
      %2565 = vst [vmem:[#allocation4 + $0x210] sm:$0xff] %v2546
      %2566 = vst [vmem:[#allocation4 + $0x218] sm:$0xff] %v2547
      %2567 = vst [vmem:[#allocation4 + $0x220] sm:$0xff] %v2548
      %2568 = vst.msk [vmem:[#allocation4 + $0x228] sm:$0xff] %vm240, %v2539
      %v2569 = vld [vmem:[#allocation3] sm:$0xff]
      %v2570 = vld [vmem:[#allocation3 + $0x8] sm:$0xff]
      %v2571 = vld [vmem:[#allocation3 + $0x10] sm:$0xff]
      %v2572 = vld [vmem:[#allocation3 + $0x18] sm:$0xff]
      %v2573 = vld [vmem:[#allocation3 + $0x20] sm:$0xff]
      %v2574 = vld [vmem:[#allocation3 + $0x28] sm:$0xff]
      %v2575 = vld [vmem:[#allocation3 + $0x30] sm:$0xff]
      %v2576 = vld [vmem:[#allocation3 + $0x38] sm:$0xff]
      %v2577 = vld [vmem:[#allocation3 + $0x40] sm:$0xff]
      %v2578 = vld [vmem:[#allocation3 + $0x48] sm:$0xff]
      %2589 = vrot.lane.b32.xlu0 %v2569, 59
      %v2590 = vpop.permute.xlu0 %2589
      %2591 = vrot.lane.b32.xlu0 %v2570, 59
      %v2592 = vpop.permute.xlu0 %2591
      %2593 = vrot.lane.b32.xlu0 %v2571, 59
      %v2594 = vpop.permute.xlu0 %2593
      %2595 = vrot.lane.b32.xlu0 %v2572, 59
      %v2596 = vpop.permute.xlu0 %2595
      %2597 = vrot.lane.b32.xlu0 %v2573, 59
      %v2598 = vpop.permute.xlu0 %2597
      %2599 = vrot.lane.b32.xlu0 %v2574, 59
      %v2600 = vpop.permute.xlu0 %2599
      %2601 = vrot.lane.b32.xlu0 %v2575, 59
      %v2602 = vpop.permute.xlu0 %2601
      %2603 = vrot.lane.b32.xlu0 %v2576, 59
      %v2604 = vpop.permute.xlu0 %2603
      %2605 = vrot.lane.b32.xlu0 %v2577, 59
      %v2606 = vpop.permute.xlu0 %2605
      %2607 = vrot.lane.b32.xlu0 %v2578, 59
      %v2608 = vpop.permute.xlu0 %2607
      %v2609 = vsel %vm1236, %v2590, %v2592
      %v2610 = vsel %vm1236, %v2592, %v2594
      %v2611 = vsel %vm1236, %v2594, %v2596
      %v2612 = vsel %vm1236, %v2596, %v2598
      %v2613 = vsel %vm1236, %v2598, %v2600
      %v2614 = vsel %vm1236, %v2600, %v2602
      %v2615 = vsel %vm1236, %v2602, %v2604
      %v2616 = vsel %vm1236, %v2604, %v2606
      %v2617 = vsel %vm1236, %v2606, %v2608
      %2628 = vst [vmem:[#allocation4 + $0x230] sm:$0xff] %v2609
      %2629 = vst [vmem:[#allocation4 + $0x238] sm:$0xff] %v2610
      %2630 = vst [vmem:[#allocation4 + $0x240] sm:$0xff] %v2611
      %2631 = vst [vmem:[#allocation4 + $0x248] sm:$0xff] %v2612
      %2632 = vst [vmem:[#allocation4 + $0x250] sm:$0xff] %v2613
      %2633 = vst [vmem:[#allocation4 + $0x258] sm:$0xff] %v2614
      %2634 = vst [vmem:[#allocation4 + $0x260] sm:$0xff] %v2615
      %2635 = vst [vmem:[#allocation4 + $0x268] sm:$0xff] %v2616
      %2636 = vst [vmem:[#allocation4 + $0x270] sm:$0xff] %v2617
      %2637 = vst.msk [vmem:[#allocation4 + $0x278] sm:$0xff] %vm240, %v2608
      %v2638 = vld [vmem:[#allocation3] sm:$0xff]
      %v2639 = vld [vmem:[#allocation3 + $0x8] sm:$0xff]
      %v2640 = vld [vmem:[#allocation3 + $0x10] sm:$0xff]
      %v2641 = vld [vmem:[#allocation3 + $0x18] sm:$0xff]
      %v2642 = vld [vmem:[#allocation3 + $0x20] sm:$0xff]
      %v2643 = vld [vmem:[#allocation3 + $0x28] sm:$0xff]
      %v2644 = vld [vmem:[#allocation3 + $0x30] sm:$0xff]
      %v2645 = vld [vmem:[#allocation3 + $0x38] sm:$0xff]
      %v2646 = vld [vmem:[#allocation3 + $0x40] sm:$0xff]
      %v2647 = vld [vmem:[#allocation3 + $0x48] sm:$0xff]
      %2658 = vrot.lane.b32.xlu0 %v2638, 58
      %v2659 = vpop.permute.xlu0 %2658
      %2660 = vrot.lane.b32.xlu0 %v2639, 58
      %v2661 = vpop.permute.xlu0 %2660
      %2662 = vrot.lane.b32.xlu0 %v2640, 58
      %v2663 = vpop.permute.xlu0 %2662
      %2664 = vrot.lane.b32.xlu0 %v2641, 58
      %v2665 = vpop.permute.xlu0 %2664
      %2666 = vrot.lane.b32.xlu0 %v2642, 58
      %v2667 = vpop.permute.xlu0 %2666
      %2668 = vrot.lane.b32.xlu0 %v2643, 58
      %v2669 = vpop.permute.xlu0 %2668
      %2670 = vrot.lane.b32.xlu0 %v2644, 58
      %v2671 = vpop.permute.xlu0 %2670
      %2672 = vrot.lane.b32.xlu0 %v2645, 58
      %v2673 = vpop.permute.xlu0 %2672
      %2674 = vrot.lane.b32.xlu0 %v2646, 58
      %v2675 = vpop.permute.xlu0 %2674
      %2676 = vrot.lane.b32.xlu0 %v2647, 58
      %v2677 = vpop.permute.xlu0 %2676
      %v2678 = vsel %vm1385, %v2659, %v2661
      %v2679 = vsel %vm1385, %v2661, %v2663
      %v2680 = vsel %vm1385, %v2663, %v2665
      %v2681 = vsel %vm1385, %v2665, %v2667
      %v2682 = vsel %vm1385, %v2667, %v2669
      %v2683 = vsel %vm1385, %v2669, %v2671
      %v2684 = vsel %vm1385, %v2671, %v2673
      %v2685 = vsel %vm1385, %v2673, %v2675
      %v2686 = vsel %vm1385, %v2675, %v2677
      %2697 = vst [vmem:[#allocation4 + $0x280] sm:$0xff] %v2678
      %2698 = vst [vmem:[#allocation4 + $0x288] sm:$0xff] %v2679
      %2699 = vst [vmem:[#allocation4 + $0x290] sm:$0xff] %v2680
      %2700 = vst [vmem:[#allocation4 + $0x298] sm:$0xff] %v2681
      %2701 = vst [vmem:[#allocation4 + $0x2a0] sm:$0xff] %v2682
      %2702 = vst [vmem:[#allocation4 + $0x2a8] sm:$0xff] %v2683
      %2703 = vst [vmem:[#allocation4 + $0x2b0] sm:$0xff] %v2684
      %2704 = vst [vmem:[#allocation4 + $0x2b8] sm:$0xff] %v2685
      %2705 = vst [vmem:[#allocation4 + $0x2c0] sm:$0xff] %v2686
      %2706 = vst.msk [vmem:[#allocation4 + $0x2c8] sm:$0xff] %vm240, %v2677
      %v2707 = vld [vmem:[%s2] sm:$0xf]
      %v2708 = vld [vmem:[#allocation4] sm:$0xff]
      %v2709 = vld [vmem:[#allocation4 + $0x8] sm:$0xff]
      %v2710 = vld [vmem:[#allocation4 + $0x10] sm:$0xff]
      %v2711 = vld [vmem:[#allocation4 + $0x18] sm:$0xff]
      %v2712 = vld [vmem:[#allocation4 + $0x20] sm:$0xff]
      %v2713 = vld [vmem:[#allocation4 + $0x28] sm:$0xff]
      %v2714 = vld [vmem:[#allocation4 + $0x30] sm:$0xff]
      %v2715 = vld [vmem:[#allocation4 + $0x38] sm:$0xff]
      %v2716 = vld [vmem:[#allocation4 + $0x40] sm:$0xff]
      %v2717 = vld [vmem:[#allocation4 + $0x48] sm:$0xff]
      %v2718 = vld [vmem:[#allocation4 + $0x50] sm:$0xff]
      %v2719 = vld [vmem:[#allocation4 + $0x58] sm:$0xff]
      %v2720 = vld [vmem:[#allocation4 + $0x60] sm:$0xff]
      %v2721 = vld [vmem:[#allocation4 + $0x68] sm:$0xff]
      %v2722 = vld [vmem:[#allocation4 + $0x70] sm:$0xff]
      %v2723 = vld [vmem:[#allocation4 + $0x78] sm:$0xff]
      %v2724 = vld [vmem:[#allocation4 + $0x80] sm:$0xff]
      %v2725 = vld [vmem:[#allocation4 + $0x88] sm:$0xff]
      %v2726 = vld [vmem:[#allocation4 + $0x90] sm:$0xff]
      %v2727 = vld [vmem:[#allocation4 + $0x98] sm:$0xff]
      %v2728 = vld [vmem:[#allocation4 + $0xa0] sm:$0xff]
      %v2729 = vld [vmem:[#allocation4 + $0xa8] sm:$0xff]
      %v2730 = vld [vmem:[#allocation4 + $0xb0] sm:$0xff]
      %v2731 = vld [vmem:[#allocation4 + $0xb8] sm:$0xff]
      %v2732 = vld [vmem:[#allocation4 + $0xc0] sm:$0xff]
      %v2733 = vld [vmem:[#allocation4 + $0xc8] sm:$0xff]
      %v2734 = vld [vmem:[#allocation4 + $0xd0] sm:$0xff]
      %v2735 = vld [vmem:[#allocation4 + $0xd8] sm:$0xff]
      %v2736 = vld [vmem:[#allocation4 + $0xe0] sm:$0xff]
      %v2737 = vld [vmem:[#allocation4 + $0xe8] sm:$0xff]
      %v2738 = vld [vmem:[#allocation4 + $0xf0] sm:$0xff]
      %v2739 = vld [vmem:[#allocation4 + $0xf8] sm:$0xff]
      %v2740 = vld [vmem:[#allocation4 + $0x100] sm:$0xff]
      %v2741 = vld [vmem:[#allocation4 + $0x108] sm:$0xff]
      %v2742 = vld [vmem:[#allocation4 + $0x110] sm:$0xff]
      %v2743 = vld [vmem:[#allocation4 + $0x118] sm:$0xff]
      %v2744 = vld [vmem:[#allocation4 + $0x120] sm:$0xff]
      %v2745 = vld [vmem:[#allocation4 + $0x128] sm:$0xff]
      %v2746 = vld [vmem:[#allocation4 + $0x130] sm:$0xff]
      %v2747 = vld [vmem:[#allocation4 + $0x138] sm:$0xff]
      %v2748 = vld [vmem:[#allocation4 + $0x140] sm:$0xff]
      %v2749 = vld [vmem:[#allocation4 + $0x148] sm:$0xff]
      %v2750 = vld [vmem:[#allocation4 + $0x150] sm:$0xff]
      %v2751 = vld [vmem:[#allocation4 + $0x158] sm:$0xff]
      %v2752 = vld [vmem:[#allocation4 + $0x160] sm:$0xff]
      %v2753 = vld [vmem:[#allocation4 + $0x168] sm:$0xff]
      %v2754 = vld [vmem:[#allocation4 + $0x170] sm:$0xff]
      %v2755 = vld [vmem:[#allocation4 + $0x178] sm:$0xff]
      %v2756 = vld [vmem:[#allocation4 + $0x180] sm:$0xff]
      %v2757 = vld [vmem:[#allocation4 + $0x188] sm:$0xff]
      %v2758 = vld [vmem:[#allocation4 + $0x190] sm:$0xff]
      %v2759 = vld [vmem:[#allocation4 + $0x198] sm:$0xff]
      %v2760 = vld [vmem:[#allocation4 + $0x1a0] sm:$0xff]
      %v2761 = vld [vmem:[#allocation4 + $0x1a8] sm:$0xff]
      %v2762 = vld [vmem:[#allocation4 + $0x1b0] sm:$0xff]
      %v2763 = vld [vmem:[#allocation4 + $0x1b8] sm:$0xff]
      %v2764 = vld [vmem:[#allocation4 + $0x1c0] sm:$0xff]
      %v2765 = vld [vmem:[#allocation4 + $0x1c8] sm:$0xff]
      %v2766 = vld [vmem:[#allocation4 + $0x1d0] sm:$0xff]
      %v2767 = vld [vmem:[#allocation4 + $0x1d8] sm:$0xff]
      %v2768 = vld [vmem:[#allocation4 + $0x1e0] sm:$0xff]
      %v2769 = vld [vmem:[#allocation4 + $0x1e8] sm:$0xff]
      %v2770 = vld [vmem:[#allocation4 + $0x1f0] sm:$0xff]
      %v2771 = vld [vmem:[#allocation4 + $0x1f8] sm:$0xff]
      %v2772 = vld [vmem:[#allocation4 + $0x200] sm:$0xff]
      %v2773 = vld [vmem:[#allocation4 + $0x208] sm:$0xff]
      %v2774 = vld [vmem:[#allocation4 + $0x210] sm:$0xff]
      %v2775 = vld [vmem:[#allocation4 + $0x218] sm:$0xff]
      %v2776 = vld [vmem:[#allocation4 + $0x220] sm:$0xff]
      %v2777 = vld [vmem:[#allocation4 + $0x228] sm:$0xff]
      %v2778 = vld [vmem:[#allocation4 + $0x230] sm:$0xff]
      %v2779 = vld [vmem:[#allocation4 + $0x238] sm:$0xff]
      %v2780 = vld [vmem:[#allocation4 + $0x240] sm:$0xff]
      %v2781 = vld [vmem:[#allocation4 + $0x248] sm:$0xff]
      %v2782 = vld [vmem:[#allocation4 + $0x250] sm:$0xff]
      %v2783 = vld [vmem:[#allocation4 + $0x258] sm:$0xff]
      %v2784 = vld [vmem:[#allocation4 + $0x260] sm:$0xff]
      %v2785 = vld [vmem:[#allocation4 + $0x268] sm:$0xff]
      %v2786 = vld [vmem:[#allocation4 + $0x270] sm:$0xff]
      %v2787 = vld [vmem:[#allocation4 + $0x278] sm:$0xff]
      %v2788 = vld [vmem:[#allocation4 + $0x280] sm:$0xff]
      %v2789 = vld [vmem:[#allocation4 + $0x288] sm:$0xff]
      %v2790 = vld [vmem:[#allocation4 + $0x290] sm:$0xff]
      %v2791 = vld [vmem:[#allocation4 + $0x298] sm:$0xff]
      %v2792 = vld [vmem:[#allocation4 + $0x2a0] sm:$0xff]
      %v2793 = vld [vmem:[#allocation4 + $0x2a8] sm:$0xff]
      %v2794 = vld [vmem:[#allocation4 + $0x2b0] sm:$0xff]
      %v2795 = vld [vmem:[#allocation4 + $0x2b8] sm:$0xff]
      %v2796 = vld [vmem:[#allocation4 + $0x2c0] sm:$0xff]
      %v2797 = vld [vmem:[#allocation4 + $0x2c8] sm:$0xff]
      %v2798 = vpack.c.bf16 %v2718, %v2708
      %v2799 = vpack.c.bf16 %v2719, %v2709
      %v2800 = vpack.c.bf16 %v2720, %v2710
      %v2801 = vpack.c.bf16 %v2721, %v2711
      %v2802 = vpack.c.bf16 %v2722, %v2712
      %v2803 = vpack.c.bf16 %v2723, %v2713
      %v2804 = vpack.c.bf16 %v2724, %v2714
      %v2805 = vpack.c.bf16 %v2725, %v2715
      %v2806 = vpack.c.bf16 %v2726, %v2716
      %v2807 = vpack.c.bf16 %v2727, %v2717
      %v2808 = vpack.c.bf16 %v2738, %v2728
      %v2809 = vpack.c.bf16 %v2739, %v2729
      %v2810 = vpack.c.bf16 %v2740, %v2730
      %v2811 = vpack.c.bf16 %v2741, %v2731
      %v2812 = vpack.c.bf16 %v2742, %v2732
      %v2813 = vpack.c.bf16 %v2743, %v2733
      %v2814 = vpack.c.bf16 %v2744, %v2734
      %v2815 = vpack.c.bf16 %v2745, %v2735
      %v2816 = vpack.c.bf16 %v2746, %v2736
      %v2817 = vpack.c.bf16 %v2747, %v2737
      %v2818 = vpack.c.bf16 %v2758, %v2748
      %v2819 = vpack.c.bf16 %v2759, %v2749
      %v2820 = vpack.c.bf16 %v2760, %v2750
      %v2821 = vpack.c.bf16 %v2761, %v2751
      %v2822 = vpack.c.bf16 %v2762, %v2752
      %v2823 = vpack.c.bf16 %v2763, %v2753
      %v2824 = vpack.c.bf16 %v2764, %v2754
      %v2825 = vpack.c.bf16 %v2765, %v2755
      %v2826 = vpack.c.bf16 %v2766, %v2756
      %v2827 = vpack.c.bf16 %v2767, %v2757
      %v2828 = vpack.c.bf16 %v2778, %v2768
      %v2829 = vpack.c.bf16 %v2779, %v2769
      %v2830 = vpack.c.bf16 %v2780, %v2770
      %v2831 = vpack.c.bf16 %v2781, %v2771
      %v2832 = vpack.c.bf16 %v2782, %v2772
      %v2833 = vpack.c.bf16 %v2783, %v2773
      %v2834 = vpack.c.bf16 %v2784, %v2774
      %v2835 = vpack.c.bf16 %v2785, %v2775
      %v2836 = vpack.c.bf16 %v2786, %v2776
      %v2837 = vpack.c.bf16 %v2787, %v2777
      %v2838 = vpack.c.bf16 %v2788, %v2788
      %v2839 = vpack.c.bf16 %v2789, %v2789
      %v2840 = vpack.c.bf16 %v2790, %v2790
      %v2841 = vpack.c.bf16 %v2791, %v2791
      %v2842 = vpack.c.bf16 %v2792, %v2792
      %v2843 = vpack.c.bf16 %v2793, %v2793
      %v2844 = vpack.c.bf16 %v2794, %v2794
      %v2845 = vpack.c.bf16 %v2795, %v2795
      %v2846 = vpack.c.bf16 %v2796, %v2796
      %v2847 = vpack.c.bf16 %v2797, %v2797
      %vm2848 = vcmask 588800
      %v2850 = vsel %vm2848, %v2707, 0
      %vm2852 = vcmask 1043456
      %v2854 = vsel %vm2852, %v2838, 0
      %v2857 = vsel %vm2852, %v2839, 0
      %v2860 = vsel %vm2852, %v2840, 0
      %v2863 = vsel %vm2852, %v2841, 0
      %v2866 = vsel %vm2852, %v2842, 0
      %v2869 = vsel %vm2852, %v2843, 0
      %v2872 = vsel %vm2852, %v2844, 0
      %v2875 = vsel %vm2852, %v2845, 0
      %v2878 = vsel %vm2852, %v2846, 0
      %v2881 = vsel %vm2852, %v2847, 0
      %2883 = vmatprep.subr.bf16.mxu0 0
      %2884 = vmatpush1.bf16.msra.mxu0 0
      %2885 = vmatprep.subr.bf16.mxu0 0
      %2886 = vmatpush1.bf16.msra.mxu0 0
      %2887 = vmatprep.subr.bf16.mxu0 0
      %2888 = vmatpush1.bf16.msra.mxu0 0
      %2889 = vmatprep.subr.bf16.mxu0 %v2857
      %2890 = vmatpush1.bf16.msra.mxu0 %v2854
      %2891 = vmatprep.subr.bf16.mxu0 %v2829
      %2892 = vmatpush1.bf16.msra.mxu0 %v2828
      %2893 = vmatprep.subr.bf16.mxu0 %v2819
      %2894 = vmatpush1.bf16.msra.mxu0 %v2818
      %2895 = vmatprep.subr.bf16.mxu0 %v2809
      %2896 = vmatpush1.bf16.msra.mxu0 %v2808
      %2897 = vmatprep.subr.bf16.mxu0 %v2799
      %2898 = vmatpush1.bf16.msra.mxu0 %v2798
      %2899 = vmatprep.subr.bf16.mxu0 0
      %2900 = vmatpush2.bf16.msra.mxu0 0
      %2901 = vmatprep.subr.bf16.mxu0 0
      %2902 = vmatpush2.bf16.msra.mxu0 0
      %2903 = vmatprep.subr.bf16.mxu0 0
      %2904 = vmatpush2.bf16.msra.mxu0 0
      %2905 = vmatprep.subr.bf16.mxu0 0
      %2906 = vmatpush2.bf16.msra.mxu0 0
      %2907 = vmatprep.subr.bf16.mxu0 0
      %2908 = vmatpush2.bf16.msra.mxu0 0
      %2909 = vmatprep.subr.bf16.mxu0 0
      %2910 = vmatpush2.bf16.msra.mxu0 0
      %2911 = vmatprep.subr.bf16.mxu0 0
      %2912 = vmatpush2.bf16.msra.mxu0 0
      %2913 = vmatprep.subr.bf16.mxu0 0
      %2914 = vmatpush2.bf16.msra.mxu0 0
      %2915 = vmatprep.mubr.bf16.mxu0 0
      %2916 = vmatmul.mubr.bf16.gmra.mxu0 %v2850
      %v2917 = vpop.f32.mrf.mxu0
      %v2918 = vadd.f32 0.0, %v2917
      %v2919 = vpop.f32.mrf.mxu0
      %v2920 = vadd.f32 0.0, %v2919
      %v2921 = vpop.f32.mrf.mxu0
      %v2922 = vpop.f32.mrf.mxu0
      %2923 = vdwg.mxu0
      %2924 = vmatprep.subr.bf16.mxu0 0
      %2925 = vmatpush1.bf16.msra.mxu0 0
      %2926 = vmatprep.subr.bf16.mxu0 0
      %2927 = vmatpush1.bf16.msra.mxu0 0
      %2928 = vmatprep.subr.bf16.mxu0 0
      %2929 = vmatpush1.bf16.msra.mxu0 0
      %2930 = vmatprep.subr.bf16.mxu0 %v2863
      %2931 = vmatpush1.bf16.msra.mxu0 %v2860
      %2932 = vmatprep.subr.bf16.mxu0 %v2831
      %2933 = vmatpush1.bf16.msra.mxu0 %v2830
      %2934 = vmatprep.subr.bf16.mxu0 %v2821
      %2935 = vmatpush1.bf16.msra.mxu0 %v2820
      %2936 = vmatprep.subr.bf16.mxu0 %v2811
      %2937 = vmatpush1.bf16.msra.mxu0 %v2810
      %2938 = vmatprep.subr.bf16.mxu0 %v2801
      %2939 = vmatpush1.bf16.msra.mxu0 %v2800
      %2940 = vmatprep.subr.bf16.mxu0 0
      %2941 = vmatpush2.bf16.msra.mxu0 0
      %2942 = vmatprep.subr.bf16.mxu0 0
      %2943 = vmatpush2.bf16.msra.mxu0 0
      %2944 = vmatprep.subr.bf16.mxu0 0
      %2945 = vmatpush2.bf16.msra.mxu0 0
      %2946 = vmatprep.subr.bf16.mxu0 0
      %2947 = vmatpush2.bf16.msra.mxu0 0
      %2948 = vmatprep.subr.bf16.mxu0 0
      %2949 = vmatpush2.bf16.msra.mxu0 0
      %2950 = vmatprep.subr.bf16.mxu0 0
      %2951 = vmatpush2.bf16.msra.mxu0 0
      %2952 = vmatprep.subr.bf16.mxu0 0
      %2953 = vmatpush2.bf16.msra.mxu0 0
      %2954 = vmatprep.subr.bf16.mxu0 0
      %2955 = vmatpush2.bf16.msra.mxu0 0
      %2956 = vmatprep.mubr.bf16.mxu0 0
      %2957 = vmatmul.mubr.bf16.gmra.mxu0 %v2850
      %v2958 = vpop.f32.mrf.mxu0
      %v2959 = vadd.f32 0.0, %v2958
      %v2960 = vpop.f32.mrf.mxu0
      %v2961 = vadd.f32 0.0, %v2960
      %v2962 = vpop.f32.mrf.mxu0
      %v2963 = vpop.f32.mrf.mxu0
      %2964 = vdwg.mxu0
      %2965 = vmatprep.subr.bf16.mxu0 0
      %2966 = vmatpush1.bf16.msra.mxu0 0
      %2967 = vmatprep.subr.bf16.mxu0 0
      %2968 = vmatpush1.bf16.msra.mxu0 0
      %2969 = vmatprep.subr.bf16.mxu0 0
      %2970 = vmatpush1.bf16.msra.mxu0 0
      %2971 = vmatprep.subr.bf16.mxu0 %v2869
      %2972 = vmatpush1.bf16.msra.mxu0 %v2866
      %2973 = vmatprep.subr.bf16.mxu0 %v2833
      %2974 = vmatpush1.bf16.msra.mxu0 %v2832
      %2975 = vmatprep.subr.bf16.mxu0 %v2823
      %2976 = vmatpush1.bf16.msra.mxu0 %v2822
      %2977 = vmatprep.subr.bf16.mxu0 %v2813
      %2978 = vmatpush1.bf16.msra.mxu0 %v2812
      %2979 = vmatprep.subr.bf16.mxu0 %v2803
      %2980 = vmatpush1.bf16.msra.mxu0 %v2802
      %2981 = vmatprep.subr.bf16.mxu0 0
      %2982 = vmatpush2.bf16.msra.mxu0 0
      %2983 = vmatprep.subr.bf16.mxu0 0
      %2984 = vmatpush2.bf16.msra.mxu0 0
      %2985 = vmatprep.subr.bf16.mxu0 0
      %2986 = vmatpush2.bf16.msra.mxu0 0
      %2987 = vmatprep.subr.bf16.mxu0 0
      %2988 = vmatpush2.bf16.msra.mxu0 0
      %2989 = vmatprep.subr.bf16.mxu0 0
      %2990 = vmatpush2.bf16.msra.mxu0 0
      %2991 = vmatprep.subr.bf16.mxu0 0
      %2992 = vmatpush2.bf16.msra.mxu0 0
      %2993 = vmatprep.subr.bf16.mxu0 0
      %2994 = vmatpush2.bf16.msra.mxu0 0
      %2995 = vmatprep.subr.bf16.mxu0 0
      %2996 = vmatpush2.bf16.msra.mxu0 0
      %2997 = vmatprep.mubr.bf16.mxu0 0
      %2998 = vmatmul.mubr.bf16.gmra.mxu0 %v2850
      %v2999 = vpop.f32.mrf.mxu0
      %v3000 = vadd.f32 0.0, %v2999
      %v3001 = vpop.f32.mrf.mxu0
      %v3002 = vadd.f32 0.0, %v3001
      %v3003 = vpop.f32.mrf.mxu0
      %v3004 = vpop.f32.mrf.mxu0
      %3005 = vdwg.mxu0
      %3006 = vmatprep.subr.bf16.mxu0 0
      %3007 = vmatpush1.bf16.msra.mxu0 0
      %3008 = vmatprep.subr.bf16.mxu0 0
      %3009 = vmatpush1.bf16.msra.mxu0 0
      %3010 = vmatprep.subr.bf16.mxu0 0
      %3011 = vmatpush1.bf16.msra.mxu0 0
      %3012 = vmatprep.subr.bf16.mxu0 %v2875
      %3013 = vmatpush1.bf16.msra.mxu0 %v2872
      %3014 = vmatprep.subr.bf16.mxu0 %v2835
      %3015 = vmatpush1.bf16.msra.mxu0 %v2834
      %3016 = vmatprep.subr.bf16.mxu0 %v2825
      %3017 = vmatpush1.bf16.msra.mxu0 %v2824
      %3018 = vmatprep.subr.bf16.mxu0 %v2815
      %3019 = vmatpush1.bf16.msra.mxu0 %v2814
      %3020 = vmatprep.subr.bf16.mxu0 %v2805
      %3021 = vmatpush1.bf16.msra.mxu0 %v2804
      %3022 = vmatprep.subr.bf16.mxu0 0
      %3023 = vmatpush2.bf16.msra.mxu0 0
      %3024 = vmatprep.subr.bf16.mxu0 0
      %3025 = vmatpush2.bf16.msra.mxu0 0
      %3026 = vmatprep.subr.bf16.mxu0 0
      %3027 = vmatpush2.bf16.msra.mxu0 0
      %3028 = vmatprep.subr.bf16.mxu0 0
      %3029 = vmatpush2.bf16.msra.mxu0 0
      %3030 = vmatprep.subr.bf16.mxu0 0
      %3031 = vmatpush2.bf16.msra.mxu0 0
      %3032 = vmatprep.subr.bf16.mxu0 0
      %3033 = vmatpush2.bf16.msra.mxu0 0
      %3034 = vmatprep.subr.bf16.mxu0 0
      %3035 = vmatpush2.bf16.msra.mxu0 0
      %3036 = vmatprep.subr.bf16.mxu0 0
      %3037 = vmatpush2.bf16.msra.mxu0 0
      %3038 = vmatprep.mubr.bf16.mxu0 0
      %3039 = vmatmul.mubr.bf16.gmra.mxu0 %v2850
      %v3040 = vpop.f32.mrf.mxu0
      %v3041 = vadd.f32 0.0, %v3040
      %v3042 = vpop.f32.mrf.mxu0
      %v3043 = vadd.f32 0.0, %v3042
      %v3044 = vpop.f32.mrf.mxu0
      %v3045 = vpop.f32.mrf.mxu0
      %3046 = vdwg.mxu0
      %3047 = vmatprep.subr.bf16.mxu0 0
      %3048 = vmatpush1.bf16.msra.mxu0 0
      %3049 = vmatprep.subr.bf16.mxu0 0
      %3050 = vmatpush1.bf16.msra.mxu0 0
      %3051 = vmatprep.subr.bf16.mxu0 0
      %3052 = vmatpush1.bf16.msra.mxu0 0
      %3053 = vmatprep.subr.bf16.mxu0 %v2881
      %3054 = vmatpush1.bf16.msra.mxu0 %v2878
      %3055 = vmatprep.subr.bf16.mxu0 %v2837
      %3056 = vmatpush1.bf16.msra.mxu0 %v2836
      %3057 = vmatprep.subr.bf16.mxu0 %v2827
      %3058 = vmatpush1.bf16.msra.mxu0 %v2826
      %3059 = vmatprep.subr.bf16.mxu0 %v2817
      %3060 = vmatpush1.bf16.msra.mxu0 %v2816
      %3061 = vmatprep.subr.bf16.mxu0 %v2807
      %3062 = vmatpush1.bf16.msra.mxu0 %v2806
      %3063 = vmatprep.subr.bf16.mxu0 0
      %3064 = vmatpush2.bf16.msra.mxu0 0
      %3065 = vmatprep.subr.bf16.mxu0 0
      %3066 = vmatpush2.bf16.msra.mxu0 0
      %3067 = vmatprep.subr.bf16.mxu0 0
      %3068 = vmatpush2.bf16.msra.mxu0 0
      %3069 = vmatprep.subr.bf16.mxu0 0
      %3070 = vmatpush2.bf16.msra.mxu0 0
      %3071 = vmatprep.subr.bf16.mxu0 0
      %3072 = vmatpush2.bf16.msra.mxu0 0
      %3073 = vmatprep.subr.bf16.mxu0 0
      %3074 = vmatpush2.bf16.msra.mxu0 0
      %3075 = vmatprep.subr.bf16.mxu0 0
      %3076 = vmatpush2.bf16.msra.mxu0 0
      %3077 = vmatprep.subr.bf16.mxu0 0
      %3078 = vmatpush2.bf16.msra.mxu0 0
      %3079 = vmatprep.mubr.bf16.mxu0 0
      %3080 = vmatmul.mubr.bf16.gmra.mxu0 %v2850
      %v3081 = vpop.f32.mrf.mxu0
      %v3082 = vadd.f32 0.0, %v3081
      %v3083 = vpop.f32.mrf.mxu0
      %v3084 = vadd.f32 0.0, %v3083
      %v3085 = vpop.f32.mrf.mxu0
      %v3086 = vpop.f32.mrf.mxu0
      %3087 = vdwg.mxu0
      %v3088 = vmul.f32 %v2918, %v1935
      %v3089 = vmul.f32 %v2920, %v1939
      %v3090 = vmul.f32 %v2959, %v1943
      %v3091 = vmul.f32 %v2961, %v1947
      %v3092 = vmul.f32 %v3000, %v1951
      %v3093 = vmul.f32 %v3002, %v1955
      %v3094 = vmul.f32 %v3041, %v1959
      %v3095 = vmul.f32 %v3043, %v1963
      %v3096 = vmul.f32 %v3082, %v1967
      %v3097 = vmul.f32 %v3084, %v1971
      %v3098 = vadd.f32 %v3088, %v3089
      %v3099 = vadd.f32 %v3098, %v3090
      %v3100 = vadd.f32 %v3099, %v3091
      %v3101 = vadd.f32 %v3100, %v3092
      %v3102 = vadd.f32 %v3101, %v3093
      %v3103 = vadd.f32 %v3102, %v3094
      %v3104 = vadd.f32 %v3103, %v3095
      %v3105 = vadd.f32 %v3104, %v3096
      %v3106 = vsel %vm240, %v3097, 0.0
      %v3107 = vadd.f32 %v3105, %v3106
      %3108 = vadd.xlane.f32.xlu0 %v3107
      %v3109 = vpop.xlane.xlu0 %3108
      %v3110 = vmul.f32 %v3109, 0.0009765625
      %v3111 = vsub.f32 %v2918, %v3110
      %v3112 = vsub.f32 %v2920, %v3110
      %v3113 = vsub.f32 %v2959, %v3110
      %v3114 = vsub.f32 %v2961, %v3110
      %v3115 = vsub.f32 %v3000, %v3110
      %v3116 = vsub.f32 %v3002, %v3110
      %v3117 = vsub.f32 %v3041, %v3110
      %v3118 = vsub.f32 %v3043, %v3110
      %v3119 = vsub.f32 %v3082, %v3110
      %v3120 = vsub.f32 %v3084, %v3110
      %v3121 = vmul.f32 %v3111, %v1935
      %v3122 = vmul.f32 %v3112, %v1939
      %v3123 = vmul.f32 %v3113, %v1943
      %v3124 = vmul.f32 %v3114, %v1947
      %v3125 = vmul.f32 %v3115, %v1951
      %v3126 = vmul.f32 %v3116, %v1955
      %v3127 = vmul.f32 %v3117, %v1959
      %v3128 = vmul.f32 %v3118, %v1963
      %v3129 = vmul.f32 %v3119, %v1967
      %v3130 = vmul.f32 %v3120, %v1971
      %v3131 = vmul.f32 %v3121, %v3121
      %v3132 = vmul.f32 %v3122, %v3122
      %v3133 = vmul.f32 %v3123, %v3123
      %v3134 = vmul.f32 %v3124, %v3124
      %v3135 = vmul.f32 %v3125, %v3125
      %v3136 = vmul.f32 %v3126, %v3126
      %v3137 = vmul.f32 %v3127, %v3127
      %v3138 = vmul.f32 %v3128, %v3128
      %v3139 = vmul.f32 %v3129, %v3129
      %v3140 = vmul.f32 %v3130, %v3130
      %v3141 = vadd.f32 %v3131, %v3132
      %v3142 = vadd.f32 %v3141, %v3133
      %v3143 = vadd.f32 %v3142, %v3134
      %v3144 = vadd.f32 %v3143, %v3135
      %v3145 = vadd.f32 %v3144, %v3136
      %v3146 = vadd.f32 %v3145, %v3137
      %v3147 = vadd.f32 %v3146, %v3138
      %v3148 = vadd.f32 %v3147, %v3139
      %v3149 = vsel %vm240, %v3140, 0.0
      %v3150 = vadd.f32 %v3148, %v3149
      %3151 = vadd.xlane.f32.xlu0 %v3150
      %v3152 = vpop.xlane.xlu0 %3151
      %v3153 = vmul.f32 %v3152, 0.0009765625
      %v3154 = vadd.f32 %v3153, 1e-05
      %v3155 = vrsqrt.pop %v3154
      %v3156 = vmul.f32 %v3121, %v3155
      %v3157 = vmul.f32 %v3122, %v3155
      %v3158 = vmul.f32 %v3123, %v3155
      %v3159 = vmul.f32 %v3124, %v3155
      %v3160 = vmul.f32 %v3125, %v3155
      %v3161 = vmul.f32 %v3126, %v3155
      %v3162 = vmul.f32 %v3127, %v3155
      %v3163 = vmul.f32 %v3128, %v3155
      %v3164 = vmul.f32 %v3129, %v3155
      %v3165 = vmul.f32 %v3130, %v3155
      %v3166 = vmax.f32 %v3156, 0.0
      %v3167 = vmax.f32 %v3157, 0.0
      %v3168 = vmax.f32 %v3158, 0.0
      %v3169 = vmax.f32 %v3159, 0.0
      %v3170 = vmax.f32 %v3160, 0.0
      %v3171 = vmax.f32 %v3161, 0.0
      %v3172 = vmax.f32 %v3162, 0.0
      %v3173 = vmax.f32 %v3163, 0.0
      %v3174 = vmax.f32 %v3164, 0.0
      %v3175 = vmax.f32 %v3165, 0.0
      %vm3176 = vcmask 281600
      %3177 = vst.msk [vmem:[%s197] sm:$0xf] %vm3176, 0
      %v3178 = vpack.c.bf16 %v3166, %v3166
      %v3179 = vpack.c.bf16 %v3167, %v3167
      %v3180 = vpack.c.bf16 %v3168, %v3168
      %v3181 = vpack.c.bf16 %v3169, %v3169
      %v3182 = vpack.c.bf16 %v3170, %v3170
      %v3183 = vpack.c.bf16 %v3171, %v3171
      %v3184 = vpack.c.bf16 %v3172, %v3172
      %v3185 = vpack.c.bf16 %v3173, %v3173
      %v3186 = vpack.c.bf16 %v3174, %v3174
      %v3187 = vpack.c.bf16 %v3175, %v3175
      %v3198 = vunpack.c.l.b16 %v3178
      %v3199 = vunpack.c.l.b16 %v3179
      %v3200 = vunpack.c.l.b16 %v3180
      %v3201 = vunpack.c.l.b16 %v3181
      %v3202 = vunpack.c.l.b16 %v3182
      %v3203 = vunpack.c.l.b16 %v3183
      %v3204 = vunpack.c.l.b16 %v3184
      %v3205 = vunpack.c.l.b16 %v3185
      %v3206 = vunpack.c.l.b16 %v3186
      %v3207 = vunpack.c.l.b16 %v3187
      %v3208 = vpack.c.b16 %v3199, %v3198
      %v3209 = vpack.c.b16 %v3201, %v3200
      %v3210 = vpack.c.b16 %v3203, %v3202
      %v3211 = vpack.c.b16 %v3205, %v3204
      %v3212 = vpack.c.b16 %v3207, %v3206
      %3213 = vrot.lane.b32.xlu0 %v3208, 35
      %v3214 = vpop.permute.xlu0 %3213
      %3215 = vrot.lane.b32.xlu0 %v3209, 35
      %v3216 = vpop.permute.xlu0 %3215
      %3217 = vrot.lane.b32.xlu0 %v3210, 35
      %v3218 = vpop.permute.xlu0 %3217
      %3219 = vrot.lane.b32.xlu0 %v3211, 35
      %v3220 = vpop.permute.xlu0 %3219
      %3221 = vrot.lane.b32.xlu0 %v3212, 35
      %v3222 = vpop.permute.xlu0 %3221
      %v3223 = vrot.slane %v3214, 4
      %v3224 = vrot.slane %v3216, 4
      %v3225 = vrot.slane %v3218, 4
      %v3226 = vrot.slane %v3220, 4
      %v3227 = vrot.slane %v3222, 4
      %vm3228 = vcmask 285696
      %v3229 = vsel %vm3228, %v3223, %v3214
      %vm3230 = vcmask 1043456
      %v3231 = vsel %vm3230, %v3223, %v3224
      %v3232 = vsel %vm3228, %v3231, %v3216
      %v3233 = vsel %vm3230, %v3224, %v3225
      %v3234 = vsel %vm3228, %v3233, %v3218
      %v3235 = vsel %vm3230, %v3225, %v3226
      %v3236 = vsel %vm3228, %v3235, %v3220
      %v3237 = vsel %vm3230, %v3226, %v3227
      %v3238 = vsel %vm3228, %v3237, %v3222
      %vm3244 = vcmask 1043736
      %vm3245 = vcmask 1047556
      %vm3246 = vmor %vm3245, %vm3244
      %3247 = vst.msk [vmem:[%s197] sm:$0xff] %vm3246, %v3229
      %3248 = vst [vmem:[%s197 + $0x8] sm:$0xff] %v3232
      %3249 = vst [vmem:[%s197 + $0x10] sm:$0xff] %v3234
      %3250 = vst [vmem:[%s197 + $0x18] sm:$0xff] %v3236
      %vm3251 = vcmask 318468
      %vm3252 = vmor %vm3251, %vm2852
      %3253 = vst.msk [vmem:[%s197 + $0x20] sm:$0xff] %vm3252, %v3238
      %vm3254 = vcmask 601400
      %3255 = vst.msk [vmem:[%s197 + $0x24] sm:$0xf] %vm3254, 0
      %p3256 = scmp.lt.s32.totalorder %s15, 1
      %s3257 = scalar_select %p3256, %s15, 1
      %s3258 = smul.addr %s3257, 10
      %s3259 = smul.addr %s3258, 4
      %s3260 = scalar_lea.vmem %s4, %s3259
      // Predicated region
      $region37: #{upsampler_forward.10} parent=35 // pred_check
        %p3261 = pneg %p122
      $region38: #{upsampler_forward.10} parent=35 // pred_check_branch
        %3263 = sbr.rel (%p3261) target = $region40
      $region39: #{upsampler_forward.10} parent=35 // pred_region
        _
      $region40: #{upsampler_forward.10} parent=35 // pred_fallthru
        _
    $region36: #{upsampler_forward.10} parent=5 // pred_fallthru
      _
    %p3264 = scmp.le.s32.totalorder 2, %s10
    // Predicated region
    $region41: #{upsampler_forward.10} parent=5 // pred_check
      %p3265 = pneg %p3264
    $region42: #{upsampler_forward.10} parent=5 // pred_check_branch
      %3267 = sbr.rel (%p3265) target = $region44
    $region43: #{upsampler_forward.10} parent=5 // pred_region
      %s3268 = ssub.s32 %s10, 2
      // Predicated region
      $region45: #{upsampler_forward.10} parent=43 // pred_check
        %p3269 = pneg %p128
      $region46: #{upsampler_forward.10} parent=43 // pred_check_branch
        %3271 = sbr.rel (%p3269) target = $region48
      $region47: #{upsampler_forward.10} parent=43 // pred_region
        %p3272 = scmp.lt.s32.totalorder %s16, 1
        %s3273 = scalar_select %p3272, %s16, 1
        %s3274 = smul.addr %s3273, 10
        %s3275 = smul.addr %s3274, 4
        %s3276 = scalar_lea.vmem %s4, %s3275
      $region48: #{upsampler_forward.10} parent=43 // pred_fallthru
        _
    $region44: #{upsampler_forward.10} parent=5 // pred_fallthru
      _
  $region6: #{upsampler_forward.10} parent=0 // loop_footer
    %s14 = sadd.s32 1, %s10
  $region7: #{upsampler_forward.10} parent=0 // loop_footer_branch
    %9 = sbr.rel target = $region3
  $region8: #{upsampler_forward.10} parent=0 // loop_exit
    _

</llo_original>
